<compile_context>
chip_gen: v6e
topology: v6e:2x2x1
jax: 0.10.0
libtpu: 0.0.40
codegen_flags: <defaults>
</compile_context>

<pallas_src>
import jax
import jax.numpy as jnp
from jax.experimental import pallas as pl
from jax.experimental.pallas import tpu as pltpu

HIDDIM = 16
CREATE_TRD = 2.5
CREATE_TRD2 = 5.0
ROUTING_ITERS = 3


def capnet_kernel(hist_emb_ref, user_emb_ref, caps_ref, cap_mask_ref,
                  hist_mask_ref, w_ref, b_ref, caps_out_ref, score_ref):
    TB, L, D = hist_emb_ref.shape
    K = cap_mask_ref.shape[1]

    hist_emb = hist_emb_ref[...]                     # (TB, L, D) bf16
    user_emb = user_emb_ref[...]                     # (TB, D)    f32
    caps = caps_ref[...].reshape(TB, K, D)           # (TB, K, D) f32 (zero-padded rows)
    cap_mask_f = cap_mask_ref[...]                   # (TB, K)    f32 {0,1}
    hist_mask_f = hist_mask_ref[...]                 # (TB, L)    f32 {0,1}
    W = w_ref[...]                                   # (2D, D)    bf16
    bias = b_ref[...]                                # (1, D)     f32

    # trans(cat([hist_emb, user_emb.repeat], -1))
    #   == hist_emb @ W[:D] + user_emb @ W[D:] + b   (MXU, f32 accumulation)
    hist_part = jnp.dot(hist_emb.reshape(TB * L, D), W[:D, :],
                        preferred_element_type=jnp.float32).reshape(TB, L, D)
    user_part = jnp.dot(user_emb.astype(jnp.bfloat16), W[D:, :],
                        preferred_element_type=jnp.float32)          # (TB, D)
    hist_hat = hist_part + user_part[:, None, :] + bias              # (TB, L, D) f32

    # Additive capsule mask, hoisted out of the routing loop
    # (masked_fill_(~cap_mask, -inf) == a + a_bias, and -inf is idempotent).
    neg_inf = jnp.float32(-jnp.inf)
    a_bias = jnp.broadcast_to(
        jnp.where(cap_mask_f > 0.5, 0.0, neg_inf)[:, :, None], (TB, K, L))

    # Agreement a[b,k,l] = <caps[b,k,:], hist_hat[b,l,:]>; contract d of both
    # operands directly (no materialized hist_hat^T).
    a = jnp.einsum('bkd,bld->bkl', caps, hist_hat,
                   preferred_element_type=jnp.float32)               # (TB, K, L)

    a_max = denom = None
    for it in range(ROUTING_ITERS):
        # masked_fill_(~cap_mask, -inf) then softmax over the capsule axis.
        a = a + a_bias                                               # masked logits
        a_max = jnp.max(a, axis=1, keepdims=True)                    # (TB, 1, L)
        e = jnp.exp(a - a_max)
        denom = jnp.sum(e, axis=1, keepdims=True)                    # (TB, 1, L)
        # Exact divide so sum_k b == 1 (parity with torch.softmax). Rows with
        # zero valid capsules give denom == 0 -> NaN, exactly like the reference.
        b_route = e / denom                                          # (TB, K, L)

        # c = b @ hist_hat (hist_hat_iter == hist_hat numerically; detach only
        # affects gradients in the reference).
        c = jnp.einsum('bkl,bld->bkd', b_route, hist_hat,
                       preferred_element_type=jnp.float32)           # (TB, K, D)
        # TODO(synk): proj=True branch (torch.inverse of the mbk x mbk Gram
        # matrix) has no clean Pallas equivalent and is not implemented.
        s = jnp.sum(c * c, axis=-1, keepdims=True)                   # |c|^2 (TB, K, 1)
        caps = (jnp.sqrt(s) / (s + 1.0)) * c                         # squash

        if it < ROUTING_ITERS - 1:
            a = jnp.einsum('bkd,bld->bkl', caps, hist_hat,
                           preferred_element_type=jnp.float32) + a

    # capsules.squeeze() * cap_mask, stored lane-dense as (TB, K*D).
    caps_out_ref[...] = (caps * cap_mask_f[:, :, None]).reshape(TB, K * D)

    # create_score from the final softmax logits:
    #   log(sum_k b) - mean_k(log b) == a_max + log(denom) - mean_k(a)
    # Rows with any masked capsule have mean_k(a) = -inf -> +inf, matching the
    # PyTorch module exactly; +inf where hist_mask is False.
    mean_a = jnp.mean(a, axis=1)                                     # (TB, L)
    create_score = a_max[:, 0, :] + jnp.log(denom[:, 0, :]) - mean_a
    score_ref[...] = jnp.where(hist_mask_f > 0.5, create_score,
                               jnp.float32(jnp.inf))


def _vmem_capacity_bytes():
    """Physical VMEM per TensorCore (v5e/v6e: 128 MiB, v7x: 64 MiB)."""
    try:
        info_fn = getattr(pltpu, "get_tpu_info", None)
        if info_fn is not None:
            return int(info_fn().vmem_capacity_bytes)
    except Exception:
        pass
    return 64 * 1024 * 1024     # conservative fallback (v7x per-core)


def _pick_batch_tile(B, L, D, K, vmem_budget_bytes):
    """Batch rows per grid step.

    Target the largest power-of-two tile (<= 512) that divides B and fits the
    per-generation VMEM budget; larger tiles amortize the ~0.35us/step pipeline
    overhead (tile sweeps: ~30% of roofline at tiny tiles vs ~85% at 512) and
    give v7x megacore sharding real per-step work.  With L = 16, any TB >= 32
    also makes the trans matmul's M = TB*L a multiple of 512 (whole MXU passes).
    Falls back to a single whole-batch block (block dims equal to the full
    array are always legal) when B has no such divisor.
    """
    # Rough per-batch-row VMEM residency: double-buffered pipelined blocks plus
    # the in-kernel f32 temporaries, times a generous lane-padding factor
    # (D, K, L are far below the 128-lane vreg width).
    per_row = (2 * (L * D * 2)                         # hist_emb bf16, dbl-buffered
               + 2 * (D + K * D + K + L) * 4           # other inputs, dbl-buffered
               + 2 * (K * D + L) * 4                   # outputs, dbl-buffered
               + L * D * 4                             # hist_hat f32
               + 6 * K * L * 4 + 4 * K * D * 4)        # routing temporaries
    per_row *= 8                                       # lane-padding / spill headroom
    cap = max(8, vmem_budget_bytes // (2 * per_row))
    for tb in (512, 256, 128, 64, 32, 16, 8):
        if tb <= cap and B % tb == 0:
            return tb
    return B


def base_capnet_forward(item_table, user_table, trans_w, trans_b,
                        user_id, hist, tgt, capsules_init, cap_mask,
                        hist_mask, tgt_mask):
    """memflag=True, proj=False path of BaseCapNet.forward."""
    # memflag=True: concatenate target into history.
    hist_full = jnp.concatenate([hist, tgt], axis=1)                 # (B, L)
    hist_mask_full = jnp.concatenate([hist_mask, tgt_mask], axis=1)  # (B, L)

    # Embedding lookups (data-dependent gather) kept as JAX glue. The item table
    # is cast to bf16 *before* the gather so the dominant (B, L, D) activation is
    # written and re-read by the kernel at half the HBM traffic.
    # TODO(synk): move the item gather into the kernel (bf16 table resident in
    # VMEM + in-kernel take on the int32 ids) to remove the HBM round-trip when
    # the table fits the per-generation VMEM budget; per-row DMA gathers are
    # descriptor-bound and worse, so this stays in XLA for now.
    hist_emb = item_table.astype(jnp.bfloat16)[hist_full]            # (B, L, D) bf16
    user_emb = user_table[user_id[:, 0]].astype(jnp.float32)         # (B, D)    f32

    B, L, D = hist_emb.shape
    K = capsules_init.shape[1]

    vmem_cap = _vmem_capacity_bytes()
    # ~3/4 of physical VMEM: ~96 MiB on v5e/v6e (128 MiB), ~48 MiB on v7x (64 MiB).
    vmem_limit = int(min(vmem_cap * 3 // 4, 96 * 1024 * 1024))
    TB = _pick_batch_tile(B, L, D, K, vmem_limit)
    grid = (B // TB,)

    caps_in = capsules_init.astype(jnp.float32).reshape(B, K * D)    # (B, K*D) lane-dense
    cap_mask_f = cap_mask.astype(jnp.float32)                        # (B, K)
    hist_mask_f = hist_mask_full.astype(jnp.float32)                 # (B, L)
    w_bf = trans_w.astype(jnp.bfloat16)                              # (2D, D)
    b_f32 = trans_b.reshape(1, D).astype(jnp.float32)                # (1, D)

    cost = pl.CostEstimate(
        flops=int(2 * B * L * D * (2 * D)
                  + 2 * (2 * ROUTING_ITERS + 1) * B * K * L * D),
        transcendentals=int(ROUTING_ITERS * B * K * L + ROUTING_ITERS * B * K
                            + B * L),
        bytes_accessed=int(hist_emb.size * 2 + user_emb.size * 4
                           + 2 * caps_in.size * 4 + cap_mask_f.size * 4
                           + 2 * hist_mask_f.size * 4
                           + w_bf.size * 2 + b_f32.size * 4))

    caps_out_flat, create_score = pl.pallas_call(
        capnet_kernel,
        out_shape=(jax.ShapeDtypeStruct((B, K * D), jnp.float32),
                   jax.ShapeDtypeStruct((B, L), jnp.float32)),
        grid_spec=pltpu.PrefetchScalarGridSpec(
            num_scalar_prefetch=0,
            grid=grid,
            in_specs=[
                pl.BlockSpec((TB, L, D), lambda i: (i, 0, 0)),       # hist_emb (bf16)
                pl.BlockSpec((TB, D), lambda i: (i, 0)),             # user_emb
                pl.BlockSpec((TB, K * D), lambda i: (i, 0)),         # capsules (flat)
                pl.BlockSpec((TB, K), lambda i: (i, 0)),             # cap_mask
                pl.BlockSpec((TB, L), lambda i: (i, 0)),             # hist_mask
                pl.BlockSpec((2 * D, D), lambda i: (0, 0)),          # trans W (resident)
                pl.BlockSpec((1, D), lambda i: (0, 0)),              # trans b (resident)
            ],
            out_specs=(
                pl.BlockSpec((TB, K * D), lambda i: (i, 0)),         # capsules out (flat)
                pl.BlockSpec((TB, L), lambda i: (i, 0)),             # create_score
            )),
        compiler_params=pltpu.CompilerParams(
            dimension_semantics=("parallel",),       # megacore sharding on v7x
            vmem_limit_bytes=vmem_limit),            # generation-aware limit
        cost_estimate=cost,
        input_output_aliases={2: 0},   # reuse capsules_init buffer for caps out
    )(hist_emb, user_emb, caps_in, cap_mask_f, hist_mask_f, w_bf, b_f32)

    caps_out = caps_out_flat.reshape(B, K, D)

    # create = sum(create_score < create_trd, dim=1) > create_trd2   (scalar glue)
    create = jnp.sum(create_score < CREATE_TRD, axis=1) > CREATE_TRD2
    return caps_out, create


# TODO(synk): memflag=False branch (python random.choices negative sampling from
# neg_set, loss_pos/loss_neg) is data-dependent host-side logic and is not ported.

if __name__ == "__main__":
    B, Lh, Lt, D, MBK = 16, 8, 8, HIDDIM, 4
    item_num, user_num = 50, 10

    key = jax.random.PRNGKey(0)
    k1, k2, k3, k4, k5, k6, k7, k8 = jax.random.split(key, 8)

    # Deterministic parameter init (shapes per module __init__)
    item_table = jax.random.normal(k1, (item_num + 1, D), jnp.float32) * 0.1
    item_table = item_table.at[0].set(0.0)   # padding_idx=0
    user_table = jax.random.normal(k2, (user_num + 1, D), jnp.float32) * 0.1
    user_table = user_table.at[0].set(0.0)   # padding_idx=0
    trans_w = jax.random.normal(k3, (2 * D, D), jnp.float32) * 0.1   # Linear(2D -> D)
    trans_b = jax.random.normal(k4, (D,), jnp.float32) * 0.1
    # (self.dnn is unused by the memflag=True forward path and therefore omitted.)

    # Example inputs
    user_id = jax.random.randint(k5, (B, 1), 1, user_num + 1)
    hist = jax.random.randint(k6, (B, Lh), 1, item_num + 1)
    hist = hist.at[:, -1].set(0)             # one padded history slot per row
    tgt = jax.random.randint(k7, (B, Lt), 1, item_num + 1)
    hist_mask = hist != 0
    tgt_mask = tgt != 0

    # caps / Ks: per-user capsule lists, zero-padded to mbk = max(Ks).
    # Every row has >= 1 valid capsule (required, as in the reference).
    Ks = [(i % MBK) + 1 for i in range(B)]
    cap_mask = jnp.array([[k < Ks[i] for k in range(MBK)] for i in range(B)])
    capsules_init = jax.random.normal(k8, (B, MBK, D), jnp.float32) * 0.1
    capsules_init = capsules_init * cap_mask[:, :, None]

    fwd = jax.jit(base_capnet_forward)
    caps_out, create = fwd(item_table, user_table, trans_w, trans_b,
                           user_id, hist, tgt, capsules_init, cap_mask,
                           hist_mask, tgt_mask)
    jax.block_until_ready((caps_out, create))

    assert caps_out.shape == (B, MBK, D)
    assert create.shape == (B,)
    assert bool(jnp.all(jnp.isfinite(caps_out)))
    print("KERNEL_OK")
</pallas_src>

<mosaic_0001>
module attributes {stable_mosaic.version = 11 : i64} {
  func.func @capnet_kernel(%arg0: i32, %arg1: memref<16x16x16xbf16, #tpu.memory_space<vmem>>, %arg2: memref<16x16xf32, #tpu.memory_space<vmem>>, %arg3: memref<16x64xf32, #tpu.memory_space<vmem>>, %arg4: memref<16x4xf32, #tpu.memory_space<vmem>>, %arg5: memref<16x16xf32, #tpu.memory_space<vmem>>, %arg6: memref<32x16xbf16, #tpu.memory_space<vmem>>, %arg7: memref<1x16xf32, #tpu.memory_space<vmem>>, %arg8: memref<16x64xf32, #tpu.memory_space<vmem>>, %arg9: memref<16x16xf32, #tpu.memory_space<vmem>>) attributes {dimension_semantics = [#tpu.dimension_semantics<parallel>], iteration_bounds = array<i64: 1>, scalar_prefetch = 0 : i64, scratch_operands = 0 : i64, tpu.core_type = #tpu.core_type<tc>, window_params = [{transform_indices = @transform_0, window_bounds = array<i64: 16, 16, 16>}, {transform_indices = @transform_1, window_bounds = array<i64: 16, 16>}, {transform_indices = @transform_2, window_bounds = array<i64: 16, 64>}, {transform_indices = @transform_3, window_bounds = array<i64: 16, 4>}, {transform_indices = @transform_4, window_bounds = array<i64: 16, 16>}, {pipeline_mode = #tpu.pipeline_mode<synchronous>, transform_indices = @transform_5, window_bounds = array<i64: 32, 16>}, {pipeline_mode = #tpu.pipeline_mode<synchronous>, transform_indices = @transform_6, window_bounds = array<i64: 1, 16>}, {transform_indices = @transform_7, window_bounds = array<i64: 16, 64>}, {transform_indices = @transform_8, window_bounds = array<i64: 16, 16>}]} {
    %c0 = arith.constant 0 : index
    %c0_0 = arith.constant 0 : index
    %c0_1 = arith.constant 0 : index
    %0 = vector.load %arg1[%c0, %c0_0, %c0_1] : memref<16x16x16xbf16, #tpu.memory_space<vmem>>, vector<16x16x16xbf16>
    %c0_2 = arith.constant 0 : index
    %c0_3 = arith.constant 0 : index
    %1 = vector.load %arg2[%c0_2, %c0_3] : memref<16x16xf32, #tpu.memory_space<vmem>>, vector<16x16xf32>
    %c0_4 = arith.constant 0 : index
    %c0_5 = arith.constant 0 : index
    %2 = vector.load %arg3[%c0_4, %c0_5] : memref<16x64xf32, #tpu.memory_space<vmem>>, vector<16x64xf32>
    %3 = vector.shape_cast %2 : vector<16x64xf32> to vector<16x4x16xf32>
    %c0_6 = arith.constant 0 : index
    %c0_7 = arith.constant 0 : index
    %4 = vector.load %arg4[%c0_6, %c0_7] : memref<16x4xf32, #tpu.memory_space<vmem>>, vector<16x4xf32>
    %c0_8 = arith.constant 0 : index
    %c0_9 = arith.constant 0 : index
    %5 = vector.load %arg5[%c0_8, %c0_9] : memref<16x16xf32, #tpu.memory_space<vmem>>, vector<16x16xf32>
    %c0_10 = arith.constant 0 : index
    %c0_11 = arith.constant 0 : index
    %6 = vector.load %arg6[%c0_10, %c0_11] : memref<32x16xbf16, #tpu.memory_space<vmem>>, vector<32x16xbf16>
    %c0_12 = arith.constant 0 : index
    %c0_13 = arith.constant 0 : index
    %7 = vector.load %arg7[%c0_12, %c0_13] : memref<1x16xf32, #tpu.memory_space<vmem>>, vector<1x16xf32>
    %8 = vector.shape_cast %0 : vector<16x16x16xbf16> to vector<256x16xbf16>
    %9 = vector.extract_strided_slice %6 {offsets = [0, 0], sizes = [16, 16], strides = [1, 1]} : vector<32x16xbf16> to vector<16x16xbf16>
    %cst = arith.constant dense<0.000000e+00> : vector<256x16xf32>
    %10 = tpu.matmul %8, %9, %cst {dimension_numbers = #tpu.dot_dimension_numbers<[1], [0], [0], [1], [0, 0, 1, 1], [], []>} : vector<256x16xbf16>, vector<16x16xbf16>, vector<256x16xf32> -> vector<256x16xf32>
    %11 = vector.shape_cast %10 : vector<256x16xf32> to vector<16x16x16xf32>
    %12 = arith.truncf %1 : vector<16x16xf32> to vector<16x16xbf16>
    %13 = vector.extract_strided_slice %6 {offsets = [16, 0], sizes = [16, 16], strides = [1, 1]} : vector<32x16xbf16> to vector<16x16xbf16>
    %cst_14 = arith.constant dense<0.000000e+00> : vector<16x16xf32>
    %14 = tpu.matmul %12, %13, %cst_14 {dimension_numbers = #tpu.dot_dimension_numbers<[1], [0], [0], [1], [0, 0, 1, 1], [], []>} : vector<16x16xbf16>, vector<16x16xbf16>, vector<16x16xf32> -> vector<16x16xf32>
    %15 = vector.shape_cast %14 : vector<16x16xf32> to vector<16x1x16xf32>
    %16 = vector.broadcast %15 : vector<16x1x16xf32> to vector<16x16x16xf32>
    %17 = arith.addf %11, %16 : vector<16x16x16xf32>
    %18 = vector.shape_cast %7 : vector<1x16xf32> to vector<1x1x16xf32>
    %19 = vector.broadcast %18 : vector<1x1x16xf32> to vector<16x16x16xf32>
    %20 = arith.addf %17, %19 : vector<16x16x16xf32>
    %cst_15 = arith.constant 5.000000e-01 : f32
    %21 = vector.broadcast %cst_15 : f32 to vector<16x4xf32>
    %22 = arith.cmpf ogt, %4, %21 : vector<16x4xf32>
    %cst_16 = arith.constant 0.000000e+00 : f32
    %cst_17 = arith.constant 0xFF800000 : f32
    %23 = vector.broadcast %cst_16 : f32 to vector<16x4xf32>
    %24 = vector.broadcast %cst_17 : f32 to vector<16x4xf32>
    %25 = arith.select %22, %23, %24 : vector<16x4xi1>, vector<16x4xf32>
    %26 = vector.shape_cast %25 : vector<16x4xf32> to vector<16x4x1xf32>
    %27 = vector.shape_cast %26 : vector<16x4x1xf32> to vector<16x4x1xf32>
    %28 = vector.broadcast %27 : vector<16x4x1xf32> to vector<16x4x16xf32>
    "tpu.trace_start"() <{level = 10 : i32, message = "bkd,bld->bkl"}> : () -> ()
    %cst_18 = arith.constant dense<0.000000e+00> : vector<16x4x16xf32>
    %29 = tpu.matmul %3, %20, %cst_18 {dimension_numbers = #tpu.dot_dimension_numbers<[2], [2], [1], [1], [0, 0, 0, 1, 1, 1], [0], [0]>} : vector<16x4x16xf32>, vector<16x16x16xf32>, vector<16x4x16xf32> -> vector<16x4x16xf32>
    "tpu.trace_stop"() : () -> ()
    %30 = arith.addf %29, %28 : vector<16x4x16xf32>
    %cst_19 = arith.constant dense<0xFF800000> : vector<16x16xf32>
    %31 = vector.multi_reduction <maximumf>, %30, %cst_19 [1] : vector<16x4x16xf32> to vector<16x16xf32>
    %32 = vector.shape_cast %31 : vector<16x16xf32> to vector<16x1x16xf32>
    %33 = vector.broadcast %32 : vector<16x1x16xf32> to vector<16x4x16xf32>
    %34 = arith.subf %30, %33 : vector<16x4x16xf32>
    %35 = math.exp %34 : vector<16x4x16xf32>
    %cst_20 = arith.constant dense<0.000000e+00> : vector<16x16xf32>
    %36 = vector.multi_reduction <add>, %35, %cst_20 [1] : vector<16x4x16xf32> to vector<16x16xf32>
    %37 = vector.shape_cast %36 : vector<16x16xf32> to vector<16x1x16xf32>
    %38 = vector.broadcast %37 : vector<16x1x16xf32> to vector<16x4x16xf32>
    %39 = arith.divf %35, %38 : vector<16x4x16xf32>
    "tpu.trace_start"() <{level = 10 : i32, message = "bkl,bld->bkd"}> : () -> ()
    %cst_21 = arith.constant dense<0.000000e+00> : vector<16x4x16xf32>
    %40 = tpu.matmul %39, %20, %cst_21 {dimension_numbers = #tpu.dot_dimension_numbers<[2], [1], [1], [2], [0, 0, 0, 1, 1, 2], [0], [0]>} : vector<16x4x16xf32>, vector<16x16x16xf32>, vector<16x4x16xf32> -> vector<16x4x16xf32>
    "tpu.trace_stop"() : () -> ()
    %41 = arith.mulf %40, %40 : vector<16x4x16xf32>
    %cst_22 = arith.constant dense<0.000000e+00> : vector<16x4xf32>
    %42 = vector.multi_reduction <add>, %41, %cst_22 [2] : vector<16x4x16xf32> to vector<16x4xf32>
    %43 = vector.shape_cast %42 : vector<16x4xf32> to vector<16x4x1xf32>
    %44 = math.sqrt %43 : vector<16x4x1xf32>
    %cst_23 = arith.constant 1.000000e+00 : f32
    %45 = vector.broadcast %cst_23 : f32 to vector<16x4x1xf32>
    %46 = arith.addf %43, %45 : vector<16x4x1xf32>
    %47 = arith.divf %44, %46 : vector<16x4x1xf32>
    %48 = vector.broadcast %47 : vector<16x4x1xf32> to vector<16x4x16xf32>
    %49 = arith.mulf %48, %40 : vector<16x4x16xf32>
    "tpu.trace_start"() <{level = 10 : i32, message = "bkd,bld->bkl"}> : () -> ()
    %cst_24 = arith.constant dense<0.000000e+00> : vector<16x4x16xf32>
    %50 = tpu.matmul %49, %20, %cst_24 {dimension_numbers = #tpu.dot_dimension_numbers<[2], [2], [1], [1], [0, 0, 0, 1, 1, 1], [0], [0]>} : vector<16x4x16xf32>, vector<16x16x16xf32>, vector<16x4x16xf32> -> vector<16x4x16xf32>
    "tpu.trace_stop"() : () -> ()
    %51 = arith.addf %50, %30 : vector<16x4x16xf32>
    %52 = arith.addf %51, %28 : vector<16x4x16xf32>
    %cst_25 = arith.constant dense<0xFF800000> : vector<16x16xf32>
    %53 = vector.multi_reduction <maximumf>, %52, %cst_25 [1] : vector<16x4x16xf32> to vector<16x16xf32>
    %54 = vector.shape_cast %53 : vector<16x16xf32> to vector<16x1x16xf32>
    %55 = vector.broadcast %54 : vector<16x1x16xf32> to vector<16x4x16xf32>
    %56 = arith.subf %52, %55 : vector<16x4x16xf32>
    %57 = math.exp %56 : vector<16x4x16xf32>
    %cst_26 = arith.constant dense<0.000000e+00> : vector<16x16xf32>
    %58 = vector.multi_reduction <add>, %57, %cst_26 [1] : vector<16x4x16xf32> to vector<16x16xf32>
    %59 = vector.shape_cast %58 : vector<16x16xf32> to vector<16x1x16xf32>
    %60 = vector.broadcast %59 : vector<16x1x16xf32> to vector<16x4x16xf32>
    %61 = arith.divf %57, %60 : vector<16x4x16xf32>
    "tpu.trace_start"() <{level = 10 : i32, message = "bkl,bld->bkd"}> : () -> ()
    %cst_27 = arith.constant dense<0.000000e+00> : vector<16x4x16xf32>
    %62 = tpu.matmul %61, %20, %cst_27 {dimension_numbers = #tpu.dot_dimension_numbers<[2], [1], [1], [2], [0, 0, 0, 1, 1, 2], [0], [0]>} : vector<16x4x16xf32>, vector<16x16x16xf32>, vector<16x4x16xf32> -> vector<16x4x16xf32>
    "tpu.trace_stop"() : () -> ()
    %63 = arith.mulf %62, %62 : vector<16x4x16xf32>
    %cst_28 = arith.constant dense<0.000000e+00> : vector<16x4xf32>
    %64 = vector.multi_reduction <add>, %63, %cst_28 [2] : vector<16x4x16xf32> to vector<16x4xf32>
    %65 = vector.shape_cast %64 : vector<16x4xf32> to vector<16x4x1xf32>
    %66 = math.sqrt %65 : vector<16x4x1xf32>
    %cst_29 = arith.constant 1.000000e+00 : f32
    %67 = vector.broadcast %cst_29 : f32 to vector<16x4x1xf32>
    %68 = arith.addf %65, %67 : vector<16x4x1xf32>
    %69 = arith.divf %66, %68 : vector<16x4x1xf32>
    %70 = vector.broadcast %69 : vector<16x4x1xf32> to vector<16x4x16xf32>
    %71 = arith.mulf %70, %62 : vector<16x4x16xf32>
    "tpu.trace_start"() <{level = 10 : i32, message = "bkd,bld->bkl"}> : () -> ()
    %cst_30 = arith.constant dense<0.000000e+00> : vector<16x4x16xf32>
    %72 = tpu.matmul %71, %20, %cst_30 {dimension_numbers = #tpu.dot_dimension_numbers<[2], [2], [1], [1], [0, 0, 0, 1, 1, 1], [0], [0]>} : vector<16x4x16xf32>, vector<16x16x16xf32>, vector<16x4x16xf32> -> vector<16x4x16xf32>
    "tpu.trace_stop"() : () -> ()
    %73 = arith.addf %72, %52 : vector<16x4x16xf32>
    %74 = arith.addf %73, %28 : vector<16x4x16xf32>
    %cst_31 = arith.constant dense<0xFF800000> : vector<16x16xf32>
    %75 = vector.multi_reduction <maximumf>, %74, %cst_31 [1] : vector<16x4x16xf32> to vector<16x16xf32>
    %76 = vector.shape_cast %75 : vector<16x16xf32> to vector<16x1x16xf32>
    %77 = vector.broadcast %76 : vector<16x1x16xf32> to vector<16x4x16xf32>
    %78 = arith.subf %74, %77 : vector<16x4x16xf32>
    %79 = math.exp %78 : vector<16x4x16xf32>
    %cst_32 = arith.constant dense<0.000000e+00> : vector<16x16xf32>
    %80 = vector.multi_reduction <add>, %79, %cst_32 [1] : vector<16x4x16xf32> to vector<16x16xf32>
    %81 = vector.shape_cast %80 : vector<16x16xf32> to vector<16x1x16xf32>
    %82 = vector.broadcast %81 : vector<16x1x16xf32> to vector<16x4x16xf32>
    %83 = arith.divf %79, %82 : vector<16x4x16xf32>
    "tpu.trace_start"() <{level = 10 : i32, message = "bkl,bld->bkd"}> : () -> ()
    %cst_33 = arith.constant dense<0.000000e+00> : vector<16x4x16xf32>
    %84 = tpu.matmul %83, %20, %cst_33 {dimension_numbers = #tpu.dot_dimension_numbers<[2], [1], [1], [2], [0, 0, 0, 1, 1, 2], [0], [0]>} : vector<16x4x16xf32>, vector<16x16x16xf32>, vector<16x4x16xf32> -> vector<16x4x16xf32>
    "tpu.trace_stop"() : () -> ()
    %85 = arith.mulf %84, %84 : vector<16x4x16xf32>
    %cst_34 = arith.constant dense<0.000000e+00> : vector<16x4xf32>
    %86 = vector.multi_reduction <add>, %85, %cst_34 [2] : vector<16x4x16xf32> to vector<16x4xf32>
    %87 = vector.shape_cast %86 : vector<16x4xf32> to vector<16x4x1xf32>
    %88 = math.sqrt %87 : vector<16x4x1xf32>
    %cst_35 = arith.constant 1.000000e+00 : f32
    %89 = vector.broadcast %cst_35 : f32 to vector<16x4x1xf32>
    %90 = arith.addf %87, %89 : vector<16x4x1xf32>
    %91 = arith.divf %88, %90 : vector<16x4x1xf32>
    %92 = vector.broadcast %91 : vector<16x4x1xf32> to vector<16x4x16xf32>
    %93 = arith.mulf %92, %84 : vector<16x4x16xf32>
    %94 = vector.shape_cast %4 : vector<16x4xf32> to vector<16x4x1xf32>
    %95 = vector.broadcast %94 : vector<16x4x1xf32> to vector<16x4x16xf32>
    %96 = arith.mulf %93, %95 : vector<16x4x16xf32>
    %97 = vector.shape_cast %96 : vector<16x4x16xf32> to vector<16x64xf32>
    %c0_36 = arith.constant 0 : index
    %c0_37 = arith.constant 0 : index
    %98 = vector.load %arg8[%c0_36, %c0_37] : memref<16x64xf32, #tpu.memory_space<vmem>>, vector<16x64xf32>
    tpu.vector_store %arg8[%c0_36, %c0_37], %97 {strides = array<i32>} : memref<16x64xf32, #tpu.memory_space<vmem>>, vector<16x64xf32>,
    %cst_38 = arith.constant dense<0.000000e+00> : vector<16x16xf32>
    %99 = vector.multi_reduction <add>, %74, %cst_38 [1] : vector<16x4x16xf32> to vector<16x16xf32>
    %cst_39 = arith.constant 4.000000e+00 : f32
    %100 = vector.broadcast %cst_39 : f32 to vector<16x16xf32>
    %101 = arith.divf %99, %100 : vector<16x16xf32>
    %102 = vector.shape_cast %76 : vector<16x1x16xf32> to vector<16x16xf32>
    %103 = vector.shape_cast %81 : vector<16x1x16xf32> to vector<16x16xf32>
    %104 = math.log %103 : vector<16x16xf32>
    %105 = arith.addf %102, %104 : vector<16x16xf32>
    %106 = arith.subf %105, %101 : vector<16x16xf32>
    %cst_40 = arith.constant 5.000000e-01 : f32
    %107 = vector.broadcast %cst_40 : f32 to vector<16x16xf32>
    %108 = arith.cmpf ogt, %5, %107 : vector<16x16xf32>
    %cst_41 = arith.constant 0x7F800000 : f32
    %109 = vector.broadcast %cst_41 : f32 to vector<16x16xf32>
    %110 = arith.select %108, %106, %109 : vector<16x16xi1>, vector<16x16xf32>
    %c0_42 = arith.constant 0 : index
    %c0_43 = arith.constant 0 : index
    %111 = vector.load %arg9[%c0_42, %c0_43] : memref<16x16xf32, #tpu.memory_space<vmem>>, vector<16x16xf32>
    tpu.vector_store %arg9[%c0_42, %c0_43], %110 {strides = array<i32>} : memref<16x16xf32, #tpu.memory_space<vmem>>, vector<16x16xf32>,
    return
  }
  func.func @transform_0(%arg0: i32) -> (i32, i32, i32) {
    %c0_i32 = arith.constant 0 : i32
    %c0_i32_0 = arith.constant 0 : i32
    %c0_i32_1 = arith.constant 0 : i32
    return %arg0, %c0_i32, %c0_i32_0 : i32, i32, i32
  }
  func.func @transform_1(%arg0: i32) -> (i32, i32) {
    %c0_i32 = arith.constant 0 : i32
    %c0_i32_0 = arith.constant 0 : i32
    return %arg0, %c0_i32 : i32, i32
  }
  func.func @transform_2(%arg0: i32) -> (i32, i32) {
    %c0_i32 = arith.constant 0 : i32
    %c0_i32_0 = arith.constant 0 : i32
    return %arg0, %c0_i32 : i32, i32
  }
  func.func @transform_3(%arg0: i32) -> (i32, i32) {
    %c0_i32 = arith.constant 0 : i32
    %c0_i32_0 = arith.constant 0 : i32
    return %arg0, %c0_i32 : i32, i32
  }
  func.func @transform_4(%arg0: i32) -> (i32, i32) {
    %c0_i32 = arith.constant 0 : i32
    %c0_i32_0 = arith.constant 0 : i32
    return %arg0, %c0_i32 : i32, i32
  }
  func.func @transform_5(%arg0: i32) -> (i32, i32) {
    %c0_i32 = arith.constant 0 : i32
    %c0_i32_0 = arith.constant 0 : i32
    %c0_i32_1 = arith.constant 0 : i32
    return %c0_i32, %c0_i32_0 : i32, i32
  }
  func.func @transform_6(%arg0: i32) -> (i32, i32) {
    %c0_i32 = arith.constant 0 : i32
    %c0_i32_0 = arith.constant 0 : i32
    %c0_i32_1 = arith.constant 0 : i32
    return %c0_i32, %c0_i32_0 : i32, i32
  }
  func.func @transform_7(%arg0: i32) -> (i32, i32) {
    %c0_i32 = arith.constant 0 : i32
    %c0_i32_0 = arith.constant 0 : i32
    return %arg0, %c0_i32 : i32, i32
  }
  func.func @transform_8(%arg0: i32) -> (i32, i32) {
    %c0_i32 = arith.constant 0 : i32
    %c0_i32_0 = arith.constant 0 : i32
    return %arg0, %c0_i32 : i32, i32
  }
}

</mosaic_0001>

<llo_original>
// kernel: base_capnet_forward.1
$region0: #{base_capnet_forward.1}
  #allocation0 [shape = 'u32[]', space=smem, size = 0x4, offset = 0x4, fixed_abs, tag = 'smem constant byte address 0x4 - core index']
  #allocation1 [shape = 'u32[144,128]{1,0:T(1,128)}', space=vmem, size = 0x12000, scoped, tag = 'internal scratch']
  %s0 = inlined_call_operand.vmem [shape: bf16[16,16,16], index: 0, kind: input, shape index: {}]
  %s1 = inlined_call_operand.vmem [shape: f32[16,16], index: 1, kind: input, shape index: {}]
  %s2 = inlined_call_operand.vmem [shape: f32[16,64], index: 2, kind: input, shape index: {}, may-alias: {2,7}]
  %s3 = inlined_call_operand.vmem [shape: f32[16,4], index: 3, kind: input, shape index: {}]
  %s4 = inlined_call_operand.vmem [shape: f32[16,16], index: 4, kind: input, shape index: {}]
  %s5 = inlined_call_operand.vmem [shape: bf16[32,16], index: 5, kind: input, shape index: {}]
  %s6 = inlined_call_operand.vmem [shape: f32[1,16], index: 6, kind: input, shape index: {}]
  %s7 = inlined_call_operand.vmem [shape: f32[16,64], index: 7, kind: output, shape index: {0}, may-alias: {2,7}]
  %s8 = inlined_call_operand.vmem [shape: f32[16,16], index: 8, kind: output, shape index: {1}]
  %9 = xla_tuple %s7, %s8
  %s10 = sld [smem:[#allocation0]]
  $region46: #{base_capnet_forward.1} parent=0
    _
  %s12 = ssub.s32 1, %s10
  %s13 = scalar_select 0, %s12, %s10
  // Predicated region
  $region2: #{base_capnet_forward.1} parent=0 // pred_check
    _
  $region3: #{base_capnet_forward.1} parent=0 // pred_check_branch
    %15 = sbr.rel (0) target = $region5
  $region4: #{base_capnet_forward.1} parent=0 // pred_region
    _
  $region5: #{base_capnet_forward.1} parent=0 // pred_fallthru
    _
  // Predicated region
  $region6: #{base_capnet_forward.1} parent=0 // pred_check
    _
  $region7: #{base_capnet_forward.1} parent=0 // pred_check_branch
    %17 = sbr.rel (0) target = $region9
  $region8: #{base_capnet_forward.1} parent=0 // pred_region
    _
  $region9: #{base_capnet_forward.1} parent=0 // pred_fallthru
    _
  // Predicated region
  $region10: #{base_capnet_forward.1} parent=0 // pred_check
    _
  $region11: #{base_capnet_forward.1} parent=0 // pred_check_branch
    %19 = sbr.rel (0) target = $region13
  $region12: #{base_capnet_forward.1} parent=0 // pred_region
    _
  $region13: #{base_capnet_forward.1} parent=0 // pred_fallthru
    _
  // Predicated region
  $region14: #{base_capnet_forward.1} parent=0 // pred_check
    _
  $region15: #{base_capnet_forward.1} parent=0 // pred_check_branch
    %21 = sbr.rel (0) target = $region17
  $region16: #{base_capnet_forward.1} parent=0 // pred_region
    _
  $region17: #{base_capnet_forward.1} parent=0 // pred_fallthru
    _
  // Predicated region
  $region18: #{base_capnet_forward.1} parent=0 // pred_check
    _
  $region19: #{base_capnet_forward.1} parent=0 // pred_check_branch
    %23 = sbr.rel (0) target = $region21
  $region20: #{base_capnet_forward.1} parent=0 // pred_region
    _
  $region21: #{base_capnet_forward.1} parent=0 // pred_fallthru
    _
  // Predicated region
  $region22: #{base_capnet_forward.1} parent=0 // pred_check
    _
  $region23: #{base_capnet_forward.1} parent=0 // pred_check_branch
    %25 = sbr.rel (0) target = $region25
  $region24: #{base_capnet_forward.1} parent=0 // pred_region
    _
  $region25: #{base_capnet_forward.1} parent=0 // pred_fallthru
    _
  // Predicated region
  $region26: #{base_capnet_forward.1} parent=0 // pred_check
    _
  $region27: #{base_capnet_forward.1} parent=0 // pred_check_branch
    %27 = sbr.rel (0) target = $region29
  $region28: #{base_capnet_forward.1} parent=0 // pred_region
    _
  $region29: #{base_capnet_forward.1} parent=0 // pred_fallthru
    _
  %v29 = vld [vmem:[%s0] sm:$0xf]
  %v30 = vld [vmem:[%s0 + $0x4] sm:$0xf]
  %v31 = vld [vmem:[%s0 + $0x8] sm:$0xf]
  %v32 = vld [vmem:[%s0 + $0xc] sm:$0xf]
  %v33 = vld [vmem:[%s0 + $0x10] sm:$0xf]
  %v34 = vld [vmem:[%s0 + $0x14] sm:$0xf]
  %v35 = vld [vmem:[%s0 + $0x18] sm:$0xf]
  %v36 = vld [vmem:[%s0 + $0x1c] sm:$0xf]
  %v37 = vld [vmem:[%s0 + $0x20] sm:$0xf]
  %v38 = vld [vmem:[%s0 + $0x24] sm:$0xf]
  %v39 = vld [vmem:[%s0 + $0x28] sm:$0xf]
  %v40 = vld [vmem:[%s0 + $0x2c] sm:$0xf]
  %v41 = vld [vmem:[%s0 + $0x30] sm:$0xf]
  %v42 = vld [vmem:[%s0 + $0x34] sm:$0xf]
  %v43 = vld [vmem:[%s0 + $0x38] sm:$0xf]
  %v44 = vld [vmem:[%s0 + $0x3c] sm:$0xf]
  %v45 = vld [vmem:[%s0 + $0x40] sm:$0xf]
  %v46 = vld [vmem:[%s0 + $0x44] sm:$0xf]
  %v47 = vld [vmem:[%s0 + $0x48] sm:$0xf]
  %v48 = vld [vmem:[%s0 + $0x4c] sm:$0xf]
  %v49 = vld [vmem:[%s0 + $0x50] sm:$0xf]
  %v50 = vld [vmem:[%s0 + $0x54] sm:$0xf]
  %v51 = vld [vmem:[%s0 + $0x58] sm:$0xf]
  %v52 = vld [vmem:[%s0 + $0x5c] sm:$0xf]
  %v53 = vld [vmem:[%s0 + $0x60] sm:$0xf]
  %v54 = vld [vmem:[%s0 + $0x64] sm:$0xf]
  %v55 = vld [vmem:[%s0 + $0x68] sm:$0xf]
  %v56 = vld [vmem:[%s0 + $0x6c] sm:$0xf]
  %v57 = vld [vmem:[%s0 + $0x70] sm:$0xf]
  %v58 = vld [vmem:[%s0 + $0x74] sm:$0xf]
  %v59 = vld [vmem:[%s0 + $0x78] sm:$0xf]
  %v60 = vld [vmem:[%s0 + $0x7c] sm:$0xf]
  %v61 = vld [vmem:[%s1] sm:$0xff]
  %v62 = vld [vmem:[%s1 + $0x8] sm:$0xff]
  %v63 = vld [vmem:[%s2] sm:$0xff]
  %v64 = vld [vmem:[%s2 + $0x8] sm:$0xff]
  %67 = vrot.lane.b32.xlu0 %v63, 112
  %v68 = vpop.permute.xlu0 %67
  %69 = vrot.lane.b32.xlu0 %v64, 112
  %v70 = vpop.permute.xlu0 %69
  %73 = vrot.lane.b32.xlu0 %v63, 96
  %v74 = vpop.permute.xlu0 %73
  %75 = vrot.lane.b32.xlu0 %v64, 96
  %v76 = vpop.permute.xlu0 %75
  %79 = vrot.lane.b32.xlu0 %v63, 80
  %v80 = vpop.permute.xlu0 %79
  %81 = vrot.lane.b32.xlu0 %v64, 80
  %v82 = vpop.permute.xlu0 %81
  %v85 = vcombine.low %v63, %v74
  %v86 = vcombine.high %v63, %v74
  %v88 = vunpack.c.l.s4 1983009808
  %v89 = vunpack.c.0.s8 %v88
  %v90 = vlaneseq
  %v91 = vshrl.u32 %v90, 7
  %v92 = vsub.s32 %v89, %v91
  %v93 = vrot.slane %v85, %v92
  %v95 = vunpack.c.l.s4 1983009808
  %v96 = vunpack.c.0.s8 %v95
  %v97 = vlaneseq
  %v98 = vshrl.u32 %v97, 7
  %v99 = vsub.s32 %v96, %v98
  %v100 = vrot.slane %v86, %v99
  %v101 = vcombine.low %v68, %v80
  %v102 = vcombine.high %v68, %v80
  %v104 = vunpack.c.l.s4 1983009808
  %v105 = vunpack.c.0.s8 %v104
  %v106 = vlaneseq
  %v107 = vshrl.u32 %v106, 7
  %v108 = vsub.s32 %v105, %v107
  %v109 = vrot.slane %v101, %v108
  %v111 = vunpack.c.l.s4 1983009808
  %v112 = vunpack.c.0.s8 %v111
  %v113 = vlaneseq
  %v114 = vshrl.u32 %v113, 7
  %v115 = vsub.s32 %v112, %v114
  %v116 = vrot.slane %v102, %v115
  %v117 = vcombine.low %v93, %v109
  %v118 = vcombine.high %v93, %v109
  %v120 = vunpack.c.l.s4 1934713408
  %v121 = vunpack.c.0.s8 %v120
  %v122 = vlaneseq
  %v123 = vshrl.u32 %v122, 7
  %v124 = vsub.s32 %v121, %v123
  %v125 = vrot.slane %v117, %v124
  %v127 = vunpack.c.l.s4 1934713408
  %v128 = vunpack.c.0.s8 %v127
  %v129 = vlaneseq
  %v130 = vshrl.u32 %v129, 7
  %v131 = vsub.s32 %v128, %v130
  %v132 = vrot.slane %v118, %v131
  %v133 = vcombine.low %v100, %v116
  %v134 = vcombine.high %v100, %v116
  %v136 = vunpack.c.l.s4 1934713408
  %v137 = vunpack.c.0.s8 %v136
  %v138 = vlaneseq
  %v139 = vshrl.u32 %v138, 7
  %v140 = vsub.s32 %v137, %v139
  %v141 = vrot.slane %v133, %v140
  %v143 = vunpack.c.l.s4 1934713408
  %v144 = vunpack.c.0.s8 %v143
  %v145 = vlaneseq
  %v146 = vshrl.u32 %v145, 7
  %v147 = vsub.s32 %v144, %v146
  %v148 = vrot.slane %v134, %v147
  %v149 = vcombine.high %v125, 0.0
  %v150 = vcombine.high %v132, 0.0
  %v151 = vcombine.high %v141, 0.0
  %v152 = vcombine.high %v148, 0.0
  %v153 = vcombine.low %v64, %v76
  %v154 = vcombine.high %v64, %v76
  %v156 = vunpack.c.l.s4 1983009808
  %v157 = vunpack.c.0.s8 %v156
  %v158 = vlaneseq
  %v159 = vshrl.u32 %v158, 7
  %v160 = vsub.s32 %v157, %v159
  %v161 = vrot.slane %v153, %v160
  %v163 = vunpack.c.l.s4 1983009808
  %v164 = vunpack.c.0.s8 %v163
  %v165 = vlaneseq
  %v166 = vshrl.u32 %v165, 7
  %v167 = vsub.s32 %v164, %v166
  %v168 = vrot.slane %v154, %v167
  %v169 = vcombine.low %v70, %v82
  %v170 = vcombine.high %v70, %v82
  %v172 = vunpack.c.l.s4 1983009808
  %v173 = vunpack.c.0.s8 %v172
  %v174 = vlaneseq
  %v175 = vshrl.u32 %v174, 7
  %v176 = vsub.s32 %v173, %v175
  %v177 = vrot.slane %v169, %v176
  %v179 = vunpack.c.l.s4 1983009808
  %v180 = vunpack.c.0.s8 %v179
  %v181 = vlaneseq
  %v182 = vshrl.u32 %v181, 7
  %v183 = vsub.s32 %v180, %v182
  %v184 = vrot.slane %v170, %v183
  %v185 = vcombine.low %v161, %v177
  %v186 = vcombine.high %v161, %v177
  %v188 = vunpack.c.l.s4 1934713408
  %v189 = vunpack.c.0.s8 %v188
  %v190 = vlaneseq
  %v191 = vshrl.u32 %v190, 7
  %v192 = vsub.s32 %v189, %v191
  %v193 = vrot.slane %v185, %v192
  %v195 = vunpack.c.l.s4 1934713408
  %v196 = vunpack.c.0.s8 %v195
  %v197 = vlaneseq
  %v198 = vshrl.u32 %v197, 7
  %v199 = vsub.s32 %v196, %v198
  %v200 = vrot.slane %v186, %v199
  %v201 = vcombine.low %v168, %v184
  %v202 = vcombine.high %v168, %v184
  %v204 = vunpack.c.l.s4 1934713408
  %v205 = vunpack.c.0.s8 %v204
  %v206 = vlaneseq
  %v207 = vshrl.u32 %v206, 7
  %v208 = vsub.s32 %v205, %v207
  %v209 = vrot.slane %v201, %v208
  %v211 = vunpack.c.l.s4 1934713408
  %v212 = vunpack.c.0.s8 %v211
  %v213 = vlaneseq
  %v214 = vshrl.u32 %v213, 7
  %v215 = vsub.s32 %v212, %v214
  %v216 = vrot.slane %v202, %v215
  %v217 = vcombine.high %v193, 0.0
  %v218 = vcombine.high %v200, 0.0
  %v219 = vcombine.high %v209, 0.0
  %v220 = vcombine.high %v216, 0.0
  %v221 = vld [vmem:[%s3] sm:$0xff]
  %v222 = vld [vmem:[%s3 + $0x8] sm:$0xff]
  %v223 = vld [vmem:[%s4] sm:$0xff]
  %v224 = vld [vmem:[%s4 + $0x8] sm:$0xff]
  %v225 = vld [vmem:[%s5] sm:$0xf]
  %v226 = vld [vmem:[%s5 + $0x4] sm:$0xf]
  %v227 = vld [vmem:[%s5 + $0x8] sm:$0xf]
  %v228 = vld [vmem:[%s5 + $0xc] sm:$0xf]
  %v229 = vld [vmem:[%s6] sm:$0x1]
  %v262 = vunpack.c.l.b16 %v29
  %v263 = vunpack.c.l.b16 %v30
  %v264 = vunpack.c.l.b16 %v31
  %v265 = vunpack.c.l.b16 %v32
  %v266 = vunpack.c.l.b16 %v33
  %v267 = vunpack.c.l.b16 %v34
  %v268 = vunpack.c.l.b16 %v35
  %v269 = vunpack.c.l.b16 %v36
  %v270 = vunpack.c.l.b16 %v37
  %v271 = vunpack.c.l.b16 %v38
  %v272 = vunpack.c.l.b16 %v39
  %v273 = vunpack.c.l.b16 %v40
  %v274 = vunpack.c.l.b16 %v41
  %v275 = vunpack.c.l.b16 %v42
  %v276 = vunpack.c.l.b16 %v43
  %v277 = vunpack.c.l.b16 %v44
  %v278 = vunpack.c.l.b16 %v45
  %v279 = vunpack.c.l.b16 %v46
  %v280 = vunpack.c.l.b16 %v47
  %v281 = vunpack.c.l.b16 %v48
  %v282 = vunpack.c.l.b16 %v49
  %v283 = vunpack.c.l.b16 %v50
  %v284 = vunpack.c.l.b16 %v51
  %v285 = vunpack.c.l.b16 %v52
  %v286 = vunpack.c.l.b16 %v53
  %v287 = vunpack.c.l.b16 %v54
  %v288 = vunpack.c.l.b16 %v55
  %v289 = vunpack.c.l.b16 %v56
  %v290 = vunpack.c.l.b16 %v57
  %v291 = vunpack.c.l.b16 %v58
  %v292 = vunpack.c.l.b16 %v59
  %v293 = vunpack.c.l.b16 %v60
  %v294 = vpack.c.b16 %v263, %v262
  %v295 = vpack.c.b16 %v265, %v264
  %v296 = vpack.c.b16 %v267, %v266
  %v297 = vpack.c.b16 %v269, %v268
  %v298 = vpack.c.b16 %v271, %v270
  %v299 = vpack.c.b16 %v273, %v272
  %v300 = vpack.c.b16 %v275, %v274
  %v301 = vpack.c.b16 %v277, %v276
  %v302 = vpack.c.b16 %v279, %v278
  %v303 = vpack.c.b16 %v281, %v280
  %v304 = vpack.c.b16 %v283, %v282
  %v305 = vpack.c.b16 %v285, %v284
  %v306 = vpack.c.b16 %v287, %v286
  %v307 = vpack.c.b16 %v289, %v288
  %v308 = vpack.c.b16 %v291, %v290
  %v309 = vpack.c.b16 %v293, %v292
  %v312 = vunpack.c.l.b16 %v225
  %v313 = vunpack.c.l.b16 %v226
  %v314 = vpack.c.b16 %v313, %v312
  %vm316 = vcmask 130048
  %v318 = vsel %vm316, %v294, 0
  %v321 = vsel %vm316, %v295, 0
  %v324 = vsel %vm316, %v296, 0
  %v327 = vsel %vm316, %v297, 0
  %v330 = vsel %vm316, %v298, 0
  %v333 = vsel %vm316, %v299, 0
  %v336 = vsel %vm316, %v300, 0
  %v339 = vsel %vm316, %v301, 0
  %v342 = vsel %vm316, %v302, 0
  %v345 = vsel %vm316, %v303, 0
  %v348 = vsel %vm316, %v304, 0
  %v351 = vsel %vm316, %v305, 0
  %v354 = vsel %vm316, %v306, 0
  %v357 = vsel %vm316, %v307, 0
  %v360 = vsel %vm316, %v308, 0
  %v363 = vsel %vm316, %v309, 0
  %365 = vmatprep.subr.bf16.mxu0 0
  %366 = vmatpush1.bf16.msra.mxu0 0
  %367 = vmatprep.subr.bf16.mxu0 0
  %368 = vmatpush1.bf16.msra.mxu0 0
  %369 = vmatprep.subr.bf16.mxu0 0
  %370 = vmatpush1.bf16.msra.mxu0 0
  %371 = vmatprep.subr.bf16.mxu0 0
  %372 = vmatpush1.bf16.msra.mxu0 0
  %373 = vmatprep.subr.bf16.mxu0 0
  %374 = vmatpush1.bf16.msra.mxu0 0
  %375 = vmatprep.subr.bf16.mxu0 0
  %376 = vmatpush1.bf16.msra.mxu0 0
  %377 = vmatprep.subr.bf16.mxu0 0
  %378 = vmatpush1.bf16.msra.mxu0 0
  %379 = vmatprep.subr.bf16.mxu0 0
  %380 = vmatpush1.bf16.msra.mxu0 %v314
  %381 = vmatprep.subr.bf16.mxu0 0
  %382 = vmatpush2.bf16.msra.mxu0 0
  %383 = vmatprep.subr.bf16.mxu0 0
  %384 = vmatpush2.bf16.msra.mxu0 0
  %385 = vmatprep.subr.bf16.mxu0 0
  %386 = vmatpush2.bf16.msra.mxu0 0
  %387 = vmatprep.subr.bf16.mxu0 0
  %388 = vmatpush2.bf16.msra.mxu0 0
  %389 = vmatprep.subr.bf16.mxu0 0
  %390 = vmatpush2.bf16.msra.mxu0 0
  %391 = vmatprep.subr.bf16.mxu0 0
  %392 = vmatpush2.bf16.msra.mxu0 0
  %393 = vmatprep.subr.bf16.mxu0 0
  %394 = vmatpush2.bf16.msra.mxu0 0
  %395 = vmatprep.subr.bf16.mxu0 0
  %396 = vmatpush2.bf16.msra.mxu0 0
  %397 = vmatprep.mubr.bf16.mxu0 0
  %398 = vmatmul.mubr.bf16.gmra.mxu0 %v318
  %v399 = vpop.f32.mrf.mxu0
  %v400 = vadd.f32 0.0, %v399
  %v401 = vpop.f32.mrf.mxu0
  %v402 = vpop.f32.mrf.mxu0
  %v403 = vadd.f32 0.0, %v402
  %v404 = vpop.f32.mrf.mxu0
  %405 = vmatprep.mubr.bf16.mxu0 0
  %406 = vmatmul.mubr.bf16.gmra.mxu0 %v321
  %v407 = vpop.f32.mrf.mxu0
  %v408 = vadd.f32 0.0, %v407
  %v409 = vpop.f32.mrf.mxu0
  %v410 = vpop.f32.mrf.mxu0
  %v411 = vadd.f32 0.0, %v410
  %v412 = vpop.f32.mrf.mxu0
  %413 = vmatprep.mubr.bf16.mxu0 0
  %414 = vmatmul.mubr.bf16.gmra.mxu0 %v324
  %v415 = vpop.f32.mrf.mxu0
  %v416 = vadd.f32 0.0, %v415
  %v417 = vpop.f32.mrf.mxu0
  %v418 = vpop.f32.mrf.mxu0
  %v419 = vadd.f32 0.0, %v418
  %v420 = vpop.f32.mrf.mxu0
  %421 = vmatprep.mubr.bf16.mxu0 0
  %422 = vmatmul.mubr.bf16.gmra.mxu0 %v327
  %v423 = vpop.f32.mrf.mxu0
  %v424 = vadd.f32 0.0, %v423
  %v425 = vpop.f32.mrf.mxu0
  %v426 = vpop.f32.mrf.mxu0
  %v427 = vadd.f32 0.0, %v426
  %v428 = vpop.f32.mrf.mxu0
  %429 = vmatprep.mubr.bf16.mxu0 0
  %430 = vmatmul.mubr.bf16.gmra.mxu0 %v330
  %v431 = vpop.f32.mrf.mxu0
  %v432 = vadd.f32 0.0, %v431
  %v433 = vpop.f32.mrf.mxu0
  %v434 = vpop.f32.mrf.mxu0
  %v435 = vadd.f32 0.0, %v434
  %v436 = vpop.f32.mrf.mxu0
  %437 = vmatprep.mubr.bf16.mxu0 0
  %438 = vmatmul.mubr.bf16.gmra.mxu0 %v333
  %v439 = vpop.f32.mrf.mxu0
  %v440 = vadd.f32 0.0, %v439
  %v441 = vpop.f32.mrf.mxu0
  %v442 = vpop.f32.mrf.mxu0
  %v443 = vadd.f32 0.0, %v442
  %v444 = vpop.f32.mrf.mxu0
  %445 = vmatprep.mubr.bf16.mxu0 0
  %446 = vmatmul.mubr.bf16.gmra.mxu0 %v336
  %v447 = vpop.f32.mrf.mxu0
  %v448 = vadd.f32 0.0, %v447
  %v449 = vpop.f32.mrf.mxu0
  %v450 = vpop.f32.mrf.mxu0
  %v451 = vadd.f32 0.0, %v450
  %v452 = vpop.f32.mrf.mxu0
  %453 = vmatprep.mubr.bf16.mxu0 0
  %454 = vmatmul.mubr.bf16.gmra.mxu0 %v339
  %v455 = vpop.f32.mrf.mxu0
  %v456 = vadd.f32 0.0, %v455
  %v457 = vpop.f32.mrf.mxu0
  %v458 = vpop.f32.mrf.mxu0
  %v459 = vadd.f32 0.0, %v458
  %v460 = vpop.f32.mrf.mxu0
  %461 = vmatprep.mubr.bf16.mxu0 0
  %462 = vmatmul.mubr.bf16.gmra.mxu0 %v342
  %v463 = vpop.f32.mrf.mxu0
  %v464 = vadd.f32 0.0, %v463
  %v465 = vpop.f32.mrf.mxu0
  %v466 = vpop.f32.mrf.mxu0
  %v467 = vadd.f32 0.0, %v466
  %v468 = vpop.f32.mrf.mxu0
  %469 = vmatprep.mubr.bf16.mxu0 0
  %470 = vmatmul.mubr.bf16.gmra.mxu0 %v345
  %v471 = vpop.f32.mrf.mxu0
  %v472 = vadd.f32 0.0, %v471
  %v473 = vpop.f32.mrf.mxu0
  %v474 = vpop.f32.mrf.mxu0
  %v475 = vadd.f32 0.0, %v474
  %v476 = vpop.f32.mrf.mxu0
  %477 = vmatprep.mubr.bf16.mxu0 0
  %478 = vmatmul.mubr.bf16.gmra.mxu0 %v348
  %v479 = vpop.f32.mrf.mxu0
  %v480 = vadd.f32 0.0, %v479
  %v481 = vpop.f32.mrf.mxu0
  %v482 = vpop.f32.mrf.mxu0
  %v483 = vadd.f32 0.0, %v482
  %v484 = vpop.f32.mrf.mxu0
  %485 = vmatprep.mubr.bf16.mxu0 0
  %486 = vmatmul.mubr.bf16.gmra.mxu0 %v351
  %v487 = vpop.f32.mrf.mxu0
  %v488 = vadd.f32 0.0, %v487
  %v489 = vpop.f32.mrf.mxu0
  %v490 = vpop.f32.mrf.mxu0
  %v491 = vadd.f32 0.0, %v490
  %v492 = vpop.f32.mrf.mxu0
  %493 = vmatprep.mubr.bf16.mxu0 0
  %494 = vmatmul.mubr.bf16.gmra.mxu0 %v354
  %v495 = vpop.f32.mrf.mxu0
  %v496 = vadd.f32 0.0, %v495
  %v497 = vpop.f32.mrf.mxu0
  %v498 = vpop.f32.mrf.mxu0
  %v499 = vadd.f32 0.0, %v498
  %v500 = vpop.f32.mrf.mxu0
  %501 = vmatprep.mubr.bf16.mxu0 0
  %502 = vmatmul.mubr.bf16.gmra.mxu0 %v357
  %v503 = vpop.f32.mrf.mxu0
  %v504 = vadd.f32 0.0, %v503
  %v505 = vpop.f32.mrf.mxu0
  %v506 = vpop.f32.mrf.mxu0
  %v507 = vadd.f32 0.0, %v506
  %v508 = vpop.f32.mrf.mxu0
  %509 = vmatprep.mubr.bf16.mxu0 0
  %510 = vmatmul.mubr.bf16.gmra.mxu0 %v360
  %v511 = vpop.f32.mrf.mxu0
  %v512 = vadd.f32 0.0, %v511
  %v513 = vpop.f32.mrf.mxu0
  %v514 = vpop.f32.mrf.mxu0
  %v515 = vadd.f32 0.0, %v514
  %v516 = vpop.f32.mrf.mxu0
  %517 = vmatprep.mubr.bf16.mxu0 0
  %518 = vmatmul.mubr.bf16.gmra.mxu0 %v363
  %v519 = vpop.f32.mrf.mxu0
  %v520 = vadd.f32 0.0, %v519
  %v521 = vpop.f32.mrf.mxu0
  %v522 = vpop.f32.mrf.mxu0
  %v523 = vadd.f32 0.0, %v522
  %v524 = vpop.f32.mrf.mxu0
  %525 = vdwg.mxu0
  %v526 = vpack.c.bf16 %v62, %v61
  %v529 = vunpack.c.l.b16 %v227
  %v530 = vunpack.c.l.b16 %v228
  %v531 = vpack.c.b16 %v530, %v529
  %v534 = vsel %vm316, %v526, 0
  %536 = vmatprep.subr.bf16.mxu0 0
  %537 = vmatpush1.bf16.msra.mxu0 0
  %538 = vmatprep.subr.bf16.mxu0 0
  %539 = vmatpush1.bf16.msra.mxu0 0
  %540 = vmatprep.subr.bf16.mxu0 0
  %541 = vmatpush1.bf16.msra.mxu0 0
  %542 = vmatprep.subr.bf16.mxu0 0
  %543 = vmatpush1.bf16.msra.mxu0 0
  %544 = vmatprep.subr.bf16.mxu0 0
  %545 = vmatpush1.bf16.msra.mxu0 0
  %546 = vmatprep.subr.bf16.mxu0 0
  %547 = vmatpush1.bf16.msra.mxu0 0
  %548 = vmatprep.subr.bf16.mxu0 0
  %549 = vmatpush1.bf16.msra.mxu0 0
  %550 = vmatprep.subr.bf16.mxu0 0
  %551 = vmatpush1.bf16.msra.mxu0 %v531
  %552 = vmatprep.subr.bf16.mxu0 0
  %553 = vmatpush2.bf16.msra.mxu0 0
  %554 = vmatprep.subr.bf16.mxu0 0
  %555 = vmatpush2.bf16.msra.mxu0 0
  %556 = vmatprep.subr.bf16.mxu0 0
  %557 = vmatpush2.bf16.msra.mxu0 0
  %558 = vmatprep.subr.bf16.mxu0 0
  %559 = vmatpush2.bf16.msra.mxu0 0
  %560 = vmatprep.subr.bf16.mxu0 0
  %561 = vmatpush2.bf16.msra.mxu0 0
  %562 = vmatprep.subr.bf16.mxu0 0
  %563 = vmatpush2.bf16.msra.mxu0 0
  %564 = vmatprep.subr.bf16.mxu0 0
  %565 = vmatpush2.bf16.msra.mxu0 0
  %566 = vmatprep.subr.bf16.mxu0 0
  %567 = vmatpush2.bf16.msra.mxu0 0
  %568 = vmatprep.mubr.bf16.mxu0 0
  %569 = vmatmul.mubr.bf16.gmra.mxu0 %v534
  %v570 = vpop.f32.mrf.mxu0
  %v571 = vadd.f32 0.0, %v570
  %v572 = vpop.f32.mrf.mxu0
  %v573 = vpop.f32.mrf.mxu0
  %v574 = vadd.f32 0.0, %v573
  %v575 = vpop.f32.mrf.mxu0
  %576 = vdwg.mxu0
  %v579 = vcombine.high %v571, %v571
  %v581 = vunpack.c.l.s4 1966171168
  %v582 = vunpack.c.0.s8 %v581
  %v583 = vlaneseq
  %v584 = vshrl.u32 %v583, 7
  %v585 = vsub.s32 %v582, %v584
  %v586 = vrot.slane %v571, %v585
  %v588 = vunpack.c.l.s4 1966171168
  %v589 = vunpack.c.0.s8 %v588
  %v590 = vlaneseq
  %v591 = vshrl.u32 %v590, 7
  %v592 = vsub.s32 %v589, %v591
  %v593 = vrot.slane %v579, %v592
  %v594 = vcombine.high %v586, %v586
  %v595 = vcombine.high %v593, %v593
  %v597 = vunpack.c.l.s4 1966171168
  %v598 = vunpack.c.0.s8 %v597
  %v599 = vlaneseq
  %v600 = vshrl.u32 %v599, 7
  %v601 = vsub.s32 %v598, %v600
  %v602 = vrot.slane %v586, %v601
  %v604 = vunpack.c.l.s4 1966171168
  %v605 = vunpack.c.0.s8 %v604
  %v606 = vlaneseq
  %v607 = vshrl.u32 %v606, 7
  %v608 = vsub.s32 %v605, %v607
  %v609 = vrot.slane %v593, %v608
  %v611 = vunpack.c.l.s4 1966171168
  %v612 = vunpack.c.0.s8 %v611
  %v613 = vlaneseq
  %v614 = vshrl.u32 %v613, 7
  %v615 = vsub.s32 %v612, %v614
  %v616 = vrot.slane %v594, %v615
  %v618 = vunpack.c.l.s4 1966171168
  %v619 = vunpack.c.0.s8 %v618
  %v620 = vlaneseq
  %v621 = vshrl.u32 %v620, 7
  %v622 = vsub.s32 %v619, %v621
  %v623 = vrot.slane %v595, %v622
  %v624 = vcombine.high %v602, %v602
  %v625 = vcombine.high %v609, %v609
  %v626 = vcombine.high %v616, %v616
  %v627 = vcombine.high %v623, %v623
  %v628 = vcombine.high %v574, %v574
  %v630 = vunpack.c.l.s4 1966171168
  %v631 = vunpack.c.0.s8 %v630
  %v632 = vlaneseq
  %v633 = vshrl.u32 %v632, 7
  %v634 = vsub.s32 %v631, %v633
  %v635 = vrot.slane %v574, %v634
  %v637 = vunpack.c.l.s4 1966171168
  %v638 = vunpack.c.0.s8 %v637
  %v639 = vlaneseq
  %v640 = vshrl.u32 %v639, 7
  %v641 = vsub.s32 %v638, %v640
  %v642 = vrot.slane %v628, %v641
  %v643 = vcombine.high %v635, %v635
  %v644 = vcombine.high %v642, %v642
  %v646 = vunpack.c.l.s4 1966171168
  %v647 = vunpack.c.0.s8 %v646
  %v648 = vlaneseq
  %v649 = vshrl.u32 %v648, 7
  %v650 = vsub.s32 %v647, %v649
  %v651 = vrot.slane %v635, %v650
  %v653 = vunpack.c.l.s4 1966171168
  %v654 = vunpack.c.0.s8 %v653
  %v655 = vlaneseq
  %v656 = vshrl.u32 %v655, 7
  %v657 = vsub.s32 %v654, %v656
  %v658 = vrot.slane %v642, %v657
  %v660 = vunpack.c.l.s4 1966171168
  %v661 = vunpack.c.0.s8 %v660
  %v662 = vlaneseq
  %v663 = vshrl.u32 %v662, 7
  %v664 = vsub.s32 %v661, %v663
  %v665 = vrot.slane %v643, %v664
  %v667 = vunpack.c.l.s4 1966171168
  %v668 = vunpack.c.0.s8 %v667
  %v669 = vlaneseq
  %v670 = vshrl.u32 %v669, 7
  %v671 = vsub.s32 %v668, %v670
  %v672 = vrot.slane %v644, %v671
  %v673 = vcombine.high %v651, %v651
  %v674 = vcombine.high %v658, %v658
  %v675 = vcombine.high %v665, %v665
  %v676 = vcombine.high %v672, %v672
  %v677 = vlaneseq
  %v678 = vshrl.u32 %v677, 7
  %v679 = vsub.s32 0, %v678
  %v680 = vrot.slane %v602, %v679
  %v681 = vlaneseq
  %v682 = vshrl.u32 %v681, 7
  %v683 = vsub.s32 0, %v682
  %v684 = vrot.slane %v616, %v683
  %v685 = vlaneseq
  %v686 = vshrl.u32 %v685, 7
  %v687 = vsub.s32 0, %v686
  %v688 = vrot.slane %v624, %v687
  %v689 = vlaneseq
  %v690 = vshrl.u32 %v689, 7
  %v691 = vsub.s32 0, %v690
  %v692 = vrot.slane %v626, %v691
  %v693 = vlaneseq
  %v694 = vshrl.u32 %v693, 7
  %v695 = vsub.s32 0, %v694
  %v696 = vrot.slane %v609, %v695
  %v697 = vlaneseq
  %v698 = vshrl.u32 %v697, 7
  %v699 = vsub.s32 0, %v698
  %v700 = vrot.slane %v623, %v699
  %v701 = vlaneseq
  %v702 = vshrl.u32 %v701, 7
  %v703 = vsub.s32 0, %v702
  %v704 = vrot.slane %v625, %v703
  %v705 = vlaneseq
  %v706 = vshrl.u32 %v705, 7
  %v707 = vsub.s32 0, %v706
  %v708 = vrot.slane %v627, %v707
  %v709 = vlaneseq
  %v710 = vshrl.u32 %v709, 7
  %v711 = vsub.s32 0, %v710
  %v712 = vrot.slane %v651, %v711
  %v713 = vlaneseq
  %v714 = vshrl.u32 %v713, 7
  %v715 = vsub.s32 0, %v714
  %v716 = vrot.slane %v665, %v715
  %v717 = vlaneseq
  %v718 = vshrl.u32 %v717, 7
  %v719 = vsub.s32 0, %v718
  %v720 = vrot.slane %v673, %v719
  %v721 = vlaneseq
  %v722 = vshrl.u32 %v721, 7
  %v723 = vsub.s32 0, %v722
  %v724 = vrot.slane %v675, %v723
  %v725 = vlaneseq
  %v726 = vshrl.u32 %v725, 7
  %v727 = vsub.s32 0, %v726
  %v728 = vrot.slane %v658, %v727
  %v729 = vlaneseq
  %v730 = vshrl.u32 %v729, 7
  %v731 = vsub.s32 0, %v730
  %v732 = vrot.slane %v672, %v731
  %v733 = vlaneseq
  %v734 = vshrl.u32 %v733, 7
  %v735 = vsub.s32 0, %v734
  %v736 = vrot.slane %v674, %v735
  %v737 = vlaneseq
  %v738 = vshrl.u32 %v737, 7
  %v739 = vsub.s32 0, %v738
  %v740 = vrot.slane %v676, %v739
  %v757 = vadd.f32 %v400, %v680
  %v758 = vadd.f32 %v403, %v680
  %v759 = vadd.f32 %v408, %v684
  %v760 = vadd.f32 %v411, %v684
  %v761 = vadd.f32 %v416, %v688
  %v762 = vadd.f32 %v419, %v688
  %v763 = vadd.f32 %v424, %v692
  %v764 = vadd.f32 %v427, %v692
  %v765 = vadd.f32 %v432, %v696
  %v766 = vadd.f32 %v435, %v696
  %v767 = vadd.f32 %v440, %v700
  %v768 = vadd.f32 %v443, %v700
  %v769 = vadd.f32 %v448, %v704
  %v770 = vadd.f32 %v451, %v704
  %v771 = vadd.f32 %v456, %v708
  %v772 = vadd.f32 %v459, %v708
  %v773 = vadd.f32 %v464, %v712
  %v774 = vadd.f32 %v467, %v712
  %v775 = vadd.f32 %v472, %v716
  %v776 = vadd.f32 %v475, %v716
  %v777 = vadd.f32 %v480, %v720
  %v778 = vadd.f32 %v483, %v720
  %v779 = vadd.f32 %v488, %v724
  %v780 = vadd.f32 %v491, %v724
  %v781 = vadd.f32 %v496, %v728
  %v782 = vadd.f32 %v499, %v728
  %v783 = vadd.f32 %v504, %v732
  %v784 = vadd.f32 %v507, %v732
  %v785 = vadd.f32 %v512, %v736
  %v786 = vadd.f32 %v515, %v736
  %v787 = vadd.f32 %v520, %v740
  %v788 = vadd.f32 %v523, %v740
  %v790 = vlaneseq
  %v791 = vshrl.u32 %v790, 7
  %v792 = vsub.s32 0, %v791
  %v793 = vrot.slane %v229, %v792
  %v795 = vadd.f32 %v757, %v793
  %v796 = vadd.f32 %v758, %v793
  %v797 = vadd.f32 %v759, %v793
  %v798 = vadd.f32 %v760, %v793
  %v799 = vadd.f32 %v761, %v793
  %v800 = vadd.f32 %v762, %v793
  %v801 = vadd.f32 %v763, %v793
  %v802 = vadd.f32 %v764, %v793
  %v803 = vadd.f32 %v765, %v793
  %v804 = vadd.f32 %v766, %v793
  %v805 = vadd.f32 %v767, %v793
  %v806 = vadd.f32 %v768, %v793
  %v807 = vadd.f32 %v769, %v793
  %v808 = vadd.f32 %v770, %v793
  %v809 = vadd.f32 %v771, %v793
  %v810 = vadd.f32 %v772, %v793
  %v811 = vadd.f32 %v773, %v793
  %v812 = vadd.f32 %v774, %v793
  %v813 = vadd.f32 %v775, %v793
  %v814 = vadd.f32 %v776, %v793
  %v815 = vadd.f32 %v777, %v793
  %v816 = vadd.f32 %v778, %v793
  %v817 = vadd.f32 %v779, %v793
  %v818 = vadd.f32 %v780, %v793
  %v819 = vadd.f32 %v781, %v793
  %v820 = vadd.f32 %v782, %v793
  %v821 = vadd.f32 %v783, %v793
  %v822 = vadd.f32 %v784, %v793
  %v823 = vadd.f32 %v785, %v793
  %v824 = vadd.f32 %v786, %v793
  %v825 = vadd.f32 %v787, %v793
  %v826 = vadd.f32 %v788, %v793
  %vm827 = vcmp.gt.f32.partialorder %v221, 0.5
  %vm828 = vcmp.gt.f32.partialorder %v222, 0.5
  %v829 = vsel %vm827, 0.0, -inf
  %v830 = vsel %vm828, 0.0, -inf
  %v831 = vlaneseq
  %v832 = vshrl.u32 %v831, 7
  %v833 = vsub.s32 0, %v832
  %v834 = vrot.slane %v829, %v833
  %836 = vbcast.lane.b32.xlu0 %v834, 256
  %v837 = vpop.permute.xlu0 %836
  %v838 = vlaneseq
  %v839 = vshrl.u32 %v838, 7
  %v840 = vsub.s32 1, %v839
  %v841 = vrot.slane %v829, %v840
  %843 = vbcast.lane.b32.xlu0 %v841, 256
  %v844 = vpop.permute.xlu0 %843
  %v845 = vlaneseq
  %v846 = vshrl.u32 %v845, 7
  %v847 = vsub.s32 2, %v846
  %v848 = vrot.slane %v829, %v847
  %850 = vbcast.lane.b32.xlu0 %v848, 256
  %v851 = vpop.permute.xlu0 %850
  %v852 = vlaneseq
  %v853 = vshrl.u32 %v852, 7
  %v854 = vsub.s32 3, %v853
  %v855 = vrot.slane %v829, %v854
  %857 = vbcast.lane.b32.xlu0 %v855, 256
  %v858 = vpop.permute.xlu0 %857
  %v859 = vlaneseq
  %v860 = vshrl.u32 %v859, 7
  %v861 = vsub.s32 4, %v860
  %v862 = vrot.slane %v829, %v861
  %864 = vbcast.lane.b32.xlu0 %v862, 256
  %v865 = vpop.permute.xlu0 %864
  %v866 = vlaneseq
  %v867 = vshrl.u32 %v866, 7
  %v868 = vsub.s32 5, %v867
  %v869 = vrot.slane %v829, %v868
  %871 = vbcast.lane.b32.xlu0 %v869, 256
  %v872 = vpop.permute.xlu0 %871
  %v873 = vlaneseq
  %v874 = vshrl.u32 %v873, 7
  %v875 = vsub.s32 6, %v874
  %v876 = vrot.slane %v829, %v875
  %878 = vbcast.lane.b32.xlu0 %v876, 256
  %v879 = vpop.permute.xlu0 %878
  %v880 = vlaneseq
  %v881 = vshrl.u32 %v880, 7
  %v882 = vsub.s32 7, %v881
  %v883 = vrot.slane %v829, %v882
  %885 = vbcast.lane.b32.xlu0 %v883, 256
  %v886 = vpop.permute.xlu0 %885
  %v887 = vlaneseq
  %v888 = vshrl.u32 %v887, 7
  %v889 = vsub.s32 0, %v888
  %v890 = vrot.slane %v830, %v889
  %892 = vbcast.lane.b32.xlu0 %v890, 256
  %v893 = vpop.permute.xlu0 %892
  %v894 = vlaneseq
  %v895 = vshrl.u32 %v894, 7
  %v896 = vsub.s32 1, %v895
  %v897 = vrot.slane %v830, %v896
  %899 = vbcast.lane.b32.xlu0 %v897, 256
  %v900 = vpop.permute.xlu0 %899
  %v901 = vlaneseq
  %v902 = vshrl.u32 %v901, 7
  %v903 = vsub.s32 2, %v902
  %v904 = vrot.slane %v830, %v903
  %906 = vbcast.lane.b32.xlu0 %v904, 256
  %v907 = vpop.permute.xlu0 %906
  %v908 = vlaneseq
  %v909 = vshrl.u32 %v908, 7
  %v910 = vsub.s32 3, %v909
  %v911 = vrot.slane %v830, %v910
  %913 = vbcast.lane.b32.xlu0 %v911, 256
  %v914 = vpop.permute.xlu0 %913
  %v915 = vlaneseq
  %v916 = vshrl.u32 %v915, 7
  %v917 = vsub.s32 4, %v916
  %v918 = vrot.slane %v830, %v917
  %920 = vbcast.lane.b32.xlu0 %v918, 256
  %v921 = vpop.permute.xlu0 %920
  %v922 = vlaneseq
  %v923 = vshrl.u32 %v922, 7
  %v924 = vsub.s32 5, %v923
  %v925 = vrot.slane %v830, %v924
  %927 = vbcast.lane.b32.xlu0 %v925, 256
  %v928 = vpop.permute.xlu0 %927
  %v929 = vlaneseq
  %v930 = vshrl.u32 %v929, 7
  %v931 = vsub.s32 6, %v930
  %v932 = vrot.slane %v830, %v931
  %934 = vbcast.lane.b32.xlu0 %v932, 256
  %v935 = vpop.permute.xlu0 %934
  %v936 = vlaneseq
  %v937 = vshrl.u32 %v936, 7
  %v938 = vsub.s32 7, %v937
  %v939 = vrot.slane %v830, %v938
  %941 = vbcast.lane.b32.xlu0 %v939, 256
  %v942 = vpop.permute.xlu0 %941
  %v944 = vsel %vm316, %v125, 0
  %v947 = vsel %vm316, %v795, 0
  %v950 = vsel %vm316, %v796, 0
  %952 = vmatprep.subr.mxu0 0.0
  %953 = vmatpush1.xpose.msra.mxu0 0.0
  %954 = vmatprep.subr.mxu0 0.0
  %955 = vmatpush1.xpose.msra.mxu0 0.0
  %956 = vmatprep.subr.mxu0 0.0
  %957 = vmatpush1.xpose.msra.mxu0 0.0
  %958 = vmatprep.subr.mxu0 0.0
  %959 = vmatpush1.xpose.msra.mxu0 0.0
  %960 = vmatprep.subr.mxu0 0.0
  %961 = vmatpush1.xpose.msra.mxu0 0.0
  %962 = vmatprep.subr.mxu0 0.0
  %963 = vmatpush1.xpose.msra.mxu0 0.0
  %964 = vmatprep.subr.mxu0 0.0
  %965 = vmatpush1.xpose.msra.mxu0 0.0
  %966 = vmatprep.subr.mxu0 0.0
  %967 = vmatpush1.xpose.msra.mxu0 0.0
  %968 = vmatprep.subr.mxu0 0.0
  %969 = vmatpush1.xpose.msra.mxu0 0.0
  %970 = vmatprep.subr.mxu0 0.0
  %971 = vmatpush1.xpose.msra.mxu0 0.0
  %972 = vmatprep.subr.mxu0 0.0
  %973 = vmatpush1.xpose.msra.mxu0 0.0
  %974 = vmatprep.subr.mxu0 0.0
  %975 = vmatpush1.xpose.msra.mxu0 0.0
  %976 = vmatprep.subr.mxu0 0.0
  %977 = vmatpush1.xpose.msra.mxu0 0.0
  %978 = vmatprep.subr.mxu0 0.0
  %979 = vmatpush1.xpose.msra.mxu0 0.0
  %980 = vmatprep.subr.mxu0 0.0
  %981 = vmatpush1.xpose.msra.mxu0 %v950
  %982 = vmatprep.subr.mxu0 0.0
  %983 = vmatpush1.xpose.msra.mxu0 %v947
  %984 = vmatprep.subr.mxu0 0.0
  %985 = vmatpush2.xpose.msra.mxu0 0.0
  %986 = vmatprep.subr.mxu0 0.0
  %987 = vmatpush2.xpose.msra.mxu0 0.0
  %988 = vmatprep.subr.mxu0 0.0
  %989 = vmatpush2.xpose.msra.mxu0 0.0
  %990 = vmatprep.subr.mxu0 0.0
  %991 = vmatpush2.xpose.msra.mxu0 0.0
  %992 = vmatprep.subr.mxu0 0.0
  %993 = vmatpush2.xpose.msra.mxu0 0.0
  %994 = vmatprep.subr.mxu0 0.0
  %995 = vmatpush2.xpose.msra.mxu0 0.0
  %996 = vmatprep.subr.mxu0 0.0
  %997 = vmatpush2.xpose.msra.mxu0 0.0
  %998 = vmatprep.subr.mxu0 0.0
  %999 = vmatpush2.xpose.msra.mxu0 0.0
  %1000 = vmatprep.subr.mxu0 0.0
  %1001 = vmatpush2.xpose.msra.mxu0 0.0
  %1002 = vmatprep.subr.mxu0 0.0
  %1003 = vmatpush2.xpose.msra.mxu0 0.0
  %1004 = vmatprep.subr.mxu0 0.0
  %1005 = vmatpush2.xpose.msra.mxu0 0.0
  %1006 = vmatprep.subr.mxu0 0.0
  %1007 = vmatpush2.xpose.msra.mxu0 0.0
  %1008 = vmatprep.subr.mxu0 0.0
  %1009 = vmatpush2.xpose.msra.mxu0 0.0
  %1010 = vmatprep.subr.mxu0 0.0
  %1011 = vmatpush2.xpose.msra.mxu0 0.0
  %1012 = vmatprep.subr.mxu0 0.0
  %1013 = vmatpush2.xpose.msra.mxu0 0.0
  %1014 = vmatprep.subr.mxu0 0.0
  %1015 = vmatpush2.xpose.msra.mxu0 0.0
  %1016 = vmatprep.mubr.f32.mxu0 0.0
  %1017 = vmatmul.mubr.f32.gmra.mxu0 %v944
  %v1018 = vpop.f32.mrf.mxu0
  %v1019 = vadd.f32 %v837, %v1018
  %v1020 = vpop.f32.mrf.mxu0
  %1021 = vdwg.mxu0
  %v1023 = vsel %vm316, %v149, 0
  %v1026 = vsel %vm316, %v797, 0
  %v1029 = vsel %vm316, %v798, 0
  %1031 = vmatprep.subr.mxu0 0.0
  %1032 = vmatpush1.xpose.msra.mxu0 0.0
  %1033 = vmatprep.subr.mxu0 0.0
  %1034 = vmatpush1.xpose.msra.mxu0 0.0
  %1035 = vmatprep.subr.mxu0 0.0
  %1036 = vmatpush1.xpose.msra.mxu0 0.0
  %1037 = vmatprep.subr.mxu0 0.0
  %1038 = vmatpush1.xpose.msra.mxu0 0.0
  %1039 = vmatprep.subr.mxu0 0.0
  %1040 = vmatpush1.xpose.msra.mxu0 0.0
  %1041 = vmatprep.subr.mxu0 0.0
  %1042 = vmatpush1.xpose.msra.mxu0 0.0
  %1043 = vmatprep.subr.mxu0 0.0
  %1044 = vmatpush1.xpose.msra.mxu0 0.0
  %1045 = vmatprep.subr.mxu0 0.0
  %1046 = vmatpush1.xpose.msra.mxu0 0.0
  %1047 = vmatprep.subr.mxu0 0.0
  %1048 = vmatpush1.xpose.msra.mxu0 0.0
  %1049 = vmatprep.subr.mxu0 0.0
  %1050 = vmatpush1.xpose.msra.mxu0 0.0
  %1051 = vmatprep.subr.mxu0 0.0
  %1052 = vmatpush1.xpose.msra.mxu0 0.0
  %1053 = vmatprep.subr.mxu0 0.0
  %1054 = vmatpush1.xpose.msra.mxu0 0.0
  %1055 = vmatprep.subr.mxu0 0.0
  %1056 = vmatpush1.xpose.msra.mxu0 0.0
  %1057 = vmatprep.subr.mxu0 0.0
  %1058 = vmatpush1.xpose.msra.mxu0 0.0
  %1059 = vmatprep.subr.mxu0 0.0
  %1060 = vmatpush1.xpose.msra.mxu0 %v1029
  %1061 = vmatprep.subr.mxu0 0.0
  %1062 = vmatpush1.xpose.msra.mxu0 %v1026
  %1063 = vmatprep.subr.mxu0 0.0
  %1064 = vmatpush2.xpose.msra.mxu0 0.0
  %1065 = vmatprep.subr.mxu0 0.0
  %1066 = vmatpush2.xpose.msra.mxu0 0.0
  %1067 = vmatprep.subr.mxu0 0.0
  %1068 = vmatpush2.xpose.msra.mxu0 0.0
  %1069 = vmatprep.subr.mxu0 0.0
  %1070 = vmatpush2.xpose.msra.mxu0 0.0
  %1071 = vmatprep.subr.mxu0 0.0
  %1072 = vmatpush2.xpose.msra.mxu0 0.0
  %1073 = vmatprep.subr.mxu0 0.0
  %1074 = vmatpush2.xpose.msra.mxu0 0.0
  %1075 = vmatprep.subr.mxu0 0.0
  %1076 = vmatpush2.xpose.msra.mxu0 0.0
  %1077 = vmatprep.subr.mxu0 0.0
  %1078 = vmatpush2.xpose.msra.mxu0 0.0
  %1079 = vmatprep.subr.mxu0 0.0
  %1080 = vmatpush2.xpose.msra.mxu0 0.0
  %1081 = vmatprep.subr.mxu0 0.0
  %1082 = vmatpush2.xpose.msra.mxu0 0.0
  %1083 = vmatprep.subr.mxu0 0.0
  %1084 = vmatpush2.xpose.msra.mxu0 0.0
  %1085 = vmatprep.subr.mxu0 0.0
  %1086 = vmatpush2.xpose.msra.mxu0 0.0
  %1087 = vmatprep.subr.mxu0 0.0
  %1088 = vmatpush2.xpose.msra.mxu0 0.0
  %1089 = vmatprep.subr.mxu0 0.0
  %1090 = vmatpush2.xpose.msra.mxu0 0.0
  %1091 = vmatprep.subr.mxu0 0.0
  %1092 = vmatpush2.xpose.msra.mxu0 0.0
  %1093 = vmatprep.subr.mxu0 0.0
  %1094 = vmatpush2.xpose.msra.mxu0 0.0
  %1095 = vmatprep.mubr.f32.mxu0 0.0
  %1096 = vmatmul.mubr.f32.gmra.mxu0 %v1023
  %v1097 = vpop.f32.mrf.mxu0
  %v1098 = vadd.f32 %v844, %v1097
  %v1099 = vpop.f32.mrf.mxu0
  %1100 = vdwg.mxu0
  %v1102 = vsel %vm316, %v132, 0
  %v1105 = vsel %vm316, %v799, 0
  %v1108 = vsel %vm316, %v800, 0
  %1110 = vmatprep.subr.mxu0 0.0
  %1111 = vmatpush1.xpose.msra.mxu0 0.0
  %1112 = vmatprep.subr.mxu0 0.0
  %1113 = vmatpush1.xpose.msra.mxu0 0.0
  %1114 = vmatprep.subr.mxu0 0.0
  %1115 = vmatpush1.xpose.msra.mxu0 0.0
  %1116 = vmatprep.subr.mxu0 0.0
  %1117 = vmatpush1.xpose.msra.mxu0 0.0
  %1118 = vmatprep.subr.mxu0 0.0
  %1119 = vmatpush1.xpose.msra.mxu0 0.0
  %1120 = vmatprep.subr.mxu0 0.0
  %1121 = vmatpush1.xpose.msra.mxu0 0.0
  %1122 = vmatprep.subr.mxu0 0.0
  %1123 = vmatpush1.xpose.msra.mxu0 0.0
  %1124 = vmatprep.subr.mxu0 0.0
  %1125 = vmatpush1.xpose.msra.mxu0 0.0
  %1126 = vmatprep.subr.mxu0 0.0
  %1127 = vmatpush1.xpose.msra.mxu0 0.0
  %1128 = vmatprep.subr.mxu0 0.0
  %1129 = vmatpush1.xpose.msra.mxu0 0.0
  %1130 = vmatprep.subr.mxu0 0.0
  %1131 = vmatpush1.xpose.msra.mxu0 0.0
  %1132 = vmatprep.subr.mxu0 0.0
  %1133 = vmatpush1.xpose.msra.mxu0 0.0
  %1134 = vmatprep.subr.mxu0 0.0
  %1135 = vmatpush1.xpose.msra.mxu0 0.0
  %1136 = vmatprep.subr.mxu0 0.0
  %1137 = vmatpush1.xpose.msra.mxu0 0.0
  %1138 = vmatprep.subr.mxu0 0.0
  %1139 = vmatpush1.xpose.msra.mxu0 %v1108
  %1140 = vmatprep.subr.mxu0 0.0
  %1141 = vmatpush1.xpose.msra.mxu0 %v1105
  %1142 = vmatprep.subr.mxu0 0.0
  %1143 = vmatpush2.xpose.msra.mxu0 0.0
  %1144 = vmatprep.subr.mxu0 0.0
  %1145 = vmatpush2.xpose.msra.mxu0 0.0
  %1146 = vmatprep.subr.mxu0 0.0
  %1147 = vmatpush2.xpose.msra.mxu0 0.0
  %1148 = vmatprep.subr.mxu0 0.0
  %1149 = vmatpush2.xpose.msra.mxu0 0.0
  %1150 = vmatprep.subr.mxu0 0.0
  %1151 = vmatpush2.xpose.msra.mxu0 0.0
  %1152 = vmatprep.subr.mxu0 0.0
  %1153 = vmatpush2.xpose.msra.mxu0 0.0
  %1154 = vmatprep.subr.mxu0 0.0
  %1155 = vmatpush2.xpose.msra.mxu0 0.0
  %1156 = vmatprep.subr.mxu0 0.0
  %1157 = vmatpush2.xpose.msra.mxu0 0.0
  %1158 = vmatprep.subr.mxu0 0.0
  %1159 = vmatpush2.xpose.msra.mxu0 0.0
  %1160 = vmatprep.subr.mxu0 0.0
  %1161 = vmatpush2.xpose.msra.mxu0 0.0
  %1162 = vmatprep.subr.mxu0 0.0
  %1163 = vmatpush2.xpose.msra.mxu0 0.0
  %1164 = vmatprep.subr.mxu0 0.0
  %1165 = vmatpush2.xpose.msra.mxu0 0.0
  %1166 = vmatprep.subr.mxu0 0.0
  %1167 = vmatpush2.xpose.msra.mxu0 0.0
  %1168 = vmatprep.subr.mxu0 0.0
  %1169 = vmatpush2.xpose.msra.mxu0 0.0
  %1170 = vmatprep.subr.mxu0 0.0
  %1171 = vmatpush2.xpose.msra.mxu0 0.0
  %1172 = vmatprep.subr.mxu0 0.0
  %1173 = vmatpush2.xpose.msra.mxu0 0.0
  %1174 = vmatprep.mubr.f32.mxu0 0.0
  %1175 = vmatmul.mubr.f32.gmra.mxu0 %v1102
  %v1176 = vpop.f32.mrf.mxu0
  %v1177 = vadd.f32 %v851, %v1176
  %v1178 = vpop.f32.mrf.mxu0
  %1179 = vdwg.mxu0
  %v1181 = vsel %vm316, %v150, 0
  %v1184 = vsel %vm316, %v801, 0
  %v1187 = vsel %vm316, %v802, 0
  %1189 = vmatprep.subr.mxu0 0.0
  %1190 = vmatpush1.xpose.msra.mxu0 0.0
  %1191 = vmatprep.subr.mxu0 0.0
  %1192 = vmatpush1.xpose.msra.mxu0 0.0
  %1193 = vmatprep.subr.mxu0 0.0
  %1194 = vmatpush1.xpose.msra.mxu0 0.0
  %1195 = vmatprep.subr.mxu0 0.0
  %1196 = vmatpush1.xpose.msra.mxu0 0.0
  %1197 = vmatprep.subr.mxu0 0.0
  %1198 = vmatpush1.xpose.msra.mxu0 0.0
  %1199 = vmatprep.subr.mxu0 0.0
  %1200 = vmatpush1.xpose.msra.mxu0 0.0
  %1201 = vmatprep.subr.mxu0 0.0
  %1202 = vmatpush1.xpose.msra.mxu0 0.0
  %1203 = vmatprep.subr.mxu0 0.0
  %1204 = vmatpush1.xpose.msra.mxu0 0.0
  %1205 = vmatprep.subr.mxu0 0.0
  %1206 = vmatpush1.xpose.msra.mxu0 0.0
  %1207 = vmatprep.subr.mxu0 0.0
  %1208 = vmatpush1.xpose.msra.mxu0 0.0
  %1209 = vmatprep.subr.mxu0 0.0
  %1210 = vmatpush1.xpose.msra.mxu0 0.0
  %1211 = vmatprep.subr.mxu0 0.0
  %1212 = vmatpush1.xpose.msra.mxu0 0.0
  %1213 = vmatprep.subr.mxu0 0.0
  %1214 = vmatpush1.xpose.msra.mxu0 0.0
  %1215 = vmatprep.subr.mxu0 0.0
  %1216 = vmatpush1.xpose.msra.mxu0 0.0
  %1217 = vmatprep.subr.mxu0 0.0
  %1218 = vmatpush1.xpose.msra.mxu0 %v1187
  %1219 = vmatprep.subr.mxu0 0.0
  %1220 = vmatpush1.xpose.msra.mxu0 %v1184
  %1221 = vmatprep.subr.mxu0 0.0
  %1222 = vmatpush2.xpose.msra.mxu0 0.0
  %1223 = vmatprep.subr.mxu0 0.0
  %1224 = vmatpush2.xpose.msra.mxu0 0.0
  %1225 = vmatprep.subr.mxu0 0.0
  %1226 = vmatpush2.xpose.msra.mxu0 0.0
  %1227 = vmatprep.subr.mxu0 0.0
  %1228 = vmatpush2.xpose.msra.mxu0 0.0
  %1229 = vmatprep.subr.mxu0 0.0
  %1230 = vmatpush2.xpose.msra.mxu0 0.0
  %1231 = vmatprep.subr.mxu0 0.0
  %1232 = vmatpush2.xpose.msra.mxu0 0.0
  %1233 = vmatprep.subr.mxu0 0.0
  %1234 = vmatpush2.xpose.msra.mxu0 0.0
  %1235 = vmatprep.subr.mxu0 0.0
  %1236 = vmatpush2.xpose.msra.mxu0 0.0
  %1237 = vmatprep.subr.mxu0 0.0
  %1238 = vmatpush2.xpose.msra.mxu0 0.0
  %1239 = vmatprep.subr.mxu0 0.0
  %1240 = vmatpush2.xpose.msra.mxu0 0.0
  %1241 = vmatprep.subr.mxu0 0.0
  %1242 = vmatpush2.xpose.msra.mxu0 0.0
  %1243 = vmatprep.subr.mxu0 0.0
  %1244 = vmatpush2.xpose.msra.mxu0 0.0
  %1245 = vmatprep.subr.mxu0 0.0
  %1246 = vmatpush2.xpose.msra.mxu0 0.0
  %1247 = vmatprep.subr.mxu0 0.0
  %1248 = vmatpush2.xpose.msra.mxu0 0.0
  %1249 = vmatprep.subr.mxu0 0.0
  %1250 = vmatpush2.xpose.msra.mxu0 0.0
  %1251 = vmatprep.subr.mxu0 0.0
  %1252 = vmatpush2.xpose.msra.mxu0 0.0
  %1253 = vmatprep.mubr.f32.mxu0 0.0
  %1254 = vmatmul.mubr.f32.gmra.mxu0 %v1181
  %v1255 = vpop.f32.mrf.mxu0
  %v1256 = vadd.f32 %v858, %v1255
  %v1257 = vpop.f32.mrf.mxu0
  %1258 = vdwg.mxu0
  %v1260 = vsel %vm316, %v141, 0
  %v1263 = vsel %vm316, %v803, 0
  %v1266 = vsel %vm316, %v804, 0
  %1268 = vmatprep.subr.mxu0 0.0
  %1269 = vmatpush1.xpose.msra.mxu0 0.0
  %1270 = vmatprep.subr.mxu0 0.0
  %1271 = vmatpush1.xpose.msra.mxu0 0.0
  %1272 = vmatprep.subr.mxu0 0.0
  %1273 = vmatpush1.xpose.msra.mxu0 0.0
  %1274 = vmatprep.subr.mxu0 0.0
  %1275 = vmatpush1.xpose.msra.mxu0 0.0
  %1276 = vmatprep.subr.mxu0 0.0
  %1277 = vmatpush1.xpose.msra.mxu0 0.0
  %1278 = vmatprep.subr.mxu0 0.0
  %1279 = vmatpush1.xpose.msra.mxu0 0.0
  %1280 = vmatprep.subr.mxu0 0.0
  %1281 = vmatpush1.xpose.msra.mxu0 0.0
  %1282 = vmatprep.subr.mxu0 0.0
  %1283 = vmatpush1.xpose.msra.mxu0 0.0
  %1284 = vmatprep.subr.mxu0 0.0
  %1285 = vmatpush1.xpose.msra.mxu0 0.0
  %1286 = vmatprep.subr.mxu0 0.0
  %1287 = vmatpush1.xpose.msra.mxu0 0.0
  %1288 = vmatprep.subr.mxu0 0.0
  %1289 = vmatpush1.xpose.msra.mxu0 0.0
  %1290 = vmatprep.subr.mxu0 0.0
  %1291 = vmatpush1.xpose.msra.mxu0 0.0
  %1292 = vmatprep.subr.mxu0 0.0
  %1293 = vmatpush1.xpose.msra.mxu0 0.0
  %1294 = vmatprep.subr.mxu0 0.0
  %1295 = vmatpush1.xpose.msra.mxu0 0.0
  %1296 = vmatprep.subr.mxu0 0.0
  %1297 = vmatpush1.xpose.msra.mxu0 %v1266
  %1298 = vmatprep.subr.mxu0 0.0
  %1299 = vmatpush1.xpose.msra.mxu0 %v1263
  %1300 = vmatprep.subr.mxu0 0.0
  %1301 = vmatpush2.xpose.msra.mxu0 0.0
  %1302 = vmatprep.subr.mxu0 0.0
  %1303 = vmatpush2.xpose.msra.mxu0 0.0
  %1304 = vmatprep.subr.mxu0 0.0
  %1305 = vmatpush2.xpose.msra.mxu0 0.0
  %1306 = vmatprep.subr.mxu0 0.0
  %1307 = vmatpush2.xpose.msra.mxu0 0.0
  %1308 = vmatprep.subr.mxu0 0.0
  %1309 = vmatpush2.xpose.msra.mxu0 0.0
  %1310 = vmatprep.subr.mxu0 0.0
  %1311 = vmatpush2.xpose.msra.mxu0 0.0
  %1312 = vmatprep.subr.mxu0 0.0
  %1313 = vmatpush2.xpose.msra.mxu0 0.0
  %1314 = vmatprep.subr.mxu0 0.0
  %1315 = vmatpush2.xpose.msra.mxu0 0.0
  %1316 = vmatprep.subr.mxu0 0.0
  %1317 = vmatpush2.xpose.msra.mxu0 0.0
  %1318 = vmatprep.subr.mxu0 0.0
  %1319 = vmatpush2.xpose.msra.mxu0 0.0
  %1320 = vmatprep.subr.mxu0 0.0
  %1321 = vmatpush2.xpose.msra.mxu0 0.0
  %1322 = vmatprep.subr.mxu0 0.0
  %1323 = vmatpush2.xpose.msra.mxu0 0.0
  %1324 = vmatprep.subr.mxu0 0.0
  %1325 = vmatpush2.xpose.msra.mxu0 0.0
  %1326 = vmatprep.subr.mxu0 0.0
  %1327 = vmatpush2.xpose.msra.mxu0 0.0
  %1328 = vmatprep.subr.mxu0 0.0
  %1329 = vmatpush2.xpose.msra.mxu0 0.0
  %1330 = vmatprep.subr.mxu0 0.0
  %1331 = vmatpush2.xpose.msra.mxu0 0.0
  %1332 = vmatprep.mubr.f32.mxu0 0.0
  %1333 = vmatmul.mubr.f32.gmra.mxu0 %v1260
  %v1334 = vpop.f32.mrf.mxu0
  %v1335 = vadd.f32 %v865, %v1334
  %v1336 = vpop.f32.mrf.mxu0
  %1337 = vdwg.mxu0
  %v1339 = vsel %vm316, %v151, 0
  %v1342 = vsel %vm316, %v805, 0
  %v1345 = vsel %vm316, %v806, 0
  %1347 = vmatprep.subr.mxu0 0.0
  %1348 = vmatpush1.xpose.msra.mxu0 0.0
  %1349 = vmatprep.subr.mxu0 0.0
  %1350 = vmatpush1.xpose.msra.mxu0 0.0
  %1351 = vmatprep.subr.mxu0 0.0
  %1352 = vmatpush1.xpose.msra.mxu0 0.0
  %1353 = vmatprep.subr.mxu0 0.0
  %1354 = vmatpush1.xpose.msra.mxu0 0.0
  %1355 = vmatprep.subr.mxu0 0.0
  %1356 = vmatpush1.xpose.msra.mxu0 0.0
  %1357 = vmatprep.subr.mxu0 0.0
  %1358 = vmatpush1.xpose.msra.mxu0 0.0
  %1359 = vmatprep.subr.mxu0 0.0
  %1360 = vmatpush1.xpose.msra.mxu0 0.0
  %1361 = vmatprep.subr.mxu0 0.0
  %1362 = vmatpush1.xpose.msra.mxu0 0.0
  %1363 = vmatprep.subr.mxu0 0.0
  %1364 = vmatpush1.xpose.msra.mxu0 0.0
  %1365 = vmatprep.subr.mxu0 0.0
  %1366 = vmatpush1.xpose.msra.mxu0 0.0
  %1367 = vmatprep.subr.mxu0 0.0
  %1368 = vmatpush1.xpose.msra.mxu0 0.0
  %1369 = vmatprep.subr.mxu0 0.0
  %1370 = vmatpush1.xpose.msra.mxu0 0.0
  %1371 = vmatprep.subr.mxu0 0.0
  %1372 = vmatpush1.xpose.msra.mxu0 0.0
  %1373 = vmatprep.subr.mxu0 0.0
  %1374 = vmatpush1.xpose.msra.mxu0 0.0
  %1375 = vmatprep.subr.mxu0 0.0
  %1376 = vmatpush1.xpose.msra.mxu0 %v1345
  %1377 = vmatprep.subr.mxu0 0.0
  %1378 = vmatpush1.xpose.msra.mxu0 %v1342
  %1379 = vmatprep.subr.mxu0 0.0
  %1380 = vmatpush2.xpose.msra.mxu0 0.0
  %1381 = vmatprep.subr.mxu0 0.0
  %1382 = vmatpush2.xpose.msra.mxu0 0.0
  %1383 = vmatprep.subr.mxu0 0.0
  %1384 = vmatpush2.xpose.msra.mxu0 0.0
  %1385 = vmatprep.subr.mxu0 0.0
  %1386 = vmatpush2.xpose.msra.mxu0 0.0
  %1387 = vmatprep.subr.mxu0 0.0
  %1388 = vmatpush2.xpose.msra.mxu0 0.0
  %1389 = vmatprep.subr.mxu0 0.0
  %1390 = vmatpush2.xpose.msra.mxu0 0.0
  %1391 = vmatprep.subr.mxu0 0.0
  %1392 = vmatpush2.xpose.msra.mxu0 0.0
  %1393 = vmatprep.subr.mxu0 0.0
  %1394 = vmatpush2.xpose.msra.mxu0 0.0
  %1395 = vmatprep.subr.mxu0 0.0
  %1396 = vmatpush2.xpose.msra.mxu0 0.0
  %1397 = vmatprep.subr.mxu0 0.0
  %1398 = vmatpush2.xpose.msra.mxu0 0.0
  %1399 = vmatprep.subr.mxu0 0.0
  %1400 = vmatpush2.xpose.msra.mxu0 0.0
  %1401 = vmatprep.subr.mxu0 0.0
  %1402 = vmatpush2.xpose.msra.mxu0 0.0
  %1403 = vmatprep.subr.mxu0 0.0
  %1404 = vmatpush2.xpose.msra.mxu0 0.0
  %1405 = vmatprep.subr.mxu0 0.0
  %1406 = vmatpush2.xpose.msra.mxu0 0.0
  %1407 = vmatprep.subr.mxu0 0.0
  %1408 = vmatpush2.xpose.msra.mxu0 0.0
  %1409 = vmatprep.subr.mxu0 0.0
  %1410 = vmatpush2.xpose.msra.mxu0 0.0
  %1411 = vmatprep.mubr.f32.mxu0 0.0
  %1412 = vmatmul.mubr.f32.gmra.mxu0 %v1339
  %v1413 = vpop.f32.mrf.mxu0
  %v1414 = vadd.f32 %v872, %v1413
  %v1415 = vpop.f32.mrf.mxu0
  %1416 = vdwg.mxu0
  %v1418 = vsel %vm316, %v148, 0
  %v1421 = vsel %vm316, %v807, 0
  %v1424 = vsel %vm316, %v808, 0
  %1426 = vmatprep.subr.mxu0 0.0
  %1427 = vmatpush1.xpose.msra.mxu0 0.0
  %1428 = vmatprep.subr.mxu0 0.0
  %1429 = vmatpush1.xpose.msra.mxu0 0.0
  %1430 = vmatprep.subr.mxu0 0.0
  %1431 = vmatpush1.xpose.msra.mxu0 0.0
  %1432 = vmatprep.subr.mxu0 0.0
  %1433 = vmatpush1.xpose.msra.mxu0 0.0
  %1434 = vmatprep.subr.mxu0 0.0
  %1435 = vmatpush1.xpose.msra.mxu0 0.0
  %1436 = vmatprep.subr.mxu0 0.0
  %1437 = vmatpush1.xpose.msra.mxu0 0.0
  %1438 = vmatprep.subr.mxu0 0.0
  %1439 = vmatpush1.xpose.msra.mxu0 0.0
  %1440 = vmatprep.subr.mxu0 0.0
  %1441 = vmatpush1.xpose.msra.mxu0 0.0
  %1442 = vmatprep.subr.mxu0 0.0
  %1443 = vmatpush1.xpose.msra.mxu0 0.0
  %1444 = vmatprep.subr.mxu0 0.0
  %1445 = vmatpush1.xpose.msra.mxu0 0.0
  %1446 = vmatprep.subr.mxu0 0.0
  %1447 = vmatpush1.xpose.msra.mxu0 0.0
  %1448 = vmatprep.subr.mxu0 0.0
  %1449 = vmatpush1.xpose.msra.mxu0 0.0
  %1450 = vmatprep.subr.mxu0 0.0
  %1451 = vmatpush1.xpose.msra.mxu0 0.0
  %1452 = vmatprep.subr.mxu0 0.0
  %1453 = vmatpush1.xpose.msra.mxu0 0.0
  %1454 = vmatprep.subr.mxu0 0.0
  %1455 = vmatpush1.xpose.msra.mxu0 %v1424
  %1456 = vmatprep.subr.mxu0 0.0
  %1457 = vmatpush1.xpose.msra.mxu0 %v1421
  %1458 = vmatprep.subr.mxu0 0.0
  %1459 = vmatpush2.xpose.msra.mxu0 0.0
  %1460 = vmatprep.subr.mxu0 0.0
  %1461 = vmatpush2.xpose.msra.mxu0 0.0
  %1462 = vmatprep.subr.mxu0 0.0
  %1463 = vmatpush2.xpose.msra.mxu0 0.0
  %1464 = vmatprep.subr.mxu0 0.0
  %1465 = vmatpush2.xpose.msra.mxu0 0.0
  %1466 = vmatprep.subr.mxu0 0.0
  %1467 = vmatpush2.xpose.msra.mxu0 0.0
  %1468 = vmatprep.subr.mxu0 0.0
  %1469 = vmatpush2.xpose.msra.mxu0 0.0
  %1470 = vmatprep.subr.mxu0 0.0
  %1471 = vmatpush2.xpose.msra.mxu0 0.0
  %1472 = vmatprep.subr.mxu0 0.0
  %1473 = vmatpush2.xpose.msra.mxu0 0.0
  %1474 = vmatprep.subr.mxu0 0.0
  %1475 = vmatpush2.xpose.msra.mxu0 0.0
  %1476 = vmatprep.subr.mxu0 0.0
  %1477 = vmatpush2.xpose.msra.mxu0 0.0
  %1478 = vmatprep.subr.mxu0 0.0
  %1479 = vmatpush2.xpose.msra.mxu0 0.0
  %1480 = vmatprep.subr.mxu0 0.0
  %1481 = vmatpush2.xpose.msra.mxu0 0.0
  %1482 = vmatprep.subr.mxu0 0.0
  %1483 = vmatpush2.xpose.msra.mxu0 0.0
  %1484 = vmatprep.subr.mxu0 0.0
  %1485 = vmatpush2.xpose.msra.mxu0 0.0
  %1486 = vmatprep.subr.mxu0 0.0
  %1487 = vmatpush2.xpose.msra.mxu0 0.0
  %1488 = vmatprep.subr.mxu0 0.0
  %1489 = vmatpush2.xpose.msra.mxu0 0.0
  %1490 = vmatprep.mubr.f32.mxu0 0.0
  %1491 = vmatmul.mubr.f32.gmra.mxu0 %v1418
  %v1492 = vpop.f32.mrf.mxu0
  %v1493 = vadd.f32 %v879, %v1492
  %v1494 = vpop.f32.mrf.mxu0
  %1495 = vdwg.mxu0
  %v1497 = vsel %vm316, %v152, 0
  %v1500 = vsel %vm316, %v809, 0
  %v1503 = vsel %vm316, %v810, 0
  %1505 = vmatprep.subr.mxu0 0.0
  %1506 = vmatpush1.xpose.msra.mxu0 0.0
  %1507 = vmatprep.subr.mxu0 0.0
  %1508 = vmatpush1.xpose.msra.mxu0 0.0
  %1509 = vmatprep.subr.mxu0 0.0
  %1510 = vmatpush1.xpose.msra.mxu0 0.0
  %1511 = vmatprep.subr.mxu0 0.0
  %1512 = vmatpush1.xpose.msra.mxu0 0.0
  %1513 = vmatprep.subr.mxu0 0.0
  %1514 = vmatpush1.xpose.msra.mxu0 0.0
  %1515 = vmatprep.subr.mxu0 0.0
  %1516 = vmatpush1.xpose.msra.mxu0 0.0
  %1517 = vmatprep.subr.mxu0 0.0
  %1518 = vmatpush1.xpose.msra.mxu0 0.0
  %1519 = vmatprep.subr.mxu0 0.0
  %1520 = vmatpush1.xpose.msra.mxu0 0.0
  %1521 = vmatprep.subr.mxu0 0.0
  %1522 = vmatpush1.xpose.msra.mxu0 0.0
  %1523 = vmatprep.subr.mxu0 0.0
  %1524 = vmatpush1.xpose.msra.mxu0 0.0
  %1525 = vmatprep.subr.mxu0 0.0
  %1526 = vmatpush1.xpose.msra.mxu0 0.0
  %1527 = vmatprep.subr.mxu0 0.0
  %1528 = vmatpush1.xpose.msra.mxu0 0.0
  %1529 = vmatprep.subr.mxu0 0.0
  %1530 = vmatpush1.xpose.msra.mxu0 0.0
  %1531 = vmatprep.subr.mxu0 0.0
  %1532 = vmatpush1.xpose.msra.mxu0 0.0
  %1533 = vmatprep.subr.mxu0 0.0
  %1534 = vmatpush1.xpose.msra.mxu0 %v1503
  %1535 = vmatprep.subr.mxu0 0.0
  %1536 = vmatpush1.xpose.msra.mxu0 %v1500
  %1537 = vmatprep.subr.mxu0 0.0
  %1538 = vmatpush2.xpose.msra.mxu0 0.0
  %1539 = vmatprep.subr.mxu0 0.0
  %1540 = vmatpush2.xpose.msra.mxu0 0.0
  %1541 = vmatprep.subr.mxu0 0.0
  %1542 = vmatpush2.xpose.msra.mxu0 0.0
  %1543 = vmatprep.subr.mxu0 0.0
  %1544 = vmatpush2.xpose.msra.mxu0 0.0
  %1545 = vmatprep.subr.mxu0 0.0
  %1546 = vmatpush2.xpose.msra.mxu0 0.0
  %1547 = vmatprep.subr.mxu0 0.0
  %1548 = vmatpush2.xpose.msra.mxu0 0.0
  %1549 = vmatprep.subr.mxu0 0.0
  %1550 = vmatpush2.xpose.msra.mxu0 0.0
  %1551 = vmatprep.subr.mxu0 0.0
  %1552 = vmatpush2.xpose.msra.mxu0 0.0
  %1553 = vmatprep.subr.mxu0 0.0
  %1554 = vmatpush2.xpose.msra.mxu0 0.0
  %1555 = vmatprep.subr.mxu0 0.0
  %1556 = vmatpush2.xpose.msra.mxu0 0.0
  %1557 = vmatprep.subr.mxu0 0.0
  %1558 = vmatpush2.xpose.msra.mxu0 0.0
  %1559 = vmatprep.subr.mxu0 0.0
  %1560 = vmatpush2.xpose.msra.mxu0 0.0
  %1561 = vmatprep.subr.mxu0 0.0
  %1562 = vmatpush2.xpose.msra.mxu0 0.0
  %1563 = vmatprep.subr.mxu0 0.0
  %1564 = vmatpush2.xpose.msra.mxu0 0.0
  %1565 = vmatprep.subr.mxu0 0.0
  %1566 = vmatpush2.xpose.msra.mxu0 0.0
  %1567 = vmatprep.subr.mxu0 0.0
  %1568 = vmatpush2.xpose.msra.mxu0 0.0
  %1569 = vmatprep.mubr.f32.mxu0 0.0
  %1570 = vmatmul.mubr.f32.gmra.mxu0 %v1497
  %v1571 = vpop.f32.mrf.mxu0
  %v1572 = vadd.f32 %v886, %v1571
  %v1573 = vpop.f32.mrf.mxu0
  %1574 = vdwg.mxu0
  %v1576 = vsel %vm316, %v193, 0
  %v1579 = vsel %vm316, %v811, 0
  %v1582 = vsel %vm316, %v812, 0
  %1584 = vmatprep.subr.mxu0 0.0
  %1585 = vmatpush1.xpose.msra.mxu0 0.0
  %1586 = vmatprep.subr.mxu0 0.0
  %1587 = vmatpush1.xpose.msra.mxu0 0.0
  %1588 = vmatprep.subr.mxu0 0.0
  %1589 = vmatpush1.xpose.msra.mxu0 0.0
  %1590 = vmatprep.subr.mxu0 0.0
  %1591 = vmatpush1.xpose.msra.mxu0 0.0
  %1592 = vmatprep.subr.mxu0 0.0
  %1593 = vmatpush1.xpose.msra.mxu0 0.0
  %1594 = vmatprep.subr.mxu0 0.0
  %1595 = vmatpush1.xpose.msra.mxu0 0.0
  %1596 = vmatprep.subr.mxu0 0.0
  %1597 = vmatpush1.xpose.msra.mxu0 0.0
  %1598 = vmatprep.subr.mxu0 0.0
  %1599 = vmatpush1.xpose.msra.mxu0 0.0
  %1600 = vmatprep.subr.mxu0 0.0
  %1601 = vmatpush1.xpose.msra.mxu0 0.0
  %1602 = vmatprep.subr.mxu0 0.0
  %1603 = vmatpush1.xpose.msra.mxu0 0.0
  %1604 = vmatprep.subr.mxu0 0.0
  %1605 = vmatpush1.xpose.msra.mxu0 0.0
  %1606 = vmatprep.subr.mxu0 0.0
  %1607 = vmatpush1.xpose.msra.mxu0 0.0
  %1608 = vmatprep.subr.mxu0 0.0
  %1609 = vmatpush1.xpose.msra.mxu0 0.0
  %1610 = vmatprep.subr.mxu0 0.0
  %1611 = vmatpush1.xpose.msra.mxu0 0.0
  %1612 = vmatprep.subr.mxu0 0.0
  %1613 = vmatpush1.xpose.msra.mxu0 %v1582
  %1614 = vmatprep.subr.mxu0 0.0
  %1615 = vmatpush1.xpose.msra.mxu0 %v1579
  %1616 = vmatprep.subr.mxu0 0.0
  %1617 = vmatpush2.xpose.msra.mxu0 0.0
  %1618 = vmatprep.subr.mxu0 0.0
  %1619 = vmatpush2.xpose.msra.mxu0 0.0
  %1620 = vmatprep.subr.mxu0 0.0
  %1621 = vmatpush2.xpose.msra.mxu0 0.0
  %1622 = vmatprep.subr.mxu0 0.0
  %1623 = vmatpush2.xpose.msra.mxu0 0.0
  %1624 = vmatprep.subr.mxu0 0.0
  %1625 = vmatpush2.xpose.msra.mxu0 0.0
  %1626 = vmatprep.subr.mxu0 0.0
  %1627 = vmatpush2.xpose.msra.mxu0 0.0
  %1628 = vmatprep.subr.mxu0 0.0
  %1629 = vmatpush2.xpose.msra.mxu0 0.0
  %1630 = vmatprep.subr.mxu0 0.0
  %1631 = vmatpush2.xpose.msra.mxu0 0.0
  %1632 = vmatprep.subr.mxu0 0.0
  %1633 = vmatpush2.xpose.msra.mxu0 0.0
  %1634 = vmatprep.subr.mxu0 0.0
  %1635 = vmatpush2.xpose.msra.mxu0 0.0
  %1636 = vmatprep.subr.mxu0 0.0
  %1637 = vmatpush2.xpose.msra.mxu0 0.0
  %1638 = vmatprep.subr.mxu0 0.0
  %1639 = vmatpush2.xpose.msra.mxu0 0.0
  %1640 = vmatprep.subr.mxu0 0.0
  %1641 = vmatpush2.xpose.msra.mxu0 0.0
  %1642 = vmatprep.subr.mxu0 0.0
  %1643 = vmatpush2.xpose.msra.mxu0 0.0
  %1644 = vmatprep.subr.mxu0 0.0
  %1645 = vmatpush2.xpose.msra.mxu0 0.0
  %1646 = vmatprep.subr.mxu0 0.0
  %1647 = vmatpush2.xpose.msra.mxu0 0.0
  %1648 = vmatprep.mubr.f32.mxu0 0.0
  %1649 = vmatmul.mubr.f32.gmra.mxu0 %v1576
  %v1650 = vpop.f32.mrf.mxu0
  %v1651 = vadd.f32 %v893, %v1650
  %v1652 = vpop.f32.mrf.mxu0
  %1653 = vdwg.mxu0
  %v1655 = vsel %vm316, %v217, 0
  %v1658 = vsel %vm316, %v813, 0
  %v1661 = vsel %vm316, %v814, 0
  %1663 = vmatprep.subr.mxu0 0.0
  %1664 = vmatpush1.xpose.msra.mxu0 0.0
  %1665 = vmatprep.subr.mxu0 0.0
  %1666 = vmatpush1.xpose.msra.mxu0 0.0
  %1667 = vmatprep.subr.mxu0 0.0
  %1668 = vmatpush1.xpose.msra.mxu0 0.0
  %1669 = vmatprep.subr.mxu0 0.0
  %1670 = vmatpush1.xpose.msra.mxu0 0.0
  %1671 = vmatprep.subr.mxu0 0.0
  %1672 = vmatpush1.xpose.msra.mxu0 0.0
  %1673 = vmatprep.subr.mxu0 0.0
  %1674 = vmatpush1.xpose.msra.mxu0 0.0
  %1675 = vmatprep.subr.mxu0 0.0
  %1676 = vmatpush1.xpose.msra.mxu0 0.0
  %1677 = vmatprep.subr.mxu0 0.0
  %1678 = vmatpush1.xpose.msra.mxu0 0.0
  %1679 = vmatprep.subr.mxu0 0.0
  %1680 = vmatpush1.xpose.msra.mxu0 0.0
  %1681 = vmatprep.subr.mxu0 0.0
  %1682 = vmatpush1.xpose.msra.mxu0 0.0
  %1683 = vmatprep.subr.mxu0 0.0
  %1684 = vmatpush1.xpose.msra.mxu0 0.0
  %1685 = vmatprep.subr.mxu0 0.0
  %1686 = vmatpush1.xpose.msra.mxu0 0.0
  %1687 = vmatprep.subr.mxu0 0.0
  %1688 = vmatpush1.xpose.msra.mxu0 0.0
  %1689 = vmatprep.subr.mxu0 0.0
  %1690 = vmatpush1.xpose.msra.mxu0 0.0
  %1691 = vmatprep.subr.mxu0 0.0
  %1692 = vmatpush1.xpose.msra.mxu0 %v1661
  %1693 = vmatprep.subr.mxu0 0.0
  %1694 = vmatpush1.xpose.msra.mxu0 %v1658
  %1695 = vmatprep.subr.mxu0 0.0
  %1696 = vmatpush2.xpose.msra.mxu0 0.0
  %1697 = vmatprep.subr.mxu0 0.0
  %1698 = vmatpush2.xpose.msra.mxu0 0.0
  %1699 = vmatprep.subr.mxu0 0.0
  %1700 = vmatpush2.xpose.msra.mxu0 0.0
  %1701 = vmatprep.subr.mxu0 0.0
  %1702 = vmatpush2.xpose.msra.mxu0 0.0
  %1703 = vmatprep.subr.mxu0 0.0
  %1704 = vmatpush2.xpose.msra.mxu0 0.0
  %1705 = vmatprep.subr.mxu0 0.0
  %1706 = vmatpush2.xpose.msra.mxu0 0.0
  %1707 = vmatprep.subr.mxu0 0.0
  %1708 = vmatpush2.xpose.msra.mxu0 0.0
  %1709 = vmatprep.subr.mxu0 0.0
  %1710 = vmatpush2.xpose.msra.mxu0 0.0
  %1711 = vmatprep.subr.mxu0 0.0
  %1712 = vmatpush2.xpose.msra.mxu0 0.0
  %1713 = vmatprep.subr.mxu0 0.0
  %1714 = vmatpush2.xpose.msra.mxu0 0.0
  %1715 = vmatprep.subr.mxu0 0.0
  %1716 = vmatpush2.xpose.msra.mxu0 0.0
  %1717 = vmatprep.subr.mxu0 0.0
  %1718 = vmatpush2.xpose.msra.mxu0 0.0
  %1719 = vmatprep.subr.mxu0 0.0
  %1720 = vmatpush2.xpose.msra.mxu0 0.0
  %1721 = vmatprep.subr.mxu0 0.0
  %1722 = vmatpush2.xpose.msra.mxu0 0.0
  %1723 = vmatprep.subr.mxu0 0.0
  %1724 = vmatpush2.xpose.msra.mxu0 0.0
  %1725 = vmatprep.subr.mxu0 0.0
  %1726 = vmatpush2.xpose.msra.mxu0 0.0
  %1727 = vmatprep.mubr.f32.mxu0 0.0
  %1728 = vmatmul.mubr.f32.gmra.mxu0 %v1655
  %v1729 = vpop.f32.mrf.mxu0
  %v1730 = vadd.f32 %v900, %v1729
  %v1731 = vpop.f32.mrf.mxu0
  %1732 = vdwg.mxu0
  %v1734 = vsel %vm316, %v200, 0
  %v1737 = vsel %vm316, %v815, 0
  %v1740 = vsel %vm316, %v816, 0
  %1742 = vmatprep.subr.mxu0 0.0
  %1743 = vmatpush1.xpose.msra.mxu0 0.0
  %1744 = vmatprep.subr.mxu0 0.0
  %1745 = vmatpush1.xpose.msra.mxu0 0.0
  %1746 = vmatprep.subr.mxu0 0.0
  %1747 = vmatpush1.xpose.msra.mxu0 0.0
  %1748 = vmatprep.subr.mxu0 0.0
  %1749 = vmatpush1.xpose.msra.mxu0 0.0
  %1750 = vmatprep.subr.mxu0 0.0
  %1751 = vmatpush1.xpose.msra.mxu0 0.0
  %1752 = vmatprep.subr.mxu0 0.0
  %1753 = vmatpush1.xpose.msra.mxu0 0.0
  %1754 = vmatprep.subr.mxu0 0.0
  %1755 = vmatpush1.xpose.msra.mxu0 0.0
  %1756 = vmatprep.subr.mxu0 0.0
  %1757 = vmatpush1.xpose.msra.mxu0 0.0
  %1758 = vmatprep.subr.mxu0 0.0
  %1759 = vmatpush1.xpose.msra.mxu0 0.0
  %1760 = vmatprep.subr.mxu0 0.0
  %1761 = vmatpush1.xpose.msra.mxu0 0.0
  %1762 = vmatprep.subr.mxu0 0.0
  %1763 = vmatpush1.xpose.msra.mxu0 0.0
  %1764 = vmatprep.subr.mxu0 0.0
  %1765 = vmatpush1.xpose.msra.mxu0 0.0
  %1766 = vmatprep.subr.mxu0 0.0
  %1767 = vmatpush1.xpose.msra.mxu0 0.0
  %1768 = vmatprep.subr.mxu0 0.0
  %1769 = vmatpush1.xpose.msra.mxu0 0.0
  %1770 = vmatprep.subr.mxu0 0.0
  %1771 = vmatpush1.xpose.msra.mxu0 %v1740
  %1772 = vmatprep.subr.mxu0 0.0
  %1773 = vmatpush1.xpose.msra.mxu0 %v1737
  %1774 = vmatprep.subr.mxu0 0.0
  %1775 = vmatpush2.xpose.msra.mxu0 0.0
  %1776 = vmatprep.subr.mxu0 0.0
  %1777 = vmatpush2.xpose.msra.mxu0 0.0
  %1778 = vmatprep.subr.mxu0 0.0
  %1779 = vmatpush2.xpose.msra.mxu0 0.0
  %1780 = vmatprep.subr.mxu0 0.0
  %1781 = vmatpush2.xpose.msra.mxu0 0.0
  %1782 = vmatprep.subr.mxu0 0.0
  %1783 = vmatpush2.xpose.msra.mxu0 0.0
  %1784 = vmatprep.subr.mxu0 0.0
  %1785 = vmatpush2.xpose.msra.mxu0 0.0
  %1786 = vmatprep.subr.mxu0 0.0
  %1787 = vmatpush2.xpose.msra.mxu0 0.0
  %1788 = vmatprep.subr.mxu0 0.0
  %1789 = vmatpush2.xpose.msra.mxu0 0.0
  %1790 = vmatprep.subr.mxu0 0.0
  %1791 = vmatpush2.xpose.msra.mxu0 0.0
  %1792 = vmatprep.subr.mxu0 0.0
  %1793 = vmatpush2.xpose.msra.mxu0 0.0
  %1794 = vmatprep.subr.mxu0 0.0
  %1795 = vmatpush2.xpose.msra.mxu0 0.0
  %1796 = vmatprep.subr.mxu0 0.0
  %1797 = vmatpush2.xpose.msra.mxu0 0.0
  %1798 = vmatprep.subr.mxu0 0.0
  %1799 = vmatpush2.xpose.msra.mxu0 0.0
  %1800 = vmatprep.subr.mxu0 0.0
  %1801 = vmatpush2.xpose.msra.mxu0 0.0
  %1802 = vmatprep.subr.mxu0 0.0
  %1803 = vmatpush2.xpose.msra.mxu0 0.0
  %1804 = vmatprep.subr.mxu0 0.0
  %1805 = vmatpush2.xpose.msra.mxu0 0.0
  %1806 = vmatprep.mubr.f32.mxu0 0.0
  %1807 = vmatmul.mubr.f32.gmra.mxu0 %v1734
  %v1808 = vpop.f32.mrf.mxu0
  %v1809 = vadd.f32 %v907, %v1808
  %v1810 = vpop.f32.mrf.mxu0
  %1811 = vdwg.mxu0
  %v1813 = vsel %vm316, %v218, 0
  %v1816 = vsel %vm316, %v817, 0
  %v1819 = vsel %vm316, %v818, 0
  %1821 = vmatprep.subr.mxu0 0.0
  %1822 = vmatpush1.xpose.msra.mxu0 0.0
  %1823 = vmatprep.subr.mxu0 0.0
  %1824 = vmatpush1.xpose.msra.mxu0 0.0
  %1825 = vmatprep.subr.mxu0 0.0
  %1826 = vmatpush1.xpose.msra.mxu0 0.0
  %1827 = vmatprep.subr.mxu0 0.0
  %1828 = vmatpush1.xpose.msra.mxu0 0.0
  %1829 = vmatprep.subr.mxu0 0.0
  %1830 = vmatpush1.xpose.msra.mxu0 0.0
  %1831 = vmatprep.subr.mxu0 0.0
  %1832 = vmatpush1.xpose.msra.mxu0 0.0
  %1833 = vmatprep.subr.mxu0 0.0
  %1834 = vmatpush1.xpose.msra.mxu0 0.0
  %1835 = vmatprep.subr.mxu0 0.0
  %1836 = vmatpush1.xpose.msra.mxu0 0.0
  %1837 = vmatprep.subr.mxu0 0.0
  %1838 = vmatpush1.xpose.msra.mxu0 0.0
  %1839 = vmatprep.subr.mxu0 0.0
  %1840 = vmatpush1.xpose.msra.mxu0 0.0
  %1841 = vmatprep.subr.mxu0 0.0
  %1842 = vmatpush1.xpose.msra.mxu0 0.0
  %1843 = vmatprep.subr.mxu0 0.0
  %1844 = vmatpush1.xpose.msra.mxu0 0.0
  %1845 = vmatprep.subr.mxu0 0.0
  %1846 = vmatpush1.xpose.msra.mxu0 0.0
  %1847 = vmatprep.subr.mxu0 0.0
  %1848 = vmatpush1.xpose.msra.mxu0 0.0
  %1849 = vmatprep.subr.mxu0 0.0
  %1850 = vmatpush1.xpose.msra.mxu0 %v1819
  %1851 = vmatprep.subr.mxu0 0.0
  %1852 = vmatpush1.xpose.msra.mxu0 %v1816
  %1853 = vmatprep.subr.mxu0 0.0
  %1854 = vmatpush2.xpose.msra.mxu0 0.0
  %1855 = vmatprep.subr.mxu0 0.0
  %1856 = vmatpush2.xpose.msra.mxu0 0.0
  %1857 = vmatprep.subr.mxu0 0.0
  %1858 = vmatpush2.xpose.msra.mxu0 0.0
  %1859 = vmatprep.subr.mxu0 0.0
  %1860 = vmatpush2.xpose.msra.mxu0 0.0
  %1861 = vmatprep.subr.mxu0 0.0
  %1862 = vmatpush2.xpose.msra.mxu0 0.0
  %1863 = vmatprep.subr.mxu0 0.0
  %1864 = vmatpush2.xpose.msra.mxu0 0.0
  %1865 = vmatprep.subr.mxu0 0.0
  %1866 = vmatpush2.xpose.msra.mxu0 0.0
  %1867 = vmatprep.subr.mxu0 0.0
  %1868 = vmatpush2.xpose.msra.mxu0 0.0
  %1869 = vmatprep.subr.mxu0 0.0
  %1870 = vmatpush2.xpose.msra.mxu0 0.0
  %1871 = vmatprep.subr.mxu0 0.0
  %1872 = vmatpush2.xpose.msra.mxu0 0.0
  %1873 = vmatprep.subr.mxu0 0.0
  %1874 = vmatpush2.xpose.msra.mxu0 0.0
  %1875 = vmatprep.subr.mxu0 0.0
  %1876 = vmatpush2.xpose.msra.mxu0 0.0
  %1877 = vmatprep.subr.mxu0 0.0
  %1878 = vmatpush2.xpose.msra.mxu0 0.0
  %1879 = vmatprep.subr.mxu0 0.0
  %1880 = vmatpush2.xpose.msra.mxu0 0.0
  %1881 = vmatprep.subr.mxu0 0.0
  %1882 = vmatpush2.xpose.msra.mxu0 0.0
  %1883 = vmatprep.subr.mxu0 0.0
  %1884 = vmatpush2.xpose.msra.mxu0 0.0
  %1885 = vmatprep.mubr.f32.mxu0 0.0
  %1886 = vmatmul.mubr.f32.gmra.mxu0 %v1813
  %v1887 = vpop.f32.mrf.mxu0
  %v1888 = vadd.f32 %v914, %v1887
  %v1889 = vpop.f32.mrf.mxu0
  %1890 = vdwg.mxu0
  %v1892 = vsel %vm316, %v209, 0
  %v1895 = vsel %vm316, %v819, 0
  %v1898 = vsel %vm316, %v820, 0
  %1900 = vmatprep.subr.mxu0 0.0
  %1901 = vmatpush1.xpose.msra.mxu0 0.0
  %1902 = vmatprep.subr.mxu0 0.0
  %1903 = vmatpush1.xpose.msra.mxu0 0.0
  %1904 = vmatprep.subr.mxu0 0.0
  %1905 = vmatpush1.xpose.msra.mxu0 0.0
  %1906 = vmatprep.subr.mxu0 0.0
  %1907 = vmatpush1.xpose.msra.mxu0 0.0
  %1908 = vmatprep.subr.mxu0 0.0
  %1909 = vmatpush1.xpose.msra.mxu0 0.0
  %1910 = vmatprep.subr.mxu0 0.0
  %1911 = vmatpush1.xpose.msra.mxu0 0.0
  %1912 = vmatprep.subr.mxu0 0.0
  %1913 = vmatpush1.xpose.msra.mxu0 0.0
  %1914 = vmatprep.subr.mxu0 0.0
  %1915 = vmatpush1.xpose.msra.mxu0 0.0
  %1916 = vmatprep.subr.mxu0 0.0
  %1917 = vmatpush1.xpose.msra.mxu0 0.0
  %1918 = vmatprep.subr.mxu0 0.0
  %1919 = vmatpush1.xpose.msra.mxu0 0.0
  %1920 = vmatprep.subr.mxu0 0.0
  %1921 = vmatpush1.xpose.msra.mxu0 0.0
  %1922 = vmatprep.subr.mxu0 0.0
  %1923 = vmatpush1.xpose.msra.mxu0 0.0
  %1924 = vmatprep.subr.mxu0 0.0
  %1925 = vmatpush1.xpose.msra.mxu0 0.0
  %1926 = vmatprep.subr.mxu0 0.0
  %1927 = vmatpush1.xpose.msra.mxu0 0.0
  %1928 = vmatprep.subr.mxu0 0.0
  %1929 = vmatpush1.xpose.msra.mxu0 %v1898
  %1930 = vmatprep.subr.mxu0 0.0
  %1931 = vmatpush1.xpose.msra.mxu0 %v1895
  %1932 = vmatprep.subr.mxu0 0.0
  %1933 = vmatpush2.xpose.msra.mxu0 0.0
  %1934 = vmatprep.subr.mxu0 0.0
  %1935 = vmatpush2.xpose.msra.mxu0 0.0
  %1936 = vmatprep.subr.mxu0 0.0
  %1937 = vmatpush2.xpose.msra.mxu0 0.0
  %1938 = vmatprep.subr.mxu0 0.0
  %1939 = vmatpush2.xpose.msra.mxu0 0.0
  %1940 = vmatprep.subr.mxu0 0.0
  %1941 = vmatpush2.xpose.msra.mxu0 0.0
  %1942 = vmatprep.subr.mxu0 0.0
  %1943 = vmatpush2.xpose.msra.mxu0 0.0
  %1944 = vmatprep.subr.mxu0 0.0
  %1945 = vmatpush2.xpose.msra.mxu0 0.0
  %1946 = vmatprep.subr.mxu0 0.0
  %1947 = vmatpush2.xpose.msra.mxu0 0.0
  %1948 = vmatprep.subr.mxu0 0.0
  %1949 = vmatpush2.xpose.msra.mxu0 0.0
  %1950 = vmatprep.subr.mxu0 0.0
  %1951 = vmatpush2.xpose.msra.mxu0 0.0
  %1952 = vmatprep.subr.mxu0 0.0
  %1953 = vmatpush2.xpose.msra.mxu0 0.0
  %1954 = vmatprep.subr.mxu0 0.0
  %1955 = vmatpush2.xpose.msra.mxu0 0.0
  %1956 = vmatprep.subr.mxu0 0.0
  %1957 = vmatpush2.xpose.msra.mxu0 0.0
  %1958 = vmatprep.subr.mxu0 0.0
  %1959 = vmatpush2.xpose.msra.mxu0 0.0
  %1960 = vmatprep.subr.mxu0 0.0
  %1961 = vmatpush2.xpose.msra.mxu0 0.0
  %1962 = vmatprep.subr.mxu0 0.0
  %1963 = vmatpush2.xpose.msra.mxu0 0.0
  %1964 = vmatprep.mubr.f32.mxu0 0.0
  %1965 = vmatmul.mubr.f32.gmra.mxu0 %v1892
  %v1966 = vpop.f32.mrf.mxu0
  %v1967 = vadd.f32 %v921, %v1966
  %v1968 = vpop.f32.mrf.mxu0
  %1969 = vdwg.mxu0
  %v1971 = vsel %vm316, %v219, 0
  %v1974 = vsel %vm316, %v821, 0
  %v1977 = vsel %vm316, %v822, 0
  %1979 = vmatprep.subr.mxu0 0.0
  %1980 = vmatpush1.xpose.msra.mxu0 0.0
  %1981 = vmatprep.subr.mxu0 0.0
  %1982 = vmatpush1.xpose.msra.mxu0 0.0
  %1983 = vmatprep.subr.mxu0 0.0
  %1984 = vmatpush1.xpose.msra.mxu0 0.0
  %1985 = vmatprep.subr.mxu0 0.0
  %1986 = vmatpush1.xpose.msra.mxu0 0.0
  %1987 = vmatprep.subr.mxu0 0.0
  %1988 = vmatpush1.xpose.msra.mxu0 0.0
  %1989 = vmatprep.subr.mxu0 0.0
  %1990 = vmatpush1.xpose.msra.mxu0 0.0
  %1991 = vmatprep.subr.mxu0 0.0
  %1992 = vmatpush1.xpose.msra.mxu0 0.0
  %1993 = vmatprep.subr.mxu0 0.0
  %1994 = vmatpush1.xpose.msra.mxu0 0.0
  %1995 = vmatprep.subr.mxu0 0.0
  %1996 = vmatpush1.xpose.msra.mxu0 0.0
  %1997 = vmatprep.subr.mxu0 0.0
  %1998 = vmatpush1.xpose.msra.mxu0 0.0
  %1999 = vmatprep.subr.mxu0 0.0
  %2000 = vmatpush1.xpose.msra.mxu0 0.0
  %2001 = vmatprep.subr.mxu0 0.0
  %2002 = vmatpush1.xpose.msra.mxu0 0.0
  %2003 = vmatprep.subr.mxu0 0.0
  %2004 = vmatpush1.xpose.msra.mxu0 0.0
  %2005 = vmatprep.subr.mxu0 0.0
  %2006 = vmatpush1.xpose.msra.mxu0 0.0
  %2007 = vmatprep.subr.mxu0 0.0
  %2008 = vmatpush1.xpose.msra.mxu0 %v1977
  %2009 = vmatprep.subr.mxu0 0.0
  %2010 = vmatpush1.xpose.msra.mxu0 %v1974
  %2011 = vmatprep.subr.mxu0 0.0
  %2012 = vmatpush2.xpose.msra.mxu0 0.0
  %2013 = vmatprep.subr.mxu0 0.0
  %2014 = vmatpush2.xpose.msra.mxu0 0.0
  %2015 = vmatprep.subr.mxu0 0.0
  %2016 = vmatpush2.xpose.msra.mxu0 0.0
  %2017 = vmatprep.subr.mxu0 0.0
  %2018 = vmatpush2.xpose.msra.mxu0 0.0
  %2019 = vmatprep.subr.mxu0 0.0
  %2020 = vmatpush2.xpose.msra.mxu0 0.0
  %2021 = vmatprep.subr.mxu0 0.0
  %2022 = vmatpush2.xpose.msra.mxu0 0.0
  %2023 = vmatprep.subr.mxu0 0.0
  %2024 = vmatpush2.xpose.msra.mxu0 0.0
  %2025 = vmatprep.subr.mxu0 0.0
  %2026 = vmatpush2.xpose.msra.mxu0 0.0
  %2027 = vmatprep.subr.mxu0 0.0
  %2028 = vmatpush2.xpose.msra.mxu0 0.0
  %2029 = vmatprep.subr.mxu0 0.0
  %2030 = vmatpush2.xpose.msra.mxu0 0.0
  %2031 = vmatprep.subr.mxu0 0.0
  %2032 = vmatpush2.xpose.msra.mxu0 0.0
  %2033 = vmatprep.subr.mxu0 0.0
  %2034 = vmatpush2.xpose.msra.mxu0 0.0
  %2035 = vmatprep.subr.mxu0 0.0
  %2036 = vmatpush2.xpose.msra.mxu0 0.0
  %2037 = vmatprep.subr.mxu0 0.0
  %2038 = vmatpush2.xpose.msra.mxu0 0.0
  %2039 = vmatprep.subr.mxu0 0.0
  %2040 = vmatpush2.xpose.msra.mxu0 0.0
  %2041 = vmatprep.subr.mxu0 0.0
  %2042 = vmatpush2.xpose.msra.mxu0 0.0
  %2043 = vmatprep.mubr.f32.mxu0 0.0
  %2044 = vmatmul.mubr.f32.gmra.mxu0 %v1971
  %v2045 = vpop.f32.mrf.mxu0
  %v2046 = vadd.f32 %v928, %v2045
  %v2047 = vpop.f32.mrf.mxu0
  %2048 = vdwg.mxu0
  %v2050 = vsel %vm316, %v216, 0
  %v2053 = vsel %vm316, %v823, 0
  %v2056 = vsel %vm316, %v824, 0
  %2058 = vmatprep.subr.mxu0 0.0
  %2059 = vmatpush1.xpose.msra.mxu0 0.0
  %2060 = vmatprep.subr.mxu0 0.0
  %2061 = vmatpush1.xpose.msra.mxu0 0.0
  %2062 = vmatprep.subr.mxu0 0.0
  %2063 = vmatpush1.xpose.msra.mxu0 0.0
  %2064 = vmatprep.subr.mxu0 0.0
  %2065 = vmatpush1.xpose.msra.mxu0 0.0
  %2066 = vmatprep.subr.mxu0 0.0
  %2067 = vmatpush1.xpose.msra.mxu0 0.0
  %2068 = vmatprep.subr.mxu0 0.0
  %2069 = vmatpush1.xpose.msra.mxu0 0.0
  %2070 = vmatprep.subr.mxu0 0.0
  %2071 = vmatpush1.xpose.msra.mxu0 0.0
  %2072 = vmatprep.subr.mxu0 0.0
  %2073 = vmatpush1.xpose.msra.mxu0 0.0
  %2074 = vmatprep.subr.mxu0 0.0
  %2075 = vmatpush1.xpose.msra.mxu0 0.0
  %2076 = vmatprep.subr.mxu0 0.0
  %2077 = vmatpush1.xpose.msra.mxu0 0.0
  %2078 = vmatprep.subr.mxu0 0.0
  %2079 = vmatpush1.xpose.msra.mxu0 0.0
  %2080 = vmatprep.subr.mxu0 0.0
  %2081 = vmatpush1.xpose.msra.mxu0 0.0
  %2082 = vmatprep.subr.mxu0 0.0
  %2083 = vmatpush1.xpose.msra.mxu0 0.0
  %2084 = vmatprep.subr.mxu0 0.0
  %2085 = vmatpush1.xpose.msra.mxu0 0.0
  %2086 = vmatprep.subr.mxu0 0.0
  %2087 = vmatpush1.xpose.msra.mxu0 %v2056
  %2088 = vmatprep.subr.mxu0 0.0
  %2089 = vmatpush1.xpose.msra.mxu0 %v2053
  %2090 = vmatprep.subr.mxu0 0.0
  %2091 = vmatpush2.xpose.msra.mxu0 0.0
  %2092 = vmatprep.subr.mxu0 0.0
  %2093 = vmatpush2.xpose.msra.mxu0 0.0
  %2094 = vmatprep.subr.mxu0 0.0
  %2095 = vmatpush2.xpose.msra.mxu0 0.0
  %2096 = vmatprep.subr.mxu0 0.0
  %2097 = vmatpush2.xpose.msra.mxu0 0.0
  %2098 = vmatprep.subr.mxu0 0.0
  %2099 = vmatpush2.xpose.msra.mxu0 0.0
  %2100 = vmatprep.subr.mxu0 0.0
  %2101 = vmatpush2.xpose.msra.mxu0 0.0
  %2102 = vmatprep.subr.mxu0 0.0
  %2103 = vmatpush2.xpose.msra.mxu0 0.0
  %2104 = vmatprep.subr.mxu0 0.0
  %2105 = vmatpush2.xpose.msra.mxu0 0.0
  %2106 = vmatprep.subr.mxu0 0.0
  %2107 = vmatpush2.xpose.msra.mxu0 0.0
  %2108 = vmatprep.subr.mxu0 0.0
  %2109 = vmatpush2.xpose.msra.mxu0 0.0
  %2110 = vmatprep.subr.mxu0 0.0
  %2111 = vmatpush2.xpose.msra.mxu0 0.0
  %2112 = vmatprep.subr.mxu0 0.0
  %2113 = vmatpush2.xpose.msra.mxu0 0.0
  %2114 = vmatprep.subr.mxu0 0.0
  %2115 = vmatpush2.xpose.msra.mxu0 0.0
  %2116 = vmatprep.subr.mxu0 0.0
  %2117 = vmatpush2.xpose.msra.mxu0 0.0
  %2118 = vmatprep.subr.mxu0 0.0
  %2119 = vmatpush2.xpose.msra.mxu0 0.0
  %2120 = vmatprep.subr.mxu0 0.0
  %2121 = vmatpush2.xpose.msra.mxu0 0.0
  %2122 = vmatprep.mubr.f32.mxu0 0.0
  %2123 = vmatmul.mubr.f32.gmra.mxu0 %v2050
  %v2124 = vpop.f32.mrf.mxu0
  %v2125 = vadd.f32 %v935, %v2124
  %v2126 = vpop.f32.mrf.mxu0
  %2127 = vdwg.mxu0
  %v2129 = vsel %vm316, %v220, 0
  %v2132 = vsel %vm316, %v825, 0
  %v2135 = vsel %vm316, %v826, 0
  %2137 = vmatprep.subr.mxu0 0.0
  %2138 = vmatpush1.xpose.msra.mxu0 0.0
  %2139 = vmatprep.subr.mxu0 0.0
  %2140 = vmatpush1.xpose.msra.mxu0 0.0
  %2141 = vmatprep.subr.mxu0 0.0
  %2142 = vmatpush1.xpose.msra.mxu0 0.0
  %2143 = vmatprep.subr.mxu0 0.0
  %2144 = vmatpush1.xpose.msra.mxu0 0.0
  %2145 = vmatprep.subr.mxu0 0.0
  %2146 = vmatpush1.xpose.msra.mxu0 0.0
  %2147 = vmatprep.subr.mxu0 0.0
  %2148 = vmatpush1.xpose.msra.mxu0 0.0
  %2149 = vmatprep.subr.mxu0 0.0
  %2150 = vmatpush1.xpose.msra.mxu0 0.0
  %2151 = vmatprep.subr.mxu0 0.0
  %2152 = vmatpush1.xpose.msra.mxu0 0.0
  %2153 = vmatprep.subr.mxu0 0.0
  %2154 = vmatpush1.xpose.msra.mxu0 0.0
  %2155 = vmatprep.subr.mxu0 0.0
  %2156 = vmatpush1.xpose.msra.mxu0 0.0
  %2157 = vmatprep.subr.mxu0 0.0
  %2158 = vmatpush1.xpose.msra.mxu0 0.0
  %2159 = vmatprep.subr.mxu0 0.0
  %2160 = vmatpush1.xpose.msra.mxu0 0.0
  %2161 = vmatprep.subr.mxu0 0.0
  %2162 = vmatpush1.xpose.msra.mxu0 0.0
  %2163 = vmatprep.subr.mxu0 0.0
  %2164 = vmatpush1.xpose.msra.mxu0 0.0
  %2165 = vmatprep.subr.mxu0 0.0
  %2166 = vmatpush1.xpose.msra.mxu0 %v2135
  %2167 = vmatprep.subr.mxu0 0.0
  %2168 = vmatpush1.xpose.msra.mxu0 %v2132
  %2169 = vmatprep.subr.mxu0 0.0
  %2170 = vmatpush2.xpose.msra.mxu0 0.0
  %2171 = vmatprep.subr.mxu0 0.0
  %2172 = vmatpush2.xpose.msra.mxu0 0.0
  %2173 = vmatprep.subr.mxu0 0.0
  %2174 = vmatpush2.xpose.msra.mxu0 0.0
  %2175 = vmatprep.subr.mxu0 0.0
  %2176 = vmatpush2.xpose.msra.mxu0 0.0
  %2177 = vmatprep.subr.mxu0 0.0
  %2178 = vmatpush2.xpose.msra.mxu0 0.0
  %2179 = vmatprep.subr.mxu0 0.0
  %2180 = vmatpush2.xpose.msra.mxu0 0.0
  %2181 = vmatprep.subr.mxu0 0.0
  %2182 = vmatpush2.xpose.msra.mxu0 0.0
  %2183 = vmatprep.subr.mxu0 0.0
  %2184 = vmatpush2.xpose.msra.mxu0 0.0
  %2185 = vmatprep.subr.mxu0 0.0
  %2186 = vmatpush2.xpose.msra.mxu0 0.0
  %2187 = vmatprep.subr.mxu0 0.0
  %2188 = vmatpush2.xpose.msra.mxu0 0.0
  %2189 = vmatprep.subr.mxu0 0.0
  %2190 = vmatpush2.xpose.msra.mxu0 0.0
  %2191 = vmatprep.subr.mxu0 0.0
  %2192 = vmatpush2.xpose.msra.mxu0 0.0
  %2193 = vmatprep.subr.mxu0 0.0
  %2194 = vmatpush2.xpose.msra.mxu0 0.0
  %2195 = vmatprep.subr.mxu0 0.0
  %2196 = vmatpush2.xpose.msra.mxu0 0.0
  %2197 = vmatprep.subr.mxu0 0.0
  %2198 = vmatpush2.xpose.msra.mxu0 0.0
  %2199 = vmatprep.subr.mxu0 0.0
  %2200 = vmatpush2.xpose.msra.mxu0 0.0
  %2201 = vmatprep.mubr.f32.mxu0 0.0
  %2202 = vmatmul.mubr.f32.gmra.mxu0 %v2129
  %v2203 = vpop.f32.mrf.mxu0
  %v2204 = vadd.f32 %v942, %v2203
  %v2205 = vpop.f32.mrf.mxu0
  %2206 = vdwg.mxu0
  %vm2207 = vcmask 125952
  %v2208 = vsel %vm2207, %v1019, -inf
  %v2209 = vrot.slane %v2208, 4
  %v2210 = vmax.f32 %v2208, %v2209
  %v2211 = vrot.slane %v2210, 2
  %v2212 = vmax.f32 %v2210, %v2211
  %v2213 = vrot.slane %v2212, 1
  %v2214 = vmax.f32 %v2212, %v2213
  %v2215 = vsel %vm2207, %v1098, -inf
  %v2216 = vrot.slane %v2215, 4
  %v2217 = vmax.f32 %v2215, %v2216
  %v2218 = vrot.slane %v2217, 2
  %v2219 = vmax.f32 %v2217, %v2218
  %v2220 = vrot.slane %v2219, 1
  %v2221 = vmax.f32 %v2219, %v2220
  %v2222 = vsel %vm2207, %v1177, -inf
  %v2223 = vrot.slane %v2222, 4
  %v2224 = vmax.f32 %v2222, %v2223
  %v2225 = vrot.slane %v2224, 2
  %v2226 = vmax.f32 %v2224, %v2225
  %v2227 = vrot.slane %v2226, 1
  %v2228 = vmax.f32 %v2226, %v2227
  %v2229 = vsel %vm2207, %v1256, -inf
  %v2230 = vrot.slane %v2229, 4
  %v2231 = vmax.f32 %v2229, %v2230
  %v2232 = vrot.slane %v2231, 2
  %v2233 = vmax.f32 %v2231, %v2232
  %v2234 = vrot.slane %v2233, 1
  %v2235 = vmax.f32 %v2233, %v2234
  %v2236 = vsel %vm2207, %v1335, -inf
  %v2237 = vrot.slane %v2236, 4
  %v2238 = vmax.f32 %v2236, %v2237
  %v2239 = vrot.slane %v2238, 2
  %v2240 = vmax.f32 %v2238, %v2239
  %v2241 = vrot.slane %v2240, 1
  %v2242 = vmax.f32 %v2240, %v2241
  %v2243 = vsel %vm2207, %v1414, -inf
  %v2244 = vrot.slane %v2243, 4
  %v2245 = vmax.f32 %v2243, %v2244
  %v2246 = vrot.slane %v2245, 2
  %v2247 = vmax.f32 %v2245, %v2246
  %v2248 = vrot.slane %v2247, 1
  %v2249 = vmax.f32 %v2247, %v2248
  %v2250 = vsel %vm2207, %v1493, -inf
  %v2251 = vrot.slane %v2250, 4
  %v2252 = vmax.f32 %v2250, %v2251
  %v2253 = vrot.slane %v2252, 2
  %v2254 = vmax.f32 %v2252, %v2253
  %v2255 = vrot.slane %v2254, 1
  %v2256 = vmax.f32 %v2254, %v2255
  %v2257 = vsel %vm2207, %v1572, -inf
  %v2258 = vrot.slane %v2257, 4
  %v2259 = vmax.f32 %v2257, %v2258
  %v2260 = vrot.slane %v2259, 2
  %v2261 = vmax.f32 %v2259, %v2260
  %v2262 = vrot.slane %v2261, 1
  %v2263 = vmax.f32 %v2261, %v2262
  %v2264 = vsel %vm2207, %v1651, -inf
  %v2265 = vrot.slane %v2264, 4
  %v2266 = vmax.f32 %v2264, %v2265
  %v2267 = vrot.slane %v2266, 2
  %v2268 = vmax.f32 %v2266, %v2267
  %v2269 = vrot.slane %v2268, 1
  %v2270 = vmax.f32 %v2268, %v2269
  %v2271 = vsel %vm2207, %v1730, -inf
  %v2272 = vrot.slane %v2271, 4
  %v2273 = vmax.f32 %v2271, %v2272
  %v2274 = vrot.slane %v2273, 2
  %v2275 = vmax.f32 %v2273, %v2274
  %v2276 = vrot.slane %v2275, 1
  %v2277 = vmax.f32 %v2275, %v2276
  %v2278 = vsel %vm2207, %v1809, -inf
  %v2279 = vrot.slane %v2278, 4
  %v2280 = vmax.f32 %v2278, %v2279
  %v2281 = vrot.slane %v2280, 2
  %v2282 = vmax.f32 %v2280, %v2281
  %v2283 = vrot.slane %v2282, 1
  %v2284 = vmax.f32 %v2282, %v2283
  %v2285 = vsel %vm2207, %v1888, -inf
  %v2286 = vrot.slane %v2285, 4
  %v2287 = vmax.f32 %v2285, %v2286
  %v2288 = vrot.slane %v2287, 2
  %v2289 = vmax.f32 %v2287, %v2288
  %v2290 = vrot.slane %v2289, 1
  %v2291 = vmax.f32 %v2289, %v2290
  %v2292 = vsel %vm2207, %v1967, -inf
  %v2293 = vrot.slane %v2292, 4
  %v2294 = vmax.f32 %v2292, %v2293
  %v2295 = vrot.slane %v2294, 2
  %v2296 = vmax.f32 %v2294, %v2295
  %v2297 = vrot.slane %v2296, 1
  %v2298 = vmax.f32 %v2296, %v2297
  %v2299 = vsel %vm2207, %v2046, -inf
  %v2300 = vrot.slane %v2299, 4
  %v2301 = vmax.f32 %v2299, %v2300
  %v2302 = vrot.slane %v2301, 2
  %v2303 = vmax.f32 %v2301, %v2302
  %v2304 = vrot.slane %v2303, 1
  %v2305 = vmax.f32 %v2303, %v2304
  %v2306 = vsel %vm2207, %v2125, -inf
  %v2307 = vrot.slane %v2306, 4
  %v2308 = vmax.f32 %v2306, %v2307
  %v2309 = vrot.slane %v2308, 2
  %v2310 = vmax.f32 %v2308, %v2309
  %v2311 = vrot.slane %v2310, 1
  %v2312 = vmax.f32 %v2310, %v2311
  %v2313 = vsel %vm2207, %v2204, -inf
  %v2314 = vrot.slane %v2313, 4
  %v2315 = vmax.f32 %v2313, %v2314
  %v2316 = vrot.slane %v2315, 2
  %v2317 = vmax.f32 %v2315, %v2316
  %v2318 = vrot.slane %v2317, 1
  %v2319 = vmax.f32 %v2317, %v2318
  %v2320 = vsub.f32 %v1019, %v2214
  %v2321 = vsub.f32 %v1098, %v2221
  %v2322 = vsub.f32 %v1177, %v2228
  %v2323 = vsub.f32 %v1256, %v2235
  %v2324 = vsub.f32 %v1335, %v2242
  %v2325 = vsub.f32 %v1414, %v2249
  %v2326 = vsub.f32 %v1493, %v2256
  %v2327 = vsub.f32 %v1572, %v2263
  %v2328 = vsub.f32 %v1651, %v2270
  %v2329 = vsub.f32 %v1730, %v2277
  %v2330 = vsub.f32 %v1809, %v2284
  %v2331 = vsub.f32 %v1888, %v2291
  %v2332 = vsub.f32 %v1967, %v2298
  %v2333 = vsub.f32 %v2046, %v2305
  %v2334 = vsub.f32 %v2125, %v2312
  %v2335 = vsub.f32 %v2204, %v2319
  %v2336 = vmul.f32 %v2320, 1.442695
  %v2337 = vpow.pop %v2336
  %v2338 = vmul.f32 %v2321, 1.442695
  %v2339 = vpow.pop %v2338
  %v2340 = vmul.f32 %v2322, 1.442695
  %v2341 = vpow.pop %v2340
  %v2342 = vmul.f32 %v2323, 1.442695
  %v2343 = vpow.pop %v2342
  %v2344 = vmul.f32 %v2324, 1.442695
  %v2345 = vpow.pop %v2344
  %v2346 = vmul.f32 %v2325, 1.442695
  %v2347 = vpow.pop %v2346
  %v2348 = vmul.f32 %v2326, 1.442695
  %v2349 = vpow.pop %v2348
  %v2350 = vmul.f32 %v2327, 1.442695
  %v2351 = vpow.pop %v2350
  %v2352 = vmul.f32 %v2328, 1.442695
  %v2353 = vpow.pop %v2352
  %v2354 = vmul.f32 %v2329, 1.442695
  %v2355 = vpow.pop %v2354
  %v2356 = vmul.f32 %v2330, 1.442695
  %v2357 = vpow.pop %v2356
  %v2358 = vmul.f32 %v2331, 1.442695
  %v2359 = vpow.pop %v2358
  %v2360 = vmul.f32 %v2332, 1.442695
  %v2361 = vpow.pop %v2360
  %v2362 = vmul.f32 %v2333, 1.442695
  %v2363 = vpow.pop %v2362
  %v2364 = vmul.f32 %v2334, 1.442695
  %v2365 = vpow.pop %v2364
  %v2366 = vmul.f32 %v2335, 1.442695
  %v2367 = vpow.pop %v2366
  %v2368 = vsel %vm2207, %v2337, 0.0
  %v2369 = vrot.slane %v2368, 4
  %v2370 = vadd.f32 %v2368, %v2369
  %v2371 = vrot.slane %v2370, 2
  %v2372 = vadd.f32 %v2370, %v2371
  %v2373 = vrot.slane %v2372, 1
  %v2374 = vadd.f32 %v2372, %v2373
  %v2375 = vsel %vm2207, %v2339, 0.0
  %v2376 = vrot.slane %v2375, 4
  %v2377 = vadd.f32 %v2375, %v2376
  %v2378 = vrot.slane %v2377, 2
  %v2379 = vadd.f32 %v2377, %v2378
  %v2380 = vrot.slane %v2379, 1
  %v2381 = vadd.f32 %v2379, %v2380
  %v2382 = vsel %vm2207, %v2341, 0.0
  %v2383 = vrot.slane %v2382, 4
  %v2384 = vadd.f32 %v2382, %v2383
  %v2385 = vrot.slane %v2384, 2
  %v2386 = vadd.f32 %v2384, %v2385
  %v2387 = vrot.slane %v2386, 1
  %v2388 = vadd.f32 %v2386, %v2387
  %v2389 = vsel %vm2207, %v2343, 0.0
  %v2390 = vrot.slane %v2389, 4
  %v2391 = vadd.f32 %v2389, %v2390
  %v2392 = vrot.slane %v2391, 2
  %v2393 = vadd.f32 %v2391, %v2392
  %v2394 = vrot.slane %v2393, 1
  %v2395 = vadd.f32 %v2393, %v2394
  %v2396 = vsel %vm2207, %v2345, 0.0
  %v2397 = vrot.slane %v2396, 4
  %v2398 = vadd.f32 %v2396, %v2397
  %v2399 = vrot.slane %v2398, 2
  %v2400 = vadd.f32 %v2398, %v2399
  %v2401 = vrot.slane %v2400, 1
  %v2402 = vadd.f32 %v2400, %v2401
  %v2403 = vsel %vm2207, %v2347, 0.0
  %v2404 = vrot.slane %v2403, 4
  %v2405 = vadd.f32 %v2403, %v2404
  %v2406 = vrot.slane %v2405, 2
  %v2407 = vadd.f32 %v2405, %v2406
  %v2408 = vrot.slane %v2407, 1
  %v2409 = vadd.f32 %v2407, %v2408
  %v2410 = vsel %vm2207, %v2349, 0.0
  %v2411 = vrot.slane %v2410, 4
  %v2412 = vadd.f32 %v2410, %v2411
  %v2413 = vrot.slane %v2412, 2
  %v2414 = vadd.f32 %v2412, %v2413
  %v2415 = vrot.slane %v2414, 1
  %v2416 = vadd.f32 %v2414, %v2415
  %v2417 = vsel %vm2207, %v2351, 0.0
  %v2418 = vrot.slane %v2417, 4
  %v2419 = vadd.f32 %v2417, %v2418
  %v2420 = vrot.slane %v2419, 2
  %v2421 = vadd.f32 %v2419, %v2420
  %v2422 = vrot.slane %v2421, 1
  %v2423 = vadd.f32 %v2421, %v2422
  %v2424 = vsel %vm2207, %v2353, 0.0
  %v2425 = vrot.slane %v2424, 4
  %v2426 = vadd.f32 %v2424, %v2425
  %v2427 = vrot.slane %v2426, 2
  %v2428 = vadd.f32 %v2426, %v2427
  %v2429 = vrot.slane %v2428, 1
  %v2430 = vadd.f32 %v2428, %v2429
  %v2431 = vsel %vm2207, %v2355, 0.0
  %v2432 = vrot.slane %v2431, 4
  %v2433 = vadd.f32 %v2431, %v2432
  %v2434 = vrot.slane %v2433, 2
  %v2435 = vadd.f32 %v2433, %v2434
  %v2436 = vrot.slane %v2435, 1
  %v2437 = vadd.f32 %v2435, %v2436
  %v2438 = vsel %vm2207, %v2357, 0.0
  %v2439 = vrot.slane %v2438, 4
  %v2440 = vadd.f32 %v2438, %v2439
  %v2441 = vrot.slane %v2440, 2
  %v2442 = vadd.f32 %v2440, %v2441
  %v2443 = vrot.slane %v2442, 1
  %v2444 = vadd.f32 %v2442, %v2443
  %v2445 = vsel %vm2207, %v2359, 0.0
  %v2446 = vrot.slane %v2445, 4
  %v2447 = vadd.f32 %v2445, %v2446
  %v2448 = vrot.slane %v2447, 2
  %v2449 = vadd.f32 %v2447, %v2448
  %v2450 = vrot.slane %v2449, 1
  %v2451 = vadd.f32 %v2449, %v2450
  %v2452 = vsel %vm2207, %v2361, 0.0
  %v2453 = vrot.slane %v2452, 4
  %v2454 = vadd.f32 %v2452, %v2453
  %v2455 = vrot.slane %v2454, 2
  %v2456 = vadd.f32 %v2454, %v2455
  %v2457 = vrot.slane %v2456, 1
  %v2458 = vadd.f32 %v2456, %v2457
  %v2459 = vsel %vm2207, %v2363, 0.0
  %v2460 = vrot.slane %v2459, 4
  %v2461 = vadd.f32 %v2459, %v2460
  %v2462 = vrot.slane %v2461, 2
  %v2463 = vadd.f32 %v2461, %v2462
  %v2464 = vrot.slane %v2463, 1
  %v2465 = vadd.f32 %v2463, %v2464
  %v2466 = vsel %vm2207, %v2365, 0.0
  %v2467 = vrot.slane %v2466, 4
  %v2468 = vadd.f32 %v2466, %v2467
  %v2469 = vrot.slane %v2468, 2
  %v2470 = vadd.f32 %v2468, %v2469
  %v2471 = vrot.slane %v2470, 1
  %v2472 = vadd.f32 %v2470, %v2471
  %v2473 = vsel %vm2207, %v2367, 0.0
  %v2474 = vrot.slane %v2473, 4
  %v2475 = vadd.f32 %v2473, %v2474
  %v2476 = vrot.slane %v2475, 2
  %v2477 = vadd.f32 %v2475, %v2476
  %v2478 = vrot.slane %v2477, 1
  %v2479 = vadd.f32 %v2477, %v2478
  %v2480 = vrcp.pop %v2374
  %v2481 = vmul.f32 %v2337, %v2480
  %v2482 = vrcp.pop %v2381
  %v2483 = vmul.f32 %v2339, %v2482
  %v2484 = vrcp.pop %v2388
  %v2485 = vmul.f32 %v2341, %v2484
  %v2486 = vrcp.pop %v2395
  %v2487 = vmul.f32 %v2343, %v2486
  %v2488 = vrcp.pop %v2402
  %v2489 = vmul.f32 %v2345, %v2488
  %v2490 = vrcp.pop %v2409
  %v2491 = vmul.f32 %v2347, %v2490
  %v2492 = vrcp.pop %v2416
  %v2493 = vmul.f32 %v2349, %v2492
  %v2494 = vrcp.pop %v2423
  %v2495 = vmul.f32 %v2351, %v2494
  %v2496 = vrcp.pop %v2430
  %v2497 = vmul.f32 %v2353, %v2496
  %v2498 = vrcp.pop %v2437
  %v2499 = vmul.f32 %v2355, %v2498
  %v2500 = vrcp.pop %v2444
  %v2501 = vmul.f32 %v2357, %v2500
  %v2502 = vrcp.pop %v2451
  %v2503 = vmul.f32 %v2359, %v2502
  %v2504 = vrcp.pop %v2458
  %v2505 = vmul.f32 %v2361, %v2504
  %v2506 = vrcp.pop %v2465
  %v2507 = vmul.f32 %v2363, %v2506
  %v2508 = vrcp.pop %v2472
  %v2509 = vmul.f32 %v2365, %v2508
  %v2510 = vrcp.pop %v2479
  %v2511 = vmul.f32 %v2367, %v2510
  %v2513 = vsel %vm316, %v2481, 0
  %2515 = vmatprep.subr.mxu0 0.0
  %2516 = vmatpush1.msra.mxu0 0.0
  %2517 = vmatprep.subr.mxu0 0.0
  %2518 = vmatpush1.msra.mxu0 0.0
  %2519 = vmatprep.subr.mxu0 0.0
  %2520 = vmatpush1.msra.mxu0 0.0
  %2521 = vmatprep.subr.mxu0 0.0
  %2522 = vmatpush1.msra.mxu0 0.0
  %2523 = vmatprep.subr.mxu0 0.0
  %2524 = vmatpush1.msra.mxu0 0.0
  %2525 = vmatprep.subr.mxu0 0.0
  %2526 = vmatpush1.msra.mxu0 0.0
  %2527 = vmatprep.subr.mxu0 0.0
  %2528 = vmatpush1.msra.mxu0 0.0
  %2529 = vmatprep.subr.mxu0 0.0
  %2530 = vmatpush1.msra.mxu0 0.0
  %2531 = vmatprep.subr.mxu0 0.0
  %2532 = vmatpush1.msra.mxu0 0.0
  %2533 = vmatprep.subr.mxu0 0.0
  %2534 = vmatpush1.msra.mxu0 0.0
  %2535 = vmatprep.subr.mxu0 0.0
  %2536 = vmatpush1.msra.mxu0 0.0
  %2537 = vmatprep.subr.mxu0 0.0
  %2538 = vmatpush1.msra.mxu0 0.0
  %2539 = vmatprep.subr.mxu0 0.0
  %2540 = vmatpush1.msra.mxu0 0.0
  %2541 = vmatprep.subr.mxu0 0.0
  %2542 = vmatpush1.msra.mxu0 0.0
  %2543 = vmatprep.subr.mxu0 0.0
  %2544 = vmatpush1.msra.mxu0 %v796
  %2545 = vmatprep.subr.mxu0 0.0
  %2546 = vmatpush1.msra.mxu0 %v795
  %2547 = vmatprep.subr.mxu0 0.0
  %2548 = vmatpush2.msra.mxu0 0.0
  %2549 = vmatprep.subr.mxu0 0.0
  %2550 = vmatpush2.msra.mxu0 0.0
  %2551 = vmatprep.subr.mxu0 0.0
  %2552 = vmatpush2.msra.mxu0 0.0
  %2553 = vmatprep.subr.mxu0 0.0
  %2554 = vmatpush2.msra.mxu0 0.0
  %2555 = vmatprep.subr.mxu0 0.0
  %2556 = vmatpush2.msra.mxu0 0.0
  %2557 = vmatprep.subr.mxu0 0.0
  %2558 = vmatpush2.msra.mxu0 0.0
  %2559 = vmatprep.subr.mxu0 0.0
  %2560 = vmatpush2.msra.mxu0 0.0
  %2561 = vmatprep.subr.mxu0 0.0
  %2562 = vmatpush2.msra.mxu0 0.0
  %2563 = vmatprep.subr.mxu0 0.0
  %2564 = vmatpush2.msra.mxu0 0.0
  %2565 = vmatprep.subr.mxu0 0.0
  %2566 = vmatpush2.msra.mxu0 0.0
  %2567 = vmatprep.subr.mxu0 0.0
  %2568 = vmatpush2.msra.mxu0 0.0
  %2569 = vmatprep.subr.mxu0 0.0
  %2570 = vmatpush2.msra.mxu0 0.0
  %2571 = vmatprep.subr.mxu0 0.0
  %2572 = vmatpush2.msra.mxu0 0.0
  %2573 = vmatprep.subr.mxu0 0.0
  %2574 = vmatpush2.msra.mxu0 0.0
  %2575 = vmatprep.subr.mxu0 0.0
  %2576 = vmatpush2.msra.mxu0 0.0
  %2577 = vmatprep.subr.mxu0 0.0
  %2578 = vmatpush2.msra.mxu0 0.0
  %2579 = vmatprep.mubr.f32.mxu0 0.0
  %2580 = vmatmul.mubr.f32.gmra.mxu0 %v2513
  %v2581 = vpop.f32.mrf.mxu0
  %v2582 = vadd.f32 0.0, %v2581
  %v2583 = vpop.f32.mrf.mxu0
  %2584 = vdwg.mxu0
  %v2586 = vsel %vm316, %v2483, 0
  %2588 = vmatprep.subr.mxu0 0.0
  %2589 = vmatpush1.msra.mxu0 0.0
  %2590 = vmatprep.subr.mxu0 0.0
  %2591 = vmatpush1.msra.mxu0 0.0
  %2592 = vmatprep.subr.mxu0 0.0
  %2593 = vmatpush1.msra.mxu0 0.0
  %2594 = vmatprep.subr.mxu0 0.0
  %2595 = vmatpush1.msra.mxu0 0.0
  %2596 = vmatprep.subr.mxu0 0.0
  %2597 = vmatpush1.msra.mxu0 0.0
  %2598 = vmatprep.subr.mxu0 0.0
  %2599 = vmatpush1.msra.mxu0 0.0
  %2600 = vmatprep.subr.mxu0 0.0
  %2601 = vmatpush1.msra.mxu0 0.0
  %2602 = vmatprep.subr.mxu0 0.0
  %2603 = vmatpush1.msra.mxu0 0.0
  %2604 = vmatprep.subr.mxu0 0.0
  %2605 = vmatpush1.msra.mxu0 0.0
  %2606 = vmatprep.subr.mxu0 0.0
  %2607 = vmatpush1.msra.mxu0 0.0
  %2608 = vmatprep.subr.mxu0 0.0
  %2609 = vmatpush1.msra.mxu0 0.0
  %2610 = vmatprep.subr.mxu0 0.0
  %2611 = vmatpush1.msra.mxu0 0.0
  %2612 = vmatprep.subr.mxu0 0.0
  %2613 = vmatpush1.msra.mxu0 0.0
  %2614 = vmatprep.subr.mxu0 0.0
  %2615 = vmatpush1.msra.mxu0 0.0
  %2616 = vmatprep.subr.mxu0 0.0
  %2617 = vmatpush1.msra.mxu0 %v798
  %2618 = vmatprep.subr.mxu0 0.0
  %2619 = vmatpush1.msra.mxu0 %v797
  %2620 = vmatprep.subr.mxu0 0.0
  %2621 = vmatpush2.msra.mxu0 0.0
  %2622 = vmatprep.subr.mxu0 0.0
  %2623 = vmatpush2.msra.mxu0 0.0
  %2624 = vmatprep.subr.mxu0 0.0
  %2625 = vmatpush2.msra.mxu0 0.0
  %2626 = vmatprep.subr.mxu0 0.0
  %2627 = vmatpush2.msra.mxu0 0.0
  %2628 = vmatprep.subr.mxu0 0.0
  %2629 = vmatpush2.msra.mxu0 0.0
  %2630 = vmatprep.subr.mxu0 0.0
  %2631 = vmatpush2.msra.mxu0 0.0
  %2632 = vmatprep.subr.mxu0 0.0
  %2633 = vmatpush2.msra.mxu0 0.0
  %2634 = vmatprep.subr.mxu0 0.0
  %2635 = vmatpush2.msra.mxu0 0.0
  %2636 = vmatprep.subr.mxu0 0.0
  %2637 = vmatpush2.msra.mxu0 0.0
  %2638 = vmatprep.subr.mxu0 0.0
  %2639 = vmatpush2.msra.mxu0 0.0
  %2640 = vmatprep.subr.mxu0 0.0
  %2641 = vmatpush2.msra.mxu0 0.0
  %2642 = vmatprep.subr.mxu0 0.0
  %2643 = vmatpush2.msra.mxu0 0.0
  %2644 = vmatprep.subr.mxu0 0.0
  %2645 = vmatpush2.msra.mxu0 0.0
  %2646 = vmatprep.subr.mxu0 0.0
  %2647 = vmatpush2.msra.mxu0 0.0
  %2648 = vmatprep.subr.mxu0 0.0
  %2649 = vmatpush2.msra.mxu0 0.0
  %2650 = vmatprep.subr.mxu0 0.0
  %2651 = vmatpush2.msra.mxu0 0.0
  %2652 = vmatprep.mubr.f32.mxu0 0.0
  %2653 = vmatmul.mubr.f32.gmra.mxu0 %v2586
  %v2654 = vpop.f32.mrf.mxu0
  %v2655 = vadd.f32 0.0, %v2654
  %v2656 = vpop.f32.mrf.mxu0
  %2657 = vdwg.mxu0
  %v2659 = vsel %vm316, %v2485, 0
  %2661 = vmatprep.subr.mxu0 0.0
  %2662 = vmatpush1.msra.mxu0 0.0
  %2663 = vmatprep.subr.mxu0 0.0
  %2664 = vmatpush1.msra.mxu0 0.0
  %2665 = vmatprep.subr.mxu0 0.0
  %2666 = vmatpush1.msra.mxu0 0.0
  %2667 = vmatprep.subr.mxu0 0.0
  %2668 = vmatpush1.msra.mxu0 0.0
  %2669 = vmatprep.subr.mxu0 0.0
  %2670 = vmatpush1.msra.mxu0 0.0
  %2671 = vmatprep.subr.mxu0 0.0
  %2672 = vmatpush1.msra.mxu0 0.0
  %2673 = vmatprep.subr.mxu0 0.0
  %2674 = vmatpush1.msra.mxu0 0.0
  %2675 = vmatprep.subr.mxu0 0.0
  %2676 = vmatpush1.msra.mxu0 0.0
  %2677 = vmatprep.subr.mxu0 0.0
  %2678 = vmatpush1.msra.mxu0 0.0
  %2679 = vmatprep.subr.mxu0 0.0
  %2680 = vmatpush1.msra.mxu0 0.0
  %2681 = vmatprep.subr.mxu0 0.0
  %2682 = vmatpush1.msra.mxu0 0.0
  %2683 = vmatprep.subr.mxu0 0.0
  %2684 = vmatpush1.msra.mxu0 0.0
  %2685 = vmatprep.subr.mxu0 0.0
  %2686 = vmatpush1.msra.mxu0 0.0
  %2687 = vmatprep.subr.mxu0 0.0
  %2688 = vmatpush1.msra.mxu0 0.0
  %2689 = vmatprep.subr.mxu0 0.0
  %2690 = vmatpush1.msra.mxu0 %v800
  %2691 = vmatprep.subr.mxu0 0.0
  %2692 = vmatpush1.msra.mxu0 %v799
  %2693 = vmatprep.subr.mxu0 0.0
  %2694 = vmatpush2.msra.mxu0 0.0
  %2695 = vmatprep.subr.mxu0 0.0
  %2696 = vmatpush2.msra.mxu0 0.0
  %2697 = vmatprep.subr.mxu0 0.0
  %2698 = vmatpush2.msra.mxu0 0.0
  %2699 = vmatprep.subr.mxu0 0.0
  %2700 = vmatpush2.msra.mxu0 0.0
  %2701 = vmatprep.subr.mxu0 0.0
  %2702 = vmatpush2.msra.mxu0 0.0
  %2703 = vmatprep.subr.mxu0 0.0
  %2704 = vmatpush2.msra.mxu0 0.0
  %2705 = vmatprep.subr.mxu0 0.0
  %2706 = vmatpush2.msra.mxu0 0.0
  %2707 = vmatprep.subr.mxu0 0.0
  %2708 = vmatpush2.msra.mxu0 0.0
  %2709 = vmatprep.subr.mxu0 0.0
  %2710 = vmatpush2.msra.mxu0 0.0
  %2711 = vmatprep.subr.mxu0 0.0
  %2712 = vmatpush2.msra.mxu0 0.0
  %2713 = vmatprep.subr.mxu0 0.0
  %2714 = vmatpush2.msra.mxu0 0.0
  %2715 = vmatprep.subr.mxu0 0.0
  %2716 = vmatpush2.msra.mxu0 0.0
  %2717 = vmatprep.subr.mxu0 0.0
  %2718 = vmatpush2.msra.mxu0 0.0
  %2719 = vmatprep.subr.mxu0 0.0
  %2720 = vmatpush2.msra.mxu0 0.0
  %2721 = vmatprep.subr.mxu0 0.0
  %2722 = vmatpush2.msra.mxu0 0.0
  %2723 = vmatprep.subr.mxu0 0.0
  %2724 = vmatpush2.msra.mxu0 0.0
  %2725 = vmatprep.mubr.f32.mxu0 0.0
  %2726 = vmatmul.mubr.f32.gmra.mxu0 %v2659
  %v2727 = vpop.f32.mrf.mxu0
  %v2728 = vadd.f32 0.0, %v2727
  %v2729 = vpop.f32.mrf.mxu0
  %2730 = vdwg.mxu0
  %v2732 = vsel %vm316, %v2487, 0
  %2734 = vmatprep.subr.mxu0 0.0
  %2735 = vmatpush1.msra.mxu0 0.0
  %2736 = vmatprep.subr.mxu0 0.0
  %2737 = vmatpush1.msra.mxu0 0.0
  %2738 = vmatprep.subr.mxu0 0.0
  %2739 = vmatpush1.msra.mxu0 0.0
  %2740 = vmatprep.subr.mxu0 0.0
  %2741 = vmatpush1.msra.mxu0 0.0
  %2742 = vmatprep.subr.mxu0 0.0
  %2743 = vmatpush1.msra.mxu0 0.0
  %2744 = vmatprep.subr.mxu0 0.0
  %2745 = vmatpush1.msra.mxu0 0.0
  %2746 = vmatprep.subr.mxu0 0.0
  %2747 = vmatpush1.msra.mxu0 0.0
  %2748 = vmatprep.subr.mxu0 0.0
  %2749 = vmatpush1.msra.mxu0 0.0
  %2750 = vmatprep.subr.mxu0 0.0
  %2751 = vmatpush1.msra.mxu0 0.0
  %2752 = vmatprep.subr.mxu0 0.0
  %2753 = vmatpush1.msra.mxu0 0.0
  %2754 = vmatprep.subr.mxu0 0.0
  %2755 = vmatpush1.msra.mxu0 0.0
  %2756 = vmatprep.subr.mxu0 0.0
  %2757 = vmatpush1.msra.mxu0 0.0
  %2758 = vmatprep.subr.mxu0 0.0
  %2759 = vmatpush1.msra.mxu0 0.0
  %2760 = vmatprep.subr.mxu0 0.0
  %2761 = vmatpush1.msra.mxu0 0.0
  %2762 = vmatprep.subr.mxu0 0.0
  %2763 = vmatpush1.msra.mxu0 %v802
  %2764 = vmatprep.subr.mxu0 0.0
  %2765 = vmatpush1.msra.mxu0 %v801
  %2766 = vmatprep.subr.mxu0 0.0
  %2767 = vmatpush2.msra.mxu0 0.0
  %2768 = vmatprep.subr.mxu0 0.0
  %2769 = vmatpush2.msra.mxu0 0.0
  %2770 = vmatprep.subr.mxu0 0.0
  %2771 = vmatpush2.msra.mxu0 0.0
  %2772 = vmatprep.subr.mxu0 0.0
  %2773 = vmatpush2.msra.mxu0 0.0
  %2774 = vmatprep.subr.mxu0 0.0
  %2775 = vmatpush2.msra.mxu0 0.0
  %2776 = vmatprep.subr.mxu0 0.0
  %2777 = vmatpush2.msra.mxu0 0.0
  %2778 = vmatprep.subr.mxu0 0.0
  %2779 = vmatpush2.msra.mxu0 0.0
  %2780 = vmatprep.subr.mxu0 0.0
  %2781 = vmatpush2.msra.mxu0 0.0
  %2782 = vmatprep.subr.mxu0 0.0
  %2783 = vmatpush2.msra.mxu0 0.0
  %2784 = vmatprep.subr.mxu0 0.0
  %2785 = vmatpush2.msra.mxu0 0.0
  %2786 = vmatprep.subr.mxu0 0.0
  %2787 = vmatpush2.msra.mxu0 0.0
  %2788 = vmatprep.subr.mxu0 0.0
  %2789 = vmatpush2.msra.mxu0 0.0
  %2790 = vmatprep.subr.mxu0 0.0
  %2791 = vmatpush2.msra.mxu0 0.0
  %2792 = vmatprep.subr.mxu0 0.0
  %2793 = vmatpush2.msra.mxu0 0.0
  %2794 = vmatprep.subr.mxu0 0.0
  %2795 = vmatpush2.msra.mxu0 0.0
  %2796 = vmatprep.subr.mxu0 0.0
  %2797 = vmatpush2.msra.mxu0 0.0
  %2798 = vmatprep.mubr.f32.mxu0 0.0
  %2799 = vmatmul.mubr.f32.gmra.mxu0 %v2732
  %v2800 = vpop.f32.mrf.mxu0
  %v2801 = vadd.f32 0.0, %v2800
  %v2802 = vpop.f32.mrf.mxu0
  %2803 = vdwg.mxu0
  %v2805 = vsel %vm316, %v2489, 0
  %2807 = vmatprep.subr.mxu0 0.0
  %2808 = vmatpush1.msra.mxu0 0.0
  %2809 = vmatprep.subr.mxu0 0.0
  %2810 = vmatpush1.msra.mxu0 0.0
  %2811 = vmatprep.subr.mxu0 0.0
  %2812 = vmatpush1.msra.mxu0 0.0
  %2813 = vmatprep.subr.mxu0 0.0
  %2814 = vmatpush1.msra.mxu0 0.0
  %2815 = vmatprep.subr.mxu0 0.0
  %2816 = vmatpush1.msra.mxu0 0.0
  %2817 = vmatprep.subr.mxu0 0.0
  %2818 = vmatpush1.msra.mxu0 0.0
  %2819 = vmatprep.subr.mxu0 0.0
  %2820 = vmatpush1.msra.mxu0 0.0
  %2821 = vmatprep.subr.mxu0 0.0
  %2822 = vmatpush1.msra.mxu0 0.0
  %2823 = vmatprep.subr.mxu0 0.0
  %2824 = vmatpush1.msra.mxu0 0.0
  %2825 = vmatprep.subr.mxu0 0.0
  %2826 = vmatpush1.msra.mxu0 0.0
  %2827 = vmatprep.subr.mxu0 0.0
  %2828 = vmatpush1.msra.mxu0 0.0
  %2829 = vmatprep.subr.mxu0 0.0
  %2830 = vmatpush1.msra.mxu0 0.0
  %2831 = vmatprep.subr.mxu0 0.0
  %2832 = vmatpush1.msra.mxu0 0.0
  %2833 = vmatprep.subr.mxu0 0.0
  %2834 = vmatpush1.msra.mxu0 0.0
  %2835 = vmatprep.subr.mxu0 0.0
  %2836 = vmatpush1.msra.mxu0 %v804
  %2837 = vmatprep.subr.mxu0 0.0
  %2838 = vmatpush1.msra.mxu0 %v803
  %2839 = vmatprep.subr.mxu0 0.0
  %2840 = vmatpush2.msra.mxu0 0.0
  %2841 = vmatprep.subr.mxu0 0.0
  %2842 = vmatpush2.msra.mxu0 0.0
  %2843 = vmatprep.subr.mxu0 0.0
  %2844 = vmatpush2.msra.mxu0 0.0
  %2845 = vmatprep.subr.mxu0 0.0
  %2846 = vmatpush2.msra.mxu0 0.0
  %2847 = vmatprep.subr.mxu0 0.0
  %2848 = vmatpush2.msra.mxu0 0.0
  %2849 = vmatprep.subr.mxu0 0.0
  %2850 = vmatpush2.msra.mxu0 0.0
  %2851 = vmatprep.subr.mxu0 0.0
  %2852 = vmatpush2.msra.mxu0 0.0
  %2853 = vmatprep.subr.mxu0 0.0
  %2854 = vmatpush2.msra.mxu0 0.0
  %2855 = vmatprep.subr.mxu0 0.0
  %2856 = vmatpush2.msra.mxu0 0.0
  %2857 = vmatprep.subr.mxu0 0.0
  %2858 = vmatpush2.msra.mxu0 0.0
  %2859 = vmatprep.subr.mxu0 0.0
  %2860 = vmatpush2.msra.mxu0 0.0
  %2861 = vmatprep.subr.mxu0 0.0
  %2862 = vmatpush2.msra.mxu0 0.0
  %2863 = vmatprep.subr.mxu0 0.0
  %2864 = vmatpush2.msra.mxu0 0.0
  %2865 = vmatprep.subr.mxu0 0.0
  %2866 = vmatpush2.msra.mxu0 0.0
  %2867 = vmatprep.subr.mxu0 0.0
  %2868 = vmatpush2.msra.mxu0 0.0
  %2869 = vmatprep.subr.mxu0 0.0
  %2870 = vmatpush2.msra.mxu0 0.0
  %2871 = vmatprep.mubr.f32.mxu0 0.0
  %2872 = vmatmul.mubr.f32.gmra.mxu0 %v2805
  %v2873 = vpop.f32.mrf.mxu0
  %v2874 = vadd.f32 0.0, %v2873
  %v2875 = vpop.f32.mrf.mxu0
  %2876 = vdwg.mxu0
  %v2878 = vsel %vm316, %v2491, 0
  %2880 = vmatprep.subr.mxu0 0.0
  %2881 = vmatpush1.msra.mxu0 0.0
  %2882 = vmatprep.subr.mxu0 0.0
  %2883 = vmatpush1.msra.mxu0 0.0
  %2884 = vmatprep.subr.mxu0 0.0
  %2885 = vmatpush1.msra.mxu0 0.0
  %2886 = vmatprep.subr.mxu0 0.0
  %2887 = vmatpush1.msra.mxu0 0.0
  %2888 = vmatprep.subr.mxu0 0.0
  %2889 = vmatpush1.msra.mxu0 0.0
  %2890 = vmatprep.subr.mxu0 0.0
  %2891 = vmatpush1.msra.mxu0 0.0
  %2892 = vmatprep.subr.mxu0 0.0
  %2893 = vmatpush1.msra.mxu0 0.0
  %2894 = vmatprep.subr.mxu0 0.0
  %2895 = vmatpush1.msra.mxu0 0.0
  %2896 = vmatprep.subr.mxu0 0.0
  %2897 = vmatpush1.msra.mxu0 0.0
  %2898 = vmatprep.subr.mxu0 0.0
  %2899 = vmatpush1.msra.mxu0 0.0
  %2900 = vmatprep.subr.mxu0 0.0
  %2901 = vmatpush1.msra.mxu0 0.0
  %2902 = vmatprep.subr.mxu0 0.0
  %2903 = vmatpush1.msra.mxu0 0.0
  %2904 = vmatprep.subr.mxu0 0.0
  %2905 = vmatpush1.msra.mxu0 0.0
  %2906 = vmatprep.subr.mxu0 0.0
  %2907 = vmatpush1.msra.mxu0 0.0
  %2908 = vmatprep.subr.mxu0 0.0
  %2909 = vmatpush1.msra.mxu0 %v806
  %2910 = vmatprep.subr.mxu0 0.0
  %2911 = vmatpush1.msra.mxu0 %v805
  %2912 = vmatprep.subr.mxu0 0.0
  %2913 = vmatpush2.msra.mxu0 0.0
  %2914 = vmatprep.subr.mxu0 0.0
  %2915 = vmatpush2.msra.mxu0 0.0
  %2916 = vmatprep.subr.mxu0 0.0
  %2917 = vmatpush2.msra.mxu0 0.0
  %2918 = vmatprep.subr.mxu0 0.0
  %2919 = vmatpush2.msra.mxu0 0.0
  %2920 = vmatprep.subr.mxu0 0.0
  %2921 = vmatpush2.msra.mxu0 0.0
  %2922 = vmatprep.subr.mxu0 0.0
  %2923 = vmatpush2.msra.mxu0 0.0
  %2924 = vmatprep.subr.mxu0 0.0
  %2925 = vmatpush2.msra.mxu0 0.0
  %2926 = vmatprep.subr.mxu0 0.0
  %2927 = vmatpush2.msra.mxu0 0.0
  %2928 = vmatprep.subr.mxu0 0.0
  %2929 = vmatpush2.msra.mxu0 0.0
  %2930 = vmatprep.subr.mxu0 0.0
  %2931 = vmatpush2.msra.mxu0 0.0
  %2932 = vmatprep.subr.mxu0 0.0
  %2933 = vmatpush2.msra.mxu0 0.0
  %2934 = vmatprep.subr.mxu0 0.0
  %2935 = vmatpush2.msra.mxu0 0.0
  %2936 = vmatprep.subr.mxu0 0.0
  %2937 = vmatpush2.msra.mxu0 0.0
  %2938 = vmatprep.subr.mxu0 0.0
  %2939 = vmatpush2.msra.mxu0 0.0
  %2940 = vmatprep.subr.mxu0 0.0
  %2941 = vmatpush2.msra.mxu0 0.0
  %2942 = vmatprep.subr.mxu0 0.0
  %2943 = vmatpush2.msra.mxu0 0.0
  %2944 = vmatprep.mubr.f32.mxu0 0.0
  %2945 = vmatmul.mubr.f32.gmra.mxu0 %v2878
  %v2946 = vpop.f32.mrf.mxu0
  %v2947 = vadd.f32 0.0, %v2946
  %v2948 = vpop.f32.mrf.mxu0
  %2949 = vdwg.mxu0
  %v2951 = vsel %vm316, %v2493, 0
  %2953 = vmatprep.subr.mxu0 0.0
  %2954 = vmatpush1.msra.mxu0 0.0
  %2955 = vmatprep.subr.mxu0 0.0
  %2956 = vmatpush1.msra.mxu0 0.0
  %2957 = vmatprep.subr.mxu0 0.0
  %2958 = vmatpush1.msra.mxu0 0.0
  %2959 = vmatprep.subr.mxu0 0.0
  %2960 = vmatpush1.msra.mxu0 0.0
  %2961 = vmatprep.subr.mxu0 0.0
  %2962 = vmatpush1.msra.mxu0 0.0
  %2963 = vmatprep.subr.mxu0 0.0
  %2964 = vmatpush1.msra.mxu0 0.0
  %2965 = vmatprep.subr.mxu0 0.0
  %2966 = vmatpush1.msra.mxu0 0.0
  %2967 = vmatprep.subr.mxu0 0.0
  %2968 = vmatpush1.msra.mxu0 0.0
  %2969 = vmatprep.subr.mxu0 0.0
  %2970 = vmatpush1.msra.mxu0 0.0
  %2971 = vmatprep.subr.mxu0 0.0
  %2972 = vmatpush1.msra.mxu0 0.0
  %2973 = vmatprep.subr.mxu0 0.0
  %2974 = vmatpush1.msra.mxu0 0.0
  %2975 = vmatprep.subr.mxu0 0.0
  %2976 = vmatpush1.msra.mxu0 0.0
  %2977 = vmatprep.subr.mxu0 0.0
  %2978 = vmatpush1.msra.mxu0 0.0
  %2979 = vmatprep.subr.mxu0 0.0
  %2980 = vmatpush1.msra.mxu0 0.0
  %2981 = vmatprep.subr.mxu0 0.0
  %2982 = vmatpush1.msra.mxu0 %v808
  %2983 = vmatprep.subr.mxu0 0.0
  %2984 = vmatpush1.msra.mxu0 %v807
  %2985 = vmatprep.subr.mxu0 0.0
  %2986 = vmatpush2.msra.mxu0 0.0
  %2987 = vmatprep.subr.mxu0 0.0
  %2988 = vmatpush2.msra.mxu0 0.0
  %2989 = vmatprep.subr.mxu0 0.0
  %2990 = vmatpush2.msra.mxu0 0.0
  %2991 = vmatprep.subr.mxu0 0.0
  %2992 = vmatpush2.msra.mxu0 0.0
  %2993 = vmatprep.subr.mxu0 0.0
  %2994 = vmatpush2.msra.mxu0 0.0
  %2995 = vmatprep.subr.mxu0 0.0
  %2996 = vmatpush2.msra.mxu0 0.0
  %2997 = vmatprep.subr.mxu0 0.0
  %2998 = vmatpush2.msra.mxu0 0.0
  %2999 = vmatprep.subr.mxu0 0.0
  %3000 = vmatpush2.msra.mxu0 0.0
  %3001 = vmatprep.subr.mxu0 0.0
  %3002 = vmatpush2.msra.mxu0 0.0
  %3003 = vmatprep.subr.mxu0 0.0
  %3004 = vmatpush2.msra.mxu0 0.0
  %3005 = vmatprep.subr.mxu0 0.0
  %3006 = vmatpush2.msra.mxu0 0.0
  %3007 = vmatprep.subr.mxu0 0.0
  %3008 = vmatpush2.msra.mxu0 0.0
  %3009 = vmatprep.subr.mxu0 0.0
  %3010 = vmatpush2.msra.mxu0 0.0
  %3011 = vmatprep.subr.mxu0 0.0
  %3012 = vmatpush2.msra.mxu0 0.0
  %3013 = vmatprep.subr.mxu0 0.0
  %3014 = vmatpush2.msra.mxu0 0.0
  %3015 = vmatprep.subr.mxu0 0.0
  %3016 = vmatpush2.msra.mxu0 0.0
  %3017 = vmatprep.mubr.f32.mxu0 0.0
  %3018 = vmatmul.mubr.f32.gmra.mxu0 %v2951
  %v3019 = vpop.f32.mrf.mxu0
  %v3020 = vadd.f32 0.0, %v3019
  %v3021 = vpop.f32.mrf.mxu0
  %3022 = vdwg.mxu0
  %v3024 = vsel %vm316, %v2495, 0
  %3026 = vmatprep.subr.mxu0 0.0
  %3027 = vmatpush1.msra.mxu0 0.0
  %3028 = vmatprep.subr.mxu0 0.0
  %3029 = vmatpush1.msra.mxu0 0.0
  %3030 = vmatprep.subr.mxu0 0.0
  %3031 = vmatpush1.msra.mxu0 0.0
  %3032 = vmatprep.subr.mxu0 0.0
  %3033 = vmatpush1.msra.mxu0 0.0
  %3034 = vmatprep.subr.mxu0 0.0
  %3035 = vmatpush1.msra.mxu0 0.0
  %3036 = vmatprep.subr.mxu0 0.0
  %3037 = vmatpush1.msra.mxu0 0.0
  %3038 = vmatprep.subr.mxu0 0.0
  %3039 = vmatpush1.msra.mxu0 0.0
  %3040 = vmatprep.subr.mxu0 0.0
  %3041 = vmatpush1.msra.mxu0 0.0
  %3042 = vmatprep.subr.mxu0 0.0
  %3043 = vmatpush1.msra.mxu0 0.0
  %3044 = vmatprep.subr.mxu0 0.0
  %3045 = vmatpush1.msra.mxu0 0.0
  %3046 = vmatprep.subr.mxu0 0.0
  %3047 = vmatpush1.msra.mxu0 0.0
  %3048 = vmatprep.subr.mxu0 0.0
  %3049 = vmatpush1.msra.mxu0 0.0
  %3050 = vmatprep.subr.mxu0 0.0
  %3051 = vmatpush1.msra.mxu0 0.0
  %3052 = vmatprep.subr.mxu0 0.0
  %3053 = vmatpush1.msra.mxu0 0.0
  %3054 = vmatprep.subr.mxu0 0.0
  %3055 = vmatpush1.msra.mxu0 %v810
  %3056 = vmatprep.subr.mxu0 0.0
  %3057 = vmatpush1.msra.mxu0 %v809
  %3058 = vmatprep.subr.mxu0 0.0
  %3059 = vmatpush2.msra.mxu0 0.0
  %3060 = vmatprep.subr.mxu0 0.0
  %3061 = vmatpush2.msra.mxu0 0.0
  %3062 = vmatprep.subr.mxu0 0.0
  %3063 = vmatpush2.msra.mxu0 0.0
  %3064 = vmatprep.subr.mxu0 0.0
  %3065 = vmatpush2.msra.mxu0 0.0
  %3066 = vmatprep.subr.mxu0 0.0
  %3067 = vmatpush2.msra.mxu0 0.0
  %3068 = vmatprep.subr.mxu0 0.0
  %3069 = vmatpush2.msra.mxu0 0.0
  %3070 = vmatprep.subr.mxu0 0.0
  %3071 = vmatpush2.msra.mxu0 0.0
  %3072 = vmatprep.subr.mxu0 0.0
  %3073 = vmatpush2.msra.mxu0 0.0
  %3074 = vmatprep.subr.mxu0 0.0
  %3075 = vmatpush2.msra.mxu0 0.0
  %3076 = vmatprep.subr.mxu0 0.0
  %3077 = vmatpush2.msra.mxu0 0.0
  %3078 = vmatprep.subr.mxu0 0.0
  %3079 = vmatpush2.msra.mxu0 0.0
  %3080 = vmatprep.subr.mxu0 0.0
  %3081 = vmatpush2.msra.mxu0 0.0
  %3082 = vmatprep.subr.mxu0 0.0
  %3083 = vmatpush2.msra.mxu0 0.0
  %3084 = vmatprep.subr.mxu0 0.0
  %3085 = vmatpush2.msra.mxu0 0.0
  %3086 = vmatprep.subr.mxu0 0.0
  %3087 = vmatpush2.msra.mxu0 0.0
  %3088 = vmatprep.subr.mxu0 0.0
  %3089 = vmatpush2.msra.mxu0 0.0
  %3090 = vmatprep.mubr.f32.mxu0 0.0
  %3091 = vmatmul.mubr.f32.gmra.mxu0 %v3024
  %v3092 = vpop.f32.mrf.mxu0
  %v3093 = vadd.f32 0.0, %v3092
  %v3094 = vpop.f32.mrf.mxu0
  %3095 = vdwg.mxu0
  %v3097 = vsel %vm316, %v2497, 0
  %3099 = vmatprep.subr.mxu0 0.0
  %3100 = vmatpush1.msra.mxu0 0.0
  %3101 = vmatprep.subr.mxu0 0.0
  %3102 = vmatpush1.msra.mxu0 0.0
  %3103 = vmatprep.subr.mxu0 0.0
  %3104 = vmatpush1.msra.mxu0 0.0
  %3105 = vmatprep.subr.mxu0 0.0
  %3106 = vmatpush1.msra.mxu0 0.0
  %3107 = vmatprep.subr.mxu0 0.0
  %3108 = vmatpush1.msra.mxu0 0.0
  %3109 = vmatprep.subr.mxu0 0.0
  %3110 = vmatpush1.msra.mxu0 0.0
  %3111 = vmatprep.subr.mxu0 0.0
  %3112 = vmatpush1.msra.mxu0 0.0
  %3113 = vmatprep.subr.mxu0 0.0
  %3114 = vmatpush1.msra.mxu0 0.0
  %3115 = vmatprep.subr.mxu0 0.0
  %3116 = vmatpush1.msra.mxu0 0.0
  %3117 = vmatprep.subr.mxu0 0.0
  %3118 = vmatpush1.msra.mxu0 0.0
  %3119 = vmatprep.subr.mxu0 0.0
  %3120 = vmatpush1.msra.mxu0 0.0
  %3121 = vmatprep.subr.mxu0 0.0
  %3122 = vmatpush1.msra.mxu0 0.0
  %3123 = vmatprep.subr.mxu0 0.0
  %3124 = vmatpush1.msra.mxu0 0.0
  %3125 = vmatprep.subr.mxu0 0.0
  %3126 = vmatpush1.msra.mxu0 0.0
  %3127 = vmatprep.subr.mxu0 0.0
  %3128 = vmatpush1.msra.mxu0 %v812
  %3129 = vmatprep.subr.mxu0 0.0
  %3130 = vmatpush1.msra.mxu0 %v811
  %3131 = vmatprep.subr.mxu0 0.0
  %3132 = vmatpush2.msra.mxu0 0.0
  %3133 = vmatprep.subr.mxu0 0.0
  %3134 = vmatpush2.msra.mxu0 0.0
  %3135 = vmatprep.subr.mxu0 0.0
  %3136 = vmatpush2.msra.mxu0 0.0
  %3137 = vmatprep.subr.mxu0 0.0
  %3138 = vmatpush2.msra.mxu0 0.0
  %3139 = vmatprep.subr.mxu0 0.0
  %3140 = vmatpush2.msra.mxu0 0.0
  %3141 = vmatprep.subr.mxu0 0.0
  %3142 = vmatpush2.msra.mxu0 0.0
  %3143 = vmatprep.subr.mxu0 0.0
  %3144 = vmatpush2.msra.mxu0 0.0
  %3145 = vmatprep.subr.mxu0 0.0
  %3146 = vmatpush2.msra.mxu0 0.0
  %3147 = vmatprep.subr.mxu0 0.0
  %3148 = vmatpush2.msra.mxu0 0.0
  %3149 = vmatprep.subr.mxu0 0.0
  %3150 = vmatpush2.msra.mxu0 0.0
  %3151 = vmatprep.subr.mxu0 0.0
  %3152 = vmatpush2.msra.mxu0 0.0
  %3153 = vmatprep.subr.mxu0 0.0
  %3154 = vmatpush2.msra.mxu0 0.0
  %3155 = vmatprep.subr.mxu0 0.0
  %3156 = vmatpush2.msra.mxu0 0.0
  %3157 = vmatprep.subr.mxu0 0.0
  %3158 = vmatpush2.msra.mxu0 0.0
  %3159 = vmatprep.subr.mxu0 0.0
  %3160 = vmatpush2.msra.mxu0 0.0
  %3161 = vmatprep.subr.mxu0 0.0
  %3162 = vmatpush2.msra.mxu0 0.0
  %3163 = vmatprep.mubr.f32.mxu0 0.0
  %3164 = vmatmul.mubr.f32.gmra.mxu0 %v3097
  %v3165 = vpop.f32.mrf.mxu0
  %v3166 = vadd.f32 0.0, %v3165
  %v3167 = vpop.f32.mrf.mxu0
  %3168 = vdwg.mxu0
  %v3170 = vsel %vm316, %v2499, 0
  %3172 = vmatprep.subr.mxu0 0.0
  %3173 = vmatpush1.msra.mxu0 0.0
  %3174 = vmatprep.subr.mxu0 0.0
  %3175 = vmatpush1.msra.mxu0 0.0
  %3176 = vmatprep.subr.mxu0 0.0
  %3177 = vmatpush1.msra.mxu0 0.0
  %3178 = vmatprep.subr.mxu0 0.0
  %3179 = vmatpush1.msra.mxu0 0.0
  %3180 = vmatprep.subr.mxu0 0.0
  %3181 = vmatpush1.msra.mxu0 0.0
  %3182 = vmatprep.subr.mxu0 0.0
  %3183 = vmatpush1.msra.mxu0 0.0
  %3184 = vmatprep.subr.mxu0 0.0
  %3185 = vmatpush1.msra.mxu0 0.0
  %3186 = vmatprep.subr.mxu0 0.0
  %3187 = vmatpush1.msra.mxu0 0.0
  %3188 = vmatprep.subr.mxu0 0.0
  %3189 = vmatpush1.msra.mxu0 0.0
  %3190 = vmatprep.subr.mxu0 0.0
  %3191 = vmatpush1.msra.mxu0 0.0
  %3192 = vmatprep.subr.mxu0 0.0
  %3193 = vmatpush1.msra.mxu0 0.0
  %3194 = vmatprep.subr.mxu0 0.0
  %3195 = vmatpush1.msra.mxu0 0.0
  %3196 = vmatprep.subr.mxu0 0.0
  %3197 = vmatpush1.msra.mxu0 0.0
  %3198 = vmatprep.subr.mxu0 0.0
  %3199 = vmatpush1.msra.mxu0 0.0
  %3200 = vmatprep.subr.mxu0 0.0
  %3201 = vmatpush1.msra.mxu0 %v814
  %3202 = vmatprep.subr.mxu0 0.0
  %3203 = vmatpush1.msra.mxu0 %v813
  %3204 = vmatprep.subr.mxu0 0.0
  %3205 = vmatpush2.msra.mxu0 0.0
  %3206 = vmatprep.subr.mxu0 0.0
  %3207 = vmatpush2.msra.mxu0 0.0
  %3208 = vmatprep.subr.mxu0 0.0
  %3209 = vmatpush2.msra.mxu0 0.0
  %3210 = vmatprep.subr.mxu0 0.0
  %3211 = vmatpush2.msra.mxu0 0.0
  %3212 = vmatprep.subr.mxu0 0.0
  %3213 = vmatpush2.msra.mxu0 0.0
  %3214 = vmatprep.subr.mxu0 0.0
  %3215 = vmatpush2.msra.mxu0 0.0
  %3216 = vmatprep.subr.mxu0 0.0
  %3217 = vmatpush2.msra.mxu0 0.0
  %3218 = vmatprep.subr.mxu0 0.0
  %3219 = vmatpush2.msra.mxu0 0.0
  %3220 = vmatprep.subr.mxu0 0.0
  %3221 = vmatpush2.msra.mxu0 0.0
  %3222 = vmatprep.subr.mxu0 0.0
  %3223 = vmatpush2.msra.mxu0 0.0
  %3224 = vmatprep.subr.mxu0 0.0
  %3225 = vmatpush2.msra.mxu0 0.0
  %3226 = vmatprep.subr.mxu0 0.0
  %3227 = vmatpush2.msra.mxu0 0.0
  %3228 = vmatprep.subr.mxu0 0.0
  %3229 = vmatpush2.msra.mxu0 0.0
  %3230 = vmatprep.subr.mxu0 0.0
  %3231 = vmatpush2.msra.mxu0 0.0
  %3232 = vmatprep.subr.mxu0 0.0
  %3233 = vmatpush2.msra.mxu0 0.0
  %3234 = vmatprep.subr.mxu0 0.0
  %3235 = vmatpush2.msra.mxu0 0.0
  %3236 = vmatprep.mubr.f32.mxu0 0.0
  %3237 = vmatmul.mubr.f32.gmra.mxu0 %v3170
  %v3238 = vpop.f32.mrf.mxu0
  %v3239 = vadd.f32 0.0, %v3238
  %v3240 = vpop.f32.mrf.mxu0
  %3241 = vdwg.mxu0
  %v3243 = vsel %vm316, %v2501, 0
  %3245 = vmatprep.subr.mxu0 0.0
  %3246 = vmatpush1.msra.mxu0 0.0
  %3247 = vmatprep.subr.mxu0 0.0
  %3248 = vmatpush1.msra.mxu0 0.0
  %3249 = vmatprep.subr.mxu0 0.0
  %3250 = vmatpush1.msra.mxu0 0.0
  %3251 = vmatprep.subr.mxu0 0.0
  %3252 = vmatpush1.msra.mxu0 0.0
  %3253 = vmatprep.subr.mxu0 0.0
  %3254 = vmatpush1.msra.mxu0 0.0
  %3255 = vmatprep.subr.mxu0 0.0
  %3256 = vmatpush1.msra.mxu0 0.0
  %3257 = vmatprep.subr.mxu0 0.0
  %3258 = vmatpush1.msra.mxu0 0.0
  %3259 = vmatprep.subr.mxu0 0.0
  %3260 = vmatpush1.msra.mxu0 0.0
  %3261 = vmatprep.subr.mxu0 0.0
  %3262 = vmatpush1.msra.mxu0 0.0
  %3263 = vmatprep.subr.mxu0 0.0
  %3264 = vmatpush1.msra.mxu0 0.0
  %3265 = vmatprep.subr.mxu0 0.0
  %3266 = vmatpush1.msra.mxu0 0.0
  %3267 = vmatprep.subr.mxu0 0.0
  %3268 = vmatpush1.msra.mxu0 0.0
  %3269 = vmatprep.subr.mxu0 0.0
  %3270 = vmatpush1.msra.mxu0 0.0
  %3271 = vmatprep.subr.mxu0 0.0
  %3272 = vmatpush1.msra.mxu0 0.0
  %3273 = vmatprep.subr.mxu0 0.0
  %3274 = vmatpush1.msra.mxu0 %v816
  %3275 = vmatprep.subr.mxu0 0.0
  %3276 = vmatpush1.msra.mxu0 %v815
  %3277 = vmatprep.subr.mxu0 0.0
  %3278 = vmatpush2.msra.mxu0 0.0
  %3279 = vmatprep.subr.mxu0 0.0
  %3280 = vmatpush2.msra.mxu0 0.0
  %3281 = vmatprep.subr.mxu0 0.0
  %3282 = vmatpush2.msra.mxu0 0.0
  %3283 = vmatprep.subr.mxu0 0.0
  %3284 = vmatpush2.msra.mxu0 0.0
  %3285 = vmatprep.subr.mxu0 0.0
  %3286 = vmatpush2.msra.mxu0 0.0
  %3287 = vmatprep.subr.mxu0 0.0
  %3288 = vmatpush2.msra.mxu0 0.0
  %3289 = vmatprep.subr.mxu0 0.0
  %3290 = vmatpush2.msra.mxu0 0.0
  %3291 = vmatprep.subr.mxu0 0.0
  %3292 = vmatpush2.msra.mxu0 0.0
  %3293 = vmatprep.subr.mxu0 0.0
  %3294 = vmatpush2.msra.mxu0 0.0
  %3295 = vmatprep.subr.mxu0 0.0
  %3296 = vmatpush2.msra.mxu0 0.0
  %3297 = vmatprep.subr.mxu0 0.0
  %3298 = vmatpush2.msra.mxu0 0.0
  %3299 = vmatprep.subr.mxu0 0.0
  %3300 = vmatpush2.msra.mxu0 0.0
  %3301 = vmatprep.subr.mxu0 0.0
  %3302 = vmatpush2.msra.mxu0 0.0
  %3303 = vmatprep.subr.mxu0 0.0
  %3304 = vmatpush2.msra.mxu0 0.0
  %3305 = vmatprep.subr.mxu0 0.0
  %3306 = vmatpush2.msra.mxu0 0.0
  %3307 = vmatprep.subr.mxu0 0.0
  %3308 = vmatpush2.msra.mxu0 0.0
  %3309 = vmatprep.mubr.f32.mxu0 0.0
  %3310 = vmatmul.mubr.f32.gmra.mxu0 %v3243
  %v3311 = vpop.f32.mrf.mxu0
  %v3312 = vadd.f32 0.0, %v3311
  %v3313 = vpop.f32.mrf.mxu0
  %3314 = vdwg.mxu0
  %v3316 = vsel %vm316, %v2503, 0
  %3318 = vmatprep.subr.mxu0 0.0
  %3319 = vmatpush1.msra.mxu0 0.0
  %3320 = vmatprep.subr.mxu0 0.0
  %3321 = vmatpush1.msra.mxu0 0.0
  %3322 = vmatprep.subr.mxu0 0.0
  %3323 = vmatpush1.msra.mxu0 0.0
  %3324 = vmatprep.subr.mxu0 0.0
  %3325 = vmatpush1.msra.mxu0 0.0
  %3326 = vmatprep.subr.mxu0 0.0
  %3327 = vmatpush1.msra.mxu0 0.0
  %3328 = vmatprep.subr.mxu0 0.0
  %3329 = vmatpush1.msra.mxu0 0.0
  %3330 = vmatprep.subr.mxu0 0.0
  %3331 = vmatpush1.msra.mxu0 0.0
  %3332 = vmatprep.subr.mxu0 0.0
  %3333 = vmatpush1.msra.mxu0 0.0
  %3334 = vmatprep.subr.mxu0 0.0
  %3335 = vmatpush1.msra.mxu0 0.0
  %3336 = vmatprep.subr.mxu0 0.0
  %3337 = vmatpush1.msra.mxu0 0.0
  %3338 = vmatprep.subr.mxu0 0.0
  %3339 = vmatpush1.msra.mxu0 0.0
  %3340 = vmatprep.subr.mxu0 0.0
  %3341 = vmatpush1.msra.mxu0 0.0
  %3342 = vmatprep.subr.mxu0 0.0
  %3343 = vmatpush1.msra.mxu0 0.0
  %3344 = vmatprep.subr.mxu0 0.0
  %3345 = vmatpush1.msra.mxu0 0.0
  %3346 = vmatprep.subr.mxu0 0.0
  %3347 = vmatpush1.msra.mxu0 %v818
  %3348 = vmatprep.subr.mxu0 0.0
  %3349 = vmatpush1.msra.mxu0 %v817
  %3350 = vmatprep.subr.mxu0 0.0
  %3351 = vmatpush2.msra.mxu0 0.0
  %3352 = vmatprep.subr.mxu0 0.0
  %3353 = vmatpush2.msra.mxu0 0.0
  %3354 = vmatprep.subr.mxu0 0.0
  %3355 = vmatpush2.msra.mxu0 0.0
  %3356 = vmatprep.subr.mxu0 0.0
  %3357 = vmatpush2.msra.mxu0 0.0
  %3358 = vmatprep.subr.mxu0 0.0
  %3359 = vmatpush2.msra.mxu0 0.0
  %3360 = vmatprep.subr.mxu0 0.0
  %3361 = vmatpush2.msra.mxu0 0.0
  %3362 = vmatprep.subr.mxu0 0.0
  %3363 = vmatpush2.msra.mxu0 0.0
  %3364 = vmatprep.subr.mxu0 0.0
  %3365 = vmatpush2.msra.mxu0 0.0
  %3366 = vmatprep.subr.mxu0 0.0
  %3367 = vmatpush2.msra.mxu0 0.0
  %3368 = vmatprep.subr.mxu0 0.0
  %3369 = vmatpush2.msra.mxu0 0.0
  %3370 = vmatprep.subr.mxu0 0.0
  %3371 = vmatpush2.msra.mxu0 0.0
  %3372 = vmatprep.subr.mxu0 0.0
  %3373 = vmatpush2.msra.mxu0 0.0
  %3374 = vmatprep.subr.mxu0 0.0
  %3375 = vmatpush2.msra.mxu0 0.0
  %3376 = vmatprep.subr.mxu0 0.0
  %3377 = vmatpush2.msra.mxu0 0.0
  %3378 = vmatprep.subr.mxu0 0.0
  %3379 = vmatpush2.msra.mxu0 0.0
  %3380 = vmatprep.subr.mxu0 0.0
  %3381 = vmatpush2.msra.mxu0 0.0
  %3382 = vmatprep.mubr.f32.mxu0 0.0
  %3383 = vmatmul.mubr.f32.gmra.mxu0 %v3316
  %v3384 = vpop.f32.mrf.mxu0
  %v3385 = vadd.f32 0.0, %v3384
  %v3386 = vpop.f32.mrf.mxu0
  %3387 = vdwg.mxu0
  %v3389 = vsel %vm316, %v2505, 0
  %3391 = vmatprep.subr.mxu0 0.0
  %3392 = vmatpush1.msra.mxu0 0.0
  %3393 = vmatprep.subr.mxu0 0.0
  %3394 = vmatpush1.msra.mxu0 0.0
  %3395 = vmatprep.subr.mxu0 0.0
  %3396 = vmatpush1.msra.mxu0 0.0
  %3397 = vmatprep.subr.mxu0 0.0
  %3398 = vmatpush1.msra.mxu0 0.0
  %3399 = vmatprep.subr.mxu0 0.0
  %3400 = vmatpush1.msra.mxu0 0.0
  %3401 = vmatprep.subr.mxu0 0.0
  %3402 = vmatpush1.msra.mxu0 0.0
  %3403 = vmatprep.subr.mxu0 0.0
  %3404 = vmatpush1.msra.mxu0 0.0
  %3405 = vmatprep.subr.mxu0 0.0
  %3406 = vmatpush1.msra.mxu0 0.0
  %3407 = vmatprep.subr.mxu0 0.0
  %3408 = vmatpush1.msra.mxu0 0.0
  %3409 = vmatprep.subr.mxu0 0.0
  %3410 = vmatpush1.msra.mxu0 0.0
  %3411 = vmatprep.subr.mxu0 0.0
  %3412 = vmatpush1.msra.mxu0 0.0
  %3413 = vmatprep.subr.mxu0 0.0
  %3414 = vmatpush1.msra.mxu0 0.0
  %3415 = vmatprep.subr.mxu0 0.0
  %3416 = vmatpush1.msra.mxu0 0.0
  %3417 = vmatprep.subr.mxu0 0.0
  %3418 = vmatpush1.msra.mxu0 0.0
  %3419 = vmatprep.subr.mxu0 0.0
  %3420 = vmatpush1.msra.mxu0 %v820
  %3421 = vmatprep.subr.mxu0 0.0
  %3422 = vmatpush1.msra.mxu0 %v819
  %3423 = vmatprep.subr.mxu0 0.0
  %3424 = vmatpush2.msra.mxu0 0.0
  %3425 = vmatprep.subr.mxu0 0.0
  %3426 = vmatpush2.msra.mxu0 0.0
  %3427 = vmatprep.subr.mxu0 0.0
  %3428 = vmatpush2.msra.mxu0 0.0
  %3429 = vmatprep.subr.mxu0 0.0
  %3430 = vmatpush2.msra.mxu0 0.0
  %3431 = vmatprep.subr.mxu0 0.0
  %3432 = vmatpush2.msra.mxu0 0.0
  %3433 = vmatprep.subr.mxu0 0.0
  %3434 = vmatpush2.msra.mxu0 0.0
  %3435 = vmatprep.subr.mxu0 0.0
  %3436 = vmatpush2.msra.mxu0 0.0
  %3437 = vmatprep.subr.mxu0 0.0
  %3438 = vmatpush2.msra.mxu0 0.0
  %3439 = vmatprep.subr.mxu0 0.0
  %3440 = vmatpush2.msra.mxu0 0.0
  %3441 = vmatprep.subr.mxu0 0.0
  %3442 = vmatpush2.msra.mxu0 0.0
  %3443 = vmatprep.subr.mxu0 0.0
  %3444 = vmatpush2.msra.mxu0 0.0
  %3445 = vmatprep.subr.mxu0 0.0
  %3446 = vmatpush2.msra.mxu0 0.0
  %3447 = vmatprep.subr.mxu0 0.0
  %3448 = vmatpush2.msra.mxu0 0.0
  %3449 = vmatprep.subr.mxu0 0.0
  %3450 = vmatpush2.msra.mxu0 0.0
  %3451 = vmatprep.subr.mxu0 0.0
  %3452 = vmatpush2.msra.mxu0 0.0
  %3453 = vmatprep.subr.mxu0 0.0
  %3454 = vmatpush2.msra.mxu0 0.0
  %3455 = vmatprep.mubr.f32.mxu0 0.0
  %3456 = vmatmul.mubr.f32.gmra.mxu0 %v3389
  %v3457 = vpop.f32.mrf.mxu0
  %v3458 = vadd.f32 0.0, %v3457
  %v3459 = vpop.f32.mrf.mxu0
  %3460 = vdwg.mxu0
  %v3462 = vsel %vm316, %v2507, 0
  %3464 = vmatprep.subr.mxu0 0.0
  %3465 = vmatpush1.msra.mxu0 0.0
  %3466 = vmatprep.subr.mxu0 0.0
  %3467 = vmatpush1.msra.mxu0 0.0
  %3468 = vmatprep.subr.mxu0 0.0
  %3469 = vmatpush1.msra.mxu0 0.0
  %3470 = vmatprep.subr.mxu0 0.0
  %3471 = vmatpush1.msra.mxu0 0.0
  %3472 = vmatprep.subr.mxu0 0.0
  %3473 = vmatpush1.msra.mxu0 0.0
  %3474 = vmatprep.subr.mxu0 0.0
  %3475 = vmatpush1.msra.mxu0 0.0
  %3476 = vmatprep.subr.mxu0 0.0
  %3477 = vmatpush1.msra.mxu0 0.0
  %3478 = vmatprep.subr.mxu0 0.0
  %3479 = vmatpush1.msra.mxu0 0.0
  %3480 = vmatprep.subr.mxu0 0.0
  %3481 = vmatpush1.msra.mxu0 0.0
  %3482 = vmatprep.subr.mxu0 0.0
  %3483 = vmatpush1.msra.mxu0 0.0
  %3484 = vmatprep.subr.mxu0 0.0
  %3485 = vmatpush1.msra.mxu0 0.0
  %3486 = vmatprep.subr.mxu0 0.0
  %3487 = vmatpush1.msra.mxu0 0.0
  %3488 = vmatprep.subr.mxu0 0.0
  %3489 = vmatpush1.msra.mxu0 0.0
  %3490 = vmatprep.subr.mxu0 0.0
  %3491 = vmatpush1.msra.mxu0 0.0
  %3492 = vmatprep.subr.mxu0 0.0
  %3493 = vmatpush1.msra.mxu0 %v822
  %3494 = vmatprep.subr.mxu0 0.0
  %3495 = vmatpush1.msra.mxu0 %v821
  %3496 = vmatprep.subr.mxu0 0.0
  %3497 = vmatpush2.msra.mxu0 0.0
  %3498 = vmatprep.subr.mxu0 0.0
  %3499 = vmatpush2.msra.mxu0 0.0
  %3500 = vmatprep.subr.mxu0 0.0
  %3501 = vmatpush2.msra.mxu0 0.0
  %3502 = vmatprep.subr.mxu0 0.0
  %3503 = vmatpush2.msra.mxu0 0.0
  %3504 = vmatprep.subr.mxu0 0.0
  %3505 = vmatpush2.msra.mxu0 0.0
  %3506 = vmatprep.subr.mxu0 0.0
  %3507 = vmatpush2.msra.mxu0 0.0
  %3508 = vmatprep.subr.mxu0 0.0
  %3509 = vmatpush2.msra.mxu0 0.0
  %3510 = vmatprep.subr.mxu0 0.0
  %3511 = vmatpush2.msra.mxu0 0.0
  %3512 = vmatprep.subr.mxu0 0.0
  %3513 = vmatpush2.msra.mxu0 0.0
  %3514 = vmatprep.subr.mxu0 0.0
  %3515 = vmatpush2.msra.mxu0 0.0
  %3516 = vmatprep.subr.mxu0 0.0
  %3517 = vmatpush2.msra.mxu0 0.0
  %3518 = vmatprep.subr.mxu0 0.0
  %3519 = vmatpush2.msra.mxu0 0.0
  %3520 = vmatprep.subr.mxu0 0.0
  %3521 = vmatpush2.msra.mxu0 0.0
  %3522 = vmatprep.subr.mxu0 0.0
  %3523 = vmatpush2.msra.mxu0 0.0
  %3524 = vmatprep.subr.mxu0 0.0
  %3525 = vmatpush2.msra.mxu0 0.0
  %3526 = vmatprep.subr.mxu0 0.0
  %3527 = vmatpush2.msra.mxu0 0.0
  %3528 = vmatprep.mubr.f32.mxu0 0.0
  %3529 = vmatmul.mubr.f32.gmra.mxu0 %v3462
  %v3530 = vpop.f32.mrf.mxu0
  %v3531 = vadd.f32 0.0, %v3530
  %v3532 = vpop.f32.mrf.mxu0
  %3533 = vdwg.mxu0
  %v3535 = vsel %vm316, %v2509, 0
  %3537 = vmatprep.subr.mxu0 0.0
  %3538 = vmatpush1.msra.mxu0 0.0
  %3539 = vmatprep.subr.mxu0 0.0
  %3540 = vmatpush1.msra.mxu0 0.0
  %3541 = vmatprep.subr.mxu0 0.0
  %3542 = vmatpush1.msra.mxu0 0.0
  %3543 = vmatprep.subr.mxu0 0.0
  %3544 = vmatpush1.msra.mxu0 0.0
  %3545 = vmatprep.subr.mxu0 0.0
  %3546 = vmatpush1.msra.mxu0 0.0
  %3547 = vmatprep.subr.mxu0 0.0
  %3548 = vmatpush1.msra.mxu0 0.0
  %3549 = vmatprep.subr.mxu0 0.0
  %3550 = vmatpush1.msra.mxu0 0.0
  %3551 = vmatprep.subr.mxu0 0.0
  %3552 = vmatpush1.msra.mxu0 0.0
  %3553 = vmatprep.subr.mxu0 0.0
  %3554 = vmatpush1.msra.mxu0 0.0
  %3555 = vmatprep.subr.mxu0 0.0
  %3556 = vmatpush1.msra.mxu0 0.0
  %3557 = vmatprep.subr.mxu0 0.0
  %3558 = vmatpush1.msra.mxu0 0.0
  %3559 = vmatprep.subr.mxu0 0.0
  %3560 = vmatpush1.msra.mxu0 0.0
  %3561 = vmatprep.subr.mxu0 0.0
  %3562 = vmatpush1.msra.mxu0 0.0
  %3563 = vmatprep.subr.mxu0 0.0
  %3564 = vmatpush1.msra.mxu0 0.0
  %3565 = vmatprep.subr.mxu0 0.0
  %3566 = vmatpush1.msra.mxu0 %v824
  %3567 = vmatprep.subr.mxu0 0.0
  %3568 = vmatpush1.msra.mxu0 %v823
  %3569 = vmatprep.subr.mxu0 0.0
  %3570 = vmatpush2.msra.mxu0 0.0
  %3571 = vmatprep.subr.mxu0 0.0
  %3572 = vmatpush2.msra.mxu0 0.0
  %3573 = vmatprep.subr.mxu0 0.0
  %3574 = vmatpush2.msra.mxu0 0.0
  %3575 = vmatprep.subr.mxu0 0.0
  %3576 = vmatpush2.msra.mxu0 0.0
  %3577 = vmatprep.subr.mxu0 0.0
  %3578 = vmatpush2.msra.mxu0 0.0
  %3579 = vmatprep.subr.mxu0 0.0
  %3580 = vmatpush2.msra.mxu0 0.0
  %3581 = vmatprep.subr.mxu0 0.0
  %3582 = vmatpush2.msra.mxu0 0.0
  %3583 = vmatprep.subr.mxu0 0.0
  %3584 = vmatpush2.msra.mxu0 0.0
  %3585 = vmatprep.subr.mxu0 0.0
  %3586 = vmatpush2.msra.mxu0 0.0
  %3587 = vmatprep.subr.mxu0 0.0
  %3588 = vmatpush2.msra.mxu0 0.0
  %3589 = vmatprep.subr.mxu0 0.0
  %3590 = vmatpush2.msra.mxu0 0.0
  %3591 = vmatprep.subr.mxu0 0.0
  %3592 = vmatpush2.msra.mxu0 0.0
  %3593 = vmatprep.subr.mxu0 0.0
  %3594 = vmatpush2.msra.mxu0 0.0
  %3595 = vmatprep.subr.mxu0 0.0
  %3596 = vmatpush2.msra.mxu0 0.0
  %3597 = vmatprep.subr.mxu0 0.0
  %3598 = vmatpush2.msra.mxu0 0.0
  %3599 = vmatprep.subr.mxu0 0.0
  %3600 = vmatpush2.msra.mxu0 0.0
  %3601 = vmatprep.mubr.f32.mxu0 0.0
  %3602 = vmatmul.mubr.f32.gmra.mxu0 %v3535
  %v3603 = vpop.f32.mrf.mxu0
  %v3604 = vadd.f32 0.0, %v3603
  %v3605 = vpop.f32.mrf.mxu0
  %3606 = vdwg.mxu0
  %v3608 = vsel %vm316, %v2511, 0
  %3610 = vmatprep.subr.mxu0 0.0
  %3611 = vmatpush1.msra.mxu0 0.0
  %3612 = vmatprep.subr.mxu0 0.0
  %3613 = vmatpush1.msra.mxu0 0.0
  %3614 = vmatprep.subr.mxu0 0.0
  %3615 = vmatpush1.msra.mxu0 0.0
  %3616 = vmatprep.subr.mxu0 0.0
  %3617 = vmatpush1.msra.mxu0 0.0
  %3618 = vmatprep.subr.mxu0 0.0
  %3619 = vmatpush1.msra.mxu0 0.0
  %3620 = vmatprep.subr.mxu0 0.0
  %3621 = vmatpush1.msra.mxu0 0.0
  %3622 = vmatprep.subr.mxu0 0.0
  %3623 = vmatpush1.msra.mxu0 0.0
  %3624 = vmatprep.subr.mxu0 0.0
  %3625 = vmatpush1.msra.mxu0 0.0
  %3626 = vmatprep.subr.mxu0 0.0
  %3627 = vmatpush1.msra.mxu0 0.0
  %3628 = vmatprep.subr.mxu0 0.0
  %3629 = vmatpush1.msra.mxu0 0.0
  %3630 = vmatprep.subr.mxu0 0.0
  %3631 = vmatpush1.msra.mxu0 0.0
  %3632 = vmatprep.subr.mxu0 0.0
  %3633 = vmatpush1.msra.mxu0 0.0
  %3634 = vmatprep.subr.mxu0 0.0
  %3635 = vmatpush1.msra.mxu0 0.0
  %3636 = vmatprep.subr.mxu0 0.0
  %3637 = vmatpush1.msra.mxu0 0.0
  %3638 = vmatprep.subr.mxu0 0.0
  %3639 = vmatpush1.msra.mxu0 %v826
  %3640 = vmatprep.subr.mxu0 0.0
  %3641 = vmatpush1.msra.mxu0 %v825
  %3642 = vmatprep.subr.mxu0 0.0
  %3643 = vmatpush2.msra.mxu0 0.0
  %3644 = vmatprep.subr.mxu0 0.0
  %3645 = vmatpush2.msra.mxu0 0.0
  %3646 = vmatprep.subr.mxu0 0.0
  %3647 = vmatpush2.msra.mxu0 0.0
  %3648 = vmatprep.subr.mxu0 0.0
  %3649 = vmatpush2.msra.mxu0 0.0
  %3650 = vmatprep.subr.mxu0 0.0
  %3651 = vmatpush2.msra.mxu0 0.0
  %3652 = vmatprep.subr.mxu0 0.0
  %3653 = vmatpush2.msra.mxu0 0.0
  %3654 = vmatprep.subr.mxu0 0.0
  %3655 = vmatpush2.msra.mxu0 0.0
  %3656 = vmatprep.subr.mxu0 0.0
  %3657 = vmatpush2.msra.mxu0 0.0
  %3658 = vmatprep.subr.mxu0 0.0
  %3659 = vmatpush2.msra.mxu0 0.0
  %3660 = vmatprep.subr.mxu0 0.0
  %3661 = vmatpush2.msra.mxu0 0.0
  %3662 = vmatprep.subr.mxu0 0.0
  %3663 = vmatpush2.msra.mxu0 0.0
  %3664 = vmatprep.subr.mxu0 0.0
  %3665 = vmatpush2.msra.mxu0 0.0
  %3666 = vmatprep.subr.mxu0 0.0
  %3667 = vmatpush2.msra.mxu0 0.0
  %3668 = vmatprep.subr.mxu0 0.0
  %3669 = vmatpush2.msra.mxu0 0.0
  %3670 = vmatprep.subr.mxu0 0.0
  %3671 = vmatpush2.msra.mxu0 0.0
  %3672 = vmatprep.subr.mxu0 0.0
  %3673 = vmatpush2.msra.mxu0 0.0
  %3674 = vmatprep.mubr.f32.mxu0 0.0
  %3675 = vmatmul.mubr.f32.gmra.mxu0 %v3608
  %v3676 = vpop.f32.mrf.mxu0
  %v3677 = vadd.f32 0.0, %v3676
  %v3678 = vpop.f32.mrf.mxu0
  %3679 = vdwg.mxu0
  %v3680 = vmul.f32 %v2582, %v2582
  %v3681 = vmul.f32 %v2655, %v2655
  %v3682 = vmul.f32 %v2728, %v2728
  %v3683 = vmul.f32 %v2801, %v2801
  %v3684 = vmul.f32 %v2874, %v2874
  %v3685 = vmul.f32 %v2947, %v2947
  %v3686 = vmul.f32 %v3020, %v3020
  %v3687 = vmul.f32 %v3093, %v3093
  %v3688 = vmul.f32 %v3166, %v3166
  %v3689 = vmul.f32 %v3239, %v3239
  %v3690 = vmul.f32 %v3312, %v3312
  %v3691 = vmul.f32 %v3385, %v3385
  %v3692 = vmul.f32 %v3458, %v3458
  %v3693 = vmul.f32 %v3531, %v3531
  %v3694 = vmul.f32 %v3604, %v3604
  %v3695 = vmul.f32 %v3677, %v3677
  %v3696 = vsel %vm2207, %v3680, 0.0
  %3697 = vadd.xlane.f32.xlu0 %v3696
  %v3698 = vpop.xlane.xlu0 %3697
  %v3699 = vsel %vm2207, %v3681, 0.0
  %3700 = vadd.xlane.f32.xlu0 %v3699
  %v3701 = vpop.xlane.xlu0 %3700
  %v3702 = vsel %vm2207, %v3682, 0.0
  %3703 = vadd.xlane.f32.xlu0 %v3702
  %v3704 = vpop.xlane.xlu0 %3703
  %v3705 = vsel %vm2207, %v3683, 0.0
  %3706 = vadd.xlane.f32.xlu0 %v3705
  %v3707 = vpop.xlane.xlu0 %3706
  %v3708 = vsel %vm2207, %v3684, 0.0
  %3709 = vadd.xlane.f32.xlu0 %v3708
  %v3710 = vpop.xlane.xlu0 %3709
  %v3711 = vsel %vm2207, %v3685, 0.0
  %3712 = vadd.xlane.f32.xlu0 %v3711
  %v3713 = vpop.xlane.xlu0 %3712
  %v3714 = vsel %vm2207, %v3686, 0.0
  %3715 = vadd.xlane.f32.xlu0 %v3714
  %v3716 = vpop.xlane.xlu0 %3715
  %v3717 = vsel %vm2207, %v3687, 0.0
  %3718 = vadd.xlane.f32.xlu0 %v3717
  %v3719 = vpop.xlane.xlu0 %3718
  %v3720 = vsel %vm2207, %v3688, 0.0
  %3721 = vadd.xlane.f32.xlu0 %v3720
  %v3722 = vpop.xlane.xlu0 %3721
  %v3723 = vsel %vm2207, %v3689, 0.0
  %3724 = vadd.xlane.f32.xlu0 %v3723
  %v3725 = vpop.xlane.xlu0 %3724
  %v3726 = vsel %vm2207, %v3690, 0.0
  %3727 = vadd.xlane.f32.xlu0 %v3726
  %v3728 = vpop.xlane.xlu0 %3727
  %v3729 = vsel %vm2207, %v3691, 0.0
  %3730 = vadd.xlane.f32.xlu0 %v3729
  %v3731 = vpop.xlane.xlu0 %3730
  %v3732 = vsel %vm2207, %v3692, 0.0
  %3733 = vadd.xlane.f32.xlu0 %v3732
  %v3734 = vpop.xlane.xlu0 %3733
  %v3735 = vsel %vm2207, %v3693, 0.0
  %3736 = vadd.xlane.f32.xlu0 %v3735
  %v3737 = vpop.xlane.xlu0 %3736
  %v3738 = vsel %vm2207, %v3694, 0.0
  %3739 = vadd.xlane.f32.xlu0 %v3738
  %v3740 = vpop.xlane.xlu0 %3739
  %v3741 = vsel %vm2207, %v3695, 0.0
  %3742 = vadd.xlane.f32.xlu0 %v3741
  %v3743 = vpop.xlane.xlu0 %3742
  %v3744 = vrsqrt.pop %v3698
  %v3745 = vmul.f32 %v3698, %v3744
  %vm3746 = vcmp.eq.f32.partialorder %v3698, inf
  %v3747 = vsel %vm3746, %v3698, %v3745
  %vm3748 = vcmp.eq.f32.partialorder %v3698, 0.0
  %v3749 = vand.u32 %v3698, 2147483648
  %v3750 = vsel %vm3748, %v3749, %v3747
  %v3751 = vrsqrt.pop %v3701
  %v3752 = vmul.f32 %v3701, %v3751
  %vm3753 = vcmp.eq.f32.partialorder %v3701, inf
  %v3754 = vsel %vm3753, %v3701, %v3752
  %vm3755 = vcmp.eq.f32.partialorder %v3701, 0.0
  %v3756 = vand.u32 %v3701, 2147483648
  %v3757 = vsel %vm3755, %v3756, %v3754
  %v3758 = vrsqrt.pop %v3704
  %v3759 = vmul.f32 %v3704, %v3758
  %vm3760 = vcmp.eq.f32.partialorder %v3704, inf
  %v3761 = vsel %vm3760, %v3704, %v3759
  %vm3762 = vcmp.eq.f32.partialorder %v3704, 0.0
  %v3763 = vand.u32 %v3704, 2147483648
  %v3764 = vsel %vm3762, %v3763, %v3761
  %v3765 = vrsqrt.pop %v3707
  %v3766 = vmul.f32 %v3707, %v3765
  %vm3767 = vcmp.eq.f32.partialorder %v3707, inf
  %v3768 = vsel %vm3767, %v3707, %v3766
  %vm3769 = vcmp.eq.f32.partialorder %v3707, 0.0
  %v3770 = vand.u32 %v3707, 2147483648
  %v3771 = vsel %vm3769, %v3770, %v3768
  %v3772 = vrsqrt.pop %v3710
  %v3773 = vmul.f32 %v3710, %v3772
  %vm3774 = vcmp.eq.f32.partialorder %v3710, inf
  %v3775 = vsel %vm3774, %v3710, %v3773
  %vm3776 = vcmp.eq.f32.partialorder %v3710, 0.0
  %v3777 = vand.u32 %v3710, 2147483648
  %v3778 = vsel %vm3776, %v3777, %v3775
  %v3779 = vrsqrt.pop %v3713
  %v3780 = vmul.f32 %v3713, %v3779
  %vm3781 = vcmp.eq.f32.partialorder %v3713, inf
  %v3782 = vsel %vm3781, %v3713, %v3780
  %vm3783 = vcmp.eq.f32.partialorder %v3713, 0.0
  %v3784 = vand.u32 %v3713, 2147483648
  %v3785 = vsel %vm3783, %v3784, %v3782
  %v3786 = vrsqrt.pop %v3716
  %v3787 = vmul.f32 %v3716, %v3786
  %vm3788 = vcmp.eq.f32.partialorder %v3716, inf
  %v3789 = vsel %vm3788, %v3716, %v3787
  %vm3790 = vcmp.eq.f32.partialorder %v3716, 0.0
  %v3791 = vand.u32 %v3716, 2147483648
  %v3792 = vsel %vm3790, %v3791, %v3789
  %v3793 = vrsqrt.pop %v3719
  %v3794 = vmul.f32 %v3719, %v3793
  %vm3795 = vcmp.eq.f32.partialorder %v3719, inf
  %v3796 = vsel %vm3795, %v3719, %v3794
  %vm3797 = vcmp.eq.f32.partialorder %v3719, 0.0
  %v3798 = vand.u32 %v3719, 2147483648
  %v3799 = vsel %vm3797, %v3798, %v3796
  %v3800 = vrsqrt.pop %v3722
  %v3801 = vmul.f32 %v3722, %v3800
  %vm3802 = vcmp.eq.f32.partialorder %v3722, inf
  %v3803 = vsel %vm3802, %v3722, %v3801
  %vm3804 = vcmp.eq.f32.partialorder %v3722, 0.0
  %v3805 = vand.u32 %v3722, 2147483648
  %v3806 = vsel %vm3804, %v3805, %v3803
  %v3807 = vrsqrt.pop %v3725
  %v3808 = vmul.f32 %v3725, %v3807
  %vm3809 = vcmp.eq.f32.partialorder %v3725, inf
  %v3810 = vsel %vm3809, %v3725, %v3808
  %vm3811 = vcmp.eq.f32.partialorder %v3725, 0.0
  %v3812 = vand.u32 %v3725, 2147483648
  %v3813 = vsel %vm3811, %v3812, %v3810
  %v3814 = vrsqrt.pop %v3728
  %v3815 = vmul.f32 %v3728, %v3814
  %vm3816 = vcmp.eq.f32.partialorder %v3728, inf
  %v3817 = vsel %vm3816, %v3728, %v3815
  %vm3818 = vcmp.eq.f32.partialorder %v3728, 0.0
  %v3819 = vand.u32 %v3728, 2147483648
  %v3820 = vsel %vm3818, %v3819, %v3817
  %v3821 = vrsqrt.pop %v3731
  %v3822 = vmul.f32 %v3731, %v3821
  %vm3823 = vcmp.eq.f32.partialorder %v3731, inf
  %v3824 = vsel %vm3823, %v3731, %v3822
  %vm3825 = vcmp.eq.f32.partialorder %v3731, 0.0
  %v3826 = vand.u32 %v3731, 2147483648
  %v3827 = vsel %vm3825, %v3826, %v3824
  %v3828 = vrsqrt.pop %v3734
  %v3829 = vmul.f32 %v3734, %v3828
  %vm3830 = vcmp.eq.f32.partialorder %v3734, inf
  %v3831 = vsel %vm3830, %v3734, %v3829
  %vm3832 = vcmp.eq.f32.partialorder %v3734, 0.0
  %v3833 = vand.u32 %v3734, 2147483648
  %v3834 = vsel %vm3832, %v3833, %v3831
  %v3835 = vrsqrt.pop %v3737
  %v3836 = vmul.f32 %v3737, %v3835
  %vm3837 = vcmp.eq.f32.partialorder %v3737, inf
  %v3838 = vsel %vm3837, %v3737, %v3836
  %vm3839 = vcmp.eq.f32.partialorder %v3737, 0.0
  %v3840 = vand.u32 %v3737, 2147483648
  %v3841 = vsel %vm3839, %v3840, %v3838
  %v3842 = vrsqrt.pop %v3740
  %v3843 = vmul.f32 %v3740, %v3842
  %vm3844 = vcmp.eq.f32.partialorder %v3740, inf
  %v3845 = vsel %vm3844, %v3740, %v3843
  %vm3846 = vcmp.eq.f32.partialorder %v3740, 0.0
  %v3847 = vand.u32 %v3740, 2147483648
  %v3848 = vsel %vm3846, %v3847, %v3845
  %v3849 = vrsqrt.pop %v3743
  %v3850 = vmul.f32 %v3743, %v3849
  %vm3851 = vcmp.eq.f32.partialorder %v3743, inf
  %v3852 = vsel %vm3851, %v3743, %v3850
  %vm3853 = vcmp.eq.f32.partialorder %v3743, 0.0
  %v3854 = vand.u32 %v3743, 2147483648
  %v3855 = vsel %vm3853, %v3854, %v3852
  %v3856 = vadd.f32 %v3698, 1.0
  %v3857 = vadd.f32 %v3701, 1.0
  %v3858 = vadd.f32 %v3704, 1.0
  %v3859 = vadd.f32 %v3707, 1.0
  %v3860 = vadd.f32 %v3710, 1.0
  %v3861 = vadd.f32 %v3713, 1.0
  %v3862 = vadd.f32 %v3716, 1.0
  %v3863 = vadd.f32 %v3719, 1.0
  %v3864 = vadd.f32 %v3722, 1.0
  %v3865 = vadd.f32 %v3725, 1.0
  %v3866 = vadd.f32 %v3728, 1.0
  %v3867 = vadd.f32 %v3731, 1.0
  %v3868 = vadd.f32 %v3734, 1.0
  %v3869 = vadd.f32 %v3737, 1.0
  %v3870 = vadd.f32 %v3740, 1.0
  %v3871 = vadd.f32 %v3743, 1.0
  %v3872 = vrcp.pop %v3856
  %v3873 = vmul.f32 %v3750, %v3872
  %v3874 = vrcp.pop %v3857
  %v3875 = vmul.f32 %v3757, %v3874
  %v3876 = vrcp.pop %v3858
  %v3877 = vmul.f32 %v3764, %v3876
  %v3878 = vrcp.pop %v3859
  %v3879 = vmul.f32 %v3771, %v3878
  %v3880 = vrcp.pop %v3860
  %v3881 = vmul.f32 %v3778, %v3880
  %v3882 = vrcp.pop %v3861
  %v3883 = vmul.f32 %v3785, %v3882
  %v3884 = vrcp.pop %v3862
  %v3885 = vmul.f32 %v3792, %v3884
  %v3886 = vrcp.pop %v3863
  %v3887 = vmul.f32 %v3799, %v3886
  %v3888 = vrcp.pop %v3864
  %v3889 = vmul.f32 %v3806, %v3888
  %v3890 = vrcp.pop %v3865
  %v3891 = vmul.f32 %v3813, %v3890
  %v3892 = vrcp.pop %v3866
  %v3893 = vmul.f32 %v3820, %v3892
  %v3894 = vrcp.pop %v3867
  %v3895 = vmul.f32 %v3827, %v3894
  %v3896 = vrcp.pop %v3868
  %v3897 = vmul.f32 %v3834, %v3896
  %v3898 = vrcp.pop %v3869
  %v3899 = vmul.f32 %v3841, %v3898
  %v3900 = vrcp.pop %v3870
  %v3901 = vmul.f32 %v3848, %v3900
  %v3902 = vrcp.pop %v3871
  %v3903 = vmul.f32 %v3855, %v3902
  %v3904 = vmul.f32 %v3873, %v2582
  %v3905 = vmul.f32 %v3875, %v2655
  %v3906 = vmul.f32 %v3877, %v2728
  %v3907 = vmul.f32 %v3879, %v2801
  %v3908 = vmul.f32 %v3881, %v2874
  %v3909 = vmul.f32 %v3883, %v2947
  %v3910 = vmul.f32 %v3885, %v3020
  %v3911 = vmul.f32 %v3887, %v3093
  %v3912 = vmul.f32 %v3889, %v3166
  %v3913 = vmul.f32 %v3891, %v3239
  %v3914 = vmul.f32 %v3893, %v3312
  %v3915 = vmul.f32 %v3895, %v3385
  %v3916 = vmul.f32 %v3897, %v3458
  %v3917 = vmul.f32 %v3899, %v3531
  %v3918 = vmul.f32 %v3901, %v3604
  %v3919 = vmul.f32 %v3903, %v3677
  %v3921 = vsel %vm316, %v3904, 0
  %3923 = vmatprep.subr.mxu0 0.0
  %3924 = vmatpush1.xpose.msra.mxu0 0.0
  %3925 = vmatprep.subr.mxu0 0.0
  %3926 = vmatpush1.xpose.msra.mxu0 0.0
  %3927 = vmatprep.subr.mxu0 0.0
  %3928 = vmatpush1.xpose.msra.mxu0 0.0
  %3929 = vmatprep.subr.mxu0 0.0
  %3930 = vmatpush1.xpose.msra.mxu0 0.0
  %3931 = vmatprep.subr.mxu0 0.0
  %3932 = vmatpush1.xpose.msra.mxu0 0.0
  %3933 = vmatprep.subr.mxu0 0.0
  %3934 = vmatpush1.xpose.msra.mxu0 0.0
  %3935 = vmatprep.subr.mxu0 0.0
  %3936 = vmatpush1.xpose.msra.mxu0 0.0
  %3937 = vmatprep.subr.mxu0 0.0
  %3938 = vmatpush1.xpose.msra.mxu0 0.0
  %3939 = vmatprep.subr.mxu0 0.0
  %3940 = vmatpush1.xpose.msra.mxu0 0.0
  %3941 = vmatprep.subr.mxu0 0.0
  %3942 = vmatpush1.xpose.msra.mxu0 0.0
  %3943 = vmatprep.subr.mxu0 0.0
  %3944 = vmatpush1.xpose.msra.mxu0 0.0
  %3945 = vmatprep.subr.mxu0 0.0
  %3946 = vmatpush1.xpose.msra.mxu0 0.0
  %3947 = vmatprep.subr.mxu0 0.0
  %3948 = vmatpush1.xpose.msra.mxu0 0.0
  %3949 = vmatprep.subr.mxu0 0.0
  %3950 = vmatpush1.xpose.msra.mxu0 0.0
  %3951 = vmatprep.subr.mxu0 0.0
  %3952 = vmatpush1.xpose.msra.mxu0 %v950
  %3953 = vmatprep.subr.mxu0 0.0
  %3954 = vmatpush1.xpose.msra.mxu0 %v947
  %3955 = vmatprep.subr.mxu0 0.0
  %3956 = vmatpush2.xpose.msra.mxu0 0.0
  %3957 = vmatprep.subr.mxu0 0.0
  %3958 = vmatpush2.xpose.msra.mxu0 0.0
  %3959 = vmatprep.subr.mxu0 0.0
  %3960 = vmatpush2.xpose.msra.mxu0 0.0
  %3961 = vmatprep.subr.mxu0 0.0
  %3962 = vmatpush2.xpose.msra.mxu0 0.0
  %3963 = vmatprep.subr.mxu0 0.0
  %3964 = vmatpush2.xpose.msra.mxu0 0.0
  %3965 = vmatprep.subr.mxu0 0.0
  %3966 = vmatpush2.xpose.msra.mxu0 0.0
  %3967 = vmatprep.subr.mxu0 0.0
  %3968 = vmatpush2.xpose.msra.mxu0 0.0
  %3969 = vmatprep.subr.mxu0 0.0
  %3970 = vmatpush2.xpose.msra.mxu0 0.0
  %3971 = vmatprep.subr.mxu0 0.0
  %3972 = vmatpush2.xpose.msra.mxu0 0.0
  %3973 = vmatprep.subr.mxu0 0.0
  %3974 = vmatpush2.xpose.msra.mxu0 0.0
  %3975 = vmatprep.subr.mxu0 0.0
  %3976 = vmatpush2.xpose.msra.mxu0 0.0
  %3977 = vmatprep.subr.mxu0 0.0
  %3978 = vmatpush2.xpose.msra.mxu0 0.0
  %3979 = vmatprep.subr.mxu0 0.0
  %3980 = vmatpush2.xpose.msra.mxu0 0.0
  %3981 = vmatprep.subr.mxu0 0.0
  %3982 = vmatpush2.xpose.msra.mxu0 0.0
  %3983 = vmatprep.subr.mxu0 0.0
  %3984 = vmatpush2.xpose.msra.mxu0 0.0
  %3985 = vmatprep.subr.mxu0 0.0
  %3986 = vmatpush2.xpose.msra.mxu0 0.0
  %3987 = vmatprep.mubr.f32.mxu0 0.0
  %3988 = vmatmul.mubr.f32.gmra.mxu0 %v3921
  %v3989 = vpop.f32.mrf.mxu0
  %v3990 = vadd.f32 %v1019, %v3989
  %v3991 = vpop.f32.mrf.mxu0
  %3992 = vdwg.mxu0
  %v3994 = vsel %vm316, %v3905, 0
  %3996 = vmatprep.subr.mxu0 0.0
  %3997 = vmatpush1.xpose.msra.mxu0 0.0
  %3998 = vmatprep.subr.mxu0 0.0
  %3999 = vmatpush1.xpose.msra.mxu0 0.0
  %4000 = vmatprep.subr.mxu0 0.0
  %4001 = vmatpush1.xpose.msra.mxu0 0.0
  %4002 = vmatprep.subr.mxu0 0.0
  %4003 = vmatpush1.xpose.msra.mxu0 0.0
  %4004 = vmatprep.subr.mxu0 0.0
  %4005 = vmatpush1.xpose.msra.mxu0 0.0
  %4006 = vmatprep.subr.mxu0 0.0
  %4007 = vmatpush1.xpose.msra.mxu0 0.0
  %4008 = vmatprep.subr.mxu0 0.0
  %4009 = vmatpush1.xpose.msra.mxu0 0.0
  %4010 = vmatprep.subr.mxu0 0.0
  %4011 = vmatpush1.xpose.msra.mxu0 0.0
  %4012 = vmatprep.subr.mxu0 0.0
  %4013 = vmatpush1.xpose.msra.mxu0 0.0
  %4014 = vmatprep.subr.mxu0 0.0
  %4015 = vmatpush1.xpose.msra.mxu0 0.0
  %4016 = vmatprep.subr.mxu0 0.0
  %4017 = vmatpush1.xpose.msra.mxu0 0.0
  %4018 = vmatprep.subr.mxu0 0.0
  %4019 = vmatpush1.xpose.msra.mxu0 0.0
  %4020 = vmatprep.subr.mxu0 0.0
  %4021 = vmatpush1.xpose.msra.mxu0 0.0
  %4022 = vmatprep.subr.mxu0 0.0
  %4023 = vmatpush1.xpose.msra.mxu0 0.0
  %4024 = vmatprep.subr.mxu0 0.0
  %4025 = vmatpush1.xpose.msra.mxu0 %v1029
  %4026 = vmatprep.subr.mxu0 0.0
  %4027 = vmatpush1.xpose.msra.mxu0 %v1026
  %4028 = vmatprep.subr.mxu0 0.0
  %4029 = vmatpush2.xpose.msra.mxu0 0.0
  %4030 = vmatprep.subr.mxu0 0.0
  %4031 = vmatpush2.xpose.msra.mxu0 0.0
  %4032 = vmatprep.subr.mxu0 0.0
  %4033 = vmatpush2.xpose.msra.mxu0 0.0
  %4034 = vmatprep.subr.mxu0 0.0
  %4035 = vmatpush2.xpose.msra.mxu0 0.0
  %4036 = vmatprep.subr.mxu0 0.0
  %4037 = vmatpush2.xpose.msra.mxu0 0.0
  %4038 = vmatprep.subr.mxu0 0.0
  %4039 = vmatpush2.xpose.msra.mxu0 0.0
  %4040 = vmatprep.subr.mxu0 0.0
  %4041 = vmatpush2.xpose.msra.mxu0 0.0
  %4042 = vmatprep.subr.mxu0 0.0
  %4043 = vmatpush2.xpose.msra.mxu0 0.0
  %4044 = vmatprep.subr.mxu0 0.0
  %4045 = vmatpush2.xpose.msra.mxu0 0.0
  %4046 = vmatprep.subr.mxu0 0.0
  %4047 = vmatpush2.xpose.msra.mxu0 0.0
  %4048 = vmatprep.subr.mxu0 0.0
  %4049 = vmatpush2.xpose.msra.mxu0 0.0
  %4050 = vmatprep.subr.mxu0 0.0
  %4051 = vmatpush2.xpose.msra.mxu0 0.0
  %4052 = vmatprep.subr.mxu0 0.0
  %4053 = vmatpush2.xpose.msra.mxu0 0.0
  %4054 = vmatprep.subr.mxu0 0.0
  %4055 = vmatpush2.xpose.msra.mxu0 0.0
  %4056 = vmatprep.subr.mxu0 0.0
  %4057 = vmatpush2.xpose.msra.mxu0 0.0
  %4058 = vmatprep.subr.mxu0 0.0
  %4059 = vmatpush2.xpose.msra.mxu0 0.0
  %4060 = vmatprep.mubr.f32.mxu0 0.0
  %4061 = vmatmul.mubr.f32.gmra.mxu0 %v3994
  %v4062 = vpop.f32.mrf.mxu0
  %v4063 = vadd.f32 %v1098, %v4062
  %v4064 = vpop.f32.mrf.mxu0
  %4065 = vdwg.mxu0
  %v4067 = vsel %vm316, %v3906, 0
  %4069 = vmatprep.subr.mxu0 0.0
  %4070 = vmatpush1.xpose.msra.mxu0 0.0
  %4071 = vmatprep.subr.mxu0 0.0
  %4072 = vmatpush1.xpose.msra.mxu0 0.0
  %4073 = vmatprep.subr.mxu0 0.0
  %4074 = vmatpush1.xpose.msra.mxu0 0.0
  %4075 = vmatprep.subr.mxu0 0.0
  %4076 = vmatpush1.xpose.msra.mxu0 0.0
  %4077 = vmatprep.subr.mxu0 0.0
  %4078 = vmatpush1.xpose.msra.mxu0 0.0
  %4079 = vmatprep.subr.mxu0 0.0
  %4080 = vmatpush1.xpose.msra.mxu0 0.0
  %4081 = vmatprep.subr.mxu0 0.0
  %4082 = vmatpush1.xpose.msra.mxu0 0.0
  %4083 = vmatprep.subr.mxu0 0.0
  %4084 = vmatpush1.xpose.msra.mxu0 0.0
  %4085 = vmatprep.subr.mxu0 0.0
  %4086 = vmatpush1.xpose.msra.mxu0 0.0
  %4087 = vmatprep.subr.mxu0 0.0
  %4088 = vmatpush1.xpose.msra.mxu0 0.0
  %4089 = vmatprep.subr.mxu0 0.0
  %4090 = vmatpush1.xpose.msra.mxu0 0.0
  %4091 = vmatprep.subr.mxu0 0.0
  %4092 = vmatpush1.xpose.msra.mxu0 0.0
  %4093 = vmatprep.subr.mxu0 0.0
  %4094 = vmatpush1.xpose.msra.mxu0 0.0
  %4095 = vmatprep.subr.mxu0 0.0
  %4096 = vmatpush1.xpose.msra.mxu0 0.0
  %4097 = vmatprep.subr.mxu0 0.0
  %4098 = vmatpush1.xpose.msra.mxu0 %v1108
  %4099 = vmatprep.subr.mxu0 0.0
  %4100 = vmatpush1.xpose.msra.mxu0 %v1105
  %4101 = vmatprep.subr.mxu0 0.0
  %4102 = vmatpush2.xpose.msra.mxu0 0.0
  %4103 = vmatprep.subr.mxu0 0.0
  %4104 = vmatpush2.xpose.msra.mxu0 0.0
  %4105 = vmatprep.subr.mxu0 0.0
  %4106 = vmatpush2.xpose.msra.mxu0 0.0
  %4107 = vmatprep.subr.mxu0 0.0
  %4108 = vmatpush2.xpose.msra.mxu0 0.0
  %4109 = vmatprep.subr.mxu0 0.0
  %4110 = vmatpush2.xpose.msra.mxu0 0.0
  %4111 = vmatprep.subr.mxu0 0.0
  %4112 = vmatpush2.xpose.msra.mxu0 0.0
  %4113 = vmatprep.subr.mxu0 0.0
  %4114 = vmatpush2.xpose.msra.mxu0 0.0
  %4115 = vmatprep.subr.mxu0 0.0
  %4116 = vmatpush2.xpose.msra.mxu0 0.0
  %4117 = vmatprep.subr.mxu0 0.0
  %4118 = vmatpush2.xpose.msra.mxu0 0.0
  %4119 = vmatprep.subr.mxu0 0.0
  %4120 = vmatpush2.xpose.msra.mxu0 0.0
  %4121 = vmatprep.subr.mxu0 0.0
  %4122 = vmatpush2.xpose.msra.mxu0 0.0
  %4123 = vmatprep.subr.mxu0 0.0
  %4124 = vmatpush2.xpose.msra.mxu0 0.0
  %4125 = vmatprep.subr.mxu0 0.0
  %4126 = vmatpush2.xpose.msra.mxu0 0.0
  %4127 = vmatprep.subr.mxu0 0.0
  %4128 = vmatpush2.xpose.msra.mxu0 0.0
  %4129 = vmatprep.subr.mxu0 0.0
  %4130 = vmatpush2.xpose.msra.mxu0 0.0
  %4131 = vmatprep.subr.mxu0 0.0
  %4132 = vmatpush2.xpose.msra.mxu0 0.0
  %4133 = vmatprep.mubr.f32.mxu0 0.0
  %4134 = vmatmul.mubr.f32.gmra.mxu0 %v4067
  %v4135 = vpop.f32.mrf.mxu0
  %v4136 = vadd.f32 %v1177, %v4135
  %v4137 = vpop.f32.mrf.mxu0
  %4138 = vdwg.mxu0
  %v4140 = vsel %vm316, %v3907, 0
  %4142 = vmatprep.subr.mxu0 0.0
  %4143 = vmatpush1.xpose.msra.mxu0 0.0
  %4144 = vmatprep.subr.mxu0 0.0
  %4145 = vmatpush1.xpose.msra.mxu0 0.0
  %4146 = vmatprep.subr.mxu0 0.0
  %4147 = vmatpush1.xpose.msra.mxu0 0.0
  %4148 = vmatprep.subr.mxu0 0.0
  %4149 = vmatpush1.xpose.msra.mxu0 0.0
  %4150 = vmatprep.subr.mxu0 0.0
  %4151 = vmatpush1.xpose.msra.mxu0 0.0
  %4152 = vmatprep.subr.mxu0 0.0
  %4153 = vmatpush1.xpose.msra.mxu0 0.0
  %4154 = vmatprep.subr.mxu0 0.0
  %4155 = vmatpush1.xpose.msra.mxu0 0.0
  %4156 = vmatprep.subr.mxu0 0.0
  %4157 = vmatpush1.xpose.msra.mxu0 0.0
  %4158 = vmatprep.subr.mxu0 0.0
  %4159 = vmatpush1.xpose.msra.mxu0 0.0
  %4160 = vmatprep.subr.mxu0 0.0
  %4161 = vmatpush1.xpose.msra.mxu0 0.0
  %4162 = vmatprep.subr.mxu0 0.0
  %4163 = vmatpush1.xpose.msra.mxu0 0.0
  %4164 = vmatprep.subr.mxu0 0.0
  %4165 = vmatpush1.xpose.msra.mxu0 0.0
  %4166 = vmatprep.subr.mxu0 0.0
  %4167 = vmatpush1.xpose.msra.mxu0 0.0
  %4168 = vmatprep.subr.mxu0 0.0
  %4169 = vmatpush1.xpose.msra.mxu0 0.0
  %4170 = vmatprep.subr.mxu0 0.0
  %4171 = vmatpush1.xpose.msra.mxu0 %v1187
  %4172 = vmatprep.subr.mxu0 0.0
  %4173 = vmatpush1.xpose.msra.mxu0 %v1184
  %4174 = vmatprep.subr.mxu0 0.0
  %4175 = vmatpush2.xpose.msra.mxu0 0.0
  %4176 = vmatprep.subr.mxu0 0.0
  %4177 = vmatpush2.xpose.msra.mxu0 0.0
  %4178 = vmatprep.subr.mxu0 0.0
  %4179 = vmatpush2.xpose.msra.mxu0 0.0
  %4180 = vmatprep.subr.mxu0 0.0
  %4181 = vmatpush2.xpose.msra.mxu0 0.0
  %4182 = vmatprep.subr.mxu0 0.0
  %4183 = vmatpush2.xpose.msra.mxu0 0.0
  %4184 = vmatprep.subr.mxu0 0.0
  %4185 = vmatpush2.xpose.msra.mxu0 0.0
  %4186 = vmatprep.subr.mxu0 0.0
  %4187 = vmatpush2.xpose.msra.mxu0 0.0
  %4188 = vmatprep.subr.mxu0 0.0
  %4189 = vmatpush2.xpose.msra.mxu0 0.0
  %4190 = vmatprep.subr.mxu0 0.0
  %4191 = vmatpush2.xpose.msra.mxu0 0.0
  %4192 = vmatprep.subr.mxu0 0.0
  %4193 = vmatpush2.xpose.msra.mxu0 0.0
  %4194 = vmatprep.subr.mxu0 0.0
  %4195 = vmatpush2.xpose.msra.mxu0 0.0
  %4196 = vmatprep.subr.mxu0 0.0
  %4197 = vmatpush2.xpose.msra.mxu0 0.0
  %4198 = vmatprep.subr.mxu0 0.0
  %4199 = vmatpush2.xpose.msra.mxu0 0.0
  %4200 = vmatprep.subr.mxu0 0.0
  %4201 = vmatpush2.xpose.msra.mxu0 0.0
  %4202 = vmatprep.subr.mxu0 0.0
  %4203 = vmatpush2.xpose.msra.mxu0 0.0
  %4204 = vmatprep.subr.mxu0 0.0
  %4205 = vmatpush2.xpose.msra.mxu0 0.0
  %4206 = vmatprep.mubr.f32.mxu0 0.0
  %4207 = vmatmul.mubr.f32.gmra.mxu0 %v4140
  %v4208 = vpop.f32.mrf.mxu0
  %v4209 = vadd.f32 %v1256, %v4208
  %v4210 = vpop.f32.mrf.mxu0
  %4211 = vdwg.mxu0
  %v4213 = vsel %vm316, %v3908, 0
  %4215 = vmatprep.subr.mxu0 0.0
  %4216 = vmatpush1.xpose.msra.mxu0 0.0
  %4217 = vmatprep.subr.mxu0 0.0
  %4218 = vmatpush1.xpose.msra.mxu0 0.0
  %4219 = vmatprep.subr.mxu0 0.0
  %4220 = vmatpush1.xpose.msra.mxu0 0.0
  %4221 = vmatprep.subr.mxu0 0.0
  %4222 = vmatpush1.xpose.msra.mxu0 0.0
  %4223 = vmatprep.subr.mxu0 0.0
  %4224 = vmatpush1.xpose.msra.mxu0 0.0
  %4225 = vmatprep.subr.mxu0 0.0
  %4226 = vmatpush1.xpose.msra.mxu0 0.0
  %4227 = vmatprep.subr.mxu0 0.0
  %4228 = vmatpush1.xpose.msra.mxu0 0.0
  %4229 = vmatprep.subr.mxu0 0.0
  %4230 = vmatpush1.xpose.msra.mxu0 0.0
  %4231 = vmatprep.subr.mxu0 0.0
  %4232 = vmatpush1.xpose.msra.mxu0 0.0
  %4233 = vmatprep.subr.mxu0 0.0
  %4234 = vmatpush1.xpose.msra.mxu0 0.0
  %4235 = vmatprep.subr.mxu0 0.0
  %4236 = vmatpush1.xpose.msra.mxu0 0.0
  %4237 = vmatprep.subr.mxu0 0.0
  %4238 = vmatpush1.xpose.msra.mxu0 0.0
  %4239 = vmatprep.subr.mxu0 0.0
  %4240 = vmatpush1.xpose.msra.mxu0 0.0
  %4241 = vmatprep.subr.mxu0 0.0
  %4242 = vmatpush1.xpose.msra.mxu0 0.0
  %4243 = vmatprep.subr.mxu0 0.0
  %4244 = vmatpush1.xpose.msra.mxu0 %v1266
  %4245 = vmatprep.subr.mxu0 0.0
  %4246 = vmatpush1.xpose.msra.mxu0 %v1263
  %4247 = vmatprep.subr.mxu0 0.0
  %4248 = vmatpush2.xpose.msra.mxu0 0.0
  %4249 = vmatprep.subr.mxu0 0.0
  %4250 = vmatpush2.xpose.msra.mxu0 0.0
  %4251 = vmatprep.subr.mxu0 0.0
  %4252 = vmatpush2.xpose.msra.mxu0 0.0
  %4253 = vmatprep.subr.mxu0 0.0
  %4254 = vmatpush2.xpose.msra.mxu0 0.0
  %4255 = vmatprep.subr.mxu0 0.0
  %4256 = vmatpush2.xpose.msra.mxu0 0.0
  %4257 = vmatprep.subr.mxu0 0.0
  %4258 = vmatpush2.xpose.msra.mxu0 0.0
  %4259 = vmatprep.subr.mxu0 0.0
  %4260 = vmatpush2.xpose.msra.mxu0 0.0
  %4261 = vmatprep.subr.mxu0 0.0
  %4262 = vmatpush2.xpose.msra.mxu0 0.0
  %4263 = vmatprep.subr.mxu0 0.0
  %4264 = vmatpush2.xpose.msra.mxu0 0.0
  %4265 = vmatprep.subr.mxu0 0.0
  %4266 = vmatpush2.xpose.msra.mxu0 0.0
  %4267 = vmatprep.subr.mxu0 0.0
  %4268 = vmatpush2.xpose.msra.mxu0 0.0
  %4269 = vmatprep.subr.mxu0 0.0
  %4270 = vmatpush2.xpose.msra.mxu0 0.0
  %4271 = vmatprep.subr.mxu0 0.0
  %4272 = vmatpush2.xpose.msra.mxu0 0.0
  %4273 = vmatprep.subr.mxu0 0.0
  %4274 = vmatpush2.xpose.msra.mxu0 0.0
  %4275 = vmatprep.subr.mxu0 0.0
  %4276 = vmatpush2.xpose.msra.mxu0 0.0
  %4277 = vmatprep.subr.mxu0 0.0
  %4278 = vmatpush2.xpose.msra.mxu0 0.0
  %4279 = vmatprep.mubr.f32.mxu0 0.0
  %4280 = vmatmul.mubr.f32.gmra.mxu0 %v4213
  %v4281 = vpop.f32.mrf.mxu0
  %v4282 = vadd.f32 %v1335, %v4281
  %v4283 = vpop.f32.mrf.mxu0
  %4284 = vdwg.mxu0
  %v4286 = vsel %vm316, %v3909, 0
  %4288 = vmatprep.subr.mxu0 0.0
  %4289 = vmatpush1.xpose.msra.mxu0 0.0
  %4290 = vmatprep.subr.mxu0 0.0
  %4291 = vmatpush1.xpose.msra.mxu0 0.0
  %4292 = vmatprep.subr.mxu0 0.0
  %4293 = vmatpush1.xpose.msra.mxu0 0.0
  %4294 = vmatprep.subr.mxu0 0.0
  %4295 = vmatpush1.xpose.msra.mxu0 0.0
  %4296 = vmatprep.subr.mxu0 0.0
  %4297 = vmatpush1.xpose.msra.mxu0 0.0
  %4298 = vmatprep.subr.mxu0 0.0
  %4299 = vmatpush1.xpose.msra.mxu0 0.0
  %4300 = vmatprep.subr.mxu0 0.0
  %4301 = vmatpush1.xpose.msra.mxu0 0.0
  %4302 = vmatprep.subr.mxu0 0.0
  %4303 = vmatpush1.xpose.msra.mxu0 0.0
  %4304 = vmatprep.subr.mxu0 0.0
  %4305 = vmatpush1.xpose.msra.mxu0 0.0
  %4306 = vmatprep.subr.mxu0 0.0
  %4307 = vmatpush1.xpose.msra.mxu0 0.0
  %4308 = vmatprep.subr.mxu0 0.0
  %4309 = vmatpush1.xpose.msra.mxu0 0.0
  %4310 = vmatprep.subr.mxu0 0.0
  %4311 = vmatpush1.xpose.msra.mxu0 0.0
  %4312 = vmatprep.subr.mxu0 0.0
  %4313 = vmatpush1.xpose.msra.mxu0 0.0
  %4314 = vmatprep.subr.mxu0 0.0
  %4315 = vmatpush1.xpose.msra.mxu0 0.0
  %4316 = vmatprep.subr.mxu0 0.0
  %4317 = vmatpush1.xpose.msra.mxu0 %v1345
  %4318 = vmatprep.subr.mxu0 0.0
  %4319 = vmatpush1.xpose.msra.mxu0 %v1342
  %4320 = vmatprep.subr.mxu0 0.0
  %4321 = vmatpush2.xpose.msra.mxu0 0.0
  %4322 = vmatprep.subr.mxu0 0.0
  %4323 = vmatpush2.xpose.msra.mxu0 0.0
  %4324 = vmatprep.subr.mxu0 0.0
  %4325 = vmatpush2.xpose.msra.mxu0 0.0
  %4326 = vmatprep.subr.mxu0 0.0
  %4327 = vmatpush2.xpose.msra.mxu0 0.0
  %4328 = vmatprep.subr.mxu0 0.0
  %4329 = vmatpush2.xpose.msra.mxu0 0.0
  %4330 = vmatprep.subr.mxu0 0.0
  %4331 = vmatpush2.xpose.msra.mxu0 0.0
  %4332 = vmatprep.subr.mxu0 0.0
  %4333 = vmatpush2.xpose.msra.mxu0 0.0
  %4334 = vmatprep.subr.mxu0 0.0
  %4335 = vmatpush2.xpose.msra.mxu0 0.0
  %4336 = vmatprep.subr.mxu0 0.0
  %4337 = vmatpush2.xpose.msra.mxu0 0.0
  %4338 = vmatprep.subr.mxu0 0.0
  %4339 = vmatpush2.xpose.msra.mxu0 0.0
  %4340 = vmatprep.subr.mxu0 0.0
  %4341 = vmatpush2.xpose.msra.mxu0 0.0
  %4342 = vmatprep.subr.mxu0 0.0
  %4343 = vmatpush2.xpose.msra.mxu0 0.0
  %4344 = vmatprep.subr.mxu0 0.0
  %4345 = vmatpush2.xpose.msra.mxu0 0.0
  %4346 = vmatprep.subr.mxu0 0.0
  %4347 = vmatpush2.xpose.msra.mxu0 0.0
  %4348 = vmatprep.subr.mxu0 0.0
  %4349 = vmatpush2.xpose.msra.mxu0 0.0
  %4350 = vmatprep.subr.mxu0 0.0
  %4351 = vmatpush2.xpose.msra.mxu0 0.0
  %4352 = vmatprep.mubr.f32.mxu0 0.0
  %4353 = vmatmul.mubr.f32.gmra.mxu0 %v4286
  %v4354 = vpop.f32.mrf.mxu0
  %v4355 = vadd.f32 %v1414, %v4354
  %v4356 = vpop.f32.mrf.mxu0
  %4357 = vdwg.mxu0
  %v4359 = vsel %vm316, %v3910, 0
  %4361 = vmatprep.subr.mxu0 0.0
  %4362 = vmatpush1.xpose.msra.mxu0 0.0
  %4363 = vmatprep.subr.mxu0 0.0
  %4364 = vmatpush1.xpose.msra.mxu0 0.0
  %4365 = vmatprep.subr.mxu0 0.0
  %4366 = vmatpush1.xpose.msra.mxu0 0.0
  %4367 = vmatprep.subr.mxu0 0.0
  %4368 = vmatpush1.xpose.msra.mxu0 0.0
  %4369 = vmatprep.subr.mxu0 0.0
  %4370 = vmatpush1.xpose.msra.mxu0 0.0
  %4371 = vmatprep.subr.mxu0 0.0
  %4372 = vmatpush1.xpose.msra.mxu0 0.0
  %4373 = vmatprep.subr.mxu0 0.0
  %4374 = vmatpush1.xpose.msra.mxu0 0.0
  %4375 = vmatprep.subr.mxu0 0.0
  %4376 = vmatpush1.xpose.msra.mxu0 0.0
  %4377 = vmatprep.subr.mxu0 0.0
  %4378 = vmatpush1.xpose.msra.mxu0 0.0
  %4379 = vmatprep.subr.mxu0 0.0
  %4380 = vmatpush1.xpose.msra.mxu0 0.0
  %4381 = vmatprep.subr.mxu0 0.0
  %4382 = vmatpush1.xpose.msra.mxu0 0.0
  %4383 = vmatprep.subr.mxu0 0.0
  %4384 = vmatpush1.xpose.msra.mxu0 0.0
  %4385 = vmatprep.subr.mxu0 0.0
  %4386 = vmatpush1.xpose.msra.mxu0 0.0
  %4387 = vmatprep.subr.mxu0 0.0
  %4388 = vmatpush1.xpose.msra.mxu0 0.0
  %4389 = vmatprep.subr.mxu0 0.0
  %4390 = vmatpush1.xpose.msra.mxu0 %v1424
  %4391 = vmatprep.subr.mxu0 0.0
  %4392 = vmatpush1.xpose.msra.mxu0 %v1421
  %4393 = vmatprep.subr.mxu0 0.0
  %4394 = vmatpush2.xpose.msra.mxu0 0.0
  %4395 = vmatprep.subr.mxu0 0.0
  %4396 = vmatpush2.xpose.msra.mxu0 0.0
  %4397 = vmatprep.subr.mxu0 0.0
  %4398 = vmatpush2.xpose.msra.mxu0 0.0
  %4399 = vmatprep.subr.mxu0 0.0
  %4400 = vmatpush2.xpose.msra.mxu0 0.0
  %4401 = vmatprep.subr.mxu0 0.0
  %4402 = vmatpush2.xpose.msra.mxu0 0.0
  %4403 = vmatprep.subr.mxu0 0.0
  %4404 = vmatpush2.xpose.msra.mxu0 0.0
  %4405 = vmatprep.subr.mxu0 0.0
  %4406 = vmatpush2.xpose.msra.mxu0 0.0
  %4407 = vmatprep.subr.mxu0 0.0
  %4408 = vmatpush2.xpose.msra.mxu0 0.0
  %4409 = vmatprep.subr.mxu0 0.0
  %4410 = vmatpush2.xpose.msra.mxu0 0.0
  %4411 = vmatprep.subr.mxu0 0.0
  %4412 = vmatpush2.xpose.msra.mxu0 0.0
  %4413 = vmatprep.subr.mxu0 0.0
  %4414 = vmatpush2.xpose.msra.mxu0 0.0
  %4415 = vmatprep.subr.mxu0 0.0
  %4416 = vmatpush2.xpose.msra.mxu0 0.0
  %4417 = vmatprep.subr.mxu0 0.0
  %4418 = vmatpush2.xpose.msra.mxu0 0.0
  %4419 = vmatprep.subr.mxu0 0.0
  %4420 = vmatpush2.xpose.msra.mxu0 0.0
  %4421 = vmatprep.subr.mxu0 0.0
  %4422 = vmatpush2.xpose.msra.mxu0 0.0
  %4423 = vmatprep.subr.mxu0 0.0
  %4424 = vmatpush2.xpose.msra.mxu0 0.0
  %4425 = vmatprep.mubr.f32.mxu0 0.0
  %4426 = vmatmul.mubr.f32.gmra.mxu0 %v4359
  %v4427 = vpop.f32.mrf.mxu0
  %v4428 = vadd.f32 %v1493, %v4427
  %v4429 = vpop.f32.mrf.mxu0
  %4430 = vdwg.mxu0
  %v4432 = vsel %vm316, %v3911, 0
  %4434 = vmatprep.subr.mxu0 0.0
  %4435 = vmatpush1.xpose.msra.mxu0 0.0
  %4436 = vmatprep.subr.mxu0 0.0
  %4437 = vmatpush1.xpose.msra.mxu0 0.0
  %4438 = vmatprep.subr.mxu0 0.0
  %4439 = vmatpush1.xpose.msra.mxu0 0.0
  %4440 = vmatprep.subr.mxu0 0.0
  %4441 = vmatpush1.xpose.msra.mxu0 0.0
  %4442 = vmatprep.subr.mxu0 0.0
  %4443 = vmatpush1.xpose.msra.mxu0 0.0
  %4444 = vmatprep.subr.mxu0 0.0
  %4445 = vmatpush1.xpose.msra.mxu0 0.0
  %4446 = vmatprep.subr.mxu0 0.0
  %4447 = vmatpush1.xpose.msra.mxu0 0.0
  %4448 = vmatprep.subr.mxu0 0.0
  %4449 = vmatpush1.xpose.msra.mxu0 0.0
  %4450 = vmatprep.subr.mxu0 0.0
  %4451 = vmatpush1.xpose.msra.mxu0 0.0
  %4452 = vmatprep.subr.mxu0 0.0
  %4453 = vmatpush1.xpose.msra.mxu0 0.0
  %4454 = vmatprep.subr.mxu0 0.0
  %4455 = vmatpush1.xpose.msra.mxu0 0.0
  %4456 = vmatprep.subr.mxu0 0.0
  %4457 = vmatpush1.xpose.msra.mxu0 0.0
  %4458 = vmatprep.subr.mxu0 0.0
  %4459 = vmatpush1.xpose.msra.mxu0 0.0
  %4460 = vmatprep.subr.mxu0 0.0
  %4461 = vmatpush1.xpose.msra.mxu0 0.0
  %4462 = vmatprep.subr.mxu0 0.0
  %4463 = vmatpush1.xpose.msra.mxu0 %v1503
  %4464 = vmatprep.subr.mxu0 0.0
  %4465 = vmatpush1.xpose.msra.mxu0 %v1500
  %4466 = vmatprep.subr.mxu0 0.0
  %4467 = vmatpush2.xpose.msra.mxu0 0.0
  %4468 = vmatprep.subr.mxu0 0.0
  %4469 = vmatpush2.xpose.msra.mxu0 0.0
  %4470 = vmatprep.subr.mxu0 0.0
  %4471 = vmatpush2.xpose.msra.mxu0 0.0
  %4472 = vmatprep.subr.mxu0 0.0
  %4473 = vmatpush2.xpose.msra.mxu0 0.0
  %4474 = vmatprep.subr.mxu0 0.0
  %4475 = vmatpush2.xpose.msra.mxu0 0.0
  %4476 = vmatprep.subr.mxu0 0.0
  %4477 = vmatpush2.xpose.msra.mxu0 0.0
  %4478 = vmatprep.subr.mxu0 0.0
  %4479 = vmatpush2.xpose.msra.mxu0 0.0
  %4480 = vmatprep.subr.mxu0 0.0
  %4481 = vmatpush2.xpose.msra.mxu0 0.0
  %4482 = vmatprep.subr.mxu0 0.0
  %4483 = vmatpush2.xpose.msra.mxu0 0.0
  %4484 = vmatprep.subr.mxu0 0.0
  %4485 = vmatpush2.xpose.msra.mxu0 0.0
  %4486 = vmatprep.subr.mxu0 0.0
  %4487 = vmatpush2.xpose.msra.mxu0 0.0
  %4488 = vmatprep.subr.mxu0 0.0
  %4489 = vmatpush2.xpose.msra.mxu0 0.0
  %4490 = vmatprep.subr.mxu0 0.0
  %4491 = vmatpush2.xpose.msra.mxu0 0.0
  %4492 = vmatprep.subr.mxu0 0.0
  %4493 = vmatpush2.xpose.msra.mxu0 0.0
  %4494 = vmatprep.subr.mxu0 0.0
  %4495 = vmatpush2.xpose.msra.mxu0 0.0
  %4496 = vmatprep.subr.mxu0 0.0
  %4497 = vmatpush2.xpose.msra.mxu0 0.0
  %4498 = vmatprep.mubr.f32.mxu0 0.0
  %4499 = vmatmul.mubr.f32.gmra.mxu0 %v4432
  %v4500 = vpop.f32.mrf.mxu0
  %v4501 = vadd.f32 %v1572, %v4500
  %v4502 = vpop.f32.mrf.mxu0
  %4503 = vdwg.mxu0
  %v4505 = vsel %vm316, %v3912, 0
  %4507 = vmatprep.subr.mxu0 0.0
  %4508 = vmatpush1.xpose.msra.mxu0 0.0
  %4509 = vmatprep.subr.mxu0 0.0
  %4510 = vmatpush1.xpose.msra.mxu0 0.0
  %4511 = vmatprep.subr.mxu0 0.0
  %4512 = vmatpush1.xpose.msra.mxu0 0.0
  %4513 = vmatprep.subr.mxu0 0.0
  %4514 = vmatpush1.xpose.msra.mxu0 0.0
  %4515 = vmatprep.subr.mxu0 0.0
  %4516 = vmatpush1.xpose.msra.mxu0 0.0
  %4517 = vmatprep.subr.mxu0 0.0
  %4518 = vmatpush1.xpose.msra.mxu0 0.0
  %4519 = vmatprep.subr.mxu0 0.0
  %4520 = vmatpush1.xpose.msra.mxu0 0.0
  %4521 = vmatprep.subr.mxu0 0.0
  %4522 = vmatpush1.xpose.msra.mxu0 0.0
  %4523 = vmatprep.subr.mxu0 0.0
  %4524 = vmatpush1.xpose.msra.mxu0 0.0
  %4525 = vmatprep.subr.mxu0 0.0
  %4526 = vmatpush1.xpose.msra.mxu0 0.0
  %4527 = vmatprep.subr.mxu0 0.0
  %4528 = vmatpush1.xpose.msra.mxu0 0.0
  %4529 = vmatprep.subr.mxu0 0.0
  %4530 = vmatpush1.xpose.msra.mxu0 0.0
  %4531 = vmatprep.subr.mxu0 0.0
  %4532 = vmatpush1.xpose.msra.mxu0 0.0
  %4533 = vmatprep.subr.mxu0 0.0
  %4534 = vmatpush1.xpose.msra.mxu0 0.0
  %4535 = vmatprep.subr.mxu0 0.0
  %4536 = vmatpush1.xpose.msra.mxu0 %v1582
  %4537 = vmatprep.subr.mxu0 0.0
  %4538 = vmatpush1.xpose.msra.mxu0 %v1579
  %4539 = vmatprep.subr.mxu0 0.0
  %4540 = vmatpush2.xpose.msra.mxu0 0.0
  %4541 = vmatprep.subr.mxu0 0.0
  %4542 = vmatpush2.xpose.msra.mxu0 0.0
  %4543 = vmatprep.subr.mxu0 0.0
  %4544 = vmatpush2.xpose.msra.mxu0 0.0
  %4545 = vmatprep.subr.mxu0 0.0
  %4546 = vmatpush2.xpose.msra.mxu0 0.0
  %4547 = vmatprep.subr.mxu0 0.0
  %4548 = vmatpush2.xpose.msra.mxu0 0.0
  %4549 = vmatprep.subr.mxu0 0.0
  %4550 = vmatpush2.xpose.msra.mxu0 0.0
  %4551 = vmatprep.subr.mxu0 0.0
  %4552 = vmatpush2.xpose.msra.mxu0 0.0
  %4553 = vmatprep.subr.mxu0 0.0
  %4554 = vmatpush2.xpose.msra.mxu0 0.0
  %4555 = vmatprep.subr.mxu0 0.0
  %4556 = vmatpush2.xpose.msra.mxu0 0.0
  %4557 = vmatprep.subr.mxu0 0.0
  %4558 = vmatpush2.xpose.msra.mxu0 0.0
  %4559 = vmatprep.subr.mxu0 0.0
  %4560 = vmatpush2.xpose.msra.mxu0 0.0
  %4561 = vmatprep.subr.mxu0 0.0
  %4562 = vmatpush2.xpose.msra.mxu0 0.0
  %4563 = vmatprep.subr.mxu0 0.0
  %4564 = vmatpush2.xpose.msra.mxu0 0.0
  %4565 = vmatprep.subr.mxu0 0.0
  %4566 = vmatpush2.xpose.msra.mxu0 0.0
  %4567 = vmatprep.subr.mxu0 0.0
  %4568 = vmatpush2.xpose.msra.mxu0 0.0
  %4569 = vmatprep.subr.mxu0 0.0
  %4570 = vmatpush2.xpose.msra.mxu0 0.0
  %4571 = vmatprep.mubr.f32.mxu0 0.0
  %4572 = vmatmul.mubr.f32.gmra.mxu0 %v4505
  %v4573 = vpop.f32.mrf.mxu0
  %v4574 = vadd.f32 %v1651, %v4573
  %v4575 = vpop.f32.mrf.mxu0
  %4576 = vdwg.mxu0
  %v4578 = vsel %vm316, %v3913, 0
  %4580 = vmatprep.subr.mxu0 0.0
  %4581 = vmatpush1.xpose.msra.mxu0 0.0
  %4582 = vmatprep.subr.mxu0 0.0
  %4583 = vmatpush1.xpose.msra.mxu0 0.0
  %4584 = vmatprep.subr.mxu0 0.0
  %4585 = vmatpush1.xpose.msra.mxu0 0.0
  %4586 = vmatprep.subr.mxu0 0.0
  %4587 = vmatpush1.xpose.msra.mxu0 0.0
  %4588 = vmatprep.subr.mxu0 0.0
  %4589 = vmatpush1.xpose.msra.mxu0 0.0
  %4590 = vmatprep.subr.mxu0 0.0
  %4591 = vmatpush1.xpose.msra.mxu0 0.0
  %4592 = vmatprep.subr.mxu0 0.0
  %4593 = vmatpush1.xpose.msra.mxu0 0.0
  %4594 = vmatprep.subr.mxu0 0.0
  %4595 = vmatpush1.xpose.msra.mxu0 0.0
  %4596 = vmatprep.subr.mxu0 0.0
  %4597 = vmatpush1.xpose.msra.mxu0 0.0
  %4598 = vmatprep.subr.mxu0 0.0
  %4599 = vmatpush1.xpose.msra.mxu0 0.0
  %4600 = vmatprep.subr.mxu0 0.0
  %4601 = vmatpush1.xpose.msra.mxu0 0.0
  %4602 = vmatprep.subr.mxu0 0.0
  %4603 = vmatpush1.xpose.msra.mxu0 0.0
  %4604 = vmatprep.subr.mxu0 0.0
  %4605 = vmatpush1.xpose.msra.mxu0 0.0
  %4606 = vmatprep.subr.mxu0 0.0
  %4607 = vmatpush1.xpose.msra.mxu0 0.0
  %4608 = vmatprep.subr.mxu0 0.0
  %4609 = vmatpush1.xpose.msra.mxu0 %v1661
  %4610 = vmatprep.subr.mxu0 0.0
  %4611 = vmatpush1.xpose.msra.mxu0 %v1658
  %4612 = vmatprep.subr.mxu0 0.0
  %4613 = vmatpush2.xpose.msra.mxu0 0.0
  %4614 = vmatprep.subr.mxu0 0.0
  %4615 = vmatpush2.xpose.msra.mxu0 0.0
  %4616 = vmatprep.subr.mxu0 0.0
  %4617 = vmatpush2.xpose.msra.mxu0 0.0
  %4618 = vmatprep.subr.mxu0 0.0
  %4619 = vmatpush2.xpose.msra.mxu0 0.0
  %4620 = vmatprep.subr.mxu0 0.0
  %4621 = vmatpush2.xpose.msra.mxu0 0.0
  %4622 = vmatprep.subr.mxu0 0.0
  %4623 = vmatpush2.xpose.msra.mxu0 0.0
  %4624 = vmatprep.subr.mxu0 0.0
  %4625 = vmatpush2.xpose.msra.mxu0 0.0
  %4626 = vmatprep.subr.mxu0 0.0
  %4627 = vmatpush2.xpose.msra.mxu0 0.0
  %4628 = vmatprep.subr.mxu0 0.0
  %4629 = vmatpush2.xpose.msra.mxu0 0.0
  %4630 = vmatprep.subr.mxu0 0.0
  %4631 = vmatpush2.xpose.msra.mxu0 0.0
  %4632 = vmatprep.subr.mxu0 0.0
  %4633 = vmatpush2.xpose.msra.mxu0 0.0
  %4634 = vmatprep.subr.mxu0 0.0
  %4635 = vmatpush2.xpose.msra.mxu0 0.0
  %4636 = vmatprep.subr.mxu0 0.0
  %4637 = vmatpush2.xpose.msra.mxu0 0.0
  %4638 = vmatprep.subr.mxu0 0.0
  %4639 = vmatpush2.xpose.msra.mxu0 0.0
  %4640 = vmatprep.subr.mxu0 0.0
  %4641 = vmatpush2.xpose.msra.mxu0 0.0
  %4642 = vmatprep.subr.mxu0 0.0
  %4643 = vmatpush2.xpose.msra.mxu0 0.0
  %4644 = vmatprep.mubr.f32.mxu0 0.0
  %4645 = vmatmul.mubr.f32.gmra.mxu0 %v4578
  %v4646 = vpop.f32.mrf.mxu0
  %v4647 = vadd.f32 %v1730, %v4646
  %v4648 = vpop.f32.mrf.mxu0
  %4649 = vdwg.mxu0
  %v4651 = vsel %vm316, %v3914, 0
  %4653 = vmatprep.subr.mxu0 0.0
  %4654 = vmatpush1.xpose.msra.mxu0 0.0
  %4655 = vmatprep.subr.mxu0 0.0
  %4656 = vmatpush1.xpose.msra.mxu0 0.0
  %4657 = vmatprep.subr.mxu0 0.0
  %4658 = vmatpush1.xpose.msra.mxu0 0.0
  %4659 = vmatprep.subr.mxu0 0.0
  %4660 = vmatpush1.xpose.msra.mxu0 0.0
  %4661 = vmatprep.subr.mxu0 0.0
  %4662 = vmatpush1.xpose.msra.mxu0 0.0
  %4663 = vmatprep.subr.mxu0 0.0
  %4664 = vmatpush1.xpose.msra.mxu0 0.0
  %4665 = vmatprep.subr.mxu0 0.0
  %4666 = vmatpush1.xpose.msra.mxu0 0.0
  %4667 = vmatprep.subr.mxu0 0.0
  %4668 = vmatpush1.xpose.msra.mxu0 0.0
  %4669 = vmatprep.subr.mxu0 0.0
  %4670 = vmatpush1.xpose.msra.mxu0 0.0
  %4671 = vmatprep.subr.mxu0 0.0
  %4672 = vmatpush1.xpose.msra.mxu0 0.0
  %4673 = vmatprep.subr.mxu0 0.0
  %4674 = vmatpush1.xpose.msra.mxu0 0.0
  %4675 = vmatprep.subr.mxu0 0.0
  %4676 = vmatpush1.xpose.msra.mxu0 0.0
  %4677 = vmatprep.subr.mxu0 0.0
  %4678 = vmatpush1.xpose.msra.mxu0 0.0
  %4679 = vmatprep.subr.mxu0 0.0
  %4680 = vmatpush1.xpose.msra.mxu0 0.0
  %4681 = vmatprep.subr.mxu0 0.0
  %4682 = vmatpush1.xpose.msra.mxu0 %v1740
  %4683 = vmatprep.subr.mxu0 0.0
  %4684 = vmatpush1.xpose.msra.mxu0 %v1737
  %4685 = vmatprep.subr.mxu0 0.0
  %4686 = vmatpush2.xpose.msra.mxu0 0.0
  %4687 = vmatprep.subr.mxu0 0.0
  %4688 = vmatpush2.xpose.msra.mxu0 0.0
  %4689 = vmatprep.subr.mxu0 0.0
  %4690 = vmatpush2.xpose.msra.mxu0 0.0
  %4691 = vmatprep.subr.mxu0 0.0
  %4692 = vmatpush2.xpose.msra.mxu0 0.0
  %4693 = vmatprep.subr.mxu0 0.0
  %4694 = vmatpush2.xpose.msra.mxu0 0.0
  %4695 = vmatprep.subr.mxu0 0.0
  %4696 = vmatpush2.xpose.msra.mxu0 0.0
  %4697 = vmatprep.subr.mxu0 0.0
  %4698 = vmatpush2.xpose.msra.mxu0 0.0
  %4699 = vmatprep.subr.mxu0 0.0
  %4700 = vmatpush2.xpose.msra.mxu0 0.0
  %4701 = vmatprep.subr.mxu0 0.0
  %4702 = vmatpush2.xpose.msra.mxu0 0.0
  %4703 = vmatprep.subr.mxu0 0.0
  %4704 = vmatpush2.xpose.msra.mxu0 0.0
  %4705 = vmatprep.subr.mxu0 0.0
  %4706 = vmatpush2.xpose.msra.mxu0 0.0
  %4707 = vmatprep.subr.mxu0 0.0
  %4708 = vmatpush2.xpose.msra.mxu0 0.0
  %4709 = vmatprep.subr.mxu0 0.0
  %4710 = vmatpush2.xpose.msra.mxu0 0.0
  %4711 = vmatprep.subr.mxu0 0.0
  %4712 = vmatpush2.xpose.msra.mxu0 0.0
  %4713 = vmatprep.subr.mxu0 0.0
  %4714 = vmatpush2.xpose.msra.mxu0 0.0
  %4715 = vmatprep.subr.mxu0 0.0
  %4716 = vmatpush2.xpose.msra.mxu0 0.0
  %4717 = vmatprep.mubr.f32.mxu0 0.0
  %4718 = vmatmul.mubr.f32.gmra.mxu0 %v4651
  %v4719 = vpop.f32.mrf.mxu0
  %v4720 = vadd.f32 %v1809, %v4719
  %v4721 = vpop.f32.mrf.mxu0
  %4722 = vdwg.mxu0
  %v4724 = vsel %vm316, %v3915, 0
  %4726 = vmatprep.subr.mxu0 0.0
  %4727 = vmatpush1.xpose.msra.mxu0 0.0
  %4728 = vmatprep.subr.mxu0 0.0
  %4729 = vmatpush1.xpose.msra.mxu0 0.0
  %4730 = vmatprep.subr.mxu0 0.0
  %4731 = vmatpush1.xpose.msra.mxu0 0.0
  %4732 = vmatprep.subr.mxu0 0.0
  %4733 = vmatpush1.xpose.msra.mxu0 0.0
  %4734 = vmatprep.subr.mxu0 0.0
  %4735 = vmatpush1.xpose.msra.mxu0 0.0
  %4736 = vmatprep.subr.mxu0 0.0
  %4737 = vmatpush1.xpose.msra.mxu0 0.0
  %4738 = vmatprep.subr.mxu0 0.0
  %4739 = vmatpush1.xpose.msra.mxu0 0.0
  %4740 = vmatprep.subr.mxu0 0.0
  %4741 = vmatpush1.xpose.msra.mxu0 0.0
  %4742 = vmatprep.subr.mxu0 0.0
  %4743 = vmatpush1.xpose.msra.mxu0 0.0
  %4744 = vmatprep.subr.mxu0 0.0
  %4745 = vmatpush1.xpose.msra.mxu0 0.0
  %4746 = vmatprep.subr.mxu0 0.0
  %4747 = vmatpush1.xpose.msra.mxu0 0.0
  %4748 = vmatprep.subr.mxu0 0.0
  %4749 = vmatpush1.xpose.msra.mxu0 0.0
  %4750 = vmatprep.subr.mxu0 0.0
  %4751 = vmatpush1.xpose.msra.mxu0 0.0
  %4752 = vmatprep.subr.mxu0 0.0
  %4753 = vmatpush1.xpose.msra.mxu0 0.0
  %4754 = vmatprep.subr.mxu0 0.0
  %4755 = vmatpush1.xpose.msra.mxu0 %v1819
  %4756 = vmatprep.subr.mxu0 0.0
  %4757 = vmatpush1.xpose.msra.mxu0 %v1816
  %4758 = vmatprep.subr.mxu0 0.0
  %4759 = vmatpush2.xpose.msra.mxu0 0.0
  %4760 = vmatprep.subr.mxu0 0.0
  %4761 = vmatpush2.xpose.msra.mxu0 0.0
  %4762 = vmatprep.subr.mxu0 0.0
  %4763 = vmatpush2.xpose.msra.mxu0 0.0
  %4764 = vmatprep.subr.mxu0 0.0
  %4765 = vmatpush2.xpose.msra.mxu0 0.0
  %4766 = vmatprep.subr.mxu0 0.0
  %4767 = vmatpush2.xpose.msra.mxu0 0.0
  %4768 = vmatprep.subr.mxu0 0.0
  %4769 = vmatpush2.xpose.msra.mxu0 0.0
  %4770 = vmatprep.subr.mxu0 0.0
  %4771 = vmatpush2.xpose.msra.mxu0 0.0
  %4772 = vmatprep.subr.mxu0 0.0
  %4773 = vmatpush2.xpose.msra.mxu0 0.0
  %4774 = vmatprep.subr.mxu0 0.0
  %4775 = vmatpush2.xpose.msra.mxu0 0.0
  %4776 = vmatprep.subr.mxu0 0.0
  %4777 = vmatpush2.xpose.msra.mxu0 0.0
  %4778 = vmatprep.subr.mxu0 0.0
  %4779 = vmatpush2.xpose.msra.mxu0 0.0
  %4780 = vmatprep.subr.mxu0 0.0
  %4781 = vmatpush2.xpose.msra.mxu0 0.0
  %4782 = vmatprep.subr.mxu0 0.0
  %4783 = vmatpush2.xpose.msra.mxu0 0.0
  %4784 = vmatprep.subr.mxu0 0.0
  %4785 = vmatpush2.xpose.msra.mxu0 0.0
  %4786 = vmatprep.subr.mxu0 0.0
  %4787 = vmatpush2.xpose.msra.mxu0 0.0
  %4788 = vmatprep.subr.mxu0 0.0
  %4789 = vmatpush2.xpose.msra.mxu0 0.0
  %4790 = vmatprep.mubr.f32.mxu0 0.0
  %4791 = vmatmul.mubr.f32.gmra.mxu0 %v4724
  %v4792 = vpop.f32.mrf.mxu0
  %v4793 = vadd.f32 %v1888, %v4792
  %v4794 = vpop.f32.mrf.mxu0
  %4795 = vdwg.mxu0
  %v4797 = vsel %vm316, %v3916, 0
  %4799 = vmatprep.subr.mxu0 0.0
  %4800 = vmatpush1.xpose.msra.mxu0 0.0
  %4801 = vmatprep.subr.mxu0 0.0
  %4802 = vmatpush1.xpose.msra.mxu0 0.0
  %4803 = vmatprep.subr.mxu0 0.0
  %4804 = vmatpush1.xpose.msra.mxu0 0.0
  %4805 = vmatprep.subr.mxu0 0.0
  %4806 = vmatpush1.xpose.msra.mxu0 0.0
  %4807 = vmatprep.subr.mxu0 0.0
  %4808 = vmatpush1.xpose.msra.mxu0 0.0
  %4809 = vmatprep.subr.mxu0 0.0
  %4810 = vmatpush1.xpose.msra.mxu0 0.0
  %4811 = vmatprep.subr.mxu0 0.0
  %4812 = vmatpush1.xpose.msra.mxu0 0.0
  %4813 = vmatprep.subr.mxu0 0.0
  %4814 = vmatpush1.xpose.msra.mxu0 0.0
  %4815 = vmatprep.subr.mxu0 0.0
  %4816 = vmatpush1.xpose.msra.mxu0 0.0
  %4817 = vmatprep.subr.mxu0 0.0
  %4818 = vmatpush1.xpose.msra.mxu0 0.0
  %4819 = vmatprep.subr.mxu0 0.0
  %4820 = vmatpush1.xpose.msra.mxu0 0.0
  %4821 = vmatprep.subr.mxu0 0.0
  %4822 = vmatpush1.xpose.msra.mxu0 0.0
  %4823 = vmatprep.subr.mxu0 0.0
  %4824 = vmatpush1.xpose.msra.mxu0 0.0
  %4825 = vmatprep.subr.mxu0 0.0
  %4826 = vmatpush1.xpose.msra.mxu0 0.0
  %4827 = vmatprep.subr.mxu0 0.0
  %4828 = vmatpush1.xpose.msra.mxu0 %v1898
  %4829 = vmatprep.subr.mxu0 0.0
  %4830 = vmatpush1.xpose.msra.mxu0 %v1895
  %4831 = vmatprep.subr.mxu0 0.0
  %4832 = vmatpush2.xpose.msra.mxu0 0.0
  %4833 = vmatprep.subr.mxu0 0.0
  %4834 = vmatpush2.xpose.msra.mxu0 0.0
  %4835 = vmatprep.subr.mxu0 0.0
  %4836 = vmatpush2.xpose.msra.mxu0 0.0
  %4837 = vmatprep.subr.mxu0 0.0
  %4838 = vmatpush2.xpose.msra.mxu0 0.0
  %4839 = vmatprep.subr.mxu0 0.0
  %4840 = vmatpush2.xpose.msra.mxu0 0.0
  %4841 = vmatprep.subr.mxu0 0.0
  %4842 = vmatpush2.xpose.msra.mxu0 0.0
  %4843 = vmatprep.subr.mxu0 0.0
  %4844 = vmatpush2.xpose.msra.mxu0 0.0
  %4845 = vmatprep.subr.mxu0 0.0
  %4846 = vmatpush2.xpose.msra.mxu0 0.0
  %4847 = vmatprep.subr.mxu0 0.0
  %4848 = vmatpush2.xpose.msra.mxu0 0.0
  %4849 = vmatprep.subr.mxu0 0.0
  %4850 = vmatpush2.xpose.msra.mxu0 0.0
  %4851 = vmatprep.subr.mxu0 0.0
  %4852 = vmatpush2.xpose.msra.mxu0 0.0
  %4853 = vmatprep.subr.mxu0 0.0
  %4854 = vmatpush2.xpose.msra.mxu0 0.0
  %4855 = vmatprep.subr.mxu0 0.0
  %4856 = vmatpush2.xpose.msra.mxu0 0.0
  %4857 = vmatprep.subr.mxu0 0.0
  %4858 = vmatpush2.xpose.msra.mxu0 0.0
  %4859 = vmatprep.subr.mxu0 0.0
  %4860 = vmatpush2.xpose.msra.mxu0 0.0
  %4861 = vmatprep.subr.mxu0 0.0
  %4862 = vmatpush2.xpose.msra.mxu0 0.0
  %4863 = vmatprep.mubr.f32.mxu0 0.0
  %4864 = vmatmul.mubr.f32.gmra.mxu0 %v4797
  %v4865 = vpop.f32.mrf.mxu0
  %v4866 = vadd.f32 %v1967, %v4865
  %v4867 = vpop.f32.mrf.mxu0
  %4868 = vdwg.mxu0
  %v4870 = vsel %vm316, %v3917, 0
  %4872 = vmatprep.subr.mxu0 0.0
  %4873 = vmatpush1.xpose.msra.mxu0 0.0
  %4874 = vmatprep.subr.mxu0 0.0
  %4875 = vmatpush1.xpose.msra.mxu0 0.0
  %4876 = vmatprep.subr.mxu0 0.0
  %4877 = vmatpush1.xpose.msra.mxu0 0.0
  %4878 = vmatprep.subr.mxu0 0.0
  %4879 = vmatpush1.xpose.msra.mxu0 0.0
  %4880 = vmatprep.subr.mxu0 0.0
  %4881 = vmatpush1.xpose.msra.mxu0 0.0
  %4882 = vmatprep.subr.mxu0 0.0
  %4883 = vmatpush1.xpose.msra.mxu0 0.0
  %4884 = vmatprep.subr.mxu0 0.0
  %4885 = vmatpush1.xpose.msra.mxu0 0.0
  %4886 = vmatprep.subr.mxu0 0.0
  %4887 = vmatpush1.xpose.msra.mxu0 0.0
  %4888 = vmatprep.subr.mxu0 0.0
  %4889 = vmatpush1.xpose.msra.mxu0 0.0
  %4890 = vmatprep.subr.mxu0 0.0
  %4891 = vmatpush1.xpose.msra.mxu0 0.0
  %4892 = vmatprep.subr.mxu0 0.0
  %4893 = vmatpush1.xpose.msra.mxu0 0.0
  %4894 = vmatprep.subr.mxu0 0.0
  %4895 = vmatpush1.xpose.msra.mxu0 0.0
  %4896 = vmatprep.subr.mxu0 0.0
  %4897 = vmatpush1.xpose.msra.mxu0 0.0
  %4898 = vmatprep.subr.mxu0 0.0
  %4899 = vmatpush1.xpose.msra.mxu0 0.0
  %4900 = vmatprep.subr.mxu0 0.0
  %4901 = vmatpush1.xpose.msra.mxu0 %v1977
  %4902 = vmatprep.subr.mxu0 0.0
  %4903 = vmatpush1.xpose.msra.mxu0 %v1974
  %4904 = vmatprep.subr.mxu0 0.0
  %4905 = vmatpush2.xpose.msra.mxu0 0.0
  %4906 = vmatprep.subr.mxu0 0.0
  %4907 = vmatpush2.xpose.msra.mxu0 0.0
  %4908 = vmatprep.subr.mxu0 0.0
  %4909 = vmatpush2.xpose.msra.mxu0 0.0
  %4910 = vmatprep.subr.mxu0 0.0
  %4911 = vmatpush2.xpose.msra.mxu0 0.0
  %4912 = vmatprep.subr.mxu0 0.0
  %4913 = vmatpush2.xpose.msra.mxu0 0.0
  %4914 = vmatprep.subr.mxu0 0.0
  %4915 = vmatpush2.xpose.msra.mxu0 0.0
  %4916 = vmatprep.subr.mxu0 0.0
  %4917 = vmatpush2.xpose.msra.mxu0 0.0
  %4918 = vmatprep.subr.mxu0 0.0
  %4919 = vmatpush2.xpose.msra.mxu0 0.0
  %4920 = vmatprep.subr.mxu0 0.0
  %4921 = vmatpush2.xpose.msra.mxu0 0.0
  %4922 = vmatprep.subr.mxu0 0.0
  %4923 = vmatpush2.xpose.msra.mxu0 0.0
  %4924 = vmatprep.subr.mxu0 0.0
  %4925 = vmatpush2.xpose.msra.mxu0 0.0
  %4926 = vmatprep.subr.mxu0 0.0
  %4927 = vmatpush2.xpose.msra.mxu0 0.0
  %4928 = vmatprep.subr.mxu0 0.0
  %4929 = vmatpush2.xpose.msra.mxu0 0.0
  %4930 = vmatprep.subr.mxu0 0.0
  %4931 = vmatpush2.xpose.msra.mxu0 0.0
  %4932 = vmatprep.subr.mxu0 0.0
  %4933 = vmatpush2.xpose.msra.mxu0 0.0
  %4934 = vmatprep.subr.mxu0 0.0
  %4935 = vmatpush2.xpose.msra.mxu0 0.0
  %4936 = vmatprep.mubr.f32.mxu0 0.0
  %4937 = vmatmul.mubr.f32.gmra.mxu0 %v4870
  %v4938 = vpop.f32.mrf.mxu0
  %v4939 = vadd.f32 %v2046, %v4938
  %v4940 = vpop.f32.mrf.mxu0
  %4941 = vdwg.mxu0
  %v4943 = vsel %vm316, %v3918, 0
  %4945 = vmatprep.subr.mxu0 0.0
  %4946 = vmatpush1.xpose.msra.mxu0 0.0
  %4947 = vmatprep.subr.mxu0 0.0
  %4948 = vmatpush1.xpose.msra.mxu0 0.0
  %4949 = vmatprep.subr.mxu0 0.0
  %4950 = vmatpush1.xpose.msra.mxu0 0.0
  %4951 = vmatprep.subr.mxu0 0.0
  %4952 = vmatpush1.xpose.msra.mxu0 0.0
  %4953 = vmatprep.subr.mxu0 0.0
  %4954 = vmatpush1.xpose.msra.mxu0 0.0
  %4955 = vmatprep.subr.mxu0 0.0
  %4956 = vmatpush1.xpose.msra.mxu0 0.0
  %4957 = vmatprep.subr.mxu0 0.0
  %4958 = vmatpush1.xpose.msra.mxu0 0.0
  %4959 = vmatprep.subr.mxu0 0.0
  %4960 = vmatpush1.xpose.msra.mxu0 0.0
  %4961 = vmatprep.subr.mxu0 0.0
  %4962 = vmatpush1.xpose.msra.mxu0 0.0
  %4963 = vmatprep.subr.mxu0 0.0
  %4964 = vmatpush1.xpose.msra.mxu0 0.0
  %4965 = vmatprep.subr.mxu0 0.0
  %4966 = vmatpush1.xpose.msra.mxu0 0.0
  %4967 = vmatprep.subr.mxu0 0.0
  %4968 = vmatpush1.xpose.msra.mxu0 0.0
  %4969 = vmatprep.subr.mxu0 0.0
  %4970 = vmatpush1.xpose.msra.mxu0 0.0
  %4971 = vmatprep.subr.mxu0 0.0
  %4972 = vmatpush1.xpose.msra.mxu0 0.0
  %4973 = vmatprep.subr.mxu0 0.0
  %4974 = vmatpush1.xpose.msra.mxu0 %v2056
  %4975 = vmatprep.subr.mxu0 0.0
  %4976 = vmatpush1.xpose.msra.mxu0 %v2053
  %4977 = vmatprep.subr.mxu0 0.0
  %4978 = vmatpush2.xpose.msra.mxu0 0.0
  %4979 = vmatprep.subr.mxu0 0.0
  %4980 = vmatpush2.xpose.msra.mxu0 0.0
  %4981 = vmatprep.subr.mxu0 0.0
  %4982 = vmatpush2.xpose.msra.mxu0 0.0
  %4983 = vmatprep.subr.mxu0 0.0
  %4984 = vmatpush2.xpose.msra.mxu0 0.0
  %4985 = vmatprep.subr.mxu0 0.0
  %4986 = vmatpush2.xpose.msra.mxu0 0.0
  %4987 = vmatprep.subr.mxu0 0.0
  %4988 = vmatpush2.xpose.msra.mxu0 0.0
  %4989 = vmatprep.subr.mxu0 0.0
  %4990 = vmatpush2.xpose.msra.mxu0 0.0
  %4991 = vmatprep.subr.mxu0 0.0
  %4992 = vmatpush2.xpose.msra.mxu0 0.0
  %4993 = vmatprep.subr.mxu0 0.0
  %4994 = vmatpush2.xpose.msra.mxu0 0.0
  %4995 = vmatprep.subr.mxu0 0.0
  %4996 = vmatpush2.xpose.msra.mxu0 0.0
  %4997 = vmatprep.subr.mxu0 0.0
  %4998 = vmatpush2.xpose.msra.mxu0 0.0
  %4999 = vmatprep.subr.mxu0 0.0
  %5000 = vmatpush2.xpose.msra.mxu0 0.0
  %5001 = vmatprep.subr.mxu0 0.0
  %5002 = vmatpush2.xpose.msra.mxu0 0.0
  %5003 = vmatprep.subr.mxu0 0.0
  %5004 = vmatpush2.xpose.msra.mxu0 0.0
  %5005 = vmatprep.subr.mxu0 0.0
  %5006 = vmatpush2.xpose.msra.mxu0 0.0
  %5007 = vmatprep.subr.mxu0 0.0
  %5008 = vmatpush2.xpose.msra.mxu0 0.0
  %5009 = vmatprep.mubr.f32.mxu0 0.0
  %5010 = vmatmul.mubr.f32.gmra.mxu0 %v4943
  %v5011 = vpop.f32.mrf.mxu0
  %v5012 = vadd.f32 %v2125, %v5011
  %v5013 = vpop.f32.mrf.mxu0
  %5014 = vdwg.mxu0
  %v5016 = vsel %vm316, %v3919, 0
  %5018 = vmatprep.subr.mxu0 0.0
  %5019 = vmatpush1.xpose.msra.mxu0 0.0
  %5020 = vmatprep.subr.mxu0 0.0
  %5021 = vmatpush1.xpose.msra.mxu0 0.0
  %5022 = vmatprep.subr.mxu0 0.0
  %5023 = vmatpush1.xpose.msra.mxu0 0.0
  %5024 = vmatprep.subr.mxu0 0.0
  %5025 = vmatpush1.xpose.msra.mxu0 0.0
  %5026 = vmatprep.subr.mxu0 0.0
  %5027 = vmatpush1.xpose.msra.mxu0 0.0
  %5028 = vmatprep.subr.mxu0 0.0
  %5029 = vmatpush1.xpose.msra.mxu0 0.0
  %5030 = vmatprep.subr.mxu0 0.0
  %5031 = vmatpush1.xpose.msra.mxu0 0.0
  %5032 = vmatprep.subr.mxu0 0.0
  %5033 = vmatpush1.xpose.msra.mxu0 0.0
  %5034 = vmatprep.subr.mxu0 0.0
  %5035 = vmatpush1.xpose.msra.mxu0 0.0
  %5036 = vmatprep.subr.mxu0 0.0
  %5037 = vmatpush1.xpose.msra.mxu0 0.0
  %5038 = vmatprep.subr.mxu0 0.0
  %5039 = vmatpush1.xpose.msra.mxu0 0.0
  %5040 = vmatprep.subr.mxu0 0.0
  %5041 = vmatpush1.xpose.msra.mxu0 0.0
  %5042 = vmatprep.subr.mxu0 0.0
  %5043 = vmatpush1.xpose.msra.mxu0 0.0
  %5044 = vmatprep.subr.mxu0 0.0
  %5045 = vmatpush1.xpose.msra.mxu0 0.0
  %5046 = vmatprep.subr.mxu0 0.0
  %5047 = vmatpush1.xpose.msra.mxu0 %v2135
  %5048 = vmatprep.subr.mxu0 0.0
  %5049 = vmatpush1.xpose.msra.mxu0 %v2132
  %5050 = vmatprep.subr.mxu0 0.0
  %5051 = vmatpush2.xpose.msra.mxu0 0.0
  %5052 = vmatprep.subr.mxu0 0.0
  %5053 = vmatpush2.xpose.msra.mxu0 0.0
  %5054 = vmatprep.subr.mxu0 0.0
  %5055 = vmatpush2.xpose.msra.mxu0 0.0
  %5056 = vmatprep.subr.mxu0 0.0
  %5057 = vmatpush2.xpose.msra.mxu0 0.0
  %5058 = vmatprep.subr.mxu0 0.0
  %5059 = vmatpush2.xpose.msra.mxu0 0.0
  %5060 = vmatprep.subr.mxu0 0.0
  %5061 = vmatpush2.xpose.msra.mxu0 0.0
  %5062 = vmatprep.subr.mxu0 0.0
  %5063 = vmatpush2.xpose.msra.mxu0 0.0
  %5064 = vmatprep.subr.mxu0 0.0
  %5065 = vmatpush2.xpose.msra.mxu0 0.0
  %5066 = vmatprep.subr.mxu0 0.0
  %5067 = vmatpush2.xpose.msra.mxu0 0.0
  %5068 = vmatprep.subr.mxu0 0.0
  %5069 = vmatpush2.xpose.msra.mxu0 0.0
  %5070 = vmatprep.subr.mxu0 0.0
  %5071 = vmatpush2.xpose.msra.mxu0 0.0
  %5072 = vmatprep.subr.mxu0 0.0
  %5073 = vmatpush2.xpose.msra.mxu0 0.0
  %5074 = vmatprep.subr.mxu0 0.0
  %5075 = vmatpush2.xpose.msra.mxu0 0.0
  %5076 = vmatprep.subr.mxu0 0.0
  %5077 = vmatpush2.xpose.msra.mxu0 0.0
  %5078 = vmatprep.subr.mxu0 0.0
  %5079 = vmatpush2.xpose.msra.mxu0 0.0
  %5080 = vmatprep.subr.mxu0 0.0
  %5081 = vmatpush2.xpose.msra.mxu0 0.0
  %5082 = vmatprep.mubr.f32.mxu0 0.0
  %5083 = vmatmul.mubr.f32.gmra.mxu0 %v5016
  %v5084 = vpop.f32.mrf.mxu0
  %v5085 = vadd.f32 %v2204, %v5084
  %v5086 = vpop.f32.mrf.mxu0
  %5087 = vdwg.mxu0
  %v5088 = vadd.f32 %v3990, %v837
  %v5089 = vadd.f32 %v4063, %v844
  %v5090 = vadd.f32 %v4136, %v851
  %v5091 = vadd.f32 %v4209, %v858
  %v5092 = vadd.f32 %v4282, %v865
  %v5093 = vadd.f32 %v4355, %v872
  %v5094 = vadd.f32 %v4428, %v879
  %v5095 = vadd.f32 %v4501, %v886
  %v5096 = vadd.f32 %v4574, %v893
  %v5097 = vadd.f32 %v4647, %v900
  %v5098 = vadd.f32 %v4720, %v907
  %v5099 = vadd.f32 %v4793, %v914
  %v5100 = vadd.f32 %v4866, %v921
  %v5101 = vadd.f32 %v4939, %v928
  %v5102 = vadd.f32 %v5012, %v935
  %v5103 = vadd.f32 %v5085, %v942
  %v5104 = vsel %vm2207, %v5088, -inf
  %v5105 = vrot.slane %v5104, 4
  %v5106 = vmax.f32 %v5104, %v5105
  %v5107 = vrot.slane %v5106, 2
  %v5108 = vmax.f32 %v5106, %v5107
  %v5109 = vrot.slane %v5108, 1
  %v5110 = vmax.f32 %v5108, %v5109
  %v5111 = vsel %vm2207, %v5089, -inf
  %v5112 = vrot.slane %v5111, 4
  %v5113 = vmax.f32 %v5111, %v5112
  %v5114 = vrot.slane %v5113, 2
  %v5115 = vmax.f32 %v5113, %v5114
  %v5116 = vrot.slane %v5115, 1
  %v5117 = vmax.f32 %v5115, %v5116
  %v5118 = vsel %vm2207, %v5090, -inf
  %v5119 = vrot.slane %v5118, 4
  %v5120 = vmax.f32 %v5118, %v5119
  %v5121 = vrot.slane %v5120, 2
  %v5122 = vmax.f32 %v5120, %v5121
  %v5123 = vrot.slane %v5122, 1
  %v5124 = vmax.f32 %v5122, %v5123
  %v5125 = vsel %vm2207, %v5091, -inf
  %v5126 = vrot.slane %v5125, 4
  %v5127 = vmax.f32 %v5125, %v5126
  %v5128 = vrot.slane %v5127, 2
  %v5129 = vmax.f32 %v5127, %v5128
  %v5130 = vrot.slane %v5129, 1
  %v5131 = vmax.f32 %v5129, %v5130
  %v5132 = vsel %vm2207, %v5092, -inf
  %v5133 = vrot.slane %v5132, 4
  %v5134 = vmax.f32 %v5132, %v5133
  %v5135 = vrot.slane %v5134, 2
  %v5136 = vmax.f32 %v5134, %v5135
  %v5137 = vrot.slane %v5136, 1
  %v5138 = vmax.f32 %v5136, %v5137
  %v5139 = vsel %vm2207, %v5093, -inf
  %v5140 = vrot.slane %v5139, 4
  %v5141 = vmax.f32 %v5139, %v5140
  %v5142 = vrot.slane %v5141, 2
  %v5143 = vmax.f32 %v5141, %v5142
  %v5144 = vrot.slane %v5143, 1
  %v5145 = vmax.f32 %v5143, %v5144
  %v5146 = vsel %vm2207, %v5094, -inf
  %v5147 = vrot.slane %v5146, 4
  %v5148 = vmax.f32 %v5146, %v5147
  %v5149 = vrot.slane %v5148, 2
  %v5150 = vmax.f32 %v5148, %v5149
  %v5151 = vrot.slane %v5150, 1
  %v5152 = vmax.f32 %v5150, %v5151
  %v5153 = vsel %vm2207, %v5095, -inf
  %v5154 = vrot.slane %v5153, 4
  %v5155 = vmax.f32 %v5153, %v5154
  %v5156 = vrot.slane %v5155, 2
  %v5157 = vmax.f32 %v5155, %v5156
  %v5158 = vrot.slane %v5157, 1
  %v5159 = vmax.f32 %v5157, %v5158
  %v5160 = vsel %vm2207, %v5096, -inf
  %v5161 = vrot.slane %v5160, 4
  %v5162 = vmax.f32 %v5160, %v5161
  %v5163 = vrot.slane %v5162, 2
  %v5164 = vmax.f32 %v5162, %v5163
  %v5165 = vrot.slane %v5164, 1
  %v5166 = vmax.f32 %v5164, %v5165
  %v5167 = vsel %vm2207, %v5097, -inf
  %v5168 = vrot.slane %v5167, 4
  %v5169 = vmax.f32 %v5167, %v5168
  %v5170 = vrot.slane %v5169, 2
  %v5171 = vmax.f32 %v5169, %v5170
  %v5172 = vrot.slane %v5171, 1
  %v5173 = vmax.f32 %v5171, %v5172
  %v5174 = vsel %vm2207, %v5098, -inf
  %v5175 = vrot.slane %v5174, 4
  %v5176 = vmax.f32 %v5174, %v5175
  %v5177 = vrot.slane %v5176, 2
  %v5178 = vmax.f32 %v5176, %v5177
  %v5179 = vrot.slane %v5178, 1
  %v5180 = vmax.f32 %v5178, %v5179
  %v5181 = vsel %vm2207, %v5099, -inf
  %v5182 = vrot.slane %v5181, 4
  %v5183 = vmax.f32 %v5181, %v5182
  %v5184 = vrot.slane %v5183, 2
  %v5185 = vmax.f32 %v5183, %v5184
  %v5186 = vrot.slane %v5185, 1
  %v5187 = vmax.f32 %v5185, %v5186
  %v5188 = vsel %vm2207, %v5100, -inf
  %v5189 = vrot.slane %v5188, 4
  %v5190 = vmax.f32 %v5188, %v5189
  %v5191 = vrot.slane %v5190, 2
  %v5192 = vmax.f32 %v5190, %v5191
  %v5193 = vrot.slane %v5192, 1
  %v5194 = vmax.f32 %v5192, %v5193
  %v5195 = vsel %vm2207, %v5101, -inf
  %v5196 = vrot.slane %v5195, 4
  %v5197 = vmax.f32 %v5195, %v5196
  %v5198 = vrot.slane %v5197, 2
  %v5199 = vmax.f32 %v5197, %v5198
  %v5200 = vrot.slane %v5199, 1
  %v5201 = vmax.f32 %v5199, %v5200
  %v5202 = vsel %vm2207, %v5102, -inf
  %v5203 = vrot.slane %v5202, 4
  %v5204 = vmax.f32 %v5202, %v5203
  %v5205 = vrot.slane %v5204, 2
  %v5206 = vmax.f32 %v5204, %v5205
  %v5207 = vrot.slane %v5206, 1
  %v5208 = vmax.f32 %v5206, %v5207
  %v5209 = vsel %vm2207, %v5103, -inf
  %v5210 = vrot.slane %v5209, 4
  %v5211 = vmax.f32 %v5209, %v5210
  %v5212 = vrot.slane %v5211, 2
  %v5213 = vmax.f32 %v5211, %v5212
  %v5214 = vrot.slane %v5213, 1
  %v5215 = vmax.f32 %v5213, %v5214
  %v5216 = vsub.f32 %v5088, %v5110
  %v5217 = vsub.f32 %v5089, %v5117
  %v5218 = vsub.f32 %v5090, %v5124
  %v5219 = vsub.f32 %v5091, %v5131
  %v5220 = vsub.f32 %v5092, %v5138
  %v5221 = vsub.f32 %v5093, %v5145
  %v5222 = vsub.f32 %v5094, %v5152
  %v5223 = vsub.f32 %v5095, %v5159
  %v5224 = vsub.f32 %v5096, %v5166
  %v5225 = vsub.f32 %v5097, %v5173
  %v5226 = vsub.f32 %v5098, %v5180
  %v5227 = vsub.f32 %v5099, %v5187
  %v5228 = vsub.f32 %v5100, %v5194
  %v5229 = vsub.f32 %v5101, %v5201
  %v5230 = vsub.f32 %v5102, %v5208
  %v5231 = vsub.f32 %v5103, %v5215
  %v5232 = vmul.f32 %v5216, 1.442695
  %v5233 = vpow.pop %v5232
  %v5234 = vmul.f32 %v5217, 1.442695
  %v5235 = vpow.pop %v5234
  %v5236 = vmul.f32 %v5218, 1.442695
  %v5237 = vpow.pop %v5236
  %v5238 = vmul.f32 %v5219, 1.442695
  %v5239 = vpow.pop %v5238
  %v5240 = vmul.f32 %v5220, 1.442695
  %v5241 = vpow.pop %v5240
  %v5242 = vmul.f32 %v5221, 1.442695
  %v5243 = vpow.pop %v5242
  %v5244 = vmul.f32 %v5222, 1.442695
  %v5245 = vpow.pop %v5244
  %v5246 = vmul.f32 %v5223, 1.442695
  %v5247 = vpow.pop %v5246
  %v5248 = vmul.f32 %v5224, 1.442695
  %v5249 = vpow.pop %v5248
  %v5250 = vmul.f32 %v5225, 1.442695
  %v5251 = vpow.pop %v5250
  %v5252 = vmul.f32 %v5226, 1.442695
  %v5253 = vpow.pop %v5252
  %v5254 = vmul.f32 %v5227, 1.442695
  %v5255 = vpow.pop %v5254
  %v5256 = vmul.f32 %v5228, 1.442695
  %v5257 = vpow.pop %v5256
  %v5258 = vmul.f32 %v5229, 1.442695
  %v5259 = vpow.pop %v5258
  %v5260 = vmul.f32 %v5230, 1.442695
  %v5261 = vpow.pop %v5260
  %v5262 = vmul.f32 %v5231, 1.442695
  %v5263 = vpow.pop %v5262
  %v5264 = vsel %vm2207, %v5233, 0.0
  %v5265 = vrot.slane %v5264, 4
  %v5266 = vadd.f32 %v5264, %v5265
  %v5267 = vrot.slane %v5266, 2
  %v5268 = vadd.f32 %v5266, %v5267
  %v5269 = vrot.slane %v5268, 1
  %v5270 = vadd.f32 %v5268, %v5269
  %v5271 = vsel %vm2207, %v5235, 0.0
  %v5272 = vrot.slane %v5271, 4
  %v5273 = vadd.f32 %v5271, %v5272
  %v5274 = vrot.slane %v5273, 2
  %v5275 = vadd.f32 %v5273, %v5274
  %v5276 = vrot.slane %v5275, 1
  %v5277 = vadd.f32 %v5275, %v5276
  %v5278 = vsel %vm2207, %v5237, 0.0
  %v5279 = vrot.slane %v5278, 4
  %v5280 = vadd.f32 %v5278, %v5279
  %v5281 = vrot.slane %v5280, 2
  %v5282 = vadd.f32 %v5280, %v5281
  %v5283 = vrot.slane %v5282, 1
  %v5284 = vadd.f32 %v5282, %v5283
  %v5285 = vsel %vm2207, %v5239, 0.0
  %v5286 = vrot.slane %v5285, 4
  %v5287 = vadd.f32 %v5285, %v5286
  %v5288 = vrot.slane %v5287, 2
  %v5289 = vadd.f32 %v5287, %v5288
  %v5290 = vrot.slane %v5289, 1
  %v5291 = vadd.f32 %v5289, %v5290
  %v5292 = vsel %vm2207, %v5241, 0.0
  %v5293 = vrot.slane %v5292, 4
  %v5294 = vadd.f32 %v5292, %v5293
  %v5295 = vrot.slane %v5294, 2
  %v5296 = vadd.f32 %v5294, %v5295
  %v5297 = vrot.slane %v5296, 1
  %v5298 = vadd.f32 %v5296, %v5297
  %v5299 = vsel %vm2207, %v5243, 0.0
  %v5300 = vrot.slane %v5299, 4
  %v5301 = vadd.f32 %v5299, %v5300
  %v5302 = vrot.slane %v5301, 2
  %v5303 = vadd.f32 %v5301, %v5302
  %v5304 = vrot.slane %v5303, 1
  %v5305 = vadd.f32 %v5303, %v5304
  %v5306 = vsel %vm2207, %v5245, 0.0
  %v5307 = vrot.slane %v5306, 4
  %v5308 = vadd.f32 %v5306, %v5307
  %v5309 = vrot.slane %v5308, 2
  %v5310 = vadd.f32 %v5308, %v5309
  %v5311 = vrot.slane %v5310, 1
  %v5312 = vadd.f32 %v5310, %v5311
  %v5313 = vsel %vm2207, %v5247, 0.0
  %v5314 = vrot.slane %v5313, 4
  %v5315 = vadd.f32 %v5313, %v5314
  %v5316 = vrot.slane %v5315, 2
  %v5317 = vadd.f32 %v5315, %v5316
  %v5318 = vrot.slane %v5317, 1
  %v5319 = vadd.f32 %v5317, %v5318
  %v5320 = vsel %vm2207, %v5249, 0.0
  %v5321 = vrot.slane %v5320, 4
  %v5322 = vadd.f32 %v5320, %v5321
  %v5323 = vrot.slane %v5322, 2
  %v5324 = vadd.f32 %v5322, %v5323
  %v5325 = vrot.slane %v5324, 1
  %v5326 = vadd.f32 %v5324, %v5325
  %v5327 = vsel %vm2207, %v5251, 0.0
  %v5328 = vrot.slane %v5327, 4
  %v5329 = vadd.f32 %v5327, %v5328
  %v5330 = vrot.slane %v5329, 2
  %v5331 = vadd.f32 %v5329, %v5330
  %v5332 = vrot.slane %v5331, 1
  %v5333 = vadd.f32 %v5331, %v5332
  %v5334 = vsel %vm2207, %v5253, 0.0
  %v5335 = vrot.slane %v5334, 4
  %v5336 = vadd.f32 %v5334, %v5335
  %v5337 = vrot.slane %v5336, 2
  %v5338 = vadd.f32 %v5336, %v5337
  %v5339 = vrot.slane %v5338, 1
  %v5340 = vadd.f32 %v5338, %v5339
  %v5341 = vsel %vm2207, %v5255, 0.0
  %v5342 = vrot.slane %v5341, 4
  %v5343 = vadd.f32 %v5341, %v5342
  %v5344 = vrot.slane %v5343, 2
  %v5345 = vadd.f32 %v5343, %v5344
  %v5346 = vrot.slane %v5345, 1
  %v5347 = vadd.f32 %v5345, %v5346
  %v5348 = vsel %vm2207, %v5257, 0.0
  %v5349 = vrot.slane %v5348, 4
  %v5350 = vadd.f32 %v5348, %v5349
  %v5351 = vrot.slane %v5350, 2
  %v5352 = vadd.f32 %v5350, %v5351
  %v5353 = vrot.slane %v5352, 1
  %v5354 = vadd.f32 %v5352, %v5353
  %v5355 = vsel %vm2207, %v5259, 0.0
  %v5356 = vrot.slane %v5355, 4
  %v5357 = vadd.f32 %v5355, %v5356
  %v5358 = vrot.slane %v5357, 2
  %v5359 = vadd.f32 %v5357, %v5358
  %v5360 = vrot.slane %v5359, 1
  %v5361 = vadd.f32 %v5359, %v5360
  %v5362 = vsel %vm2207, %v5261, 0.0
  %v5363 = vrot.slane %v5362, 4
  %v5364 = vadd.f32 %v5362, %v5363
  %v5365 = vrot.slane %v5364, 2
  %v5366 = vadd.f32 %v5364, %v5365
  %v5367 = vrot.slane %v5366, 1
  %v5368 = vadd.f32 %v5366, %v5367
  %v5369 = vsel %vm2207, %v5263, 0.0
  %v5370 = vrot.slane %v5369, 4
  %v5371 = vadd.f32 %v5369, %v5370
  %v5372 = vrot.slane %v5371, 2
  %v5373 = vadd.f32 %v5371, %v5372
  %v5374 = vrot.slane %v5373, 1
  %v5375 = vadd.f32 %v5373, %v5374
  %v5376 = vrcp.pop %v5270
  %v5377 = vmul.f32 %v5233, %v5376
  %v5378 = vrcp.pop %v5277
  %v5379 = vmul.f32 %v5235, %v5378
  %v5380 = vrcp.pop %v5284
  %v5381 = vmul.f32 %v5237, %v5380
  %v5382 = vrcp.pop %v5291
  %v5383 = vmul.f32 %v5239, %v5382
  %v5384 = vrcp.pop %v5298
  %v5385 = vmul.f32 %v5241, %v5384
  %v5386 = vrcp.pop %v5305
  %v5387 = vmul.f32 %v5243, %v5386
  %v5388 = vrcp.pop %v5312
  %v5389 = vmul.f32 %v5245, %v5388
  %v5390 = vrcp.pop %v5319
  %v5391 = vmul.f32 %v5247, %v5390
  %v5392 = vrcp.pop %v5326
  %v5393 = vmul.f32 %v5249, %v5392
  %v5394 = vrcp.pop %v5333
  %v5395 = vmul.f32 %v5251, %v5394
  %v5396 = vrcp.pop %v5340
  %v5397 = vmul.f32 %v5253, %v5396
  %v5398 = vrcp.pop %v5347
  %v5399 = vmul.f32 %v5255, %v5398
  %v5400 = vrcp.pop %v5354
  %v5401 = vmul.f32 %v5257, %v5400
  %v5402 = vrcp.pop %v5361
  %v5403 = vmul.f32 %v5259, %v5402
  %v5404 = vrcp.pop %v5368
  %v5405 = vmul.f32 %v5261, %v5404
  %v5406 = vrcp.pop %v5375
  %v5407 = vmul.f32 %v5263, %v5406
  %v5409 = vsel %vm316, %v5377, 0
  %5411 = vmatprep.subr.mxu0 0.0
  %5412 = vmatpush1.msra.mxu0 0.0
  %5413 = vmatprep.subr.mxu0 0.0
  %5414 = vmatpush1.msra.mxu0 0.0
  %5415 = vmatprep.subr.mxu0 0.0
  %5416 = vmatpush1.msra.mxu0 0.0
  %5417 = vmatprep.subr.mxu0 0.0
  %5418 = vmatpush1.msra.mxu0 0.0
  %5419 = vmatprep.subr.mxu0 0.0
  %5420 = vmatpush1.msra.mxu0 0.0
  %5421 = vmatprep.subr.mxu0 0.0
  %5422 = vmatpush1.msra.mxu0 0.0
  %5423 = vmatprep.subr.mxu0 0.0
  %5424 = vmatpush1.msra.mxu0 0.0
  %5425 = vmatprep.subr.mxu0 0.0
  %5426 = vmatpush1.msra.mxu0 0.0
  %5427 = vmatprep.subr.mxu0 0.0
  %5428 = vmatpush1.msra.mxu0 0.0
  %5429 = vmatprep.subr.mxu0 0.0
  %5430 = vmatpush1.msra.mxu0 0.0
  %5431 = vmatprep.subr.mxu0 0.0
  %5432 = vmatpush1.msra.mxu0 0.0
  %5433 = vmatprep.subr.mxu0 0.0
  %5434 = vmatpush1.msra.mxu0 0.0
  %5435 = vmatprep.subr.mxu0 0.0
  %5436 = vmatpush1.msra.mxu0 0.0
  %5437 = vmatprep.subr.mxu0 0.0
  %5438 = vmatpush1.msra.mxu0 0.0
  %5439 = vmatprep.subr.mxu0 0.0
  %5440 = vmatpush1.msra.mxu0 %v796
  %5441 = vmatprep.subr.mxu0 0.0
  %5442 = vmatpush1.msra.mxu0 %v795
  %5443 = vmatprep.subr.mxu0 0.0
  %5444 = vmatpush2.msra.mxu0 0.0
  %5445 = vmatprep.subr.mxu0 0.0
  %5446 = vmatpush2.msra.mxu0 0.0
  %5447 = vmatprep.subr.mxu0 0.0
  %5448 = vmatpush2.msra.mxu0 0.0
  %5449 = vmatprep.subr.mxu0 0.0
  %5450 = vmatpush2.msra.mxu0 0.0
  %5451 = vmatprep.subr.mxu0 0.0
  %5452 = vmatpush2.msra.mxu0 0.0
  %5453 = vmatprep.subr.mxu0 0.0
  %5454 = vmatpush2.msra.mxu0 0.0
  %5455 = vmatprep.subr.mxu0 0.0
  %5456 = vmatpush2.msra.mxu0 0.0
  %5457 = vmatprep.subr.mxu0 0.0
  %5458 = vmatpush2.msra.mxu0 0.0
  %5459 = vmatprep.subr.mxu0 0.0
  %5460 = vmatpush2.msra.mxu0 0.0
  %5461 = vmatprep.subr.mxu0 0.0
  %5462 = vmatpush2.msra.mxu0 0.0
  %5463 = vmatprep.subr.mxu0 0.0
  %5464 = vmatpush2.msra.mxu0 0.0
  %5465 = vmatprep.subr.mxu0 0.0
  %5466 = vmatpush2.msra.mxu0 0.0
  %5467 = vmatprep.subr.mxu0 0.0
  %5468 = vmatpush2.msra.mxu0 0.0
  %5469 = vmatprep.subr.mxu0 0.0
  %5470 = vmatpush2.msra.mxu0 0.0
  %5471 = vmatprep.subr.mxu0 0.0
  %5472 = vmatpush2.msra.mxu0 0.0
  %5473 = vmatprep.subr.mxu0 0.0
  %5474 = vmatpush2.msra.mxu0 0.0
  %5475 = vmatprep.mubr.f32.mxu0 0.0
  %5476 = vmatmul.mubr.f32.gmra.mxu0 %v5409
  %v5477 = vpop.f32.mrf.mxu0
  %v5478 = vadd.f32 0.0, %v5477
  %v5479 = vpop.f32.mrf.mxu0
  %5480 = vdwg.mxu0
  %v5482 = vsel %vm316, %v5379, 0
  %5484 = vmatprep.subr.mxu0 0.0
  %5485 = vmatpush1.msra.mxu0 0.0
  %5486 = vmatprep.subr.mxu0 0.0
  %5487 = vmatpush1.msra.mxu0 0.0
  %5488 = vmatprep.subr.mxu0 0.0
  %5489 = vmatpush1.msra.mxu0 0.0
  %5490 = vmatprep.subr.mxu0 0.0
  %5491 = vmatpush1.msra.mxu0 0.0
  %5492 = vmatprep.subr.mxu0 0.0
  %5493 = vmatpush1.msra.mxu0 0.0
  %5494 = vmatprep.subr.mxu0 0.0
  %5495 = vmatpush1.msra.mxu0 0.0
  %5496 = vmatprep.subr.mxu0 0.0
  %5497 = vmatpush1.msra.mxu0 0.0
  %5498 = vmatprep.subr.mxu0 0.0
  %5499 = vmatpush1.msra.mxu0 0.0
  %5500 = vmatprep.subr.mxu0 0.0
  %5501 = vmatpush1.msra.mxu0 0.0
  %5502 = vmatprep.subr.mxu0 0.0
  %5503 = vmatpush1.msra.mxu0 0.0
  %5504 = vmatprep.subr.mxu0 0.0
  %5505 = vmatpush1.msra.mxu0 0.0
  %5506 = vmatprep.subr.mxu0 0.0
  %5507 = vmatpush1.msra.mxu0 0.0
  %5508 = vmatprep.subr.mxu0 0.0
  %5509 = vmatpush1.msra.mxu0 0.0
  %5510 = vmatprep.subr.mxu0 0.0
  %5511 = vmatpush1.msra.mxu0 0.0
  %5512 = vmatprep.subr.mxu0 0.0
  %5513 = vmatpush1.msra.mxu0 %v798
  %5514 = vmatprep.subr.mxu0 0.0
  %5515 = vmatpush1.msra.mxu0 %v797
  %5516 = vmatprep.subr.mxu0 0.0
  %5517 = vmatpush2.msra.mxu0 0.0
  %5518 = vmatprep.subr.mxu0 0.0
  %5519 = vmatpush2.msra.mxu0 0.0
  %5520 = vmatprep.subr.mxu0 0.0
  %5521 = vmatpush2.msra.mxu0 0.0
  %5522 = vmatprep.subr.mxu0 0.0
  %5523 = vmatpush2.msra.mxu0 0.0
  %5524 = vmatprep.subr.mxu0 0.0
  %5525 = vmatpush2.msra.mxu0 0.0
  %5526 = vmatprep.subr.mxu0 0.0
  %5527 = vmatpush2.msra.mxu0 0.0
  %5528 = vmatprep.subr.mxu0 0.0
  %5529 = vmatpush2.msra.mxu0 0.0
  %5530 = vmatprep.subr.mxu0 0.0
  %5531 = vmatpush2.msra.mxu0 0.0
  %5532 = vmatprep.subr.mxu0 0.0
  %5533 = vmatpush2.msra.mxu0 0.0
  %5534 = vmatprep.subr.mxu0 0.0
  %5535 = vmatpush2.msra.mxu0 0.0
  %5536 = vmatprep.subr.mxu0 0.0
  %5537 = vmatpush2.msra.mxu0 0.0
  %5538 = vmatprep.subr.mxu0 0.0
  %5539 = vmatpush2.msra.mxu0 0.0
  %5540 = vmatprep.subr.mxu0 0.0
  %5541 = vmatpush2.msra.mxu0 0.0
  %5542 = vmatprep.subr.mxu0 0.0
  %5543 = vmatpush2.msra.mxu0 0.0
  %5544 = vmatprep.subr.mxu0 0.0
  %5545 = vmatpush2.msra.mxu0 0.0
  %5546 = vmatprep.subr.mxu0 0.0
  %5547 = vmatpush2.msra.mxu0 0.0
  %5548 = vmatprep.mubr.f32.mxu0 0.0
  %5549 = vmatmul.mubr.f32.gmra.mxu0 %v5482
  %v5550 = vpop.f32.mrf.mxu0
  %v5551 = vadd.f32 0.0, %v5550
  %v5552 = vpop.f32.mrf.mxu0
  %5553 = vdwg.mxu0
  %v5555 = vsel %vm316, %v5381, 0
  %5557 = vmatprep.subr.mxu0 0.0
  %5558 = vmatpush1.msra.mxu0 0.0
  %5559 = vmatprep.subr.mxu0 0.0
  %5560 = vmatpush1.msra.mxu0 0.0
  %5561 = vmatprep.subr.mxu0 0.0
  %5562 = vmatpush1.msra.mxu0 0.0
  %5563 = vmatprep.subr.mxu0 0.0
  %5564 = vmatpush1.msra.mxu0 0.0
  %5565 = vmatprep.subr.mxu0 0.0
  %5566 = vmatpush1.msra.mxu0 0.0
  %5567 = vmatprep.subr.mxu0 0.0
  %5568 = vmatpush1.msra.mxu0 0.0
  %5569 = vmatprep.subr.mxu0 0.0
  %5570 = vmatpush1.msra.mxu0 0.0
  %5571 = vmatprep.subr.mxu0 0.0
  %5572 = vmatpush1.msra.mxu0 0.0
  %5573 = vmatprep.subr.mxu0 0.0
  %5574 = vmatpush1.msra.mxu0 0.0
  %5575 = vmatprep.subr.mxu0 0.0
  %5576 = vmatpush1.msra.mxu0 0.0
  %5577 = vmatprep.subr.mxu0 0.0
  %5578 = vmatpush1.msra.mxu0 0.0
  %5579 = vmatprep.subr.mxu0 0.0
  %5580 = vmatpush1.msra.mxu0 0.0
  %5581 = vmatprep.subr.mxu0 0.0
  %5582 = vmatpush1.msra.mxu0 0.0
  %5583 = vmatprep.subr.mxu0 0.0
  %5584 = vmatpush1.msra.mxu0 0.0
  %5585 = vmatprep.subr.mxu0 0.0
  %5586 = vmatpush1.msra.mxu0 %v800
  %5587 = vmatprep.subr.mxu0 0.0
  %5588 = vmatpush1.msra.mxu0 %v799
  %5589 = vmatprep.subr.mxu0 0.0
  %5590 = vmatpush2.msra.mxu0 0.0
  %5591 = vmatprep.subr.mxu0 0.0
  %5592 = vmatpush2.msra.mxu0 0.0
  %5593 = vmatprep.subr.mxu0 0.0
  %5594 = vmatpush2.msra.mxu0 0.0
  %5595 = vmatprep.subr.mxu0 0.0
  %5596 = vmatpush2.msra.mxu0 0.0
  %5597 = vmatprep.subr.mxu0 0.0
  %5598 = vmatpush2.msra.mxu0 0.0
  %5599 = vmatprep.subr.mxu0 0.0
  %5600 = vmatpush2.msra.mxu0 0.0
  %5601 = vmatprep.subr.mxu0 0.0
  %5602 = vmatpush2.msra.mxu0 0.0
  %5603 = vmatprep.subr.mxu0 0.0
  %5604 = vmatpush2.msra.mxu0 0.0
  %5605 = vmatprep.subr.mxu0 0.0
  %5606 = vmatpush2.msra.mxu0 0.0
  %5607 = vmatprep.subr.mxu0 0.0
  %5608 = vmatpush2.msra.mxu0 0.0
  %5609 = vmatprep.subr.mxu0 0.0
  %5610 = vmatpush2.msra.mxu0 0.0
  %5611 = vmatprep.subr.mxu0 0.0
  %5612 = vmatpush2.msra.mxu0 0.0
  %5613 = vmatprep.subr.mxu0 0.0
  %5614 = vmatpush2.msra.mxu0 0.0
  %5615 = vmatprep.subr.mxu0 0.0
  %5616 = vmatpush2.msra.mxu0 0.0
  %5617 = vmatprep.subr.mxu0 0.0
  %5618 = vmatpush2.msra.mxu0 0.0
  %5619 = vmatprep.subr.mxu0 0.0
  %5620 = vmatpush2.msra.mxu0 0.0
  %5621 = vmatprep.mubr.f32.mxu0 0.0
  %5622 = vmatmul.mubr.f32.gmra.mxu0 %v5555
  %v5623 = vpop.f32.mrf.mxu0
  %v5624 = vadd.f32 0.0, %v5623
  %v5625 = vpop.f32.mrf.mxu0
  %5626 = vdwg.mxu0
  %v5628 = vsel %vm316, %v5383, 0
  %5630 = vmatprep.subr.mxu0 0.0
  %5631 = vmatpush1.msra.mxu0 0.0
  %5632 = vmatprep.subr.mxu0 0.0
  %5633 = vmatpush1.msra.mxu0 0.0
  %5634 = vmatprep.subr.mxu0 0.0
  %5635 = vmatpush1.msra.mxu0 0.0
  %5636 = vmatprep.subr.mxu0 0.0
  %5637 = vmatpush1.msra.mxu0 0.0
  %5638 = vmatprep.subr.mxu0 0.0
  %5639 = vmatpush1.msra.mxu0 0.0
  %5640 = vmatprep.subr.mxu0 0.0
  %5641 = vmatpush1.msra.mxu0 0.0
  %5642 = vmatprep.subr.mxu0 0.0
  %5643 = vmatpush1.msra.mxu0 0.0
  %5644 = vmatprep.subr.mxu0 0.0
  %5645 = vmatpush1.msra.mxu0 0.0
  %5646 = vmatprep.subr.mxu0 0.0
  %5647 = vmatpush1.msra.mxu0 0.0
  %5648 = vmatprep.subr.mxu0 0.0
  %5649 = vmatpush1.msra.mxu0 0.0
  %5650 = vmatprep.subr.mxu0 0.0
  %5651 = vmatpush1.msra.mxu0 0.0
  %5652 = vmatprep.subr.mxu0 0.0
  %5653 = vmatpush1.msra.mxu0 0.0
  %5654 = vmatprep.subr.mxu0 0.0
  %5655 = vmatpush1.msra.mxu0 0.0
  %5656 = vmatprep.subr.mxu0 0.0
  %5657 = vmatpush1.msra.mxu0 0.0
  %5658 = vmatprep.subr.mxu0 0.0
  %5659 = vmatpush1.msra.mxu0 %v802
  %5660 = vmatprep.subr.mxu0 0.0
  %5661 = vmatpush1.msra.mxu0 %v801
  %5662 = vmatprep.subr.mxu0 0.0
  %5663 = vmatpush2.msra.mxu0 0.0
  %5664 = vmatprep.subr.mxu0 0.0
  %5665 = vmatpush2.msra.mxu0 0.0
  %5666 = vmatprep.subr.mxu0 0.0
  %5667 = vmatpush2.msra.mxu0 0.0
  %5668 = vmatprep.subr.mxu0 0.0
  %5669 = vmatpush2.msra.mxu0 0.0
  %5670 = vmatprep.subr.mxu0 0.0
  %5671 = vmatpush2.msra.mxu0 0.0
  %5672 = vmatprep.subr.mxu0 0.0
  %5673 = vmatpush2.msra.mxu0 0.0
  %5674 = vmatprep.subr.mxu0 0.0
  %5675 = vmatpush2.msra.mxu0 0.0
  %5676 = vmatprep.subr.mxu0 0.0
  %5677 = vmatpush2.msra.mxu0 0.0
  %5678 = vmatprep.subr.mxu0 0.0
  %5679 = vmatpush2.msra.mxu0 0.0
  %5680 = vmatprep.subr.mxu0 0.0
  %5681 = vmatpush2.msra.mxu0 0.0
  %5682 = vmatprep.subr.mxu0 0.0
  %5683 = vmatpush2.msra.mxu0 0.0
  %5684 = vmatprep.subr.mxu0 0.0
  %5685 = vmatpush2.msra.mxu0 0.0
  %5686 = vmatprep.subr.mxu0 0.0
  %5687 = vmatpush2.msra.mxu0 0.0
  %5688 = vmatprep.subr.mxu0 0.0
  %5689 = vmatpush2.msra.mxu0 0.0
  %5690 = vmatprep.subr.mxu0 0.0
  %5691 = vmatpush2.msra.mxu0 0.0
  %5692 = vmatprep.subr.mxu0 0.0
  %5693 = vmatpush2.msra.mxu0 0.0
  %5694 = vmatprep.mubr.f32.mxu0 0.0
  %5695 = vmatmul.mubr.f32.gmra.mxu0 %v5628
  %v5696 = vpop.f32.mrf.mxu0
  %v5697 = vadd.f32 0.0, %v5696
  %v5698 = vpop.f32.mrf.mxu0
  %5699 = vdwg.mxu0
  %v5701 = vsel %vm316, %v5385, 0
  %5703 = vmatprep.subr.mxu0 0.0
  %5704 = vmatpush1.msra.mxu0 0.0
  %5705 = vmatprep.subr.mxu0 0.0
  %5706 = vmatpush1.msra.mxu0 0.0
  %5707 = vmatprep.subr.mxu0 0.0
  %5708 = vmatpush1.msra.mxu0 0.0
  %5709 = vmatprep.subr.mxu0 0.0
  %5710 = vmatpush1.msra.mxu0 0.0
  %5711 = vmatprep.subr.mxu0 0.0
  %5712 = vmatpush1.msra.mxu0 0.0
  %5713 = vmatprep.subr.mxu0 0.0
  %5714 = vmatpush1.msra.mxu0 0.0
  %5715 = vmatprep.subr.mxu0 0.0
  %5716 = vmatpush1.msra.mxu0 0.0
  %5717 = vmatprep.subr.mxu0 0.0
  %5718 = vmatpush1.msra.mxu0 0.0
  %5719 = vmatprep.subr.mxu0 0.0
  %5720 = vmatpush1.msra.mxu0 0.0
  %5721 = vmatprep.subr.mxu0 0.0
  %5722 = vmatpush1.msra.mxu0 0.0
  %5723 = vmatprep.subr.mxu0 0.0
  %5724 = vmatpush1.msra.mxu0 0.0
  %5725 = vmatprep.subr.mxu0 0.0
  %5726 = vmatpush1.msra.mxu0 0.0
  %5727 = vmatprep.subr.mxu0 0.0
  %5728 = vmatpush1.msra.mxu0 0.0
  %5729 = vmatprep.subr.mxu0 0.0
  %5730 = vmatpush1.msra.mxu0 0.0
  %5731 = vmatprep.subr.mxu0 0.0
  %5732 = vmatpush1.msra.mxu0 %v804
  %5733 = vmatprep.subr.mxu0 0.0
  %5734 = vmatpush1.msra.mxu0 %v803
  %5735 = vmatprep.subr.mxu0 0.0
  %5736 = vmatpush2.msra.mxu0 0.0
  %5737 = vmatprep.subr.mxu0 0.0
  %5738 = vmatpush2.msra.mxu0 0.0
  %5739 = vmatprep.subr.mxu0 0.0
  %5740 = vmatpush2.msra.mxu0 0.0
  %5741 = vmatprep.subr.mxu0 0.0
  %5742 = vmatpush2.msra.mxu0 0.0
  %5743 = vmatprep.subr.mxu0 0.0
  %5744 = vmatpush2.msra.mxu0 0.0
  %5745 = vmatprep.subr.mxu0 0.0
  %5746 = vmatpush2.msra.mxu0 0.0
  %5747 = vmatprep.subr.mxu0 0.0
  %5748 = vmatpush2.msra.mxu0 0.0
  %5749 = vmatprep.subr.mxu0 0.0
  %5750 = vmatpush2.msra.mxu0 0.0
  %5751 = vmatprep.subr.mxu0 0.0
  %5752 = vmatpush2.msra.mxu0 0.0
  %5753 = vmatprep.subr.mxu0 0.0
  %5754 = vmatpush2.msra.mxu0 0.0
  %5755 = vmatprep.subr.mxu0 0.0
  %5756 = vmatpush2.msra.mxu0 0.0
  %5757 = vmatprep.subr.mxu0 0.0
  %5758 = vmatpush2.msra.mxu0 0.0
  %5759 = vmatprep.subr.mxu0 0.0
  %5760 = vmatpush2.msra.mxu0 0.0
  %5761 = vmatprep.subr.mxu0 0.0
  %5762 = vmatpush2.msra.mxu0 0.0
  %5763 = vmatprep.subr.mxu0 0.0
  %5764 = vmatpush2.msra.mxu0 0.0
  %5765 = vmatprep.subr.mxu0 0.0
  %5766 = vmatpush2.msra.mxu0 0.0
  %5767 = vmatprep.mubr.f32.mxu0 0.0
  %5768 = vmatmul.mubr.f32.gmra.mxu0 %v5701
  %v5769 = vpop.f32.mrf.mxu0
  %v5770 = vadd.f32 0.0, %v5769
  %v5771 = vpop.f32.mrf.mxu0
  %5772 = vdwg.mxu0
  %v5774 = vsel %vm316, %v5387, 0
  %5776 = vmatprep.subr.mxu0 0.0
  %5777 = vmatpush1.msra.mxu0 0.0
  %5778 = vmatprep.subr.mxu0 0.0
  %5779 = vmatpush1.msra.mxu0 0.0
  %5780 = vmatprep.subr.mxu0 0.0
  %5781 = vmatpush1.msra.mxu0 0.0
  %5782 = vmatprep.subr.mxu0 0.0
  %5783 = vmatpush1.msra.mxu0 0.0
  %5784 = vmatprep.subr.mxu0 0.0
  %5785 = vmatpush1.msra.mxu0 0.0
  %5786 = vmatprep.subr.mxu0 0.0
  %5787 = vmatpush1.msra.mxu0 0.0
  %5788 = vmatprep.subr.mxu0 0.0
  %5789 = vmatpush1.msra.mxu0 0.0
  %5790 = vmatprep.subr.mxu0 0.0
  %5791 = vmatpush1.msra.mxu0 0.0
  %5792 = vmatprep.subr.mxu0 0.0
  %5793 = vmatpush1.msra.mxu0 0.0
  %5794 = vmatprep.subr.mxu0 0.0
  %5795 = vmatpush1.msra.mxu0 0.0
  %5796 = vmatprep.subr.mxu0 0.0
  %5797 = vmatpush1.msra.mxu0 0.0
  %5798 = vmatprep.subr.mxu0 0.0
  %5799 = vmatpush1.msra.mxu0 0.0
  %5800 = vmatprep.subr.mxu0 0.0
  %5801 = vmatpush1.msra.mxu0 0.0
  %5802 = vmatprep.subr.mxu0 0.0
  %5803 = vmatpush1.msra.mxu0 0.0
  %5804 = vmatprep.subr.mxu0 0.0
  %5805 = vmatpush1.msra.mxu0 %v806
  %5806 = vmatprep.subr.mxu0 0.0
  %5807 = vmatpush1.msra.mxu0 %v805
  %5808 = vmatprep.subr.mxu0 0.0
  %5809 = vmatpush2.msra.mxu0 0.0
  %5810 = vmatprep.subr.mxu0 0.0
  %5811 = vmatpush2.msra.mxu0 0.0
  %5812 = vmatprep.subr.mxu0 0.0
  %5813 = vmatpush2.msra.mxu0 0.0
  %5814 = vmatprep.subr.mxu0 0.0
  %5815 = vmatpush2.msra.mxu0 0.0
  %5816 = vmatprep.subr.mxu0 0.0
  %5817 = vmatpush2.msra.mxu0 0.0
  %5818 = vmatprep.subr.mxu0 0.0
  %5819 = vmatpush2.msra.mxu0 0.0
  %5820 = vmatprep.subr.mxu0 0.0
  %5821 = vmatpush2.msra.mxu0 0.0
  %5822 = vmatprep.subr.mxu0 0.0
  %5823 = vmatpush2.msra.mxu0 0.0
  %5824 = vmatprep.subr.mxu0 0.0
  %5825 = vmatpush2.msra.mxu0 0.0
  %5826 = vmatprep.subr.mxu0 0.0
  %5827 = vmatpush2.msra.mxu0 0.0
  %5828 = vmatprep.subr.mxu0 0.0
  %5829 = vmatpush2.msra.mxu0 0.0
  %5830 = vmatprep.subr.mxu0 0.0
  %5831 = vmatpush2.msra.mxu0 0.0
  %5832 = vmatprep.subr.mxu0 0.0
  %5833 = vmatpush2.msra.mxu0 0.0
  %5834 = vmatprep.subr.mxu0 0.0
  %5835 = vmatpush2.msra.mxu0 0.0
  %5836 = vmatprep.subr.mxu0 0.0
  %5837 = vmatpush2.msra.mxu0 0.0
  %5838 = vmatprep.subr.mxu0 0.0
  %5839 = vmatpush2.msra.mxu0 0.0
  %5840 = vmatprep.mubr.f32.mxu0 0.0
  %5841 = vmatmul.mubr.f32.gmra.mxu0 %v5774
  %v5842 = vpop.f32.mrf.mxu0
  %v5843 = vadd.f32 0.0, %v5842
  %v5844 = vpop.f32.mrf.mxu0
  %5845 = vdwg.mxu0
  %v5847 = vsel %vm316, %v5389, 0
  %5849 = vmatprep.subr.mxu0 0.0
  %5850 = vmatpush1.msra.mxu0 0.0
  %5851 = vmatprep.subr.mxu0 0.0
  %5852 = vmatpush1.msra.mxu0 0.0
  %5853 = vmatprep.subr.mxu0 0.0
  %5854 = vmatpush1.msra.mxu0 0.0
  %5855 = vmatprep.subr.mxu0 0.0
  %5856 = vmatpush1.msra.mxu0 0.0
  %5857 = vmatprep.subr.mxu0 0.0
  %5858 = vmatpush1.msra.mxu0 0.0
  %5859 = vmatprep.subr.mxu0 0.0
  %5860 = vmatpush1.msra.mxu0 0.0
  %5861 = vmatprep.subr.mxu0 0.0
  %5862 = vmatpush1.msra.mxu0 0.0
  %5863 = vmatprep.subr.mxu0 0.0
  %5864 = vmatpush1.msra.mxu0 0.0
  %5865 = vmatprep.subr.mxu0 0.0
  %5866 = vmatpush1.msra.mxu0 0.0
  %5867 = vmatprep.subr.mxu0 0.0
  %5868 = vmatpush1.msra.mxu0 0.0
  %5869 = vmatprep.subr.mxu0 0.0
  %5870 = vmatpush1.msra.mxu0 0.0
  %5871 = vmatprep.subr.mxu0 0.0
  %5872 = vmatpush1.msra.mxu0 0.0
  %5873 = vmatprep.subr.mxu0 0.0
  %5874 = vmatpush1.msra.mxu0 0.0
  %5875 = vmatprep.subr.mxu0 0.0
  %5876 = vmatpush1.msra.mxu0 0.0
  %5877 = vmatprep.subr.mxu0 0.0
  %5878 = vmatpush1.msra.mxu0 %v808
  %5879 = vmatprep.subr.mxu0 0.0
  %5880 = vmatpush1.msra.mxu0 %v807
  %5881 = vmatprep.subr.mxu0 0.0
  %5882 = vmatpush2.msra.mxu0 0.0
  %5883 = vmatprep.subr.mxu0 0.0
  %5884 = vmatpush2.msra.mxu0 0.0
  %5885 = vmatprep.subr.mxu0 0.0
  %5886 = vmatpush2.msra.mxu0 0.0
  %5887 = vmatprep.subr.mxu0 0.0
  %5888 = vmatpush2.msra.mxu0 0.0
  %5889 = vmatprep.subr.mxu0 0.0
  %5890 = vmatpush2.msra.mxu0 0.0
  %5891 = vmatprep.subr.mxu0 0.0
  %5892 = vmatpush2.msra.mxu0 0.0
  %5893 = vmatprep.subr.mxu0 0.0
  %5894 = vmatpush2.msra.mxu0 0.0
  %5895 = vmatprep.subr.mxu0 0.0
  %5896 = vmatpush2.msra.mxu0 0.0
  %5897 = vmatprep.subr.mxu0 0.0
  %5898 = vmatpush2.msra.mxu0 0.0
  %5899 = vmatprep.subr.mxu0 0.0
  %5900 = vmatpush2.msra.mxu0 0.0
  %5901 = vmatprep.subr.mxu0 0.0
  %5902 = vmatpush2.msra.mxu0 0.0
  %5903 = vmatprep.subr.mxu0 0.0
  %5904 = vmatpush2.msra.mxu0 0.0
  %5905 = vmatprep.subr.mxu0 0.0
  %5906 = vmatpush2.msra.mxu0 0.0
  %5907 = vmatprep.subr.mxu0 0.0
  %5908 = vmatpush2.msra.mxu0 0.0
  %5909 = vmatprep.subr.mxu0 0.0
  %5910 = vmatpush2.msra.mxu0 0.0
  %5911 = vmatprep.subr.mxu0 0.0
  %5912 = vmatpush2.msra.mxu0 0.0
  %5913 = vmatprep.mubr.f32.mxu0 0.0
  %5914 = vmatmul.mubr.f32.gmra.mxu0 %v5847
  %v5915 = vpop.f32.mrf.mxu0
  %v5916 = vadd.f32 0.0, %v5915
  %v5917 = vpop.f32.mrf.mxu0
  %5918 = vdwg.mxu0
  %v5920 = vsel %vm316, %v5391, 0
  %5922 = vmatprep.subr.mxu0 0.0
  %5923 = vmatpush1.msra.mxu0 0.0
  %5924 = vmatprep.subr.mxu0 0.0
  %5925 = vmatpush1.msra.mxu0 0.0
  %5926 = vmatprep.subr.mxu0 0.0
  %5927 = vmatpush1.msra.mxu0 0.0
  %5928 = vmatprep.subr.mxu0 0.0
  %5929 = vmatpush1.msra.mxu0 0.0
  %5930 = vmatprep.subr.mxu0 0.0
  %5931 = vmatpush1.msra.mxu0 0.0
  %5932 = vmatprep.subr.mxu0 0.0
  %5933 = vmatpush1.msra.mxu0 0.0
  %5934 = vmatprep.subr.mxu0 0.0
  %5935 = vmatpush1.msra.mxu0 0.0
  %5936 = vmatprep.subr.mxu0 0.0
  %5937 = vmatpush1.msra.mxu0 0.0
  %5938 = vmatprep.subr.mxu0 0.0
  %5939 = vmatpush1.msra.mxu0 0.0
  %5940 = vmatprep.subr.mxu0 0.0
  %5941 = vmatpush1.msra.mxu0 0.0
  %5942 = vmatprep.subr.mxu0 0.0
  %5943 = vmatpush1.msra.mxu0 0.0
  %5944 = vmatprep.subr.mxu0 0.0
  %5945 = vmatpush1.msra.mxu0 0.0
  %5946 = vmatprep.subr.mxu0 0.0
  %5947 = vmatpush1.msra.mxu0 0.0
  %5948 = vmatprep.subr.mxu0 0.0
  %5949 = vmatpush1.msra.mxu0 0.0
  %5950 = vmatprep.subr.mxu0 0.0
  %5951 = vmatpush1.msra.mxu0 %v810
  %5952 = vmatprep.subr.mxu0 0.0
  %5953 = vmatpush1.msra.mxu0 %v809
  %5954 = vmatprep.subr.mxu0 0.0
  %5955 = vmatpush2.msra.mxu0 0.0
  %5956 = vmatprep.subr.mxu0 0.0
  %5957 = vmatpush2.msra.mxu0 0.0
  %5958 = vmatprep.subr.mxu0 0.0
  %5959 = vmatpush2.msra.mxu0 0.0
  %5960 = vmatprep.subr.mxu0 0.0
  %5961 = vmatpush2.msra.mxu0 0.0
  %5962 = vmatprep.subr.mxu0 0.0
  %5963 = vmatpush2.msra.mxu0 0.0
  %5964 = vmatprep.subr.mxu0 0.0
  %5965 = vmatpush2.msra.mxu0 0.0
  %5966 = vmatprep.subr.mxu0 0.0
  %5967 = vmatpush2.msra.mxu0 0.0
  %5968 = vmatprep.subr.mxu0 0.0
  %5969 = vmatpush2.msra.mxu0 0.0
  %5970 = vmatprep.subr.mxu0 0.0
  %5971 = vmatpush2.msra.mxu0 0.0
  %5972 = vmatprep.subr.mxu0 0.0
  %5973 = vmatpush2.msra.mxu0 0.0
  %5974 = vmatprep.subr.mxu0 0.0
  %5975 = vmatpush2.msra.mxu0 0.0
  %5976 = vmatprep.subr.mxu0 0.0
  %5977 = vmatpush2.msra.mxu0 0.0
  %5978 = vmatprep.subr.mxu0 0.0
  %5979 = vmatpush2.msra.mxu0 0.0
  %5980 = vmatprep.subr.mxu0 0.0
  %5981 = vmatpush2.msra.mxu0 0.0
  %5982 = vmatprep.subr.mxu0 0.0
  %5983 = vmatpush2.msra.mxu0 0.0
  %5984 = vmatprep.subr.mxu0 0.0
  %5985 = vmatpush2.msra.mxu0 0.0
  %5986 = vmatprep.mubr.f32.mxu0 0.0
  %5987 = vmatmul.mubr.f32.gmra.mxu0 %v5920
  %v5988 = vpop.f32.mrf.mxu0
  %v5989 = vadd.f32 0.0, %v5988
  %v5990 = vpop.f32.mrf.mxu0
  %5991 = vdwg.mxu0
  %v5993 = vsel %vm316, %v5393, 0
  %5995 = vmatprep.subr.mxu0 0.0
  %5996 = vmatpush1.msra.mxu0 0.0
  %5997 = vmatprep.subr.mxu0 0.0
  %5998 = vmatpush1.msra.mxu0 0.0
  %5999 = vmatprep.subr.mxu0 0.0
  %6000 = vmatpush1.msra.mxu0 0.0
  %6001 = vmatprep.subr.mxu0 0.0
  %6002 = vmatpush1.msra.mxu0 0.0
  %6003 = vmatprep.subr.mxu0 0.0
  %6004 = vmatpush1.msra.mxu0 0.0
  %6005 = vmatprep.subr.mxu0 0.0
  %6006 = vmatpush1.msra.mxu0 0.0
  %6007 = vmatprep.subr.mxu0 0.0
  %6008 = vmatpush1.msra.mxu0 0.0
  %6009 = vmatprep.subr.mxu0 0.0
  %6010 = vmatpush1.msra.mxu0 0.0
  %6011 = vmatprep.subr.mxu0 0.0
  %6012 = vmatpush1.msra.mxu0 0.0
  %6013 = vmatprep.subr.mxu0 0.0
  %6014 = vmatpush1.msra.mxu0 0.0
  %6015 = vmatprep.subr.mxu0 0.0
  %6016 = vmatpush1.msra.mxu0 0.0
  %6017 = vmatprep.subr.mxu0 0.0
  %6018 = vmatpush1.msra.mxu0 0.0
  %6019 = vmatprep.subr.mxu0 0.0
  %6020 = vmatpush1.msra.mxu0 0.0
  %6021 = vmatprep.subr.mxu0 0.0
  %6022 = vmatpush1.msra.mxu0 0.0
  %6023 = vmatprep.subr.mxu0 0.0
  %6024 = vmatpush1.msra.mxu0 %v812
  %6025 = vmatprep.subr.mxu0 0.0
  %6026 = vmatpush1.msra.mxu0 %v811
  %6027 = vmatprep.subr.mxu0 0.0
  %6028 = vmatpush2.msra.mxu0 0.0
  %6029 = vmatprep.subr.mxu0 0.0
  %6030 = vmatpush2.msra.mxu0 0.0
  %6031 = vmatprep.subr.mxu0 0.0
  %6032 = vmatpush2.msra.mxu0 0.0
  %6033 = vmatprep.subr.mxu0 0.0
  %6034 = vmatpush2.msra.mxu0 0.0
  %6035 = vmatprep.subr.mxu0 0.0
  %6036 = vmatpush2.msra.mxu0 0.0
  %6037 = vmatprep.subr.mxu0 0.0
  %6038 = vmatpush2.msra.mxu0 0.0
  %6039 = vmatprep.subr.mxu0 0.0
  %6040 = vmatpush2.msra.mxu0 0.0
  %6041 = vmatprep.subr.mxu0 0.0
  %6042 = vmatpush2.msra.mxu0 0.0
  %6043 = vmatprep.subr.mxu0 0.0
  %6044 = vmatpush2.msra.mxu0 0.0
  %6045 = vmatprep.subr.mxu0 0.0
  %6046 = vmatpush2.msra.mxu0 0.0
  %6047 = vmatprep.subr.mxu0 0.0
  %6048 = vmatpush2.msra.mxu0 0.0
  %6049 = vmatprep.subr.mxu0 0.0
  %6050 = vmatpush2.msra.mxu0 0.0
  %6051 = vmatprep.subr.mxu0 0.0
  %6052 = vmatpush2.msra.mxu0 0.0
  %6053 = vmatprep.subr.mxu0 0.0
  %6054 = vmatpush2.msra.mxu0 0.0
  %6055 = vmatprep.subr.mxu0 0.0
  %6056 = vmatpush2.msra.mxu0 0.0
  %6057 = vmatprep.subr.mxu0 0.0
  %6058 = vmatpush2.msra.mxu0 0.0
  %6059 = vmatprep.mubr.f32.mxu0 0.0
  %6060 = vmatmul.mubr.f32.gmra.mxu0 %v5993
  %v6061 = vpop.f32.mrf.mxu0
  %v6062 = vadd.f32 0.0, %v6061
  %v6063 = vpop.f32.mrf.mxu0
  %6064 = vdwg.mxu0
  %v6066 = vsel %vm316, %v5395, 0
  %6068 = vmatprep.subr.mxu0 0.0
  %6069 = vmatpush1.msra.mxu0 0.0
  %6070 = vmatprep.subr.mxu0 0.0
  %6071 = vmatpush1.msra.mxu0 0.0
  %6072 = vmatprep.subr.mxu0 0.0
  %6073 = vmatpush1.msra.mxu0 0.0
  %6074 = vmatprep.subr.mxu0 0.0
  %6075 = vmatpush1.msra.mxu0 0.0
  %6076 = vmatprep.subr.mxu0 0.0
  %6077 = vmatpush1.msra.mxu0 0.0
  %6078 = vmatprep.subr.mxu0 0.0
  %6079 = vmatpush1.msra.mxu0 0.0
  %6080 = vmatprep.subr.mxu0 0.0
  %6081 = vmatpush1.msra.mxu0 0.0
  %6082 = vmatprep.subr.mxu0 0.0
  %6083 = vmatpush1.msra.mxu0 0.0
  %6084 = vmatprep.subr.mxu0 0.0
  %6085 = vmatpush1.msra.mxu0 0.0
  %6086 = vmatprep.subr.mxu0 0.0
  %6087 = vmatpush1.msra.mxu0 0.0
  %6088 = vmatprep.subr.mxu0 0.0
  %6089 = vmatpush1.msra.mxu0 0.0
  %6090 = vmatprep.subr.mxu0 0.0
  %6091 = vmatpush1.msra.mxu0 0.0
  %6092 = vmatprep.subr.mxu0 0.0
  %6093 = vmatpush1.msra.mxu0 0.0
  %6094 = vmatprep.subr.mxu0 0.0
  %6095 = vmatpush1.msra.mxu0 0.0
  %6096 = vmatprep.subr.mxu0 0.0
  %6097 = vmatpush1.msra.mxu0 %v814
  %6098 = vmatprep.subr.mxu0 0.0
  %6099 = vmatpush1.msra.mxu0 %v813
  %6100 = vmatprep.subr.mxu0 0.0
  %6101 = vmatpush2.msra.mxu0 0.0
  %6102 = vmatprep.subr.mxu0 0.0
  %6103 = vmatpush2.msra.mxu0 0.0
  %6104 = vmatprep.subr.mxu0 0.0
  %6105 = vmatpush2.msra.mxu0 0.0
  %6106 = vmatprep.subr.mxu0 0.0
  %6107 = vmatpush2.msra.mxu0 0.0
  %6108 = vmatprep.subr.mxu0 0.0
  %6109 = vmatpush2.msra.mxu0 0.0
  %6110 = vmatprep.subr.mxu0 0.0
  %6111 = vmatpush2.msra.mxu0 0.0
  %6112 = vmatprep.subr.mxu0 0.0
  %6113 = vmatpush2.msra.mxu0 0.0
  %6114 = vmatprep.subr.mxu0 0.0
  %6115 = vmatpush2.msra.mxu0 0.0
  %6116 = vmatprep.subr.mxu0 0.0
  %6117 = vmatpush2.msra.mxu0 0.0
  %6118 = vmatprep.subr.mxu0 0.0
  %6119 = vmatpush2.msra.mxu0 0.0
  %6120 = vmatprep.subr.mxu0 0.0
  %6121 = vmatpush2.msra.mxu0 0.0
  %6122 = vmatprep.subr.mxu0 0.0
  %6123 = vmatpush2.msra.mxu0 0.0
  %6124 = vmatprep.subr.mxu0 0.0
  %6125 = vmatpush2.msra.mxu0 0.0
  %6126 = vmatprep.subr.mxu0 0.0
  %6127 = vmatpush2.msra.mxu0 0.0
  %6128 = vmatprep.subr.mxu0 0.0
  %6129 = vmatpush2.msra.mxu0 0.0
  %6130 = vmatprep.subr.mxu0 0.0
  %6131 = vmatpush2.msra.mxu0 0.0
  %6132 = vmatprep.mubr.f32.mxu0 0.0
  %6133 = vmatmul.mubr.f32.gmra.mxu0 %v6066
  %v6134 = vpop.f32.mrf.mxu0
  %v6135 = vadd.f32 0.0, %v6134
  %v6136 = vpop.f32.mrf.mxu0
  %6137 = vdwg.mxu0
  %v6139 = vsel %vm316, %v5397, 0
  %6141 = vmatprep.subr.mxu0 0.0
  %6142 = vmatpush1.msra.mxu0 0.0
  %6143 = vmatprep.subr.mxu0 0.0
  %6144 = vmatpush1.msra.mxu0 0.0
  %6145 = vmatprep.subr.mxu0 0.0
  %6146 = vmatpush1.msra.mxu0 0.0
  %6147 = vmatprep.subr.mxu0 0.0
  %6148 = vmatpush1.msra.mxu0 0.0
  %6149 = vmatprep.subr.mxu0 0.0
  %6150 = vmatpush1.msra.mxu0 0.0
  %6151 = vmatprep.subr.mxu0 0.0
  %6152 = vmatpush1.msra.mxu0 0.0
  %6153 = vmatprep.subr.mxu0 0.0
  %6154 = vmatpush1.msra.mxu0 0.0
  %6155 = vmatprep.subr.mxu0 0.0
  %6156 = vmatpush1.msra.mxu0 0.0
  %6157 = vmatprep.subr.mxu0 0.0
  %6158 = vmatpush1.msra.mxu0 0.0
  %6159 = vmatprep.subr.mxu0 0.0
  %6160 = vmatpush1.msra.mxu0 0.0
  %6161 = vmatprep.subr.mxu0 0.0
  %6162 = vmatpush1.msra.mxu0 0.0
  %6163 = vmatprep.subr.mxu0 0.0
  %6164 = vmatpush1.msra.mxu0 0.0
  %6165 = vmatprep.subr.mxu0 0.0
  %6166 = vmatpush1.msra.mxu0 0.0
  %6167 = vmatprep.subr.mxu0 0.0
  %6168 = vmatpush1.msra.mxu0 0.0
  %6169 = vmatprep.subr.mxu0 0.0
  %6170 = vmatpush1.msra.mxu0 %v816
  %6171 = vmatprep.subr.mxu0 0.0
  %6172 = vmatpush1.msra.mxu0 %v815
  %6173 = vmatprep.subr.mxu0 0.0
  %6174 = vmatpush2.msra.mxu0 0.0
  %6175 = vmatprep.subr.mxu0 0.0
  %6176 = vmatpush2.msra.mxu0 0.0
  %6177 = vmatprep.subr.mxu0 0.0
  %6178 = vmatpush2.msra.mxu0 0.0
  %6179 = vmatprep.subr.mxu0 0.0
  %6180 = vmatpush2.msra.mxu0 0.0
  %6181 = vmatprep.subr.mxu0 0.0
  %6182 = vmatpush2.msra.mxu0 0.0
  %6183 = vmatprep.subr.mxu0 0.0
  %6184 = vmatpush2.msra.mxu0 0.0
  %6185 = vmatprep.subr.mxu0 0.0
  %6186 = vmatpush2.msra.mxu0 0.0
  %6187 = vmatprep.subr.mxu0 0.0
  %6188 = vmatpush2.msra.mxu0 0.0
  %6189 = vmatprep.subr.mxu0 0.0
  %6190 = vmatpush2.msra.mxu0 0.0
  %6191 = vmatprep.subr.mxu0 0.0
  %6192 = vmatpush2.msra.mxu0 0.0
  %6193 = vmatprep.subr.mxu0 0.0
  %6194 = vmatpush2.msra.mxu0 0.0
  %6195 = vmatprep.subr.mxu0 0.0
  %6196 = vmatpush2.msra.mxu0 0.0
  %6197 = vmatprep.subr.mxu0 0.0
  %6198 = vmatpush2.msra.mxu0 0.0
  %6199 = vmatprep.subr.mxu0 0.0
  %6200 = vmatpush2.msra.mxu0 0.0
  %6201 = vmatprep.subr.mxu0 0.0
  %6202 = vmatpush2.msra.mxu0 0.0
  %6203 = vmatprep.subr.mxu0 0.0
  %6204 = vmatpush2.msra.mxu0 0.0
  %6205 = vmatprep.mubr.f32.mxu0 0.0
  %6206 = vmatmul.mubr.f32.gmra.mxu0 %v6139
  %v6207 = vpop.f32.mrf.mxu0
  %v6208 = vadd.f32 0.0, %v6207
  %v6209 = vpop.f32.mrf.mxu0
  %6210 = vdwg.mxu0
  %v6212 = vsel %vm316, %v5399, 0
  %6214 = vmatprep.subr.mxu0 0.0
  %6215 = vmatpush1.msra.mxu0 0.0
  %6216 = vmatprep.subr.mxu0 0.0
  %6217 = vmatpush1.msra.mxu0 0.0
  %6218 = vmatprep.subr.mxu0 0.0
  %6219 = vmatpush1.msra.mxu0 0.0
  %6220 = vmatprep.subr.mxu0 0.0
  %6221 = vmatpush1.msra.mxu0 0.0
  %6222 = vmatprep.subr.mxu0 0.0
  %6223 = vmatpush1.msra.mxu0 0.0
  %6224 = vmatprep.subr.mxu0 0.0
  %6225 = vmatpush1.msra.mxu0 0.0
  %6226 = vmatprep.subr.mxu0 0.0
  %6227 = vmatpush1.msra.mxu0 0.0
  %6228 = vmatprep.subr.mxu0 0.0
  %6229 = vmatpush1.msra.mxu0 0.0
  %6230 = vmatprep.subr.mxu0 0.0
  %6231 = vmatpush1.msra.mxu0 0.0
  %6232 = vmatprep.subr.mxu0 0.0
  %6233 = vmatpush1.msra.mxu0 0.0
  %6234 = vmatprep.subr.mxu0 0.0
  %6235 = vmatpush1.msra.mxu0 0.0
  %6236 = vmatprep.subr.mxu0 0.0
  %6237 = vmatpush1.msra.mxu0 0.0
  %6238 = vmatprep.subr.mxu0 0.0
  %6239 = vmatpush1.msra.mxu0 0.0
  %6240 = vmatprep.subr.mxu0 0.0
  %6241 = vmatpush1.msra.mxu0 0.0
  %6242 = vmatprep.subr.mxu0 0.0
  %6243 = vmatpush1.msra.mxu0 %v818
  %6244 = vmatprep.subr.mxu0 0.0
  %6245 = vmatpush1.msra.mxu0 %v817
  %6246 = vmatprep.subr.mxu0 0.0
  %6247 = vmatpush2.msra.mxu0 0.0
  %6248 = vmatprep.subr.mxu0 0.0
  %6249 = vmatpush2.msra.mxu0 0.0
  %6250 = vmatprep.subr.mxu0 0.0
  %6251 = vmatpush2.msra.mxu0 0.0
  %6252 = vmatprep.subr.mxu0 0.0
  %6253 = vmatpush2.msra.mxu0 0.0
  %6254 = vmatprep.subr.mxu0 0.0
  %6255 = vmatpush2.msra.mxu0 0.0
  %6256 = vmatprep.subr.mxu0 0.0
  %6257 = vmatpush2.msra.mxu0 0.0
  %6258 = vmatprep.subr.mxu0 0.0
  %6259 = vmatpush2.msra.mxu0 0.0
  %6260 = vmatprep.subr.mxu0 0.0
  %6261 = vmatpush2.msra.mxu0 0.0
  %6262 = vmatprep.subr.mxu0 0.0
  %6263 = vmatpush2.msra.mxu0 0.0
  %6264 = vmatprep.subr.mxu0 0.0
  %6265 = vmatpush2.msra.mxu0 0.0
  %6266 = vmatprep.subr.mxu0 0.0
  %6267 = vmatpush2.msra.mxu0 0.0
  %6268 = vmatprep.subr.mxu0 0.0
  %6269 = vmatpush2.msra.mxu0 0.0
  %6270 = vmatprep.subr.mxu0 0.0
  %6271 = vmatpush2.msra.mxu0 0.0
  %6272 = vmatprep.subr.mxu0 0.0
  %6273 = vmatpush2.msra.mxu0 0.0
  %6274 = vmatprep.subr.mxu0 0.0
  %6275 = vmatpush2.msra.mxu0 0.0
  %6276 = vmatprep.subr.mxu0 0.0
  %6277 = vmatpush2.msra.mxu0 0.0
  %6278 = vmatprep.mubr.f32.mxu0 0.0
  %6279 = vmatmul.mubr.f32.gmra.mxu0 %v6212
  %v6280 = vpop.f32.mrf.mxu0
  %v6281 = vadd.f32 0.0, %v6280
  %v6282 = vpop.f32.mrf.mxu0
  %6283 = vdwg.mxu0
  %v6285 = vsel %vm316, %v5401, 0
  %6287 = vmatprep.subr.mxu0 0.0
  %6288 = vmatpush1.msra.mxu0 0.0
  %6289 = vmatprep.subr.mxu0 0.0
  %6290 = vmatpush1.msra.mxu0 0.0
  %6291 = vmatprep.subr.mxu0 0.0
  %6292 = vmatpush1.msra.mxu0 0.0
  %6293 = vmatprep.subr.mxu0 0.0
  %6294 = vmatpush1.msra.mxu0 0.0
  %6295 = vmatprep.subr.mxu0 0.0
  %6296 = vmatpush1.msra.mxu0 0.0
  %6297 = vmatprep.subr.mxu0 0.0
  %6298 = vmatpush1.msra.mxu0 0.0
  %6299 = vmatprep.subr.mxu0 0.0
  %6300 = vmatpush1.msra.mxu0 0.0
  %6301 = vmatprep.subr.mxu0 0.0
  %6302 = vmatpush1.msra.mxu0 0.0
  %6303 = vmatprep.subr.mxu0 0.0
  %6304 = vmatpush1.msra.mxu0 0.0
  %6305 = vmatprep.subr.mxu0 0.0
  %6306 = vmatpush1.msra.mxu0 0.0
  %6307 = vmatprep.subr.mxu0 0.0
  %6308 = vmatpush1.msra.mxu0 0.0
  %6309 = vmatprep.subr.mxu0 0.0
  %6310 = vmatpush1.msra.mxu0 0.0
  %6311 = vmatprep.subr.mxu0 0.0
  %6312 = vmatpush1.msra.mxu0 0.0
  %6313 = vmatprep.subr.mxu0 0.0
  %6314 = vmatpush1.msra.mxu0 0.0
  %6315 = vmatprep.subr.mxu0 0.0
  %6316 = vmatpush1.msra.mxu0 %v820
  %6317 = vmatprep.subr.mxu0 0.0
  %6318 = vmatpush1.msra.mxu0 %v819
  %6319 = vmatprep.subr.mxu0 0.0
  %6320 = vmatpush2.msra.mxu0 0.0
  %6321 = vmatprep.subr.mxu0 0.0
  %6322 = vmatpush2.msra.mxu0 0.0
  %6323 = vmatprep.subr.mxu0 0.0
  %6324 = vmatpush2.msra.mxu0 0.0
  %6325 = vmatprep.subr.mxu0 0.0
  %6326 = vmatpush2.msra.mxu0 0.0
  %6327 = vmatprep.subr.mxu0 0.0
  %6328 = vmatpush2.msra.mxu0 0.0
  %6329 = vmatprep.subr.mxu0 0.0
  %6330 = vmatpush2.msra.mxu0 0.0
  %6331 = vmatprep.subr.mxu0 0.0
  %6332 = vmatpush2.msra.mxu0 0.0
  %6333 = vmatprep.subr.mxu0 0.0
  %6334 = vmatpush2.msra.mxu0 0.0
  %6335 = vmatprep.subr.mxu0 0.0
  %6336 = vmatpush2.msra.mxu0 0.0
  %6337 = vmatprep.subr.mxu0 0.0
  %6338 = vmatpush2.msra.mxu0 0.0
  %6339 = vmatprep.subr.mxu0 0.0
  %6340 = vmatpush2.msra.mxu0 0.0
  %6341 = vmatprep.subr.mxu0 0.0
  %6342 = vmatpush2.msra.mxu0 0.0
  %6343 = vmatprep.subr.mxu0 0.0
  %6344 = vmatpush2.msra.mxu0 0.0
  %6345 = vmatprep.subr.mxu0 0.0
  %6346 = vmatpush2.msra.mxu0 0.0
  %6347 = vmatprep.subr.mxu0 0.0
  %6348 = vmatpush2.msra.mxu0 0.0
  %6349 = vmatprep.subr.mxu0 0.0
  %6350 = vmatpush2.msra.mxu0 0.0
  %6351 = vmatprep.mubr.f32.mxu0 0.0
  %6352 = vmatmul.mubr.f32.gmra.mxu0 %v6285
  %v6353 = vpop.f32.mrf.mxu0
  %v6354 = vadd.f32 0.0, %v6353
  %v6355 = vpop.f32.mrf.mxu0
  %6356 = vdwg.mxu0
  %v6358 = vsel %vm316, %v5403, 0
  %6360 = vmatprep.subr.mxu0 0.0
  %6361 = vmatpush1.msra.mxu0 0.0
  %6362 = vmatprep.subr.mxu0 0.0
  %6363 = vmatpush1.msra.mxu0 0.0
  %6364 = vmatprep.subr.mxu0 0.0
  %6365 = vmatpush1.msra.mxu0 0.0
  %6366 = vmatprep.subr.mxu0 0.0
  %6367 = vmatpush1.msra.mxu0 0.0
  %6368 = vmatprep.subr.mxu0 0.0
  %6369 = vmatpush1.msra.mxu0 0.0
  %6370 = vmatprep.subr.mxu0 0.0
  %6371 = vmatpush1.msra.mxu0 0.0
  %6372 = vmatprep.subr.mxu0 0.0
  %6373 = vmatpush1.msra.mxu0 0.0
  %6374 = vmatprep.subr.mxu0 0.0
  %6375 = vmatpush1.msra.mxu0 0.0
  %6376 = vmatprep.subr.mxu0 0.0
  %6377 = vmatpush1.msra.mxu0 0.0
  %6378 = vmatprep.subr.mxu0 0.0
  %6379 = vmatpush1.msra.mxu0 0.0
  %6380 = vmatprep.subr.mxu0 0.0
  %6381 = vmatpush1.msra.mxu0 0.0
  %6382 = vmatprep.subr.mxu0 0.0
  %6383 = vmatpush1.msra.mxu0 0.0
  %6384 = vmatprep.subr.mxu0 0.0
  %6385 = vmatpush1.msra.mxu0 0.0
  %6386 = vmatprep.subr.mxu0 0.0
  %6387 = vmatpush1.msra.mxu0 0.0
  %6388 = vmatprep.subr.mxu0 0.0
  %6389 = vmatpush1.msra.mxu0 %v822
  %6390 = vmatprep.subr.mxu0 0.0
  %6391 = vmatpush1.msra.mxu0 %v821
  %6392 = vmatprep.subr.mxu0 0.0
  %6393 = vmatpush2.msra.mxu0 0.0
  %6394 = vmatprep.subr.mxu0 0.0
  %6395 = vmatpush2.msra.mxu0 0.0
  %6396 = vmatprep.subr.mxu0 0.0
  %6397 = vmatpush2.msra.mxu0 0.0
  %6398 = vmatprep.subr.mxu0 0.0
  %6399 = vmatpush2.msra.mxu0 0.0
  %6400 = vmatprep.subr.mxu0 0.0
  %6401 = vmatpush2.msra.mxu0 0.0
  %6402 = vmatprep.subr.mxu0 0.0
  %6403 = vmatpush2.msra.mxu0 0.0
  %6404 = vmatprep.subr.mxu0 0.0
  %6405 = vmatpush2.msra.mxu0 0.0
  %6406 = vmatprep.subr.mxu0 0.0
  %6407 = vmatpush2.msra.mxu0 0.0
  %6408 = vmatprep.subr.mxu0 0.0
  %6409 = vmatpush2.msra.mxu0 0.0
  %6410 = vmatprep.subr.mxu0 0.0
  %6411 = vmatpush2.msra.mxu0 0.0
  %6412 = vmatprep.subr.mxu0 0.0
  %6413 = vmatpush2.msra.mxu0 0.0
  %6414 = vmatprep.subr.mxu0 0.0
  %6415 = vmatpush2.msra.mxu0 0.0
  %6416 = vmatprep.subr.mxu0 0.0
  %6417 = vmatpush2.msra.mxu0 0.0
  %6418 = vmatprep.subr.mxu0 0.0
  %6419 = vmatpush2.msra.mxu0 0.0
  %6420 = vmatprep.subr.mxu0 0.0
  %6421 = vmatpush2.msra.mxu0 0.0
  %6422 = vmatprep.subr.mxu0 0.0
  %6423 = vmatpush2.msra.mxu0 0.0
  %6424 = vmatprep.mubr.f32.mxu0 0.0
  %6425 = vmatmul.mubr.f32.gmra.mxu0 %v6358
  %v6426 = vpop.f32.mrf.mxu0
  %v6427 = vadd.f32 0.0, %v6426
  %v6428 = vpop.f32.mrf.mxu0
  %6429 = vdwg.mxu0
  %v6431 = vsel %vm316, %v5405, 0
  %6433 = vmatprep.subr.mxu0 0.0
  %6434 = vmatpush1.msra.mxu0 0.0
  %6435 = vmatprep.subr.mxu0 0.0
  %6436 = vmatpush1.msra.mxu0 0.0
  %6437 = vmatprep.subr.mxu0 0.0
  %6438 = vmatpush1.msra.mxu0 0.0
  %6439 = vmatprep.subr.mxu0 0.0
  %6440 = vmatpush1.msra.mxu0 0.0
  %6441 = vmatprep.subr.mxu0 0.0
  %6442 = vmatpush1.msra.mxu0 0.0
  %6443 = vmatprep.subr.mxu0 0.0
  %6444 = vmatpush1.msra.mxu0 0.0
  %6445 = vmatprep.subr.mxu0 0.0
  %6446 = vmatpush1.msra.mxu0 0.0
  %6447 = vmatprep.subr.mxu0 0.0
  %6448 = vmatpush1.msra.mxu0 0.0
  %6449 = vmatprep.subr.mxu0 0.0
  %6450 = vmatpush1.msra.mxu0 0.0
  %6451 = vmatprep.subr.mxu0 0.0
  %6452 = vmatpush1.msra.mxu0 0.0
  %6453 = vmatprep.subr.mxu0 0.0
  %6454 = vmatpush1.msra.mxu0 0.0
  %6455 = vmatprep.subr.mxu0 0.0
  %6456 = vmatpush1.msra.mxu0 0.0
  %6457 = vmatprep.subr.mxu0 0.0
  %6458 = vmatpush1.msra.mxu0 0.0
  %6459 = vmatprep.subr.mxu0 0.0
  %6460 = vmatpush1.msra.mxu0 0.0
  %6461 = vmatprep.subr.mxu0 0.0
  %6462 = vmatpush1.msra.mxu0 %v824
  %6463 = vmatprep.subr.mxu0 0.0
  %6464 = vmatpush1.msra.mxu0 %v823
  %6465 = vmatprep.subr.mxu0 0.0
  %6466 = vmatpush2.msra.mxu0 0.0
  %6467 = vmatprep.subr.mxu0 0.0
  %6468 = vmatpush2.msra.mxu0 0.0
  %6469 = vmatprep.subr.mxu0 0.0
  %6470 = vmatpush2.msra.mxu0 0.0
  %6471 = vmatprep.subr.mxu0 0.0
  %6472 = vmatpush2.msra.mxu0 0.0
  %6473 = vmatprep.subr.mxu0 0.0
  %6474 = vmatpush2.msra.mxu0 0.0
  %6475 = vmatprep.subr.mxu0 0.0
  %6476 = vmatpush2.msra.mxu0 0.0
  %6477 = vmatprep.subr.mxu0 0.0
  %6478 = vmatpush2.msra.mxu0 0.0
  %6479 = vmatprep.subr.mxu0 0.0
  %6480 = vmatpush2.msra.mxu0 0.0
  %6481 = vmatprep.subr.mxu0 0.0
  %6482 = vmatpush2.msra.mxu0 0.0
  %6483 = vmatprep.subr.mxu0 0.0
  %6484 = vmatpush2.msra.mxu0 0.0
  %6485 = vmatprep.subr.mxu0 0.0
  %6486 = vmatpush2.msra.mxu0 0.0
  %6487 = vmatprep.subr.mxu0 0.0
  %6488 = vmatpush2.msra.mxu0 0.0
  %6489 = vmatprep.subr.mxu0 0.0
  %6490 = vmatpush2.msra.mxu0 0.0
  %6491 = vmatprep.subr.mxu0 0.0
  %6492 = vmatpush2.msra.mxu0 0.0
  %6493 = vmatprep.subr.mxu0 0.0
  %6494 = vmatpush2.msra.mxu0 0.0
  %6495 = vmatprep.subr.mxu0 0.0
  %6496 = vmatpush2.msra.mxu0 0.0
  %6497 = vmatprep.mubr.f32.mxu0 0.0
  %6498 = vmatmul.mubr.f32.gmra.mxu0 %v6431
  %v6499 = vpop.f32.mrf.mxu0
  %v6500 = vadd.f32 0.0, %v6499
  %v6501 = vpop.f32.mrf.mxu0
  %6502 = vdwg.mxu0
  %v6504 = vsel %vm316, %v5407, 0
  %6506 = vmatprep.subr.mxu0 0.0
  %6507 = vmatpush1.msra.mxu0 0.0
  %6508 = vmatprep.subr.mxu0 0.0
  %6509 = vmatpush1.msra.mxu0 0.0
  %6510 = vmatprep.subr.mxu0 0.0
  %6511 = vmatpush1.msra.mxu0 0.0
  %6512 = vmatprep.subr.mxu0 0.0
  %6513 = vmatpush1.msra.mxu0 0.0
  %6514 = vmatprep.subr.mxu0 0.0
  %6515 = vmatpush1.msra.mxu0 0.0
  %6516 = vmatprep.subr.mxu0 0.0
  %6517 = vmatpush1.msra.mxu0 0.0
  %6518 = vmatprep.subr.mxu0 0.0
  %6519 = vmatpush1.msra.mxu0 0.0
  %6520 = vmatprep.subr.mxu0 0.0
  %6521 = vmatpush1.msra.mxu0 0.0
  %6522 = vmatprep.subr.mxu0 0.0
  %6523 = vmatpush1.msra.mxu0 0.0
  %6524 = vmatprep.subr.mxu0 0.0
  %6525 = vmatpush1.msra.mxu0 0.0
  %6526 = vmatprep.subr.mxu0 0.0
  %6527 = vmatpush1.msra.mxu0 0.0
  %6528 = vmatprep.subr.mxu0 0.0
  %6529 = vmatpush1.msra.mxu0 0.0
  %6530 = vmatprep.subr.mxu0 0.0
  %6531 = vmatpush1.msra.mxu0 0.0
  %6532 = vmatprep.subr.mxu0 0.0
  %6533 = vmatpush1.msra.mxu0 0.0
  %6534 = vmatprep.subr.mxu0 0.0
  %6535 = vmatpush1.msra.mxu0 %v826
  %6536 = vmatprep.subr.mxu0 0.0
  %6537 = vmatpush1.msra.mxu0 %v825
  %6538 = vmatprep.subr.mxu0 0.0
  %6539 = vmatpush2.msra.mxu0 0.0
  %6540 = vmatprep.subr.mxu0 0.0
  %6541 = vmatpush2.msra.mxu0 0.0
  %6542 = vmatprep.subr.mxu0 0.0
  %6543 = vmatpush2.msra.mxu0 0.0
  %6544 = vmatprep.subr.mxu0 0.0
  %6545 = vmatpush2.msra.mxu0 0.0
  %6546 = vmatprep.subr.mxu0 0.0
  %6547 = vmatpush2.msra.mxu0 0.0
  %6548 = vmatprep.subr.mxu0 0.0
  %6549 = vmatpush2.msra.mxu0 0.0
  %6550 = vmatprep.subr.mxu0 0.0
  %6551 = vmatpush2.msra.mxu0 0.0
  %6552 = vmatprep.subr.mxu0 0.0
  %6553 = vmatpush2.msra.mxu0 0.0
  %6554 = vmatprep.subr.mxu0 0.0
  %6555 = vmatpush2.msra.mxu0 0.0
  %6556 = vmatprep.subr.mxu0 0.0
  %6557 = vmatpush2.msra.mxu0 0.0
  %6558 = vmatprep.subr.mxu0 0.0
  %6559 = vmatpush2.msra.mxu0 0.0
  %6560 = vmatprep.subr.mxu0 0.0
  %6561 = vmatpush2.msra.mxu0 0.0
  %6562 = vmatprep.subr.mxu0 0.0
  %6563 = vmatpush2.msra.mxu0 0.0
  %6564 = vmatprep.subr.mxu0 0.0
  %6565 = vmatpush2.msra.mxu0 0.0
  %6566 = vmatprep.subr.mxu0 0.0
  %6567 = vmatpush2.msra.mxu0 0.0
  %6568 = vmatprep.subr.mxu0 0.0
  %6569 = vmatpush2.msra.mxu0 0.0
  %6570 = vmatprep.mubr.f32.mxu0 0.0
  %6571 = vmatmul.mubr.f32.gmra.mxu0 %v6504
  %v6572 = vpop.f32.mrf.mxu0
  %v6573 = vadd.f32 0.0, %v6572
  %v6574 = vpop.f32.mrf.mxu0
  %6575 = vdwg.mxu0
  %v6576 = vmul.f32 %v5478, %v5478
  %v6577 = vmul.f32 %v5551, %v5551
  %v6578 = vmul.f32 %v5624, %v5624
  %v6579 = vmul.f32 %v5697, %v5697
  %v6580 = vmul.f32 %v5770, %v5770
  %v6581 = vmul.f32 %v5843, %v5843
  %v6582 = vmul.f32 %v5916, %v5916
  %v6583 = vmul.f32 %v5989, %v5989
  %v6584 = vmul.f32 %v6062, %v6062
  %v6585 = vmul.f32 %v6135, %v6135
  %v6586 = vmul.f32 %v6208, %v6208
  %v6587 = vmul.f32 %v6281, %v6281
  %v6588 = vmul.f32 %v6354, %v6354
  %v6589 = vmul.f32 %v6427, %v6427
  %v6590 = vmul.f32 %v6500, %v6500
  %v6591 = vmul.f32 %v6573, %v6573
  %v6592 = vsel %vm2207, %v6576, 0.0
  %6593 = vadd.xlane.f32.xlu0 %v6592
  %v6594 = vpop.xlane.xlu0 %6593
  %v6595 = vsel %vm2207, %v6577, 0.0
  %6596 = vadd.xlane.f32.xlu0 %v6595
  %v6597 = vpop.xlane.xlu0 %6596
  %v6598 = vsel %vm2207, %v6578, 0.0
  %6599 = vadd.xlane.f32.xlu0 %v6598
  %v6600 = vpop.xlane.xlu0 %6599
  %v6601 = vsel %vm2207, %v6579, 0.0
  %6602 = vadd.xlane.f32.xlu0 %v6601
  %v6603 = vpop.xlane.xlu0 %6602
  %v6604 = vsel %vm2207, %v6580, 0.0
  %6605 = vadd.xlane.f32.xlu0 %v6604
  %v6606 = vpop.xlane.xlu0 %6605
  %v6607 = vsel %vm2207, %v6581, 0.0
  %6608 = vadd.xlane.f32.xlu0 %v6607
  %v6609 = vpop.xlane.xlu0 %6608
  %v6610 = vsel %vm2207, %v6582, 0.0
  %6611 = vadd.xlane.f32.xlu0 %v6610
  %v6612 = vpop.xlane.xlu0 %6611
  %v6613 = vsel %vm2207, %v6583, 0.0
  %6614 = vadd.xlane.f32.xlu0 %v6613
  %v6615 = vpop.xlane.xlu0 %6614
  %v6616 = vsel %vm2207, %v6584, 0.0
  %6617 = vadd.xlane.f32.xlu0 %v6616
  %v6618 = vpop.xlane.xlu0 %6617
  %v6619 = vsel %vm2207, %v6585, 0.0
  %6620 = vadd.xlane.f32.xlu0 %v6619
  %v6621 = vpop.xlane.xlu0 %6620
  %v6622 = vsel %vm2207, %v6586, 0.0
  %6623 = vadd.xlane.f32.xlu0 %v6622
  %v6624 = vpop.xlane.xlu0 %6623
  %v6625 = vsel %vm2207, %v6587, 0.0
  %6626 = vadd.xlane.f32.xlu0 %v6625
  %v6627 = vpop.xlane.xlu0 %6626
  %v6628 = vsel %vm2207, %v6588, 0.0
  %6629 = vadd.xlane.f32.xlu0 %v6628
  %v6630 = vpop.xlane.xlu0 %6629
  %v6631 = vsel %vm2207, %v6589, 0.0
  %6632 = vadd.xlane.f32.xlu0 %v6631
  %v6633 = vpop.xlane.xlu0 %6632
  %v6634 = vsel %vm2207, %v6590, 0.0
  %6635 = vadd.xlane.f32.xlu0 %v6634
  %v6636 = vpop.xlane.xlu0 %6635
  %v6637 = vsel %vm2207, %v6591, 0.0
  %6638 = vadd.xlane.f32.xlu0 %v6637
  %v6639 = vpop.xlane.xlu0 %6638
  %v6640 = vrsqrt.pop %v6594
  %v6641 = vmul.f32 %v6594, %v6640
  %vm6642 = vcmp.eq.f32.partialorder %v6594, inf
  %v6643 = vsel %vm6642, %v6594, %v6641
  %vm6644 = vcmp.eq.f32.partialorder %v6594, 0.0
  %v6645 = vand.u32 %v6594, 2147483648
  %v6646 = vsel %vm6644, %v6645, %v6643
  %v6647 = vrsqrt.pop %v6597
  %v6648 = vmul.f32 %v6597, %v6647
  %vm6649 = vcmp.eq.f32.partialorder %v6597, inf
  %v6650 = vsel %vm6649, %v6597, %v6648
  %vm6651 = vcmp.eq.f32.partialorder %v6597, 0.0
  %v6652 = vand.u32 %v6597, 2147483648
  %v6653 = vsel %vm6651, %v6652, %v6650
  %v6654 = vrsqrt.pop %v6600
  %v6655 = vmul.f32 %v6600, %v6654
  %vm6656 = vcmp.eq.f32.partialorder %v6600, inf
  %v6657 = vsel %vm6656, %v6600, %v6655
  %vm6658 = vcmp.eq.f32.partialorder %v6600, 0.0
  %v6659 = vand.u32 %v6600, 2147483648
  %v6660 = vsel %vm6658, %v6659, %v6657
  %v6661 = vrsqrt.pop %v6603
  %v6662 = vmul.f32 %v6603, %v6661
  %vm6663 = vcmp.eq.f32.partialorder %v6603, inf
  %v6664 = vsel %vm6663, %v6603, %v6662
  %vm6665 = vcmp.eq.f32.partialorder %v6603, 0.0
  %v6666 = vand.u32 %v6603, 2147483648
  %v6667 = vsel %vm6665, %v6666, %v6664
  %v6668 = vrsqrt.pop %v6606
  %v6669 = vmul.f32 %v6606, %v6668
  %vm6670 = vcmp.eq.f32.partialorder %v6606, inf
  %v6671 = vsel %vm6670, %v6606, %v6669
  %vm6672 = vcmp.eq.f32.partialorder %v6606, 0.0
  %v6673 = vand.u32 %v6606, 2147483648
  %v6674 = vsel %vm6672, %v6673, %v6671
  %v6675 = vrsqrt.pop %v6609
  %v6676 = vmul.f32 %v6609, %v6675
  %vm6677 = vcmp.eq.f32.partialorder %v6609, inf
  %v6678 = vsel %vm6677, %v6609, %v6676
  %vm6679 = vcmp.eq.f32.partialorder %v6609, 0.0
  %v6680 = vand.u32 %v6609, 2147483648
  %v6681 = vsel %vm6679, %v6680, %v6678
  %v6682 = vrsqrt.pop %v6612
  %v6683 = vmul.f32 %v6612, %v6682
  %vm6684 = vcmp.eq.f32.partialorder %v6612, inf
  %v6685 = vsel %vm6684, %v6612, %v6683
  %vm6686 = vcmp.eq.f32.partialorder %v6612, 0.0
  %v6687 = vand.u32 %v6612, 2147483648
  %v6688 = vsel %vm6686, %v6687, %v6685
  %v6689 = vrsqrt.pop %v6615
  %v6690 = vmul.f32 %v6615, %v6689
  %vm6691 = vcmp.eq.f32.partialorder %v6615, inf
  %v6692 = vsel %vm6691, %v6615, %v6690
  %vm6693 = vcmp.eq.f32.partialorder %v6615, 0.0
  %v6694 = vand.u32 %v6615, 2147483648
  %v6695 = vsel %vm6693, %v6694, %v6692
  %v6696 = vrsqrt.pop %v6618
  %v6697 = vmul.f32 %v6618, %v6696
  %vm6698 = vcmp.eq.f32.partialorder %v6618, inf
  %v6699 = vsel %vm6698, %v6618, %v6697
  %vm6700 = vcmp.eq.f32.partialorder %v6618, 0.0
  %v6701 = vand.u32 %v6618, 2147483648
  %v6702 = vsel %vm6700, %v6701, %v6699
  %v6703 = vrsqrt.pop %v6621
  %v6704 = vmul.f32 %v6621, %v6703
  %vm6705 = vcmp.eq.f32.partialorder %v6621, inf
  %v6706 = vsel %vm6705, %v6621, %v6704
  %vm6707 = vcmp.eq.f32.partialorder %v6621, 0.0
  %v6708 = vand.u32 %v6621, 2147483648
  %v6709 = vsel %vm6707, %v6708, %v6706
  %v6710 = vrsqrt.pop %v6624
  %v6711 = vmul.f32 %v6624, %v6710
  %vm6712 = vcmp.eq.f32.partialorder %v6624, inf
  %v6713 = vsel %vm6712, %v6624, %v6711
  %vm6714 = vcmp.eq.f32.partialorder %v6624, 0.0
  %v6715 = vand.u32 %v6624, 2147483648
  %v6716 = vsel %vm6714, %v6715, %v6713
  %v6717 = vrsqrt.pop %v6627
  %v6718 = vmul.f32 %v6627, %v6717
  %vm6719 = vcmp.eq.f32.partialorder %v6627, inf
  %v6720 = vsel %vm6719, %v6627, %v6718
  %vm6721 = vcmp.eq.f32.partialorder %v6627, 0.0
  %v6722 = vand.u32 %v6627, 2147483648
  %v6723 = vsel %vm6721, %v6722, %v6720
  %v6724 = vrsqrt.pop %v6630
  %v6725 = vmul.f32 %v6630, %v6724
  %vm6726 = vcmp.eq.f32.partialorder %v6630, inf
  %v6727 = vsel %vm6726, %v6630, %v6725
  %vm6728 = vcmp.eq.f32.partialorder %v6630, 0.0
  %v6729 = vand.u32 %v6630, 2147483648
  %v6730 = vsel %vm6728, %v6729, %v6727
  %v6731 = vrsqrt.pop %v6633
  %v6732 = vmul.f32 %v6633, %v6731
  %vm6733 = vcmp.eq.f32.partialorder %v6633, inf
  %v6734 = vsel %vm6733, %v6633, %v6732
  %vm6735 = vcmp.eq.f32.partialorder %v6633, 0.0
  %v6736 = vand.u32 %v6633, 2147483648
  %v6737 = vsel %vm6735, %v6736, %v6734
  %v6738 = vrsqrt.pop %v6636
  %v6739 = vmul.f32 %v6636, %v6738
  %vm6740 = vcmp.eq.f32.partialorder %v6636, inf
  %v6741 = vsel %vm6740, %v6636, %v6739
  %vm6742 = vcmp.eq.f32.partialorder %v6636, 0.0
  %v6743 = vand.u32 %v6636, 2147483648
  %v6744 = vsel %vm6742, %v6743, %v6741
  %v6745 = vrsqrt.pop %v6639
  %v6746 = vmul.f32 %v6639, %v6745
  %vm6747 = vcmp.eq.f32.partialorder %v6639, inf
  %v6748 = vsel %vm6747, %v6639, %v6746
  %vm6749 = vcmp.eq.f32.partialorder %v6639, 0.0
  %v6750 = vand.u32 %v6639, 2147483648
  %v6751 = vsel %vm6749, %v6750, %v6748
  %v6752 = vadd.f32 %v6594, 1.0
  %v6753 = vadd.f32 %v6597, 1.0
  %v6754 = vadd.f32 %v6600, 1.0
  %v6755 = vadd.f32 %v6603, 1.0
  %v6756 = vadd.f32 %v6606, 1.0
  %v6757 = vadd.f32 %v6609, 1.0
  %v6758 = vadd.f32 %v6612, 1.0
  %v6759 = vadd.f32 %v6615, 1.0
  %v6760 = vadd.f32 %v6618, 1.0
  %v6761 = vadd.f32 %v6621, 1.0
  %v6762 = vadd.f32 %v6624, 1.0
  %v6763 = vadd.f32 %v6627, 1.0
  %v6764 = vadd.f32 %v6630, 1.0
  %v6765 = vadd.f32 %v6633, 1.0
  %v6766 = vadd.f32 %v6636, 1.0
  %v6767 = vadd.f32 %v6639, 1.0
  %v6768 = vrcp.pop %v6752
  %v6769 = vmul.f32 %v6646, %v6768
  %v6770 = vrcp.pop %v6753
  %v6771 = vmul.f32 %v6653, %v6770
  %v6772 = vrcp.pop %v6754
  %v6773 = vmul.f32 %v6660, %v6772
  %v6774 = vrcp.pop %v6755
  %v6775 = vmul.f32 %v6667, %v6774
  %v6776 = vrcp.pop %v6756
  %v6777 = vmul.f32 %v6674, %v6776
  %v6778 = vrcp.pop %v6757
  %v6779 = vmul.f32 %v6681, %v6778
  %v6780 = vrcp.pop %v6758
  %v6781 = vmul.f32 %v6688, %v6780
  %v6782 = vrcp.pop %v6759
  %v6783 = vmul.f32 %v6695, %v6782
  %v6784 = vrcp.pop %v6760
  %v6785 = vmul.f32 %v6702, %v6784
  %v6786 = vrcp.pop %v6761
  %v6787 = vmul.f32 %v6709, %v6786
  %v6788 = vrcp.pop %v6762
  %v6789 = vmul.f32 %v6716, %v6788
  %v6790 = vrcp.pop %v6763
  %v6791 = vmul.f32 %v6723, %v6790
  %v6792 = vrcp.pop %v6764
  %v6793 = vmul.f32 %v6730, %v6792
  %v6794 = vrcp.pop %v6765
  %v6795 = vmul.f32 %v6737, %v6794
  %v6796 = vrcp.pop %v6766
  %v6797 = vmul.f32 %v6744, %v6796
  %v6798 = vrcp.pop %v6767
  %v6799 = vmul.f32 %v6751, %v6798
  %v6800 = vmul.f32 %v6769, %v5478
  %v6801 = vmul.f32 %v6771, %v5551
  %v6802 = vmul.f32 %v6773, %v5624
  %v6803 = vmul.f32 %v6775, %v5697
  %v6804 = vmul.f32 %v6777, %v5770
  %v6805 = vmul.f32 %v6779, %v5843
  %v6806 = vmul.f32 %v6781, %v5916
  %v6807 = vmul.f32 %v6783, %v5989
  %v6808 = vmul.f32 %v6785, %v6062
  %v6809 = vmul.f32 %v6787, %v6135
  %v6810 = vmul.f32 %v6789, %v6208
  %v6811 = vmul.f32 %v6791, %v6281
  %v6812 = vmul.f32 %v6793, %v6354
  %v6813 = vmul.f32 %v6795, %v6427
  %v6814 = vmul.f32 %v6797, %v6500
  %v6815 = vmul.f32 %v6799, %v6573
  %v6817 = vsel %vm316, %v6800, 0
  %6819 = vmatprep.subr.mxu0 0.0
  %6820 = vmatpush1.xpose.msra.mxu0 0.0
  %6821 = vmatprep.subr.mxu0 0.0
  %6822 = vmatpush1.xpose.msra.mxu0 0.0
  %6823 = vmatprep.subr.mxu0 0.0
  %6824 = vmatpush1.xpose.msra.mxu0 0.0
  %6825 = vmatprep.subr.mxu0 0.0
  %6826 = vmatpush1.xpose.msra.mxu0 0.0
  %6827 = vmatprep.subr.mxu0 0.0
  %6828 = vmatpush1.xpose.msra.mxu0 0.0
  %6829 = vmatprep.subr.mxu0 0.0
  %6830 = vmatpush1.xpose.msra.mxu0 0.0
  %6831 = vmatprep.subr.mxu0 0.0
  %6832 = vmatpush1.xpose.msra.mxu0 0.0
  %6833 = vmatprep.subr.mxu0 0.0
  %6834 = vmatpush1.xpose.msra.mxu0 0.0
  %6835 = vmatprep.subr.mxu0 0.0
  %6836 = vmatpush1.xpose.msra.mxu0 0.0
  %6837 = vmatprep.subr.mxu0 0.0
  %6838 = vmatpush1.xpose.msra.mxu0 0.0
  %6839 = vmatprep.subr.mxu0 0.0
  %6840 = vmatpush1.xpose.msra.mxu0 0.0
  %6841 = vmatprep.subr.mxu0 0.0
  %6842 = vmatpush1.xpose.msra.mxu0 0.0
  %6843 = vmatprep.subr.mxu0 0.0
  %6844 = vmatpush1.xpose.msra.mxu0 0.0
  %6845 = vmatprep.subr.mxu0 0.0
  %6846 = vmatpush1.xpose.msra.mxu0 0.0
  %6847 = vmatprep.subr.mxu0 0.0
  %6848 = vmatpush1.xpose.msra.mxu0 %v950
  %6849 = vmatprep.subr.mxu0 0.0
  %6850 = vmatpush1.xpose.msra.mxu0 %v947
  %6851 = vmatprep.subr.mxu0 0.0
  %6852 = vmatpush2.xpose.msra.mxu0 0.0
  %6853 = vmatprep.subr.mxu0 0.0
  %6854 = vmatpush2.xpose.msra.mxu0 0.0
  %6855 = vmatprep.subr.mxu0 0.0
  %6856 = vmatpush2.xpose.msra.mxu0 0.0
  %6857 = vmatprep.subr.mxu0 0.0
  %6858 = vmatpush2.xpose.msra.mxu0 0.0
  %6859 = vmatprep.subr.mxu0 0.0
  %6860 = vmatpush2.xpose.msra.mxu0 0.0
  %6861 = vmatprep.subr.mxu0 0.0
  %6862 = vmatpush2.xpose.msra.mxu0 0.0
  %6863 = vmatprep.subr.mxu0 0.0
  %6864 = vmatpush2.xpose.msra.mxu0 0.0
  %6865 = vmatprep.subr.mxu0 0.0
  %6866 = vmatpush2.xpose.msra.mxu0 0.0
  %6867 = vmatprep.subr.mxu0 0.0
  %6868 = vmatpush2.xpose.msra.mxu0 0.0
  %6869 = vmatprep.subr.mxu0 0.0
  %6870 = vmatpush2.xpose.msra.mxu0 0.0
  %6871 = vmatprep.subr.mxu0 0.0
  %6872 = vmatpush2.xpose.msra.mxu0 0.0
  %6873 = vmatprep.subr.mxu0 0.0
  %6874 = vmatpush2.xpose.msra.mxu0 0.0
  %6875 = vmatprep.subr.mxu0 0.0
  %6876 = vmatpush2.xpose.msra.mxu0 0.0
  %6877 = vmatprep.subr.mxu0 0.0
  %6878 = vmatpush2.xpose.msra.mxu0 0.0
  %6879 = vmatprep.subr.mxu0 0.0
  %6880 = vmatpush2.xpose.msra.mxu0 0.0
  %6881 = vmatprep.subr.mxu0 0.0
  %6882 = vmatpush2.xpose.msra.mxu0 0.0
  %6883 = vmatprep.mubr.f32.mxu0 0.0
  %6884 = vmatmul.mubr.f32.gmra.mxu0 %v6817
  %v6885 = vpop.f32.mrf.mxu0
  %v6886 = vadd.f32 %v5088, %v6885
  %v6887 = vpop.f32.mrf.mxu0
  %6888 = vdwg.mxu0
  %v6890 = vsel %vm316, %v6801, 0
  %6892 = vmatprep.subr.mxu0 0.0
  %6893 = vmatpush1.xpose.msra.mxu0 0.0
  %6894 = vmatprep.subr.mxu0 0.0
  %6895 = vmatpush1.xpose.msra.mxu0 0.0
  %6896 = vmatprep.subr.mxu0 0.0
  %6897 = vmatpush1.xpose.msra.mxu0 0.0
  %6898 = vmatprep.subr.mxu0 0.0
  %6899 = vmatpush1.xpose.msra.mxu0 0.0
  %6900 = vmatprep.subr.mxu0 0.0
  %6901 = vmatpush1.xpose.msra.mxu0 0.0
  %6902 = vmatprep.subr.mxu0 0.0
  %6903 = vmatpush1.xpose.msra.mxu0 0.0
  %6904 = vmatprep.subr.mxu0 0.0
  %6905 = vmatpush1.xpose.msra.mxu0 0.0
  %6906 = vmatprep.subr.mxu0 0.0
  %6907 = vmatpush1.xpose.msra.mxu0 0.0
  %6908 = vmatprep.subr.mxu0 0.0
  %6909 = vmatpush1.xpose.msra.mxu0 0.0
  %6910 = vmatprep.subr.mxu0 0.0
  %6911 = vmatpush1.xpose.msra.mxu0 0.0
  %6912 = vmatprep.subr.mxu0 0.0
  %6913 = vmatpush1.xpose.msra.mxu0 0.0
  %6914 = vmatprep.subr.mxu0 0.0
  %6915 = vmatpush1.xpose.msra.mxu0 0.0
  %6916 = vmatprep.subr.mxu0 0.0
  %6917 = vmatpush1.xpose.msra.mxu0 0.0
  %6918 = vmatprep.subr.mxu0 0.0
  %6919 = vmatpush1.xpose.msra.mxu0 0.0
  %6920 = vmatprep.subr.mxu0 0.0
  %6921 = vmatpush1.xpose.msra.mxu0 %v1029
  %6922 = vmatprep.subr.mxu0 0.0
  %6923 = vmatpush1.xpose.msra.mxu0 %v1026
  %6924 = vmatprep.subr.mxu0 0.0
  %6925 = vmatpush2.xpose.msra.mxu0 0.0
  %6926 = vmatprep.subr.mxu0 0.0
  %6927 = vmatpush2.xpose.msra.mxu0 0.0
  %6928 = vmatprep.subr.mxu0 0.0
  %6929 = vmatpush2.xpose.msra.mxu0 0.0
  %6930 = vmatprep.subr.mxu0 0.0
  %6931 = vmatpush2.xpose.msra.mxu0 0.0
  %6932 = vmatprep.subr.mxu0 0.0
  %6933 = vmatpush2.xpose.msra.mxu0 0.0
  %6934 = vmatprep.subr.mxu0 0.0
  %6935 = vmatpush2.xpose.msra.mxu0 0.0
  %6936 = vmatprep.subr.mxu0 0.0
  %6937 = vmatpush2.xpose.msra.mxu0 0.0
  %6938 = vmatprep.subr.mxu0 0.0
  %6939 = vmatpush2.xpose.msra.mxu0 0.0
  %6940 = vmatprep.subr.mxu0 0.0
  %6941 = vmatpush2.xpose.msra.mxu0 0.0
  %6942 = vmatprep.subr.mxu0 0.0
  %6943 = vmatpush2.xpose.msra.mxu0 0.0
  %6944 = vmatprep.subr.mxu0 0.0
  %6945 = vmatpush2.xpose.msra.mxu0 0.0
  %6946 = vmatprep.subr.mxu0 0.0
  %6947 = vmatpush2.xpose.msra.mxu0 0.0
  %6948 = vmatprep.subr.mxu0 0.0
  %6949 = vmatpush2.xpose.msra.mxu0 0.0
  %6950 = vmatprep.subr.mxu0 0.0
  %6951 = vmatpush2.xpose.msra.mxu0 0.0
  %6952 = vmatprep.subr.mxu0 0.0
  %6953 = vmatpush2.xpose.msra.mxu0 0.0
  %6954 = vmatprep.subr.mxu0 0.0
  %6955 = vmatpush2.xpose.msra.mxu0 0.0
  %6956 = vmatprep.mubr.f32.mxu0 0.0
  %6957 = vmatmul.mubr.f32.gmra.mxu0 %v6890
  %v6958 = vpop.f32.mrf.mxu0
  %v6959 = vadd.f32 %v5089, %v6958
  %v6960 = vpop.f32.mrf.mxu0
  %6961 = vdwg.mxu0
  %v6963 = vsel %vm316, %v6802, 0
  %6965 = vmatprep.subr.mxu0 0.0
  %6966 = vmatpush1.xpose.msra.mxu0 0.0
  %6967 = vmatprep.subr.mxu0 0.0
  %6968 = vmatpush1.xpose.msra.mxu0 0.0
  %6969 = vmatprep.subr.mxu0 0.0
  %6970 = vmatpush1.xpose.msra.mxu0 0.0
  %6971 = vmatprep.subr.mxu0 0.0
  %6972 = vmatpush1.xpose.msra.mxu0 0.0
  %6973 = vmatprep.subr.mxu0 0.0
  %6974 = vmatpush1.xpose.msra.mxu0 0.0
  %6975 = vmatprep.subr.mxu0 0.0
  %6976 = vmatpush1.xpose.msra.mxu0 0.0
  %6977 = vmatprep.subr.mxu0 0.0
  %6978 = vmatpush1.xpose.msra.mxu0 0.0
  %6979 = vmatprep.subr.mxu0 0.0
  %6980 = vmatpush1.xpose.msra.mxu0 0.0
  %6981 = vmatprep.subr.mxu0 0.0
  %6982 = vmatpush1.xpose.msra.mxu0 0.0
  %6983 = vmatprep.subr.mxu0 0.0
  %6984 = vmatpush1.xpose.msra.mxu0 0.0
  %6985 = vmatprep.subr.mxu0 0.0
  %6986 = vmatpush1.xpose.msra.mxu0 0.0
  %6987 = vmatprep.subr.mxu0 0.0
  %6988 = vmatpush1.xpose.msra.mxu0 0.0
  %6989 = vmatprep.subr.mxu0 0.0
  %6990 = vmatpush1.xpose.msra.mxu0 0.0
  %6991 = vmatprep.subr.mxu0 0.0
  %6992 = vmatpush1.xpose.msra.mxu0 0.0
  %6993 = vmatprep.subr.mxu0 0.0
  %6994 = vmatpush1.xpose.msra.mxu0 %v1108
  %6995 = vmatprep.subr.mxu0 0.0
  %6996 = vmatpush1.xpose.msra.mxu0 %v1105
  %6997 = vmatprep.subr.mxu0 0.0
  %6998 = vmatpush2.xpose.msra.mxu0 0.0
  %6999 = vmatprep.subr.mxu0 0.0
  %7000 = vmatpush2.xpose.msra.mxu0 0.0
  %7001 = vmatprep.subr.mxu0 0.0
  %7002 = vmatpush2.xpose.msra.mxu0 0.0
  %7003 = vmatprep.subr.mxu0 0.0
  %7004 = vmatpush2.xpose.msra.mxu0 0.0
  %7005 = vmatprep.subr.mxu0 0.0
  %7006 = vmatpush2.xpose.msra.mxu0 0.0
  %7007 = vmatprep.subr.mxu0 0.0
  %7008 = vmatpush2.xpose.msra.mxu0 0.0
  %7009 = vmatprep.subr.mxu0 0.0
  %7010 = vmatpush2.xpose.msra.mxu0 0.0
  %7011 = vmatprep.subr.mxu0 0.0
  %7012 = vmatpush2.xpose.msra.mxu0 0.0
  %7013 = vmatprep.subr.mxu0 0.0
  %7014 = vmatpush2.xpose.msra.mxu0 0.0
  %7015 = vmatprep.subr.mxu0 0.0
  %7016 = vmatpush2.xpose.msra.mxu0 0.0
  %7017 = vmatprep.subr.mxu0 0.0
  %7018 = vmatpush2.xpose.msra.mxu0 0.0
  %7019 = vmatprep.subr.mxu0 0.0
  %7020 = vmatpush2.xpose.msra.mxu0 0.0
  %7021 = vmatprep.subr.mxu0 0.0
  %7022 = vmatpush2.xpose.msra.mxu0 0.0
  %7023 = vmatprep.subr.mxu0 0.0
  %7024 = vmatpush2.xpose.msra.mxu0 0.0
  %7025 = vmatprep.subr.mxu0 0.0
  %7026 = vmatpush2.xpose.msra.mxu0 0.0
  %7027 = vmatprep.subr.mxu0 0.0
  %7028 = vmatpush2.xpose.msra.mxu0 0.0
  %7029 = vmatprep.mubr.f32.mxu0 0.0
  %7030 = vmatmul.mubr.f32.gmra.mxu0 %v6963
  %v7031 = vpop.f32.mrf.mxu0
  %v7032 = vadd.f32 %v5090, %v7031
  %v7033 = vpop.f32.mrf.mxu0
  %7034 = vdwg.mxu0
  %v7036 = vsel %vm316, %v6803, 0
  %7038 = vmatprep.subr.mxu0 0.0
  %7039 = vmatpush1.xpose.msra.mxu0 0.0
  %7040 = vmatprep.subr.mxu0 0.0
  %7041 = vmatpush1.xpose.msra.mxu0 0.0
  %7042 = vmatprep.subr.mxu0 0.0
  %7043 = vmatpush1.xpose.msra.mxu0 0.0
  %7044 = vmatprep.subr.mxu0 0.0
  %7045 = vmatpush1.xpose.msra.mxu0 0.0
  %7046 = vmatprep.subr.mxu0 0.0
  %7047 = vmatpush1.xpose.msra.mxu0 0.0
  %7048 = vmatprep.subr.mxu0 0.0
  %7049 = vmatpush1.xpose.msra.mxu0 0.0
  %7050 = vmatprep.subr.mxu0 0.0
  %7051 = vmatpush1.xpose.msra.mxu0 0.0
  %7052 = vmatprep.subr.mxu0 0.0
  %7053 = vmatpush1.xpose.msra.mxu0 0.0
  %7054 = vmatprep.subr.mxu0 0.0
  %7055 = vmatpush1.xpose.msra.mxu0 0.0
  %7056 = vmatprep.subr.mxu0 0.0
  %7057 = vmatpush1.xpose.msra.mxu0 0.0
  %7058 = vmatprep.subr.mxu0 0.0
  %7059 = vmatpush1.xpose.msra.mxu0 0.0
  %7060 = vmatprep.subr.mxu0 0.0
  %7061 = vmatpush1.xpose.msra.mxu0 0.0
  %7062 = vmatprep.subr.mxu0 0.0
  %7063 = vmatpush1.xpose.msra.mxu0 0.0
  %7064 = vmatprep.subr.mxu0 0.0
  %7065 = vmatpush1.xpose.msra.mxu0 0.0
  %7066 = vmatprep.subr.mxu0 0.0
  %7067 = vmatpush1.xpose.msra.mxu0 %v1187
  %7068 = vmatprep.subr.mxu0 0.0
  %7069 = vmatpush1.xpose.msra.mxu0 %v1184
  %7070 = vmatprep.subr.mxu0 0.0
  %7071 = vmatpush2.xpose.msra.mxu0 0.0
  %7072 = vmatprep.subr.mxu0 0.0
  %7073 = vmatpush2.xpose.msra.mxu0 0.0
  %7074 = vmatprep.subr.mxu0 0.0
  %7075 = vmatpush2.xpose.msra.mxu0 0.0
  %7076 = vmatprep.subr.mxu0 0.0
  %7077 = vmatpush2.xpose.msra.mxu0 0.0
  %7078 = vmatprep.subr.mxu0 0.0
  %7079 = vmatpush2.xpose.msra.mxu0 0.0
  %7080 = vmatprep.subr.mxu0 0.0
  %7081 = vmatpush2.xpose.msra.mxu0 0.0
  %7082 = vmatprep.subr.mxu0 0.0
  %7083 = vmatpush2.xpose.msra.mxu0 0.0
  %7084 = vmatprep.subr.mxu0 0.0
  %7085 = vmatpush2.xpose.msra.mxu0 0.0
  %7086 = vmatprep.subr.mxu0 0.0
  %7087 = vmatpush2.xpose.msra.mxu0 0.0
  %7088 = vmatprep.subr.mxu0 0.0
  %7089 = vmatpush2.xpose.msra.mxu0 0.0
  %7090 = vmatprep.subr.mxu0 0.0
  %7091 = vmatpush2.xpose.msra.mxu0 0.0
  %7092 = vmatprep.subr.mxu0 0.0
  %7093 = vmatpush2.xpose.msra.mxu0 0.0
  %7094 = vmatprep.subr.mxu0 0.0
  %7095 = vmatpush2.xpose.msra.mxu0 0.0
  %7096 = vmatprep.subr.mxu0 0.0
  %7097 = vmatpush2.xpose.msra.mxu0 0.0
  %7098 = vmatprep.subr.mxu0 0.0
  %7099 = vmatpush2.xpose.msra.mxu0 0.0
  %7100 = vmatprep.subr.mxu0 0.0
  %7101 = vmatpush2.xpose.msra.mxu0 0.0
  %7102 = vmatprep.mubr.f32.mxu0 0.0
  %7103 = vmatmul.mubr.f32.gmra.mxu0 %v7036
  %v7104 = vpop.f32.mrf.mxu0
  %v7105 = vadd.f32 %v5091, %v7104
  %v7106 = vpop.f32.mrf.mxu0
  %7107 = vdwg.mxu0
  %v7109 = vsel %vm316, %v6804, 0
  %7111 = vmatprep.subr.mxu0 0.0
  %7112 = vmatpush1.xpose.msra.mxu0 0.0
  %7113 = vmatprep.subr.mxu0 0.0
  %7114 = vmatpush1.xpose.msra.mxu0 0.0
  %7115 = vmatprep.subr.mxu0 0.0
  %7116 = vmatpush1.xpose.msra.mxu0 0.0
  %7117 = vmatprep.subr.mxu0 0.0
  %7118 = vmatpush1.xpose.msra.mxu0 0.0
  %7119 = vmatprep.subr.mxu0 0.0
  %7120 = vmatpush1.xpose.msra.mxu0 0.0
  %7121 = vmatprep.subr.mxu0 0.0
  %7122 = vmatpush1.xpose.msra.mxu0 0.0
  %7123 = vmatprep.subr.mxu0 0.0
  %7124 = vmatpush1.xpose.msra.mxu0 0.0
  %7125 = vmatprep.subr.mxu0 0.0
  %7126 = vmatpush1.xpose.msra.mxu0 0.0
  %7127 = vmatprep.subr.mxu0 0.0
  %7128 = vmatpush1.xpose.msra.mxu0 0.0
  %7129 = vmatprep.subr.mxu0 0.0
  %7130 = vmatpush1.xpose.msra.mxu0 0.0
  %7131 = vmatprep.subr.mxu0 0.0
  %7132 = vmatpush1.xpose.msra.mxu0 0.0
  %7133 = vmatprep.subr.mxu0 0.0
  %7134 = vmatpush1.xpose.msra.mxu0 0.0
  %7135 = vmatprep.subr.mxu0 0.0
  %7136 = vmatpush1.xpose.msra.mxu0 0.0
  %7137 = vmatprep.subr.mxu0 0.0
  %7138 = vmatpush1.xpose.msra.mxu0 0.0
  %7139 = vmatprep.subr.mxu0 0.0
  %7140 = vmatpush1.xpose.msra.mxu0 %v1266
  %7141 = vmatprep.subr.mxu0 0.0
  %7142 = vmatpush1.xpose.msra.mxu0 %v1263
  %7143 = vmatprep.subr.mxu0 0.0
  %7144 = vmatpush2.xpose.msra.mxu0 0.0
  %7145 = vmatprep.subr.mxu0 0.0
  %7146 = vmatpush2.xpose.msra.mxu0 0.0
  %7147 = vmatprep.subr.mxu0 0.0
  %7148 = vmatpush2.xpose.msra.mxu0 0.0
  %7149 = vmatprep.subr.mxu0 0.0
  %7150 = vmatpush2.xpose.msra.mxu0 0.0
  %7151 = vmatprep.subr.mxu0 0.0
  %7152 = vmatpush2.xpose.msra.mxu0 0.0
  %7153 = vmatprep.subr.mxu0 0.0
  %7154 = vmatpush2.xpose.msra.mxu0 0.0
  %7155 = vmatprep.subr.mxu0 0.0
  %7156 = vmatpush2.xpose.msra.mxu0 0.0
  %7157 = vmatprep.subr.mxu0 0.0
  %7158 = vmatpush2.xpose.msra.mxu0 0.0
  %7159 = vmatprep.subr.mxu0 0.0
  %7160 = vmatpush2.xpose.msra.mxu0 0.0
  %7161 = vmatprep.subr.mxu0 0.0
  %7162 = vmatpush2.xpose.msra.mxu0 0.0
  %7163 = vmatprep.subr.mxu0 0.0
  %7164 = vmatpush2.xpose.msra.mxu0 0.0
  %7165 = vmatprep.subr.mxu0 0.0
  %7166 = vmatpush2.xpose.msra.mxu0 0.0
  %7167 = vmatprep.subr.mxu0 0.0
  %7168 = vmatpush2.xpose.msra.mxu0 0.0
  %7169 = vmatprep.subr.mxu0 0.0
  %7170 = vmatpush2.xpose.msra.mxu0 0.0
  %7171 = vmatprep.subr.mxu0 0.0
  %7172 = vmatpush2.xpose.msra.mxu0 0.0
  %7173 = vmatprep.subr.mxu0 0.0
  %7174 = vmatpush2.xpose.msra.mxu0 0.0
  %7175 = vmatprep.mubr.f32.mxu0 0.0
  %7176 = vmatmul.mubr.f32.gmra.mxu0 %v7109
  %v7177 = vpop.f32.mrf.mxu0
  %v7178 = vadd.f32 %v5092, %v7177
  %v7179 = vpop.f32.mrf.mxu0
  %7180 = vdwg.mxu0
  %v7182 = vsel %vm316, %v6805, 0
  %7184 = vmatprep.subr.mxu0 0.0
  %7185 = vmatpush1.xpose.msra.mxu0 0.0
  %7186 = vmatprep.subr.mxu0 0.0
  %7187 = vmatpush1.xpose.msra.mxu0 0.0
  %7188 = vmatprep.subr.mxu0 0.0
  %7189 = vmatpush1.xpose.msra.mxu0 0.0
  %7190 = vmatprep.subr.mxu0 0.0
  %7191 = vmatpush1.xpose.msra.mxu0 0.0
  %7192 = vmatprep.subr.mxu0 0.0
  %7193 = vmatpush1.xpose.msra.mxu0 0.0
  %7194 = vmatprep.subr.mxu0 0.0
  %7195 = vmatpush1.xpose.msra.mxu0 0.0
  %7196 = vmatprep.subr.mxu0 0.0
  %7197 = vmatpush1.xpose.msra.mxu0 0.0
  %7198 = vmatprep.subr.mxu0 0.0
  %7199 = vmatpush1.xpose.msra.mxu0 0.0
  %7200 = vmatprep.subr.mxu0 0.0
  %7201 = vmatpush1.xpose.msra.mxu0 0.0
  %7202 = vmatprep.subr.mxu0 0.0
  %7203 = vmatpush1.xpose.msra.mxu0 0.0
  %7204 = vmatprep.subr.mxu0 0.0
  %7205 = vmatpush1.xpose.msra.mxu0 0.0
  %7206 = vmatprep.subr.mxu0 0.0
  %7207 = vmatpush1.xpose.msra.mxu0 0.0
  %7208 = vmatprep.subr.mxu0 0.0
  %7209 = vmatpush1.xpose.msra.mxu0 0.0
  %7210 = vmatprep.subr.mxu0 0.0
  %7211 = vmatpush1.xpose.msra.mxu0 0.0
  %7212 = vmatprep.subr.mxu0 0.0
  %7213 = vmatpush1.xpose.msra.mxu0 %v1345
  %7214 = vmatprep.subr.mxu0 0.0
  %7215 = vmatpush1.xpose.msra.mxu0 %v1342
  %7216 = vmatprep.subr.mxu0 0.0
  %7217 = vmatpush2.xpose.msra.mxu0 0.0
  %7218 = vmatprep.subr.mxu0 0.0
  %7219 = vmatpush2.xpose.msra.mxu0 0.0
  %7220 = vmatprep.subr.mxu0 0.0
  %7221 = vmatpush2.xpose.msra.mxu0 0.0
  %7222 = vmatprep.subr.mxu0 0.0
  %7223 = vmatpush2.xpose.msra.mxu0 0.0
  %7224 = vmatprep.subr.mxu0 0.0
  %7225 = vmatpush2.xpose.msra.mxu0 0.0
  %7226 = vmatprep.subr.mxu0 0.0
  %7227 = vmatpush2.xpose.msra.mxu0 0.0
  %7228 = vmatprep.subr.mxu0 0.0
  %7229 = vmatpush2.xpose.msra.mxu0 0.0
  %7230 = vmatprep.subr.mxu0 0.0
  %7231 = vmatpush2.xpose.msra.mxu0 0.0
  %7232 = vmatprep.subr.mxu0 0.0
  %7233 = vmatpush2.xpose.msra.mxu0 0.0
  %7234 = vmatprep.subr.mxu0 0.0
  %7235 = vmatpush2.xpose.msra.mxu0 0.0
  %7236 = vmatprep.subr.mxu0 0.0
  %7237 = vmatpush2.xpose.msra.mxu0 0.0
  %7238 = vmatprep.subr.mxu0 0.0
  %7239 = vmatpush2.xpose.msra.mxu0 0.0
  %7240 = vmatprep.subr.mxu0 0.0
  %7241 = vmatpush2.xpose.msra.mxu0 0.0
  %7242 = vmatprep.subr.mxu0 0.0
  %7243 = vmatpush2.xpose.msra.mxu0 0.0
  %7244 = vmatprep.subr.mxu0 0.0
  %7245 = vmatpush2.xpose.msra.mxu0 0.0
  %7246 = vmatprep.subr.mxu0 0.0
  %7247 = vmatpush2.xpose.msra.mxu0 0.0
  %7248 = vmatprep.mubr.f32.mxu0 0.0
  %7249 = vmatmul.mubr.f32.gmra.mxu0 %v7182
  %v7250 = vpop.f32.mrf.mxu0
  %v7251 = vadd.f32 %v5093, %v7250
  %v7252 = vpop.f32.mrf.mxu0
  %7253 = vdwg.mxu0
  %v7255 = vsel %vm316, %v6806, 0
  %7257 = vmatprep.subr.mxu0 0.0
  %7258 = vmatpush1.xpose.msra.mxu0 0.0
  %7259 = vmatprep.subr.mxu0 0.0
  %7260 = vmatpush1.xpose.msra.mxu0 0.0
  %7261 = vmatprep.subr.mxu0 0.0
  %7262 = vmatpush1.xpose.msra.mxu0 0.0
  %7263 = vmatprep.subr.mxu0 0.0
  %7264 = vmatpush1.xpose.msra.mxu0 0.0
  %7265 = vmatprep.subr.mxu0 0.0
  %7266 = vmatpush1.xpose.msra.mxu0 0.0
  %7267 = vmatprep.subr.mxu0 0.0
  %7268 = vmatpush1.xpose.msra.mxu0 0.0
  %7269 = vmatprep.subr.mxu0 0.0
  %7270 = vmatpush1.xpose.msra.mxu0 0.0
  %7271 = vmatprep.subr.mxu0 0.0
  %7272 = vmatpush1.xpose.msra.mxu0 0.0
  %7273 = vmatprep.subr.mxu0 0.0
  %7274 = vmatpush1.xpose.msra.mxu0 0.0
  %7275 = vmatprep.subr.mxu0 0.0
  %7276 = vmatpush1.xpose.msra.mxu0 0.0
  %7277 = vmatprep.subr.mxu0 0.0
  %7278 = vmatpush1.xpose.msra.mxu0 0.0
  %7279 = vmatprep.subr.mxu0 0.0
  %7280 = vmatpush1.xpose.msra.mxu0 0.0
  %7281 = vmatprep.subr.mxu0 0.0
  %7282 = vmatpush1.xpose.msra.mxu0 0.0
  %7283 = vmatprep.subr.mxu0 0.0
  %7284 = vmatpush1.xpose.msra.mxu0 0.0
  %7285 = vmatprep.subr.mxu0 0.0
  %7286 = vmatpush1.xpose.msra.mxu0 %v1424
  %7287 = vmatprep.subr.mxu0 0.0
  %7288 = vmatpush1.xpose.msra.mxu0 %v1421
  %7289 = vmatprep.subr.mxu0 0.0
  %7290 = vmatpush2.xpose.msra.mxu0 0.0
  %7291 = vmatprep.subr.mxu0 0.0
  %7292 = vmatpush2.xpose.msra.mxu0 0.0
  %7293 = vmatprep.subr.mxu0 0.0
  %7294 = vmatpush2.xpose.msra.mxu0 0.0
  %7295 = vmatprep.subr.mxu0 0.0
  %7296 = vmatpush2.xpose.msra.mxu0 0.0
  %7297 = vmatprep.subr.mxu0 0.0
  %7298 = vmatpush2.xpose.msra.mxu0 0.0
  %7299 = vmatprep.subr.mxu0 0.0
  %7300 = vmatpush2.xpose.msra.mxu0 0.0
  %7301 = vmatprep.subr.mxu0 0.0
  %7302 = vmatpush2.xpose.msra.mxu0 0.0
  %7303 = vmatprep.subr.mxu0 0.0
  %7304 = vmatpush2.xpose.msra.mxu0 0.0
  %7305 = vmatprep.subr.mxu0 0.0
  %7306 = vmatpush2.xpose.msra.mxu0 0.0
  %7307 = vmatprep.subr.mxu0 0.0
  %7308 = vmatpush2.xpose.msra.mxu0 0.0
  %7309 = vmatprep.subr.mxu0 0.0
  %7310 = vmatpush2.xpose.msra.mxu0 0.0
  %7311 = vmatprep.subr.mxu0 0.0
  %7312 = vmatpush2.xpose.msra.mxu0 0.0
  %7313 = vmatprep.subr.mxu0 0.0
  %7314 = vmatpush2.xpose.msra.mxu0 0.0
  %7315 = vmatprep.subr.mxu0 0.0
  %7316 = vmatpush2.xpose.msra.mxu0 0.0
  %7317 = vmatprep.subr.mxu0 0.0
  %7318 = vmatpush2.xpose.msra.mxu0 0.0
  %7319 = vmatprep.subr.mxu0 0.0
  %7320 = vmatpush2.xpose.msra.mxu0 0.0
  %7321 = vmatprep.mubr.f32.mxu0 0.0
  %7322 = vmatmul.mubr.f32.gmra.mxu0 %v7255
  %v7323 = vpop.f32.mrf.mxu0
  %v7324 = vadd.f32 %v5094, %v7323
  %v7325 = vpop.f32.mrf.mxu0
  %7326 = vdwg.mxu0
  %v7328 = vsel %vm316, %v6807, 0
  %7330 = vmatprep.subr.mxu0 0.0
  %7331 = vmatpush1.xpose.msra.mxu0 0.0
  %7332 = vmatprep.subr.mxu0 0.0
  %7333 = vmatpush1.xpose.msra.mxu0 0.0
  %7334 = vmatprep.subr.mxu0 0.0
  %7335 = vmatpush1.xpose.msra.mxu0 0.0
  %7336 = vmatprep.subr.mxu0 0.0
  %7337 = vmatpush1.xpose.msra.mxu0 0.0
  %7338 = vmatprep.subr.mxu0 0.0
  %7339 = vmatpush1.xpose.msra.mxu0 0.0
  %7340 = vmatprep.subr.mxu0 0.0
  %7341 = vmatpush1.xpose.msra.mxu0 0.0
  %7342 = vmatprep.subr.mxu0 0.0
  %7343 = vmatpush1.xpose.msra.mxu0 0.0
  %7344 = vmatprep.subr.mxu0 0.0
  %7345 = vmatpush1.xpose.msra.mxu0 0.0
  %7346 = vmatprep.subr.mxu0 0.0
  %7347 = vmatpush1.xpose.msra.mxu0 0.0
  %7348 = vmatprep.subr.mxu0 0.0
  %7349 = vmatpush1.xpose.msra.mxu0 0.0
  %7350 = vmatprep.subr.mxu0 0.0
  %7351 = vmatpush1.xpose.msra.mxu0 0.0
  %7352 = vmatprep.subr.mxu0 0.0
  %7353 = vmatpush1.xpose.msra.mxu0 0.0
  %7354 = vmatprep.subr.mxu0 0.0
  %7355 = vmatpush1.xpose.msra.mxu0 0.0
  %7356 = vmatprep.subr.mxu0 0.0
  %7357 = vmatpush1.xpose.msra.mxu0 0.0
  %7358 = vmatprep.subr.mxu0 0.0
  %7359 = vmatpush1.xpose.msra.mxu0 %v1503
  %7360 = vmatprep.subr.mxu0 0.0
  %7361 = vmatpush1.xpose.msra.mxu0 %v1500
  %7362 = vmatprep.subr.mxu0 0.0
  %7363 = vmatpush2.xpose.msra.mxu0 0.0
  %7364 = vmatprep.subr.mxu0 0.0
  %7365 = vmatpush2.xpose.msra.mxu0 0.0
  %7366 = vmatprep.subr.mxu0 0.0
  %7367 = vmatpush2.xpose.msra.mxu0 0.0
  %7368 = vmatprep.subr.mxu0 0.0
  %7369 = vmatpush2.xpose.msra.mxu0 0.0
  %7370 = vmatprep.subr.mxu0 0.0
  %7371 = vmatpush2.xpose.msra.mxu0 0.0
  %7372 = vmatprep.subr.mxu0 0.0
  %7373 = vmatpush2.xpose.msra.mxu0 0.0
  %7374 = vmatprep.subr.mxu0 0.0
  %7375 = vmatpush2.xpose.msra.mxu0 0.0
  %7376 = vmatprep.subr.mxu0 0.0
  %7377 = vmatpush2.xpose.msra.mxu0 0.0
  %7378 = vmatprep.subr.mxu0 0.0
  %7379 = vmatpush2.xpose.msra.mxu0 0.0
  %7380 = vmatprep.subr.mxu0 0.0
  %7381 = vmatpush2.xpose.msra.mxu0 0.0
  %7382 = vmatprep.subr.mxu0 0.0
  %7383 = vmatpush2.xpose.msra.mxu0 0.0
  %7384 = vmatprep.subr.mxu0 0.0
  %7385 = vmatpush2.xpose.msra.mxu0 0.0
  %7386 = vmatprep.subr.mxu0 0.0
  %7387 = vmatpush2.xpose.msra.mxu0 0.0
  %7388 = vmatprep.subr.mxu0 0.0
  %7389 = vmatpush2.xpose.msra.mxu0 0.0
  %7390 = vmatprep.subr.mxu0 0.0
  %7391 = vmatpush2.xpose.msra.mxu0 0.0
  %7392 = vmatprep.subr.mxu0 0.0
  %7393 = vmatpush2.xpose.msra.mxu0 0.0
  %7394 = vmatprep.mubr.f32.mxu0 0.0
  %7395 = vmatmul.mubr.f32.gmra.mxu0 %v7328
  %v7396 = vpop.f32.mrf.mxu0
  %v7397 = vadd.f32 %v5095, %v7396
  %v7398 = vpop.f32.mrf.mxu0
  %7399 = vdwg.mxu0
  %v7401 = vsel %vm316, %v6808, 0
  %7403 = vmatprep.subr.mxu0 0.0
  %7404 = vmatpush1.xpose.msra.mxu0 0.0
  %7405 = vmatprep.subr.mxu0 0.0
  %7406 = vmatpush1.xpose.msra.mxu0 0.0
  %7407 = vmatprep.subr.mxu0 0.0
  %7408 = vmatpush1.xpose.msra.mxu0 0.0
  %7409 = vmatprep.subr.mxu0 0.0
  %7410 = vmatpush1.xpose.msra.mxu0 0.0
  %7411 = vmatprep.subr.mxu0 0.0
  %7412 = vmatpush1.xpose.msra.mxu0 0.0
  %7413 = vmatprep.subr.mxu0 0.0
  %7414 = vmatpush1.xpose.msra.mxu0 0.0
  %7415 = vmatprep.subr.mxu0 0.0
  %7416 = vmatpush1.xpose.msra.mxu0 0.0
  %7417 = vmatprep.subr.mxu0 0.0
  %7418 = vmatpush1.xpose.msra.mxu0 0.0
  %7419 = vmatprep.subr.mxu0 0.0
  %7420 = vmatpush1.xpose.msra.mxu0 0.0
  %7421 = vmatprep.subr.mxu0 0.0
  %7422 = vmatpush1.xpose.msra.mxu0 0.0
  %7423 = vmatprep.subr.mxu0 0.0
  %7424 = vmatpush1.xpose.msra.mxu0 0.0
  %7425 = vmatprep.subr.mxu0 0.0
  %7426 = vmatpush1.xpose.msra.mxu0 0.0
  %7427 = vmatprep.subr.mxu0 0.0
  %7428 = vmatpush1.xpose.msra.mxu0 0.0
  %7429 = vmatprep.subr.mxu0 0.0
  %7430 = vmatpush1.xpose.msra.mxu0 0.0
  %7431 = vmatprep.subr.mxu0 0.0
  %7432 = vmatpush1.xpose.msra.mxu0 %v1582
  %7433 = vmatprep.subr.mxu0 0.0
  %7434 = vmatpush1.xpose.msra.mxu0 %v1579
  %7435 = vmatprep.subr.mxu0 0.0
  %7436 = vmatpush2.xpose.msra.mxu0 0.0
  %7437 = vmatprep.subr.mxu0 0.0
  %7438 = vmatpush2.xpose.msra.mxu0 0.0
  %7439 = vmatprep.subr.mxu0 0.0
  %7440 = vmatpush2.xpose.msra.mxu0 0.0
  %7441 = vmatprep.subr.mxu0 0.0
  %7442 = vmatpush2.xpose.msra.mxu0 0.0
  %7443 = vmatprep.subr.mxu0 0.0
  %7444 = vmatpush2.xpose.msra.mxu0 0.0
  %7445 = vmatprep.subr.mxu0 0.0
  %7446 = vmatpush2.xpose.msra.mxu0 0.0
  %7447 = vmatprep.subr.mxu0 0.0
  %7448 = vmatpush2.xpose.msra.mxu0 0.0
  %7449 = vmatprep.subr.mxu0 0.0
  %7450 = vmatpush2.xpose.msra.mxu0 0.0
  %7451 = vmatprep.subr.mxu0 0.0
  %7452 = vmatpush2.xpose.msra.mxu0 0.0
  %7453 = vmatprep.subr.mxu0 0.0
  %7454 = vmatpush2.xpose.msra.mxu0 0.0
  %7455 = vmatprep.subr.mxu0 0.0
  %7456 = vmatpush2.xpose.msra.mxu0 0.0
  %7457 = vmatprep.subr.mxu0 0.0
  %7458 = vmatpush2.xpose.msra.mxu0 0.0
  %7459 = vmatprep.subr.mxu0 0.0
  %7460 = vmatpush2.xpose.msra.mxu0 0.0
  %7461 = vmatprep.subr.mxu0 0.0
  %7462 = vmatpush2.xpose.msra.mxu0 0.0
  %7463 = vmatprep.subr.mxu0 0.0
  %7464 = vmatpush2.xpose.msra.mxu0 0.0
  %7465 = vmatprep.subr.mxu0 0.0
  %7466 = vmatpush2.xpose.msra.mxu0 0.0
  %7467 = vmatprep.mubr.f32.mxu0 0.0
  %7468 = vmatmul.mubr.f32.gmra.mxu0 %v7401
  %v7469 = vpop.f32.mrf.mxu0
  %v7470 = vadd.f32 %v5096, %v7469
  %v7471 = vpop.f32.mrf.mxu0
  %7472 = vdwg.mxu0
  %v7474 = vsel %vm316, %v6809, 0
  %7476 = vmatprep.subr.mxu0 0.0
  %7477 = vmatpush1.xpose.msra.mxu0 0.0
  %7478 = vmatprep.subr.mxu0 0.0
  %7479 = vmatpush1.xpose.msra.mxu0 0.0
  %7480 = vmatprep.subr.mxu0 0.0
  %7481 = vmatpush1.xpose.msra.mxu0 0.0
  %7482 = vmatprep.subr.mxu0 0.0
  %7483 = vmatpush1.xpose.msra.mxu0 0.0
  %7484 = vmatprep.subr.mxu0 0.0
  %7485 = vmatpush1.xpose.msra.mxu0 0.0
  %7486 = vmatprep.subr.mxu0 0.0
  %7487 = vmatpush1.xpose.msra.mxu0 0.0
  %7488 = vmatprep.subr.mxu0 0.0
  %7489 = vmatpush1.xpose.msra.mxu0 0.0
  %7490 = vmatprep.subr.mxu0 0.0
  %7491 = vmatpush1.xpose.msra.mxu0 0.0
  %7492 = vmatprep.subr.mxu0 0.0
  %7493 = vmatpush1.xpose.msra.mxu0 0.0
  %7494 = vmatprep.subr.mxu0 0.0
  %7495 = vmatpush1.xpose.msra.mxu0 0.0
  %7496 = vmatprep.subr.mxu0 0.0
  %7497 = vmatpush1.xpose.msra.mxu0 0.0
  %7498 = vmatprep.subr.mxu0 0.0
  %7499 = vmatpush1.xpose.msra.mxu0 0.0
  %7500 = vmatprep.subr.mxu0 0.0
  %7501 = vmatpush1.xpose.msra.mxu0 0.0
  %7502 = vmatprep.subr.mxu0 0.0
  %7503 = vmatpush1.xpose.msra.mxu0 0.0
  %7504 = vmatprep.subr.mxu0 0.0
  %7505 = vmatpush1.xpose.msra.mxu0 %v1661
  %7506 = vmatprep.subr.mxu0 0.0
  %7507 = vmatpush1.xpose.msra.mxu0 %v1658
  %7508 = vmatprep.subr.mxu0 0.0
  %7509 = vmatpush2.xpose.msra.mxu0 0.0
  %7510 = vmatprep.subr.mxu0 0.0
  %7511 = vmatpush2.xpose.msra.mxu0 0.0
  %7512 = vmatprep.subr.mxu0 0.0
  %7513 = vmatpush2.xpose.msra.mxu0 0.0
  %7514 = vmatprep.subr.mxu0 0.0
  %7515 = vmatpush2.xpose.msra.mxu0 0.0
  %7516 = vmatprep.subr.mxu0 0.0
  %7517 = vmatpush2.xpose.msra.mxu0 0.0
  %7518 = vmatprep.subr.mxu0 0.0
  %7519 = vmatpush2.xpose.msra.mxu0 0.0
  %7520 = vmatprep.subr.mxu0 0.0
  %7521 = vmatpush2.xpose.msra.mxu0 0.0
  %7522 = vmatprep.subr.mxu0 0.0
  %7523 = vmatpush2.xpose.msra.mxu0 0.0
  %7524 = vmatprep.subr.mxu0 0.0
  %7525 = vmatpush2.xpose.msra.mxu0 0.0
  %7526 = vmatprep.subr.mxu0 0.0
  %7527 = vmatpush2.xpose.msra.mxu0 0.0
  %7528 = vmatprep.subr.mxu0 0.0
  %7529 = vmatpush2.xpose.msra.mxu0 0.0
  %7530 = vmatprep.subr.mxu0 0.0
  %7531 = vmatpush2.xpose.msra.mxu0 0.0
  %7532 = vmatprep.subr.mxu0 0.0
  %7533 = vmatpush2.xpose.msra.mxu0 0.0
  %7534 = vmatprep.subr.mxu0 0.0
  %7535 = vmatpush2.xpose.msra.mxu0 0.0
  %7536 = vmatprep.subr.mxu0 0.0
  %7537 = vmatpush2.xpose.msra.mxu0 0.0
  %7538 = vmatprep.subr.mxu0 0.0
  %7539 = vmatpush2.xpose.msra.mxu0 0.0
  %7540 = vmatprep.mubr.f32.mxu0 0.0
  %7541 = vmatmul.mubr.f32.gmra.mxu0 %v7474
  %v7542 = vpop.f32.mrf.mxu0
  %v7543 = vadd.f32 %v5097, %v7542
  %v7544 = vpop.f32.mrf.mxu0
  %7545 = vdwg.mxu0
  %v7547 = vsel %vm316, %v6810, 0
  %7549 = vmatprep.subr.mxu0 0.0
  %7550 = vmatpush1.xpose.msra.mxu0 0.0
  %7551 = vmatprep.subr.mxu0 0.0
  %7552 = vmatpush1.xpose.msra.mxu0 0.0
  %7553 = vmatprep.subr.mxu0 0.0
  %7554 = vmatpush1.xpose.msra.mxu0 0.0
  %7555 = vmatprep.subr.mxu0 0.0
  %7556 = vmatpush1.xpose.msra.mxu0 0.0
  %7557 = vmatprep.subr.mxu0 0.0
  %7558 = vmatpush1.xpose.msra.mxu0 0.0
  %7559 = vmatprep.subr.mxu0 0.0
  %7560 = vmatpush1.xpose.msra.mxu0 0.0
  %7561 = vmatprep.subr.mxu0 0.0
  %7562 = vmatpush1.xpose.msra.mxu0 0.0
  %7563 = vmatprep.subr.mxu0 0.0
  %7564 = vmatpush1.xpose.msra.mxu0 0.0
  %7565 = vmatprep.subr.mxu0 0.0
  %7566 = vmatpush1.xpose.msra.mxu0 0.0
  %7567 = vmatprep.subr.mxu0 0.0
  %7568 = vmatpush1.xpose.msra.mxu0 0.0
  %7569 = vmatprep.subr.mxu0 0.0
  %7570 = vmatpush1.xpose.msra.mxu0 0.0
  %7571 = vmatprep.subr.mxu0 0.0
  %7572 = vmatpush1.xpose.msra.mxu0 0.0
  %7573 = vmatprep.subr.mxu0 0.0
  %7574 = vmatpush1.xpose.msra.mxu0 0.0
  %7575 = vmatprep.subr.mxu0 0.0
  %7576 = vmatpush1.xpose.msra.mxu0 0.0
  %7577 = vmatprep.subr.mxu0 0.0
  %7578 = vmatpush1.xpose.msra.mxu0 %v1740
  %7579 = vmatprep.subr.mxu0 0.0
  %7580 = vmatpush1.xpose.msra.mxu0 %v1737
  %7581 = vmatprep.subr.mxu0 0.0
  %7582 = vmatpush2.xpose.msra.mxu0 0.0
  %7583 = vmatprep.subr.mxu0 0.0
  %7584 = vmatpush2.xpose.msra.mxu0 0.0
  %7585 = vmatprep.subr.mxu0 0.0
  %7586 = vmatpush2.xpose.msra.mxu0 0.0
  %7587 = vmatprep.subr.mxu0 0.0
  %7588 = vmatpush2.xpose.msra.mxu0 0.0
  %7589 = vmatprep.subr.mxu0 0.0
  %7590 = vmatpush2.xpose.msra.mxu0 0.0
  %7591 = vmatprep.subr.mxu0 0.0
  %7592 = vmatpush2.xpose.msra.mxu0 0.0
  %7593 = vmatprep.subr.mxu0 0.0
  %7594 = vmatpush2.xpose.msra.mxu0 0.0
  %7595 = vmatprep.subr.mxu0 0.0
  %7596 = vmatpush2.xpose.msra.mxu0 0.0
  %7597 = vmatprep.subr.mxu0 0.0
  %7598 = vmatpush2.xpose.msra.mxu0 0.0
  %7599 = vmatprep.subr.mxu0 0.0
  %7600 = vmatpush2.xpose.msra.mxu0 0.0
  %7601 = vmatprep.subr.mxu0 0.0
  %7602 = vmatpush2.xpose.msra.mxu0 0.0
  %7603 = vmatprep.subr.mxu0 0.0
  %7604 = vmatpush2.xpose.msra.mxu0 0.0
  %7605 = vmatprep.subr.mxu0 0.0
  %7606 = vmatpush2.xpose.msra.mxu0 0.0
  %7607 = vmatprep.subr.mxu0 0.0
  %7608 = vmatpush2.xpose.msra.mxu0 0.0
  %7609 = vmatprep.subr.mxu0 0.0
  %7610 = vmatpush2.xpose.msra.mxu0 0.0
  %7611 = vmatprep.subr.mxu0 0.0
  %7612 = vmatpush2.xpose.msra.mxu0 0.0
  %7613 = vmatprep.mubr.f32.mxu0 0.0
  %7614 = vmatmul.mubr.f32.gmra.mxu0 %v7547
  %v7615 = vpop.f32.mrf.mxu0
  %v7616 = vadd.f32 %v5098, %v7615
  %v7617 = vpop.f32.mrf.mxu0
  %7618 = vdwg.mxu0
  %v7620 = vsel %vm316, %v6811, 0
  %7622 = vmatprep.subr.mxu0 0.0
  %7623 = vmatpush1.xpose.msra.mxu0 0.0
  %7624 = vmatprep.subr.mxu0 0.0
  %7625 = vmatpush1.xpose.msra.mxu0 0.0
  %7626 = vmatprep.subr.mxu0 0.0
  %7627 = vmatpush1.xpose.msra.mxu0 0.0
  %7628 = vmatprep.subr.mxu0 0.0
  %7629 = vmatpush1.xpose.msra.mxu0 0.0
  %7630 = vmatprep.subr.mxu0 0.0
  %7631 = vmatpush1.xpose.msra.mxu0 0.0
  %7632 = vmatprep.subr.mxu0 0.0
  %7633 = vmatpush1.xpose.msra.mxu0 0.0
  %7634 = vmatprep.subr.mxu0 0.0
  %7635 = vmatpush1.xpose.msra.mxu0 0.0
  %7636 = vmatprep.subr.mxu0 0.0
  %7637 = vmatpush1.xpose.msra.mxu0 0.0
  %7638 = vmatprep.subr.mxu0 0.0
  %7639 = vmatpush1.xpose.msra.mxu0 0.0
  %7640 = vmatprep.subr.mxu0 0.0
  %7641 = vmatpush1.xpose.msra.mxu0 0.0
  %7642 = vmatprep.subr.mxu0 0.0
  %7643 = vmatpush1.xpose.msra.mxu0 0.0
  %7644 = vmatprep.subr.mxu0 0.0
  %7645 = vmatpush1.xpose.msra.mxu0 0.0
  %7646 = vmatprep.subr.mxu0 0.0
  %7647 = vmatpush1.xpose.msra.mxu0 0.0
  %7648 = vmatprep.subr.mxu0 0.0
  %7649 = vmatpush1.xpose.msra.mxu0 0.0
  %7650 = vmatprep.subr.mxu0 0.0
  %7651 = vmatpush1.xpose.msra.mxu0 %v1819
  %7652 = vmatprep.subr.mxu0 0.0
  %7653 = vmatpush1.xpose.msra.mxu0 %v1816
  %7654 = vmatprep.subr.mxu0 0.0
  %7655 = vmatpush2.xpose.msra.mxu0 0.0
  %7656 = vmatprep.subr.mxu0 0.0
  %7657 = vmatpush2.xpose.msra.mxu0 0.0
  %7658 = vmatprep.subr.mxu0 0.0
  %7659 = vmatpush2.xpose.msra.mxu0 0.0
  %7660 = vmatprep.subr.mxu0 0.0
  %7661 = vmatpush2.xpose.msra.mxu0 0.0
  %7662 = vmatprep.subr.mxu0 0.0
  %7663 = vmatpush2.xpose.msra.mxu0 0.0
  %7664 = vmatprep.subr.mxu0 0.0
  %7665 = vmatpush2.xpose.msra.mxu0 0.0
  %7666 = vmatprep.subr.mxu0 0.0
  %7667 = vmatpush2.xpose.msra.mxu0 0.0
  %7668 = vmatprep.subr.mxu0 0.0
  %7669 = vmatpush2.xpose.msra.mxu0 0.0
  %7670 = vmatprep.subr.mxu0 0.0
  %7671 = vmatpush2.xpose.msra.mxu0 0.0
  %7672 = vmatprep.subr.mxu0 0.0
  %7673 = vmatpush2.xpose.msra.mxu0 0.0
  %7674 = vmatprep.subr.mxu0 0.0
  %7675 = vmatpush2.xpose.msra.mxu0 0.0
  %7676 = vmatprep.subr.mxu0 0.0
  %7677 = vmatpush2.xpose.msra.mxu0 0.0
  %7678 = vmatprep.subr.mxu0 0.0
  %7679 = vmatpush2.xpose.msra.mxu0 0.0
  %7680 = vmatprep.subr.mxu0 0.0
  %7681 = vmatpush2.xpose.msra.mxu0 0.0
  %7682 = vmatprep.subr.mxu0 0.0
  %7683 = vmatpush2.xpose.msra.mxu0 0.0
  %7684 = vmatprep.subr.mxu0 0.0
  %7685 = vmatpush2.xpose.msra.mxu0 0.0
  %7686 = vmatprep.mubr.f32.mxu0 0.0
  %7687 = vmatmul.mubr.f32.gmra.mxu0 %v7620
  %v7688 = vpop.f32.mrf.mxu0
  %v7689 = vadd.f32 %v5099, %v7688
  %v7690 = vpop.f32.mrf.mxu0
  %7691 = vdwg.mxu0
  %v7693 = vsel %vm316, %v6812, 0
  %7695 = vmatprep.subr.mxu0 0.0
  %7696 = vmatpush1.xpose.msra.mxu0 0.0
  %7697 = vmatprep.subr.mxu0 0.0
  %7698 = vmatpush1.xpose.msra.mxu0 0.0
  %7699 = vmatprep.subr.mxu0 0.0
  %7700 = vmatpush1.xpose.msra.mxu0 0.0
  %7701 = vmatprep.subr.mxu0 0.0
  %7702 = vmatpush1.xpose.msra.mxu0 0.0
  %7703 = vmatprep.subr.mxu0 0.0
  %7704 = vmatpush1.xpose.msra.mxu0 0.0
  %7705 = vmatprep.subr.mxu0 0.0
  %7706 = vmatpush1.xpose.msra.mxu0 0.0
  %7707 = vmatprep.subr.mxu0 0.0
  %7708 = vmatpush1.xpose.msra.mxu0 0.0
  %7709 = vmatprep.subr.mxu0 0.0
  %7710 = vmatpush1.xpose.msra.mxu0 0.0
  %7711 = vmatprep.subr.mxu0 0.0
  %7712 = vmatpush1.xpose.msra.mxu0 0.0
  %7713 = vmatprep.subr.mxu0 0.0
  %7714 = vmatpush1.xpose.msra.mxu0 0.0
  %7715 = vmatprep.subr.mxu0 0.0
  %7716 = vmatpush1.xpose.msra.mxu0 0.0
  %7717 = vmatprep.subr.mxu0 0.0
  %7718 = vmatpush1.xpose.msra.mxu0 0.0
  %7719 = vmatprep.subr.mxu0 0.0
  %7720 = vmatpush1.xpose.msra.mxu0 0.0
  %7721 = vmatprep.subr.mxu0 0.0
  %7722 = vmatpush1.xpose.msra.mxu0 0.0
  %7723 = vmatprep.subr.mxu0 0.0
  %7724 = vmatpush1.xpose.msra.mxu0 %v1898
  %7725 = vmatprep.subr.mxu0 0.0
  %7726 = vmatpush1.xpose.msra.mxu0 %v1895
  %7727 = vmatprep.subr.mxu0 0.0
  %7728 = vmatpush2.xpose.msra.mxu0 0.0
  %7729 = vmatprep.subr.mxu0 0.0
  %7730 = vmatpush2.xpose.msra.mxu0 0.0
  %7731 = vmatprep.subr.mxu0 0.0
  %7732 = vmatpush2.xpose.msra.mxu0 0.0
  %7733 = vmatprep.subr.mxu0 0.0
  %7734 = vmatpush2.xpose.msra.mxu0 0.0
  %7735 = vmatprep.subr.mxu0 0.0
  %7736 = vmatpush2.xpose.msra.mxu0 0.0
  %7737 = vmatprep.subr.mxu0 0.0
  %7738 = vmatpush2.xpose.msra.mxu0 0.0
  %7739 = vmatprep.subr.mxu0 0.0
  %7740 = vmatpush2.xpose.msra.mxu0 0.0
  %7741 = vmatprep.subr.mxu0 0.0
  %7742 = vmatpush2.xpose.msra.mxu0 0.0
  %7743 = vmatprep.subr.mxu0 0.0
  %7744 = vmatpush2.xpose.msra.mxu0 0.0
  %7745 = vmatprep.subr.mxu0 0.0
  %7746 = vmatpush2.xpose.msra.mxu0 0.0
  %7747 = vmatprep.subr.mxu0 0.0
  %7748 = vmatpush2.xpose.msra.mxu0 0.0
  %7749 = vmatprep.subr.mxu0 0.0
  %7750 = vmatpush2.xpose.msra.mxu0 0.0
  %7751 = vmatprep.subr.mxu0 0.0
  %7752 = vmatpush2.xpose.msra.mxu0 0.0
  %7753 = vmatprep.subr.mxu0 0.0
  %7754 = vmatpush2.xpose.msra.mxu0 0.0
  %7755 = vmatprep.subr.mxu0 0.0
  %7756 = vmatpush2.xpose.msra.mxu0 0.0
  %7757 = vmatprep.subr.mxu0 0.0
  %7758 = vmatpush2.xpose.msra.mxu0 0.0
  %7759 = vmatprep.mubr.f32.mxu0 0.0
  %7760 = vmatmul.mubr.f32.gmra.mxu0 %v7693
  %v7761 = vpop.f32.mrf.mxu0
  %v7762 = vadd.f32 %v5100, %v7761
  %v7763 = vpop.f32.mrf.mxu0
  %7764 = vdwg.mxu0
  %v7766 = vsel %vm316, %v6813, 0
  %7768 = vmatprep.subr.mxu0 0.0
  %7769 = vmatpush1.xpose.msra.mxu0 0.0
  %7770 = vmatprep.subr.mxu0 0.0
  %7771 = vmatpush1.xpose.msra.mxu0 0.0
  %7772 = vmatprep.subr.mxu0 0.0
  %7773 = vmatpush1.xpose.msra.mxu0 0.0
  %7774 = vmatprep.subr.mxu0 0.0
  %7775 = vmatpush1.xpose.msra.mxu0 0.0
  %7776 = vmatprep.subr.mxu0 0.0
  %7777 = vmatpush1.xpose.msra.mxu0 0.0
  %7778 = vmatprep.subr.mxu0 0.0
  %7779 = vmatpush1.xpose.msra.mxu0 0.0
  %7780 = vmatprep.subr.mxu0 0.0
  %7781 = vmatpush1.xpose.msra.mxu0 0.0
  %7782 = vmatprep.subr.mxu0 0.0
  %7783 = vmatpush1.xpose.msra.mxu0 0.0
  %7784 = vmatprep.subr.mxu0 0.0
  %7785 = vmatpush1.xpose.msra.mxu0 0.0
  %7786 = vmatprep.subr.mxu0 0.0
  %7787 = vmatpush1.xpose.msra.mxu0 0.0
  %7788 = vmatprep.subr.mxu0 0.0
  %7789 = vmatpush1.xpose.msra.mxu0 0.0
  %7790 = vmatprep.subr.mxu0 0.0
  %7791 = vmatpush1.xpose.msra.mxu0 0.0
  %7792 = vmatprep.subr.mxu0 0.0
  %7793 = vmatpush1.xpose.msra.mxu0 0.0
  %7794 = vmatprep.subr.mxu0 0.0
  %7795 = vmatpush1.xpose.msra.mxu0 0.0
  %7796 = vmatprep.subr.mxu0 0.0
  %7797 = vmatpush1.xpose.msra.mxu0 %v1977
  %7798 = vmatprep.subr.mxu0 0.0
  %7799 = vmatpush1.xpose.msra.mxu0 %v1974
  %7800 = vmatprep.subr.mxu0 0.0
  %7801 = vmatpush2.xpose.msra.mxu0 0.0
  %7802 = vmatprep.subr.mxu0 0.0
  %7803 = vmatpush2.xpose.msra.mxu0 0.0
  %7804 = vmatprep.subr.mxu0 0.0
  %7805 = vmatpush2.xpose.msra.mxu0 0.0
  %7806 = vmatprep.subr.mxu0 0.0
  %7807 = vmatpush2.xpose.msra.mxu0 0.0
  %7808 = vmatprep.subr.mxu0 0.0
  %7809 = vmatpush2.xpose.msra.mxu0 0.0
  %7810 = vmatprep.subr.mxu0 0.0
  %7811 = vmatpush2.xpose.msra.mxu0 0.0
  %7812 = vmatprep.subr.mxu0 0.0
  %7813 = vmatpush2.xpose.msra.mxu0 0.0
  %7814 = vmatprep.subr.mxu0 0.0
  %7815 = vmatpush2.xpose.msra.mxu0 0.0
  %7816 = vmatprep.subr.mxu0 0.0
  %7817 = vmatpush2.xpose.msra.mxu0 0.0
  %7818 = vmatprep.subr.mxu0 0.0
  %7819 = vmatpush2.xpose.msra.mxu0 0.0
  %7820 = vmatprep.subr.mxu0 0.0
  %7821 = vmatpush2.xpose.msra.mxu0 0.0
  %7822 = vmatprep.subr.mxu0 0.0
  %7823 = vmatpush2.xpose.msra.mxu0 0.0
  %7824 = vmatprep.subr.mxu0 0.0
  %7825 = vmatpush2.xpose.msra.mxu0 0.0
  %7826 = vmatprep.subr.mxu0 0.0
  %7827 = vmatpush2.xpose.msra.mxu0 0.0
  %7828 = vmatprep.subr.mxu0 0.0
  %7829 = vmatpush2.xpose.msra.mxu0 0.0
  %7830 = vmatprep.subr.mxu0 0.0
  %7831 = vmatpush2.xpose.msra.mxu0 0.0
  %7832 = vmatprep.mubr.f32.mxu0 0.0
  %7833 = vmatmul.mubr.f32.gmra.mxu0 %v7766
  %v7834 = vpop.f32.mrf.mxu0
  %v7835 = vadd.f32 %v5101, %v7834
  %v7836 = vpop.f32.mrf.mxu0
  %7837 = vdwg.mxu0
  %v7839 = vsel %vm316, %v6814, 0
  %7841 = vmatprep.subr.mxu0 0.0
  %7842 = vmatpush1.xpose.msra.mxu0 0.0
  %7843 = vmatprep.subr.mxu0 0.0
  %7844 = vmatpush1.xpose.msra.mxu0 0.0
  %7845 = vmatprep.subr.mxu0 0.0
  %7846 = vmatpush1.xpose.msra.mxu0 0.0
  %7847 = vmatprep.subr.mxu0 0.0
  %7848 = vmatpush1.xpose.msra.mxu0 0.0
  %7849 = vmatprep.subr.mxu0 0.0
  %7850 = vmatpush1.xpose.msra.mxu0 0.0
  %7851 = vmatprep.subr.mxu0 0.0
  %7852 = vmatpush1.xpose.msra.mxu0 0.0
  %7853 = vmatprep.subr.mxu0 0.0
  %7854 = vmatpush1.xpose.msra.mxu0 0.0
  %7855 = vmatprep.subr.mxu0 0.0
  %7856 = vmatpush1.xpose.msra.mxu0 0.0
  %7857 = vmatprep.subr.mxu0 0.0
  %7858 = vmatpush1.xpose.msra.mxu0 0.0
  %7859 = vmatprep.subr.mxu0 0.0
  %7860 = vmatpush1.xpose.msra.mxu0 0.0
  %7861 = vmatprep.subr.mxu0 0.0
  %7862 = vmatpush1.xpose.msra.mxu0 0.0
  %7863 = vmatprep.subr.mxu0 0.0
  %7864 = vmatpush1.xpose.msra.mxu0 0.0
  %7865 = vmatprep.subr.mxu0 0.0
  %7866 = vmatpush1.xpose.msra.mxu0 0.0
  %7867 = vmatprep.subr.mxu0 0.0
  %7868 = vmatpush1.xpose.msra.mxu0 0.0
  %7869 = vmatprep.subr.mxu0 0.0
  %7870 = vmatpush1.xpose.msra.mxu0 %v2056
  %7871 = vmatprep.subr.mxu0 0.0
  %7872 = vmatpush1.xpose.msra.mxu0 %v2053
  %7873 = vmatprep.subr.mxu0 0.0
  %7874 = vmatpush2.xpose.msra.mxu0 0.0
  %7875 = vmatprep.subr.mxu0 0.0
  %7876 = vmatpush2.xpose.msra.mxu0 0.0
  %7877 = vmatprep.subr.mxu0 0.0
  %7878 = vmatpush2.xpose.msra.mxu0 0.0
  %7879 = vmatprep.subr.mxu0 0.0
  %7880 = vmatpush2.xpose.msra.mxu0 0.0
  %7881 = vmatprep.subr.mxu0 0.0
  %7882 = vmatpush2.xpose.msra.mxu0 0.0
  %7883 = vmatprep.subr.mxu0 0.0
  %7884 = vmatpush2.xpose.msra.mxu0 0.0
  %7885 = vmatprep.subr.mxu0 0.0
  %7886 = vmatpush2.xpose.msra.mxu0 0.0
  %7887 = vmatprep.subr.mxu0 0.0
  %7888 = vmatpush2.xpose.msra.mxu0 0.0
  %7889 = vmatprep.subr.mxu0 0.0
  %7890 = vmatpush2.xpose.msra.mxu0 0.0
  %7891 = vmatprep.subr.mxu0 0.0
  %7892 = vmatpush2.xpose.msra.mxu0 0.0
  %7893 = vmatprep.subr.mxu0 0.0
  %7894 = vmatpush2.xpose.msra.mxu0 0.0
  %7895 = vmatprep.subr.mxu0 0.0
  %7896 = vmatpush2.xpose.msra.mxu0 0.0
  %7897 = vmatprep.subr.mxu0 0.0
  %7898 = vmatpush2.xpose.msra.mxu0 0.0
  %7899 = vmatprep.subr.mxu0 0.0
  %7900 = vmatpush2.xpose.msra.mxu0 0.0
  %7901 = vmatprep.subr.mxu0 0.0
  %7902 = vmatpush2.xpose.msra.mxu0 0.0
  %7903 = vmatprep.subr.mxu0 0.0
  %7904 = vmatpush2.xpose.msra.mxu0 0.0
  %7905 = vmatprep.mubr.f32.mxu0 0.0
  %7906 = vmatmul.mubr.f32.gmra.mxu0 %v7839
  %v7907 = vpop.f32.mrf.mxu0
  %v7908 = vadd.f32 %v5102, %v7907
  %v7909 = vpop.f32.mrf.mxu0
  %7910 = vdwg.mxu0
  %v7912 = vsel %vm316, %v6815, 0
  %7914 = vmatprep.subr.mxu0 0.0
  %7915 = vmatpush1.xpose.msra.mxu0 0.0
  %7916 = vmatprep.subr.mxu0 0.0
  %7917 = vmatpush1.xpose.msra.mxu0 0.0
  %7918 = vmatprep.subr.mxu0 0.0
  %7919 = vmatpush1.xpose.msra.mxu0 0.0
  %7920 = vmatprep.subr.mxu0 0.0
  %7921 = vmatpush1.xpose.msra.mxu0 0.0
  %7922 = vmatprep.subr.mxu0 0.0
  %7923 = vmatpush1.xpose.msra.mxu0 0.0
  %7924 = vmatprep.subr.mxu0 0.0
  %7925 = vmatpush1.xpose.msra.mxu0 0.0
  %7926 = vmatprep.subr.mxu0 0.0
  %7927 = vmatpush1.xpose.msra.mxu0 0.0
  %7928 = vmatprep.subr.mxu0 0.0
  %7929 = vmatpush1.xpose.msra.mxu0 0.0
  %7930 = vmatprep.subr.mxu0 0.0
  %7931 = vmatpush1.xpose.msra.mxu0 0.0
  %7932 = vmatprep.subr.mxu0 0.0
  %7933 = vmatpush1.xpose.msra.mxu0 0.0
  %7934 = vmatprep.subr.mxu0 0.0
  %7935 = vmatpush1.xpose.msra.mxu0 0.0
  %7936 = vmatprep.subr.mxu0 0.0
  %7937 = vmatpush1.xpose.msra.mxu0 0.0
  %7938 = vmatprep.subr.mxu0 0.0
  %7939 = vmatpush1.xpose.msra.mxu0 0.0
  %7940 = vmatprep.subr.mxu0 0.0
  %7941 = vmatpush1.xpose.msra.mxu0 0.0
  %7942 = vmatprep.subr.mxu0 0.0
  %7943 = vmatpush1.xpose.msra.mxu0 %v2135
  %7944 = vmatprep.subr.mxu0 0.0
  %7945 = vmatpush1.xpose.msra.mxu0 %v2132
  %7946 = vmatprep.subr.mxu0 0.0
  %7947 = vmatpush2.xpose.msra.mxu0 0.0
  %7948 = vmatprep.subr.mxu0 0.0
  %7949 = vmatpush2.xpose.msra.mxu0 0.0
  %7950 = vmatprep.subr.mxu0 0.0
  %7951 = vmatpush2.xpose.msra.mxu0 0.0
  %7952 = vmatprep.subr.mxu0 0.0
  %7953 = vmatpush2.xpose.msra.mxu0 0.0
  %7954 = vmatprep.subr.mxu0 0.0
  %7955 = vmatpush2.xpose.msra.mxu0 0.0
  %7956 = vmatprep.subr.mxu0 0.0
  %7957 = vmatpush2.xpose.msra.mxu0 0.0
  %7958 = vmatprep.subr.mxu0 0.0
  %7959 = vmatpush2.xpose.msra.mxu0 0.0
  %7960 = vmatprep.subr.mxu0 0.0
  %7961 = vmatpush2.xpose.msra.mxu0 0.0
  %7962 = vmatprep.subr.mxu0 0.0
  %7963 = vmatpush2.xpose.msra.mxu0 0.0
  %7964 = vmatprep.subr.mxu0 0.0
  %7965 = vmatpush2.xpose.msra.mxu0 0.0
  %7966 = vmatprep.subr.mxu0 0.0
  %7967 = vmatpush2.xpose.msra.mxu0 0.0
  %7968 = vmatprep.subr.mxu0 0.0
  %7969 = vmatpush2.xpose.msra.mxu0 0.0
  %7970 = vmatprep.subr.mxu0 0.0
  %7971 = vmatpush2.xpose.msra.mxu0 0.0
  %7972 = vmatprep.subr.mxu0 0.0
  %7973 = vmatpush2.xpose.msra.mxu0 0.0
  %7974 = vmatprep.subr.mxu0 0.0
  %7975 = vmatpush2.xpose.msra.mxu0 0.0
  %7976 = vmatprep.subr.mxu0 0.0
  %7977 = vmatpush2.xpose.msra.mxu0 0.0
  %7978 = vmatprep.mubr.f32.mxu0 0.0
  %7979 = vmatmul.mubr.f32.gmra.mxu0 %v7912
  %v7980 = vpop.f32.mrf.mxu0
  %v7981 = vadd.f32 %v5103, %v7980
  %v7982 = vpop.f32.mrf.mxu0
  %7983 = vdwg.mxu0
  %v7984 = vadd.f32 %v6886, %v837
  %v7985 = vadd.f32 %v6959, %v844
  %v7986 = vadd.f32 %v7032, %v851
  %v7987 = vadd.f32 %v7105, %v858
  %v7988 = vadd.f32 %v7178, %v865
  %v7989 = vadd.f32 %v7251, %v872
  %v7990 = vadd.f32 %v7324, %v879
  %v7991 = vadd.f32 %v7397, %v886
  %v7992 = vadd.f32 %v7470, %v893
  %v7993 = vadd.f32 %v7543, %v900
  %v7994 = vadd.f32 %v7616, %v907
  %v7995 = vadd.f32 %v7689, %v914
  %v7996 = vadd.f32 %v7762, %v921
  %v7997 = vadd.f32 %v7835, %v928
  %v7998 = vadd.f32 %v7908, %v935
  %v7999 = vadd.f32 %v7981, %v942
  %v8000 = vsel %vm2207, %v7984, -inf
  %v8001 = vrot.slane %v8000, 4
  %v8002 = vmax.f32 %v8000, %v8001
  %v8003 = vrot.slane %v8002, 2
  %v8004 = vmax.f32 %v8002, %v8003
  %v8005 = vrot.slane %v8004, 1
  %v8006 = vmax.f32 %v8004, %v8005
  %v8007 = vsel %vm2207, %v7985, -inf
  %v8008 = vrot.slane %v8007, 4
  %v8009 = vmax.f32 %v8007, %v8008
  %v8010 = vrot.slane %v8009, 2
  %v8011 = vmax.f32 %v8009, %v8010
  %v8012 = vrot.slane %v8011, 1
  %v8013 = vmax.f32 %v8011, %v8012
  %v8014 = vsel %vm2207, %v7986, -inf
  %v8015 = vrot.slane %v8014, 4
  %v8016 = vmax.f32 %v8014, %v8015
  %v8017 = vrot.slane %v8016, 2
  %v8018 = vmax.f32 %v8016, %v8017
  %v8019 = vrot.slane %v8018, 1
  %v8020 = vmax.f32 %v8018, %v8019
  %v8021 = vsel %vm2207, %v7987, -inf
  %v8022 = vrot.slane %v8021, 4
  %v8023 = vmax.f32 %v8021, %v8022
  %v8024 = vrot.slane %v8023, 2
  %v8025 = vmax.f32 %v8023, %v8024
  %v8026 = vrot.slane %v8025, 1
  %v8027 = vmax.f32 %v8025, %v8026
  %v8028 = vsel %vm2207, %v7988, -inf
  %v8029 = vrot.slane %v8028, 4
  %v8030 = vmax.f32 %v8028, %v8029
  %v8031 = vrot.slane %v8030, 2
  %v8032 = vmax.f32 %v8030, %v8031
  %v8033 = vrot.slane %v8032, 1
  %v8034 = vmax.f32 %v8032, %v8033
  %v8035 = vsel %vm2207, %v7989, -inf
  %v8036 = vrot.slane %v8035, 4
  %v8037 = vmax.f32 %v8035, %v8036
  %v8038 = vrot.slane %v8037, 2
  %v8039 = vmax.f32 %v8037, %v8038
  %v8040 = vrot.slane %v8039, 1
  %v8041 = vmax.f32 %v8039, %v8040
  %v8042 = vsel %vm2207, %v7990, -inf
  %v8043 = vrot.slane %v8042, 4
  %v8044 = vmax.f32 %v8042, %v8043
  %v8045 = vrot.slane %v8044, 2
  %v8046 = vmax.f32 %v8044, %v8045
  %v8047 = vrot.slane %v8046, 1
  %v8048 = vmax.f32 %v8046, %v8047
  %v8049 = vsel %vm2207, %v7991, -inf
  %v8050 = vrot.slane %v8049, 4
  %v8051 = vmax.f32 %v8049, %v8050
  %v8052 = vrot.slane %v8051, 2
  %v8053 = vmax.f32 %v8051, %v8052
  %v8054 = vrot.slane %v8053, 1
  %v8055 = vmax.f32 %v8053, %v8054
  %v8056 = vsel %vm2207, %v7992, -inf
  %v8057 = vrot.slane %v8056, 4
  %v8058 = vmax.f32 %v8056, %v8057
  %v8059 = vrot.slane %v8058, 2
  %v8060 = vmax.f32 %v8058, %v8059
  %v8061 = vrot.slane %v8060, 1
  %v8062 = vmax.f32 %v8060, %v8061
  %v8063 = vsel %vm2207, %v7993, -inf
  %v8064 = vrot.slane %v8063, 4
  %v8065 = vmax.f32 %v8063, %v8064
  %v8066 = vrot.slane %v8065, 2
  %v8067 = vmax.f32 %v8065, %v8066
  %v8068 = vrot.slane %v8067, 1
  %v8069 = vmax.f32 %v8067, %v8068
  %v8070 = vsel %vm2207, %v7994, -inf
  %v8071 = vrot.slane %v8070, 4
  %v8072 = vmax.f32 %v8070, %v8071
  %v8073 = vrot.slane %v8072, 2
  %v8074 = vmax.f32 %v8072, %v8073
  %v8075 = vrot.slane %v8074, 1
  %v8076 = vmax.f32 %v8074, %v8075
  %v8077 = vsel %vm2207, %v7995, -inf
  %v8078 = vrot.slane %v8077, 4
  %v8079 = vmax.f32 %v8077, %v8078
  %v8080 = vrot.slane %v8079, 2
  %v8081 = vmax.f32 %v8079, %v8080
  %v8082 = vrot.slane %v8081, 1
  %v8083 = vmax.f32 %v8081, %v8082
  %v8084 = vsel %vm2207, %v7996, -inf
  %v8085 = vrot.slane %v8084, 4
  %v8086 = vmax.f32 %v8084, %v8085
  %v8087 = vrot.slane %v8086, 2
  %v8088 = vmax.f32 %v8086, %v8087
  %v8089 = vrot.slane %v8088, 1
  %v8090 = vmax.f32 %v8088, %v8089
  %v8091 = vsel %vm2207, %v7997, -inf
  %v8092 = vrot.slane %v8091, 4
  %v8093 = vmax.f32 %v8091, %v8092
  %v8094 = vrot.slane %v8093, 2
  %v8095 = vmax.f32 %v8093, %v8094
  %v8096 = vrot.slane %v8095, 1
  %v8097 = vmax.f32 %v8095, %v8096
  %v8098 = vsel %vm2207, %v7998, -inf
  %v8099 = vrot.slane %v8098, 4
  %v8100 = vmax.f32 %v8098, %v8099
  %v8101 = vrot.slane %v8100, 2
  %v8102 = vmax.f32 %v8100, %v8101
  %v8103 = vrot.slane %v8102, 1
  %v8104 = vmax.f32 %v8102, %v8103
  %v8105 = vsel %vm2207, %v7999, -inf
  %v8106 = vrot.slane %v8105, 4
  %v8107 = vmax.f32 %v8105, %v8106
  %v8108 = vrot.slane %v8107, 2
  %v8109 = vmax.f32 %v8107, %v8108
  %v8110 = vrot.slane %v8109, 1
  %v8111 = vmax.f32 %v8109, %v8110
  %v8112 = vsub.f32 %v7984, %v8006
  %v8113 = vsub.f32 %v7985, %v8013
  %v8114 = vsub.f32 %v7986, %v8020
  %v8115 = vsub.f32 %v7987, %v8027
  %v8116 = vsub.f32 %v7988, %v8034
  %v8117 = vsub.f32 %v7989, %v8041
  %v8118 = vsub.f32 %v7990, %v8048
  %v8119 = vsub.f32 %v7991, %v8055
  %v8120 = vsub.f32 %v7992, %v8062
  %v8121 = vsub.f32 %v7993, %v8069
  %v8122 = vsub.f32 %v7994, %v8076
  %v8123 = vsub.f32 %v7995, %v8083
  %v8124 = vsub.f32 %v7996, %v8090
  %v8125 = vsub.f32 %v7997, %v8097
  %v8126 = vsub.f32 %v7998, %v8104
  %v8127 = vsub.f32 %v7999, %v8111
  %v8128 = vmul.f32 %v8112, 1.442695
  %v8129 = vpow.pop %v8128
  %v8130 = vmul.f32 %v8113, 1.442695
  %v8131 = vpow.pop %v8130
  %v8132 = vmul.f32 %v8114, 1.442695
  %v8133 = vpow.pop %v8132
  %v8134 = vmul.f32 %v8115, 1.442695
  %v8135 = vpow.pop %v8134
  %v8136 = vmul.f32 %v8116, 1.442695
  %v8137 = vpow.pop %v8136
  %v8138 = vmul.f32 %v8117, 1.442695
  %v8139 = vpow.pop %v8138
  %v8140 = vmul.f32 %v8118, 1.442695
  %v8141 = vpow.pop %v8140
  %v8142 = vmul.f32 %v8119, 1.442695
  %v8143 = vpow.pop %v8142
  %v8144 = vmul.f32 %v8120, 1.442695
  %v8145 = vpow.pop %v8144
  %v8146 = vmul.f32 %v8121, 1.442695
  %v8147 = vpow.pop %v8146
  %v8148 = vmul.f32 %v8122, 1.442695
  %v8149 = vpow.pop %v8148
  %v8150 = vmul.f32 %v8123, 1.442695
  %v8151 = vpow.pop %v8150
  %v8152 = vmul.f32 %v8124, 1.442695
  %v8153 = vpow.pop %v8152
  %v8154 = vmul.f32 %v8125, 1.442695
  %v8155 = vpow.pop %v8154
  %v8156 = vmul.f32 %v8126, 1.442695
  %v8157 = vpow.pop %v8156
  %v8158 = vmul.f32 %v8127, 1.442695
  %v8159 = vpow.pop %v8158
  %v8160 = vsel %vm2207, %v8129, 0.0
  %v8161 = vrot.slane %v8160, 4
  %v8162 = vadd.f32 %v8160, %v8161
  %v8163 = vrot.slane %v8162, 2
  %v8164 = vadd.f32 %v8162, %v8163
  %v8165 = vrot.slane %v8164, 1
  %v8166 = vadd.f32 %v8164, %v8165
  %v8167 = vsel %vm2207, %v8131, 0.0
  %v8168 = vrot.slane %v8167, 4
  %v8169 = vadd.f32 %v8167, %v8168
  %v8170 = vrot.slane %v8169, 2
  %v8171 = vadd.f32 %v8169, %v8170
  %v8172 = vrot.slane %v8171, 1
  %v8173 = vadd.f32 %v8171, %v8172
  %v8174 = vsel %vm2207, %v8133, 0.0
  %v8175 = vrot.slane %v8174, 4
  %v8176 = vadd.f32 %v8174, %v8175
  %v8177 = vrot.slane %v8176, 2
  %v8178 = vadd.f32 %v8176, %v8177
  %v8179 = vrot.slane %v8178, 1
  %v8180 = vadd.f32 %v8178, %v8179
  %v8181 = vsel %vm2207, %v8135, 0.0
  %v8182 = vrot.slane %v8181, 4
  %v8183 = vadd.f32 %v8181, %v8182
  %v8184 = vrot.slane %v8183, 2
  %v8185 = vadd.f32 %v8183, %v8184
  %v8186 = vrot.slane %v8185, 1
  %v8187 = vadd.f32 %v8185, %v8186
  %v8188 = vsel %vm2207, %v8137, 0.0
  %v8189 = vrot.slane %v8188, 4
  %v8190 = vadd.f32 %v8188, %v8189
  %v8191 = vrot.slane %v8190, 2
  %v8192 = vadd.f32 %v8190, %v8191
  %v8193 = vrot.slane %v8192, 1
  %v8194 = vadd.f32 %v8192, %v8193
  %v8195 = vsel %vm2207, %v8139, 0.0
  %v8196 = vrot.slane %v8195, 4
  %v8197 = vadd.f32 %v8195, %v8196
  %v8198 = vrot.slane %v8197, 2
  %v8199 = vadd.f32 %v8197, %v8198
  %v8200 = vrot.slane %v8199, 1
  %v8201 = vadd.f32 %v8199, %v8200
  %v8202 = vsel %vm2207, %v8141, 0.0
  %v8203 = vrot.slane %v8202, 4
  %v8204 = vadd.f32 %v8202, %v8203
  %v8205 = vrot.slane %v8204, 2
  %v8206 = vadd.f32 %v8204, %v8205
  %v8207 = vrot.slane %v8206, 1
  %v8208 = vadd.f32 %v8206, %v8207
  %v8209 = vsel %vm2207, %v8143, 0.0
  %v8210 = vrot.slane %v8209, 4
  %v8211 = vadd.f32 %v8209, %v8210
  %v8212 = vrot.slane %v8211, 2
  %v8213 = vadd.f32 %v8211, %v8212
  %v8214 = vrot.slane %v8213, 1
  %v8215 = vadd.f32 %v8213, %v8214
  %v8216 = vsel %vm2207, %v8145, 0.0
  %v8217 = vrot.slane %v8216, 4
  %v8218 = vadd.f32 %v8216, %v8217
  %v8219 = vrot.slane %v8218, 2
  %v8220 = vadd.f32 %v8218, %v8219
  %v8221 = vrot.slane %v8220, 1
  %v8222 = vadd.f32 %v8220, %v8221
  %v8223 = vsel %vm2207, %v8147, 0.0
  %v8224 = vrot.slane %v8223, 4
  %v8225 = vadd.f32 %v8223, %v8224
  %v8226 = vrot.slane %v8225, 2
  %v8227 = vadd.f32 %v8225, %v8226
  %v8228 = vrot.slane %v8227, 1
  %v8229 = vadd.f32 %v8227, %v8228
  %v8230 = vsel %vm2207, %v8149, 0.0
  %v8231 = vrot.slane %v8230, 4
  %v8232 = vadd.f32 %v8230, %v8231
  %v8233 = vrot.slane %v8232, 2
  %v8234 = vadd.f32 %v8232, %v8233
  %v8235 = vrot.slane %v8234, 1
  %v8236 = vadd.f32 %v8234, %v8235
  %v8237 = vsel %vm2207, %v8151, 0.0
  %v8238 = vrot.slane %v8237, 4
  %v8239 = vadd.f32 %v8237, %v8238
  %v8240 = vrot.slane %v8239, 2
  %v8241 = vadd.f32 %v8239, %v8240
  %v8242 = vrot.slane %v8241, 1
  %v8243 = vadd.f32 %v8241, %v8242
  %v8244 = vsel %vm2207, %v8153, 0.0
  %v8245 = vrot.slane %v8244, 4
  %v8246 = vadd.f32 %v8244, %v8245
  %v8247 = vrot.slane %v8246, 2
  %v8248 = vadd.f32 %v8246, %v8247
  %v8249 = vrot.slane %v8248, 1
  %v8250 = vadd.f32 %v8248, %v8249
  %v8251 = vsel %vm2207, %v8155, 0.0
  %v8252 = vrot.slane %v8251, 4
  %v8253 = vadd.f32 %v8251, %v8252
  %v8254 = vrot.slane %v8253, 2
  %v8255 = vadd.f32 %v8253, %v8254
  %v8256 = vrot.slane %v8255, 1
  %v8257 = vadd.f32 %v8255, %v8256
  %v8258 = vsel %vm2207, %v8157, 0.0
  %v8259 = vrot.slane %v8258, 4
  %v8260 = vadd.f32 %v8258, %v8259
  %v8261 = vrot.slane %v8260, 2
  %v8262 = vadd.f32 %v8260, %v8261
  %v8263 = vrot.slane %v8262, 1
  %v8264 = vadd.f32 %v8262, %v8263
  %v8265 = vsel %vm2207, %v8159, 0.0
  %v8266 = vrot.slane %v8265, 4
  %v8267 = vadd.f32 %v8265, %v8266
  %v8268 = vrot.slane %v8267, 2
  %v8269 = vadd.f32 %v8267, %v8268
  %v8270 = vrot.slane %v8269, 1
  %v8271 = vadd.f32 %v8269, %v8270
  %v8272 = vrcp.pop %v8166
  %v8273 = vmul.f32 %v8129, %v8272
  %v8274 = vrcp.pop %v8173
  %v8275 = vmul.f32 %v8131, %v8274
  %v8276 = vrcp.pop %v8180
  %v8277 = vmul.f32 %v8133, %v8276
  %v8278 = vrcp.pop %v8187
  %v8279 = vmul.f32 %v8135, %v8278
  %v8280 = vrcp.pop %v8194
  %v8281 = vmul.f32 %v8137, %v8280
  %v8282 = vrcp.pop %v8201
  %v8283 = vmul.f32 %v8139, %v8282
  %v8284 = vrcp.pop %v8208
  %v8285 = vmul.f32 %v8141, %v8284
  %v8286 = vrcp.pop %v8215
  %v8287 = vmul.f32 %v8143, %v8286
  %v8288 = vrcp.pop %v8222
  %v8289 = vmul.f32 %v8145, %v8288
  %v8290 = vrcp.pop %v8229
  %v8291 = vmul.f32 %v8147, %v8290
  %v8292 = vrcp.pop %v8236
  %v8293 = vmul.f32 %v8149, %v8292
  %v8294 = vrcp.pop %v8243
  %v8295 = vmul.f32 %v8151, %v8294
  %v8296 = vrcp.pop %v8250
  %v8297 = vmul.f32 %v8153, %v8296
  %v8298 = vrcp.pop %v8257
  %v8299 = vmul.f32 %v8155, %v8298
  %v8300 = vrcp.pop %v8264
  %v8301 = vmul.f32 %v8157, %v8300
  %v8302 = vrcp.pop %v8271
  %v8303 = vmul.f32 %v8159, %v8302
  %v8305 = vsel %vm316, %v8273, 0
  %8307 = vmatprep.subr.mxu0 0.0
  %8308 = vmatpush1.msra.mxu0 0.0
  %8309 = vmatprep.subr.mxu0 0.0
  %8310 = vmatpush1.msra.mxu0 0.0
  %8311 = vmatprep.subr.mxu0 0.0
  %8312 = vmatpush1.msra.mxu0 0.0
  %8313 = vmatprep.subr.mxu0 0.0
  %8314 = vmatpush1.msra.mxu0 0.0
  %8315 = vmatprep.subr.mxu0 0.0
  %8316 = vmatpush1.msra.mxu0 0.0
  %8317 = vmatprep.subr.mxu0 0.0
  %8318 = vmatpush1.msra.mxu0 0.0
  %8319 = vmatprep.subr.mxu0 0.0
  %8320 = vmatpush1.msra.mxu0 0.0
  %8321 = vmatprep.subr.mxu0 0.0
  %8322 = vmatpush1.msra.mxu0 0.0
  %8323 = vmatprep.subr.mxu0 0.0
  %8324 = vmatpush1.msra.mxu0 0.0
  %8325 = vmatprep.subr.mxu0 0.0
  %8326 = vmatpush1.msra.mxu0 0.0
  %8327 = vmatprep.subr.mxu0 0.0
  %8328 = vmatpush1.msra.mxu0 0.0
  %8329 = vmatprep.subr.mxu0 0.0
  %8330 = vmatpush1.msra.mxu0 0.0
  %8331 = vmatprep.subr.mxu0 0.0
  %8332 = vmatpush1.msra.mxu0 0.0
  %8333 = vmatprep.subr.mxu0 0.0
  %8334 = vmatpush1.msra.mxu0 0.0
  %8335 = vmatprep.subr.mxu0 0.0
  %8336 = vmatpush1.msra.mxu0 %v796
  %8337 = vmatprep.subr.mxu0 0.0
  %8338 = vmatpush1.msra.mxu0 %v795
  %8339 = vmatprep.subr.mxu0 0.0
  %8340 = vmatpush2.msra.mxu0 0.0
  %8341 = vmatprep.subr.mxu0 0.0
  %8342 = vmatpush2.msra.mxu0 0.0
  %8343 = vmatprep.subr.mxu0 0.0
  %8344 = vmatpush2.msra.mxu0 0.0
  %8345 = vmatprep.subr.mxu0 0.0
  %8346 = vmatpush2.msra.mxu0 0.0
  %8347 = vmatprep.subr.mxu0 0.0
  %8348 = vmatpush2.msra.mxu0 0.0
  %8349 = vmatprep.subr.mxu0 0.0
  %8350 = vmatpush2.msra.mxu0 0.0
  %8351 = vmatprep.subr.mxu0 0.0
  %8352 = vmatpush2.msra.mxu0 0.0
  %8353 = vmatprep.subr.mxu0 0.0
  %8354 = vmatpush2.msra.mxu0 0.0
  %8355 = vmatprep.subr.mxu0 0.0
  %8356 = vmatpush2.msra.mxu0 0.0
  %8357 = vmatprep.subr.mxu0 0.0
  %8358 = vmatpush2.msra.mxu0 0.0
  %8359 = vmatprep.subr.mxu0 0.0
  %8360 = vmatpush2.msra.mxu0 0.0
  %8361 = vmatprep.subr.mxu0 0.0
  %8362 = vmatpush2.msra.mxu0 0.0
  %8363 = vmatprep.subr.mxu0 0.0
  %8364 = vmatpush2.msra.mxu0 0.0
  %8365 = vmatprep.subr.mxu0 0.0
  %8366 = vmatpush2.msra.mxu0 0.0
  %8367 = vmatprep.subr.mxu0 0.0
  %8368 = vmatpush2.msra.mxu0 0.0
  %8369 = vmatprep.subr.mxu0 0.0
  %8370 = vmatpush2.msra.mxu0 0.0
  %8371 = vmatprep.mubr.f32.mxu0 0.0
  %8372 = vmatmul.mubr.f32.gmra.mxu0 %v8305
  %v8373 = vpop.f32.mrf.mxu0
  %v8374 = vadd.f32 0.0, %v8373
  %v8375 = vpop.f32.mrf.mxu0
  %8376 = vdwg.mxu0
  %v8378 = vsel %vm316, %v8275, 0
  %8380 = vmatprep.subr.mxu0 0.0
  %8381 = vmatpush1.msra.mxu0 0.0
  %8382 = vmatprep.subr.mxu0 0.0
  %8383 = vmatpush1.msra.mxu0 0.0
  %8384 = vmatprep.subr.mxu0 0.0
  %8385 = vmatpush1.msra.mxu0 0.0
  %8386 = vmatprep.subr.mxu0 0.0
  %8387 = vmatpush1.msra.mxu0 0.0
  %8388 = vmatprep.subr.mxu0 0.0
  %8389 = vmatpush1.msra.mxu0 0.0
  %8390 = vmatprep.subr.mxu0 0.0
  %8391 = vmatpush1.msra.mxu0 0.0
  %8392 = vmatprep.subr.mxu0 0.0
  %8393 = vmatpush1.msra.mxu0 0.0
  %8394 = vmatprep.subr.mxu0 0.0
  %8395 = vmatpush1.msra.mxu0 0.0
  %8396 = vmatprep.subr.mxu0 0.0
  %8397 = vmatpush1.msra.mxu0 0.0
  %8398 = vmatprep.subr.mxu0 0.0
  %8399 = vmatpush1.msra.mxu0 0.0
  %8400 = vmatprep.subr.mxu0 0.0
  %8401 = vmatpush1.msra.mxu0 0.0
  %8402 = vmatprep.subr.mxu0 0.0
  %8403 = vmatpush1.msra.mxu0 0.0
  %8404 = vmatprep.subr.mxu0 0.0
  %8405 = vmatpush1.msra.mxu0 0.0
  %8406 = vmatprep.subr.mxu0 0.0
  %8407 = vmatpush1.msra.mxu0 0.0
  %8408 = vmatprep.subr.mxu0 0.0
  %8409 = vmatpush1.msra.mxu0 %v798
  %8410 = vmatprep.subr.mxu0 0.0
  %8411 = vmatpush1.msra.mxu0 %v797
  %8412 = vmatprep.subr.mxu0 0.0
  %8413 = vmatpush2.msra.mxu0 0.0
  %8414 = vmatprep.subr.mxu0 0.0
  %8415 = vmatpush2.msra.mxu0 0.0
  %8416 = vmatprep.subr.mxu0 0.0
  %8417 = vmatpush2.msra.mxu0 0.0
  %8418 = vmatprep.subr.mxu0 0.0
  %8419 = vmatpush2.msra.mxu0 0.0
  %8420 = vmatprep.subr.mxu0 0.0
  %8421 = vmatpush2.msra.mxu0 0.0
  %8422 = vmatprep.subr.mxu0 0.0
  %8423 = vmatpush2.msra.mxu0 0.0
  %8424 = vmatprep.subr.mxu0 0.0
  %8425 = vmatpush2.msra.mxu0 0.0
  %8426 = vmatprep.subr.mxu0 0.0
  %8427 = vmatpush2.msra.mxu0 0.0
  %8428 = vmatprep.subr.mxu0 0.0
  %8429 = vmatpush2.msra.mxu0 0.0
  %8430 = vmatprep.subr.mxu0 0.0
  %8431 = vmatpush2.msra.mxu0 0.0
  %8432 = vmatprep.subr.mxu0 0.0
  %8433 = vmatpush2.msra.mxu0 0.0
  %8434 = vmatprep.subr.mxu0 0.0
  %8435 = vmatpush2.msra.mxu0 0.0
  %8436 = vmatprep.subr.mxu0 0.0
  %8437 = vmatpush2.msra.mxu0 0.0
  %8438 = vmatprep.subr.mxu0 0.0
  %8439 = vmatpush2.msra.mxu0 0.0
  %8440 = vmatprep.subr.mxu0 0.0
  %8441 = vmatpush2.msra.mxu0 0.0
  %8442 = vmatprep.subr.mxu0 0.0
  %8443 = vmatpush2.msra.mxu0 0.0
  %8444 = vmatprep.mubr.f32.mxu0 0.0
  %8445 = vmatmul.mubr.f32.gmra.mxu0 %v8378
  %v8446 = vpop.f32.mrf.mxu0
  %v8447 = vadd.f32 0.0, %v8446
  %v8448 = vpop.f32.mrf.mxu0
  %8449 = vdwg.mxu0
  %v8451 = vsel %vm316, %v8277, 0
  %8453 = vmatprep.subr.mxu0 0.0
  %8454 = vmatpush1.msra.mxu0 0.0
  %8455 = vmatprep.subr.mxu0 0.0
  %8456 = vmatpush1.msra.mxu0 0.0
  %8457 = vmatprep.subr.mxu0 0.0
  %8458 = vmatpush1.msra.mxu0 0.0
  %8459 = vmatprep.subr.mxu0 0.0
  %8460 = vmatpush1.msra.mxu0 0.0
  %8461 = vmatprep.subr.mxu0 0.0
  %8462 = vmatpush1.msra.mxu0 0.0
  %8463 = vmatprep.subr.mxu0 0.0
  %8464 = vmatpush1.msra.mxu0 0.0
  %8465 = vmatprep.subr.mxu0 0.0
  %8466 = vmatpush1.msra.mxu0 0.0
  %8467 = vmatprep.subr.mxu0 0.0
  %8468 = vmatpush1.msra.mxu0 0.0
  %8469 = vmatprep.subr.mxu0 0.0
  %8470 = vmatpush1.msra.mxu0 0.0
  %8471 = vmatprep.subr.mxu0 0.0
  %8472 = vmatpush1.msra.mxu0 0.0
  %8473 = vmatprep.subr.mxu0 0.0
  %8474 = vmatpush1.msra.mxu0 0.0
  %8475 = vmatprep.subr.mxu0 0.0
  %8476 = vmatpush1.msra.mxu0 0.0
  %8477 = vmatprep.subr.mxu0 0.0
  %8478 = vmatpush1.msra.mxu0 0.0
  %8479 = vmatprep.subr.mxu0 0.0
  %8480 = vmatpush1.msra.mxu0 0.0
  %8481 = vmatprep.subr.mxu0 0.0
  %8482 = vmatpush1.msra.mxu0 %v800
  %8483 = vmatprep.subr.mxu0 0.0
  %8484 = vmatpush1.msra.mxu0 %v799
  %8485 = vmatprep.subr.mxu0 0.0
  %8486 = vmatpush2.msra.mxu0 0.0
  %8487 = vmatprep.subr.mxu0 0.0
  %8488 = vmatpush2.msra.mxu0 0.0
  %8489 = vmatprep.subr.mxu0 0.0
  %8490 = vmatpush2.msra.mxu0 0.0
  %8491 = vmatprep.subr.mxu0 0.0
  %8492 = vmatpush2.msra.mxu0 0.0
  %8493 = vmatprep.subr.mxu0 0.0
  %8494 = vmatpush2.msra.mxu0 0.0
  %8495 = vmatprep.subr.mxu0 0.0
  %8496 = vmatpush2.msra.mxu0 0.0
  %8497 = vmatprep.subr.mxu0 0.0
  %8498 = vmatpush2.msra.mxu0 0.0
  %8499 = vmatprep.subr.mxu0 0.0
  %8500 = vmatpush2.msra.mxu0 0.0
  %8501 = vmatprep.subr.mxu0 0.0
  %8502 = vmatpush2.msra.mxu0 0.0
  %8503 = vmatprep.subr.mxu0 0.0
  %8504 = vmatpush2.msra.mxu0 0.0
  %8505 = vmatprep.subr.mxu0 0.0
  %8506 = vmatpush2.msra.mxu0 0.0
  %8507 = vmatprep.subr.mxu0 0.0
  %8508 = vmatpush2.msra.mxu0 0.0
  %8509 = vmatprep.subr.mxu0 0.0
  %8510 = vmatpush2.msra.mxu0 0.0
  %8511 = vmatprep.subr.mxu0 0.0
  %8512 = vmatpush2.msra.mxu0 0.0
  %8513 = vmatprep.subr.mxu0 0.0
  %8514 = vmatpush2.msra.mxu0 0.0
  %8515 = vmatprep.subr.mxu0 0.0
  %8516 = vmatpush2.msra.mxu0 0.0
  %8517 = vmatprep.mubr.f32.mxu0 0.0
  %8518 = vmatmul.mubr.f32.gmra.mxu0 %v8451
  %v8519 = vpop.f32.mrf.mxu0
  %v8520 = vadd.f32 0.0, %v8519
  %v8521 = vpop.f32.mrf.mxu0
  %8522 = vdwg.mxu0
  %v8524 = vsel %vm316, %v8279, 0
  %8526 = vmatprep.subr.mxu0 0.0
  %8527 = vmatpush1.msra.mxu0 0.0
  %8528 = vmatprep.subr.mxu0 0.0
  %8529 = vmatpush1.msra.mxu0 0.0
  %8530 = vmatprep.subr.mxu0 0.0
  %8531 = vmatpush1.msra.mxu0 0.0
  %8532 = vmatprep.subr.mxu0 0.0
  %8533 = vmatpush1.msra.mxu0 0.0
  %8534 = vmatprep.subr.mxu0 0.0
  %8535 = vmatpush1.msra.mxu0 0.0
  %8536 = vmatprep.subr.mxu0 0.0
  %8537 = vmatpush1.msra.mxu0 0.0
  %8538 = vmatprep.subr.mxu0 0.0
  %8539 = vmatpush1.msra.mxu0 0.0
  %8540 = vmatprep.subr.mxu0 0.0
  %8541 = vmatpush1.msra.mxu0 0.0
  %8542 = vmatprep.subr.mxu0 0.0
  %8543 = vmatpush1.msra.mxu0 0.0
  %8544 = vmatprep.subr.mxu0 0.0
  %8545 = vmatpush1.msra.mxu0 0.0
  %8546 = vmatprep.subr.mxu0 0.0
  %8547 = vmatpush1.msra.mxu0 0.0
  %8548 = vmatprep.subr.mxu0 0.0
  %8549 = vmatpush1.msra.mxu0 0.0
  %8550 = vmatprep.subr.mxu0 0.0
  %8551 = vmatpush1.msra.mxu0 0.0
  %8552 = vmatprep.subr.mxu0 0.0
  %8553 = vmatpush1.msra.mxu0 0.0
  %8554 = vmatprep.subr.mxu0 0.0
  %8555 = vmatpush1.msra.mxu0 %v802
  %8556 = vmatprep.subr.mxu0 0.0
  %8557 = vmatpush1.msra.mxu0 %v801
  %8558 = vmatprep.subr.mxu0 0.0
  %8559 = vmatpush2.msra.mxu0 0.0
  %8560 = vmatprep.subr.mxu0 0.0
  %8561 = vmatpush2.msra.mxu0 0.0
  %8562 = vmatprep.subr.mxu0 0.0
  %8563 = vmatpush2.msra.mxu0 0.0
  %8564 = vmatprep.subr.mxu0 0.0
  %8565 = vmatpush2.msra.mxu0 0.0
  %8566 = vmatprep.subr.mxu0 0.0
  %8567 = vmatpush2.msra.mxu0 0.0
  %8568 = vmatprep.subr.mxu0 0.0
  %8569 = vmatpush2.msra.mxu0 0.0
  %8570 = vmatprep.subr.mxu0 0.0
  %8571 = vmatpush2.msra.mxu0 0.0
  %8572 = vmatprep.subr.mxu0 0.0
  %8573 = vmatpush2.msra.mxu0 0.0
  %8574 = vmatprep.subr.mxu0 0.0
  %8575 = vmatpush2.msra.mxu0 0.0
  %8576 = vmatprep.subr.mxu0 0.0
  %8577 = vmatpush2.msra.mxu0 0.0
  %8578 = vmatprep.subr.mxu0 0.0
  %8579 = vmatpush2.msra.mxu0 0.0
  %8580 = vmatprep.subr.mxu0 0.0
  %8581 = vmatpush2.msra.mxu0 0.0
  %8582 = vmatprep.subr.mxu0 0.0
  %8583 = vmatpush2.msra.mxu0 0.0
  %8584 = vmatprep.subr.mxu0 0.0
  %8585 = vmatpush2.msra.mxu0 0.0
  %8586 = vmatprep.subr.mxu0 0.0
  %8587 = vmatpush2.msra.mxu0 0.0
  %8588 = vmatprep.subr.mxu0 0.0
  %8589 = vmatpush2.msra.mxu0 0.0
  %8590 = vmatprep.mubr.f32.mxu0 0.0
  %8591 = vmatmul.mubr.f32.gmra.mxu0 %v8524
  %v8592 = vpop.f32.mrf.mxu0
  %v8593 = vadd.f32 0.0, %v8592
  %v8594 = vpop.f32.mrf.mxu0
  %8595 = vdwg.mxu0
  %v8597 = vsel %vm316, %v8281, 0
  %8599 = vmatprep.subr.mxu0 0.0
  %8600 = vmatpush1.msra.mxu0 0.0
  %8601 = vmatprep.subr.mxu0 0.0
  %8602 = vmatpush1.msra.mxu0 0.0
  %8603 = vmatprep.subr.mxu0 0.0
  %8604 = vmatpush1.msra.mxu0 0.0
  %8605 = vmatprep.subr.mxu0 0.0
  %8606 = vmatpush1.msra.mxu0 0.0
  %8607 = vmatprep.subr.mxu0 0.0
  %8608 = vmatpush1.msra.mxu0 0.0
  %8609 = vmatprep.subr.mxu0 0.0
  %8610 = vmatpush1.msra.mxu0 0.0
  %8611 = vmatprep.subr.mxu0 0.0
  %8612 = vmatpush1.msra.mxu0 0.0
  %8613 = vmatprep.subr.mxu0 0.0
  %8614 = vmatpush1.msra.mxu0 0.0
  %8615 = vmatprep.subr.mxu0 0.0
  %8616 = vmatpush1.msra.mxu0 0.0
  %8617 = vmatprep.subr.mxu0 0.0
  %8618 = vmatpush1.msra.mxu0 0.0
  %8619 = vmatprep.subr.mxu0 0.0
  %8620 = vmatpush1.msra.mxu0 0.0
  %8621 = vmatprep.subr.mxu0 0.0
  %8622 = vmatpush1.msra.mxu0 0.0
  %8623 = vmatprep.subr.mxu0 0.0
  %8624 = vmatpush1.msra.mxu0 0.0
  %8625 = vmatprep.subr.mxu0 0.0
  %8626 = vmatpush1.msra.mxu0 0.0
  %8627 = vmatprep.subr.mxu0 0.0
  %8628 = vmatpush1.msra.mxu0 %v804
  %8629 = vmatprep.subr.mxu0 0.0
  %8630 = vmatpush1.msra.mxu0 %v803
  %8631 = vmatprep.subr.mxu0 0.0
  %8632 = vmatpush2.msra.mxu0 0.0
  %8633 = vmatprep.subr.mxu0 0.0
  %8634 = vmatpush2.msra.mxu0 0.0
  %8635 = vmatprep.subr.mxu0 0.0
  %8636 = vmatpush2.msra.mxu0 0.0
  %8637 = vmatprep.subr.mxu0 0.0
  %8638 = vmatpush2.msra.mxu0 0.0
  %8639 = vmatprep.subr.mxu0 0.0
  %8640 = vmatpush2.msra.mxu0 0.0
  %8641 = vmatprep.subr.mxu0 0.0
  %8642 = vmatpush2.msra.mxu0 0.0
  %8643 = vmatprep.subr.mxu0 0.0
  %8644 = vmatpush2.msra.mxu0 0.0
  %8645 = vmatprep.subr.mxu0 0.0
  %8646 = vmatpush2.msra.mxu0 0.0
  %8647 = vmatprep.subr.mxu0 0.0
  %8648 = vmatpush2.msra.mxu0 0.0
  %8649 = vmatprep.subr.mxu0 0.0
  %8650 = vmatpush2.msra.mxu0 0.0
  %8651 = vmatprep.subr.mxu0 0.0
  %8652 = vmatpush2.msra.mxu0 0.0
  %8653 = vmatprep.subr.mxu0 0.0
  %8654 = vmatpush2.msra.mxu0 0.0
  %8655 = vmatprep.subr.mxu0 0.0
  %8656 = vmatpush2.msra.mxu0 0.0
  %8657 = vmatprep.subr.mxu0 0.0
  %8658 = vmatpush2.msra.mxu0 0.0
  %8659 = vmatprep.subr.mxu0 0.0
  %8660 = vmatpush2.msra.mxu0 0.0
  %8661 = vmatprep.subr.mxu0 0.0
  %8662 = vmatpush2.msra.mxu0 0.0
  %8663 = vmatprep.mubr.f32.mxu0 0.0
  %8664 = vmatmul.mubr.f32.gmra.mxu0 %v8597
  %v8665 = vpop.f32.mrf.mxu0
  %v8666 = vadd.f32 0.0, %v8665
  %v8667 = vpop.f32.mrf.mxu0
  %8668 = vdwg.mxu0
  %v8670 = vsel %vm316, %v8283, 0
  %8672 = vmatprep.subr.mxu0 0.0
  %8673 = vmatpush1.msra.mxu0 0.0
  %8674 = vmatprep.subr.mxu0 0.0
  %8675 = vmatpush1.msra.mxu0 0.0
  %8676 = vmatprep.subr.mxu0 0.0
  %8677 = vmatpush1.msra.mxu0 0.0
  %8678 = vmatprep.subr.mxu0 0.0
  %8679 = vmatpush1.msra.mxu0 0.0
  %8680 = vmatprep.subr.mxu0 0.0
  %8681 = vmatpush1.msra.mxu0 0.0
  %8682 = vmatprep.subr.mxu0 0.0
  %8683 = vmatpush1.msra.mxu0 0.0
  %8684 = vmatprep.subr.mxu0 0.0
  %8685 = vmatpush1.msra.mxu0 0.0
  %8686 = vmatprep.subr.mxu0 0.0
  %8687 = vmatpush1.msra.mxu0 0.0
  %8688 = vmatprep.subr.mxu0 0.0
  %8689 = vmatpush1.msra.mxu0 0.0
  %8690 = vmatprep.subr.mxu0 0.0
  %8691 = vmatpush1.msra.mxu0 0.0
  %8692 = vmatprep.subr.mxu0 0.0
  %8693 = vmatpush1.msra.mxu0 0.0
  %8694 = vmatprep.subr.mxu0 0.0
  %8695 = vmatpush1.msra.mxu0 0.0
  %8696 = vmatprep.subr.mxu0 0.0
  %8697 = vmatpush1.msra.mxu0 0.0
  %8698 = vmatprep.subr.mxu0 0.0
  %8699 = vmatpush1.msra.mxu0 0.0
  %8700 = vmatprep.subr.mxu0 0.0
  %8701 = vmatpush1.msra.mxu0 %v806
  %8702 = vmatprep.subr.mxu0 0.0
  %8703 = vmatpush1.msra.mxu0 %v805
  %8704 = vmatprep.subr.mxu0 0.0
  %8705 = vmatpush2.msra.mxu0 0.0
  %8706 = vmatprep.subr.mxu0 0.0
  %8707 = vmatpush2.msra.mxu0 0.0
  %8708 = vmatprep.subr.mxu0 0.0
  %8709 = vmatpush2.msra.mxu0 0.0
  %8710 = vmatprep.subr.mxu0 0.0
  %8711 = vmatpush2.msra.mxu0 0.0
  %8712 = vmatprep.subr.mxu0 0.0
  %8713 = vmatpush2.msra.mxu0 0.0
  %8714 = vmatprep.subr.mxu0 0.0
  %8715 = vmatpush2.msra.mxu0 0.0
  %8716 = vmatprep.subr.mxu0 0.0
  %8717 = vmatpush2.msra.mxu0 0.0
  %8718 = vmatprep.subr.mxu0 0.0
  %8719 = vmatpush2.msra.mxu0 0.0
  %8720 = vmatprep.subr.mxu0 0.0
  %8721 = vmatpush2.msra.mxu0 0.0
  %8722 = vmatprep.subr.mxu0 0.0
  %8723 = vmatpush2.msra.mxu0 0.0
  %8724 = vmatprep.subr.mxu0 0.0
  %8725 = vmatpush2.msra.mxu0 0.0
  %8726 = vmatprep.subr.mxu0 0.0
  %8727 = vmatpush2.msra.mxu0 0.0
  %8728 = vmatprep.subr.mxu0 0.0
  %8729 = vmatpush2.msra.mxu0 0.0
  %8730 = vmatprep.subr.mxu0 0.0
  %8731 = vmatpush2.msra.mxu0 0.0
  %8732 = vmatprep.subr.mxu0 0.0
  %8733 = vmatpush2.msra.mxu0 0.0
  %8734 = vmatprep.subr.mxu0 0.0
  %8735 = vmatpush2.msra.mxu0 0.0
  %8736 = vmatprep.mubr.f32.mxu0 0.0
  %8737 = vmatmul.mubr.f32.gmra.mxu0 %v8670
  %v8738 = vpop.f32.mrf.mxu0
  %v8739 = vadd.f32 0.0, %v8738
  %v8740 = vpop.f32.mrf.mxu0
  %8741 = vdwg.mxu0
  %v8743 = vsel %vm316, %v8285, 0
  %8745 = vmatprep.subr.mxu0 0.0
  %8746 = vmatpush1.msra.mxu0 0.0
  %8747 = vmatprep.subr.mxu0 0.0
  %8748 = vmatpush1.msra.mxu0 0.0
  %8749 = vmatprep.subr.mxu0 0.0
  %8750 = vmatpush1.msra.mxu0 0.0
  %8751 = vmatprep.subr.mxu0 0.0
  %8752 = vmatpush1.msra.mxu0 0.0
  %8753 = vmatprep.subr.mxu0 0.0
  %8754 = vmatpush1.msra.mxu0 0.0
  %8755 = vmatprep.subr.mxu0 0.0
  %8756 = vmatpush1.msra.mxu0 0.0
  %8757 = vmatprep.subr.mxu0 0.0
  %8758 = vmatpush1.msra.mxu0 0.0
  %8759 = vmatprep.subr.mxu0 0.0
  %8760 = vmatpush1.msra.mxu0 0.0
  %8761 = vmatprep.subr.mxu0 0.0
  %8762 = vmatpush1.msra.mxu0 0.0
  %8763 = vmatprep.subr.mxu0 0.0
  %8764 = vmatpush1.msra.mxu0 0.0
  %8765 = vmatprep.subr.mxu0 0.0
  %8766 = vmatpush1.msra.mxu0 0.0
  %8767 = vmatprep.subr.mxu0 0.0
  %8768 = vmatpush1.msra.mxu0 0.0
  %8769 = vmatprep.subr.mxu0 0.0
  %8770 = vmatpush1.msra.mxu0 0.0
  %8771 = vmatprep.subr.mxu0 0.0
  %8772 = vmatpush1.msra.mxu0 0.0
  %8773 = vmatprep.subr.mxu0 0.0
  %8774 = vmatpush1.msra.mxu0 %v808
  %8775 = vmatprep.subr.mxu0 0.0
  %8776 = vmatpush1.msra.mxu0 %v807
  %8777 = vmatprep.subr.mxu0 0.0
  %8778 = vmatpush2.msra.mxu0 0.0
  %8779 = vmatprep.subr.mxu0 0.0
  %8780 = vmatpush2.msra.mxu0 0.0
  %8781 = vmatprep.subr.mxu0 0.0
  %8782 = vmatpush2.msra.mxu0 0.0
  %8783 = vmatprep.subr.mxu0 0.0
  %8784 = vmatpush2.msra.mxu0 0.0
  %8785 = vmatprep.subr.mxu0 0.0
  %8786 = vmatpush2.msra.mxu0 0.0
  %8787 = vmatprep.subr.mxu0 0.0
  %8788 = vmatpush2.msra.mxu0 0.0
  %8789 = vmatprep.subr.mxu0 0.0
  %8790 = vmatpush2.msra.mxu0 0.0
  %8791 = vmatprep.subr.mxu0 0.0
  %8792 = vmatpush2.msra.mxu0 0.0
  %8793 = vmatprep.subr.mxu0 0.0
  %8794 = vmatpush2.msra.mxu0 0.0
  %8795 = vmatprep.subr.mxu0 0.0
  %8796 = vmatpush2.msra.mxu0 0.0
  %8797 = vmatprep.subr.mxu0 0.0
  %8798 = vmatpush2.msra.mxu0 0.0
  %8799 = vmatprep.subr.mxu0 0.0
  %8800 = vmatpush2.msra.mxu0 0.0
  %8801 = vmatprep.subr.mxu0 0.0
  %8802 = vmatpush2.msra.mxu0 0.0
  %8803 = vmatprep.subr.mxu0 0.0
  %8804 = vmatpush2.msra.mxu0 0.0
  %8805 = vmatprep.subr.mxu0 0.0
  %8806 = vmatpush2.msra.mxu0 0.0
  %8807 = vmatprep.subr.mxu0 0.0
  %8808 = vmatpush2.msra.mxu0 0.0
  %8809 = vmatprep.mubr.f32.mxu0 0.0
  %8810 = vmatmul.mubr.f32.gmra.mxu0 %v8743
  %v8811 = vpop.f32.mrf.mxu0
  %v8812 = vadd.f32 0.0, %v8811
  %v8813 = vpop.f32.mrf.mxu0
  %8814 = vdwg.mxu0
  %v8816 = vsel %vm316, %v8287, 0
  %8818 = vmatprep.subr.mxu0 0.0
  %8819 = vmatpush1.msra.mxu0 0.0
  %8820 = vmatprep.subr.mxu0 0.0
  %8821 = vmatpush1.msra.mxu0 0.0
  %8822 = vmatprep.subr.mxu0 0.0
  %8823 = vmatpush1.msra.mxu0 0.0
  %8824 = vmatprep.subr.mxu0 0.0
  %8825 = vmatpush1.msra.mxu0 0.0
  %8826 = vmatprep.subr.mxu0 0.0
  %8827 = vmatpush1.msra.mxu0 0.0
  %8828 = vmatprep.subr.mxu0 0.0
  %8829 = vmatpush1.msra.mxu0 0.0
  %8830 = vmatprep.subr.mxu0 0.0
  %8831 = vmatpush1.msra.mxu0 0.0
  %8832 = vmatprep.subr.mxu0 0.0
  %8833 = vmatpush1.msra.mxu0 0.0
  %8834 = vmatprep.subr.mxu0 0.0
  %8835 = vmatpush1.msra.mxu0 0.0
  %8836 = vmatprep.subr.mxu0 0.0
  %8837 = vmatpush1.msra.mxu0 0.0
  %8838 = vmatprep.subr.mxu0 0.0
  %8839 = vmatpush1.msra.mxu0 0.0
  %8840 = vmatprep.subr.mxu0 0.0
  %8841 = vmatpush1.msra.mxu0 0.0
  %8842 = vmatprep.subr.mxu0 0.0
  %8843 = vmatpush1.msra.mxu0 0.0
  %8844 = vmatprep.subr.mxu0 0.0
  %8845 = vmatpush1.msra.mxu0 0.0
  %8846 = vmatprep.subr.mxu0 0.0
  %8847 = vmatpush1.msra.mxu0 %v810
  %8848 = vmatprep.subr.mxu0 0.0
  %8849 = vmatpush1.msra.mxu0 %v809
  %8850 = vmatprep.subr.mxu0 0.0
  %8851 = vmatpush2.msra.mxu0 0.0
  %8852 = vmatprep.subr.mxu0 0.0
  %8853 = vmatpush2.msra.mxu0 0.0
  %8854 = vmatprep.subr.mxu0 0.0
  %8855 = vmatpush2.msra.mxu0 0.0
  %8856 = vmatprep.subr.mxu0 0.0
  %8857 = vmatpush2.msra.mxu0 0.0
  %8858 = vmatprep.subr.mxu0 0.0
  %8859 = vmatpush2.msra.mxu0 0.0
  %8860 = vmatprep.subr.mxu0 0.0
  %8861 = vmatpush2.msra.mxu0 0.0
  %8862 = vmatprep.subr.mxu0 0.0
  %8863 = vmatpush2.msra.mxu0 0.0
  %8864 = vmatprep.subr.mxu0 0.0
  %8865 = vmatpush2.msra.mxu0 0.0
  %8866 = vmatprep.subr.mxu0 0.0
  %8867 = vmatpush2.msra.mxu0 0.0
  %8868 = vmatprep.subr.mxu0 0.0
  %8869 = vmatpush2.msra.mxu0 0.0
  %8870 = vmatprep.subr.mxu0 0.0
  %8871 = vmatpush2.msra.mxu0 0.0
  %8872 = vmatprep.subr.mxu0 0.0
  %8873 = vmatpush2.msra.mxu0 0.0
  %8874 = vmatprep.subr.mxu0 0.0
  %8875 = vmatpush2.msra.mxu0 0.0
  %8876 = vmatprep.subr.mxu0 0.0
  %8877 = vmatpush2.msra.mxu0 0.0
  %8878 = vmatprep.subr.mxu0 0.0
  %8879 = vmatpush2.msra.mxu0 0.0
  %8880 = vmatprep.subr.mxu0 0.0
  %8881 = vmatpush2.msra.mxu0 0.0
  %8882 = vmatprep.mubr.f32.mxu0 0.0
  %8883 = vmatmul.mubr.f32.gmra.mxu0 %v8816
  %v8884 = vpop.f32.mrf.mxu0
  %v8885 = vadd.f32 0.0, %v8884
  %v8886 = vpop.f32.mrf.mxu0
  %8887 = vdwg.mxu0
  %v8889 = vsel %vm316, %v8289, 0
  %8891 = vmatprep.subr.mxu0 0.0
  %8892 = vmatpush1.msra.mxu0 0.0
  %8893 = vmatprep.subr.mxu0 0.0
  %8894 = vmatpush1.msra.mxu0 0.0
  %8895 = vmatprep.subr.mxu0 0.0
  %8896 = vmatpush1.msra.mxu0 0.0
  %8897 = vmatprep.subr.mxu0 0.0
  %8898 = vmatpush1.msra.mxu0 0.0
  %8899 = vmatprep.subr.mxu0 0.0
  %8900 = vmatpush1.msra.mxu0 0.0
  %8901 = vmatprep.subr.mxu0 0.0
  %8902 = vmatpush1.msra.mxu0 0.0
  %8903 = vmatprep.subr.mxu0 0.0
  %8904 = vmatpush1.msra.mxu0 0.0
  %8905 = vmatprep.subr.mxu0 0.0
  %8906 = vmatpush1.msra.mxu0 0.0
  %8907 = vmatprep.subr.mxu0 0.0
  %8908 = vmatpush1.msra.mxu0 0.0
  %8909 = vmatprep.subr.mxu0 0.0
  %8910 = vmatpush1.msra.mxu0 0.0
  %8911 = vmatprep.subr.mxu0 0.0
  %8912 = vmatpush1.msra.mxu0 0.0
  %8913 = vmatprep.subr.mxu0 0.0
  %8914 = vmatpush1.msra.mxu0 0.0
  %8915 = vmatprep.subr.mxu0 0.0
  %8916 = vmatpush1.msra.mxu0 0.0
  %8917 = vmatprep.subr.mxu0 0.0
  %8918 = vmatpush1.msra.mxu0 0.0
  %8919 = vmatprep.subr.mxu0 0.0
  %8920 = vmatpush1.msra.mxu0 %v812
  %8921 = vmatprep.subr.mxu0 0.0
  %8922 = vmatpush1.msra.mxu0 %v811
  %8923 = vmatprep.subr.mxu0 0.0
  %8924 = vmatpush2.msra.mxu0 0.0
  %8925 = vmatprep.subr.mxu0 0.0
  %8926 = vmatpush2.msra.mxu0 0.0
  %8927 = vmatprep.subr.mxu0 0.0
  %8928 = vmatpush2.msra.mxu0 0.0
  %8929 = vmatprep.subr.mxu0 0.0
  %8930 = vmatpush2.msra.mxu0 0.0
  %8931 = vmatprep.subr.mxu0 0.0
  %8932 = vmatpush2.msra.mxu0 0.0
  %8933 = vmatprep.subr.mxu0 0.0
  %8934 = vmatpush2.msra.mxu0 0.0
  %8935 = vmatprep.subr.mxu0 0.0
  %8936 = vmatpush2.msra.mxu0 0.0
  %8937 = vmatprep.subr.mxu0 0.0
  %8938 = vmatpush2.msra.mxu0 0.0
  %8939 = vmatprep.subr.mxu0 0.0
  %8940 = vmatpush2.msra.mxu0 0.0
  %8941 = vmatprep.subr.mxu0 0.0
  %8942 = vmatpush2.msra.mxu0 0.0
  %8943 = vmatprep.subr.mxu0 0.0
  %8944 = vmatpush2.msra.mxu0 0.0
  %8945 = vmatprep.subr.mxu0 0.0
  %8946 = vmatpush2.msra.mxu0 0.0
  %8947 = vmatprep.subr.mxu0 0.0
  %8948 = vmatpush2.msra.mxu0 0.0
  %8949 = vmatprep.subr.mxu0 0.0
  %8950 = vmatpush2.msra.mxu0 0.0
  %8951 = vmatprep.subr.mxu0 0.0
  %8952 = vmatpush2.msra.mxu0 0.0
  %8953 = vmatprep.subr.mxu0 0.0
  %8954 = vmatpush2.msra.mxu0 0.0
  %8955 = vmatprep.mubr.f32.mxu0 0.0
  %8956 = vmatmul.mubr.f32.gmra.mxu0 %v8889
  %v8957 = vpop.f32.mrf.mxu0
  %v8958 = vadd.f32 0.0, %v8957
  %v8959 = vpop.f32.mrf.mxu0
  %8960 = vdwg.mxu0
  %v8962 = vsel %vm316, %v8291, 0
  %8964 = vmatprep.subr.mxu0 0.0
  %8965 = vmatpush1.msra.mxu0 0.0
  %8966 = vmatprep.subr.mxu0 0.0
  %8967 = vmatpush1.msra.mxu0 0.0
  %8968 = vmatprep.subr.mxu0 0.0
  %8969 = vmatpush1.msra.mxu0 0.0
  %8970 = vmatprep.subr.mxu0 0.0
  %8971 = vmatpush1.msra.mxu0 0.0
  %8972 = vmatprep.subr.mxu0 0.0
  %8973 = vmatpush1.msra.mxu0 0.0
  %8974 = vmatprep.subr.mxu0 0.0
  %8975 = vmatpush1.msra.mxu0 0.0
  %8976 = vmatprep.subr.mxu0 0.0
  %8977 = vmatpush1.msra.mxu0 0.0
  %8978 = vmatprep.subr.mxu0 0.0
  %8979 = vmatpush1.msra.mxu0 0.0
  %8980 = vmatprep.subr.mxu0 0.0
  %8981 = vmatpush1.msra.mxu0 0.0
  %8982 = vmatprep.subr.mxu0 0.0
  %8983 = vmatpush1.msra.mxu0 0.0
  %8984 = vmatprep.subr.mxu0 0.0
  %8985 = vmatpush1.msra.mxu0 0.0
  %8986 = vmatprep.subr.mxu0 0.0
  %8987 = vmatpush1.msra.mxu0 0.0
  %8988 = vmatprep.subr.mxu0 0.0
  %8989 = vmatpush1.msra.mxu0 0.0
  %8990 = vmatprep.subr.mxu0 0.0
  %8991 = vmatpush1.msra.mxu0 0.0
  %8992 = vmatprep.subr.mxu0 0.0
  %8993 = vmatpush1.msra.mxu0 %v814
  %8994 = vmatprep.subr.mxu0 0.0
  %8995 = vmatpush1.msra.mxu0 %v813
  %8996 = vmatprep.subr.mxu0 0.0
  %8997 = vmatpush2.msra.mxu0 0.0
  %8998 = vmatprep.subr.mxu0 0.0
  %8999 = vmatpush2.msra.mxu0 0.0
  %9000 = vmatprep.subr.mxu0 0.0
  %9001 = vmatpush2.msra.mxu0 0.0
  %9002 = vmatprep.subr.mxu0 0.0
  %9003 = vmatpush2.msra.mxu0 0.0
  %9004 = vmatprep.subr.mxu0 0.0
  %9005 = vmatpush2.msra.mxu0 0.0
  %9006 = vmatprep.subr.mxu0 0.0
  %9007 = vmatpush2.msra.mxu0 0.0
  %9008 = vmatprep.subr.mxu0 0.0
  %9009 = vmatpush2.msra.mxu0 0.0
  %9010 = vmatprep.subr.mxu0 0.0
  %9011 = vmatpush2.msra.mxu0 0.0
  %9012 = vmatprep.subr.mxu0 0.0
  %9013 = vmatpush2.msra.mxu0 0.0
  %9014 = vmatprep.subr.mxu0 0.0
  %9015 = vmatpush2.msra.mxu0 0.0
  %9016 = vmatprep.subr.mxu0 0.0
  %9017 = vmatpush2.msra.mxu0 0.0
  %9018 = vmatprep.subr.mxu0 0.0
  %9019 = vmatpush2.msra.mxu0 0.0
  %9020 = vmatprep.subr.mxu0 0.0
  %9021 = vmatpush2.msra.mxu0 0.0
  %9022 = vmatprep.subr.mxu0 0.0
  %9023 = vmatpush2.msra.mxu0 0.0
  %9024 = vmatprep.subr.mxu0 0.0
  %9025 = vmatpush2.msra.mxu0 0.0
  %9026 = vmatprep.subr.mxu0 0.0
  %9027 = vmatpush2.msra.mxu0 0.0
  %9028 = vmatprep.mubr.f32.mxu0 0.0
  %9029 = vmatmul.mubr.f32.gmra.mxu0 %v8962
  %v9030 = vpop.f32.mrf.mxu0
  %v9031 = vadd.f32 0.0, %v9030
  %v9032 = vpop.f32.mrf.mxu0
  %9033 = vdwg.mxu0
  %v9035 = vsel %vm316, %v8293, 0
  %9037 = vmatprep.subr.mxu0 0.0
  %9038 = vmatpush1.msra.mxu0 0.0
  %9039 = vmatprep.subr.mxu0 0.0
  %9040 = vmatpush1.msra.mxu0 0.0
  %9041 = vmatprep.subr.mxu0 0.0
  %9042 = vmatpush1.msra.mxu0 0.0
  %9043 = vmatprep.subr.mxu0 0.0
  %9044 = vmatpush1.msra.mxu0 0.0
  %9045 = vmatprep.subr.mxu0 0.0
  %9046 = vmatpush1.msra.mxu0 0.0
  %9047 = vmatprep.subr.mxu0 0.0
  %9048 = vmatpush1.msra.mxu0 0.0
  %9049 = vmatprep.subr.mxu0 0.0
  %9050 = vmatpush1.msra.mxu0 0.0
  %9051 = vmatprep.subr.mxu0 0.0
  %9052 = vmatpush1.msra.mxu0 0.0
  %9053 = vmatprep.subr.mxu0 0.0
  %9054 = vmatpush1.msra.mxu0 0.0
  %9055 = vmatprep.subr.mxu0 0.0
  %9056 = vmatpush1.msra.mxu0 0.0
  %9057 = vmatprep.subr.mxu0 0.0
  %9058 = vmatpush1.msra.mxu0 0.0
  %9059 = vmatprep.subr.mxu0 0.0
  %9060 = vmatpush1.msra.mxu0 0.0
  %9061 = vmatprep.subr.mxu0 0.0
  %9062 = vmatpush1.msra.mxu0 0.0
  %9063 = vmatprep.subr.mxu0 0.0
  %9064 = vmatpush1.msra.mxu0 0.0
  %9065 = vmatprep.subr.mxu0 0.0
  %9066 = vmatpush1.msra.mxu0 %v816
  %9067 = vmatprep.subr.mxu0 0.0
  %9068 = vmatpush1.msra.mxu0 %v815
  %9069 = vmatprep.subr.mxu0 0.0
  %9070 = vmatpush2.msra.mxu0 0.0
  %9071 = vmatprep.subr.mxu0 0.0
  %9072 = vmatpush2.msra.mxu0 0.0
  %9073 = vmatprep.subr.mxu0 0.0
  %9074 = vmatpush2.msra.mxu0 0.0
  %9075 = vmatprep.subr.mxu0 0.0
  %9076 = vmatpush2.msra.mxu0 0.0
  %9077 = vmatprep.subr.mxu0 0.0
  %9078 = vmatpush2.msra.mxu0 0.0
  %9079 = vmatprep.subr.mxu0 0.0
  %9080 = vmatpush2.msra.mxu0 0.0
  %9081 = vmatprep.subr.mxu0 0.0
  %9082 = vmatpush2.msra.mxu0 0.0
  %9083 = vmatprep.subr.mxu0 0.0
  %9084 = vmatpush2.msra.mxu0 0.0
  %9085 = vmatprep.subr.mxu0 0.0
  %9086 = vmatpush2.msra.mxu0 0.0
  %9087 = vmatprep.subr.mxu0 0.0
  %9088 = vmatpush2.msra.mxu0 0.0
  %9089 = vmatprep.subr.mxu0 0.0
  %9090 = vmatpush2.msra.mxu0 0.0
  %9091 = vmatprep.subr.mxu0 0.0
  %9092 = vmatpush2.msra.mxu0 0.0
  %9093 = vmatprep.subr.mxu0 0.0
  %9094 = vmatpush2.msra.mxu0 0.0
  %9095 = vmatprep.subr.mxu0 0.0
  %9096 = vmatpush2.msra.mxu0 0.0
  %9097 = vmatprep.subr.mxu0 0.0
  %9098 = vmatpush2.msra.mxu0 0.0
  %9099 = vmatprep.subr.mxu0 0.0
  %9100 = vmatpush2.msra.mxu0 0.0
  %9101 = vmatprep.mubr.f32.mxu0 0.0
  %9102 = vmatmul.mubr.f32.gmra.mxu0 %v9035
  %v9103 = vpop.f32.mrf.mxu0
  %v9104 = vadd.f32 0.0, %v9103
  %v9105 = vpop.f32.mrf.mxu0
  %9106 = vdwg.mxu0
  %v9108 = vsel %vm316, %v8295, 0
  %9110 = vmatprep.subr.mxu0 0.0
  %9111 = vmatpush1.msra.mxu0 0.0
  %9112 = vmatprep.subr.mxu0 0.0
  %9113 = vmatpush1.msra.mxu0 0.0
  %9114 = vmatprep.subr.mxu0 0.0
  %9115 = vmatpush1.msra.mxu0 0.0
  %9116 = vmatprep.subr.mxu0 0.0
  %9117 = vmatpush1.msra.mxu0 0.0
  %9118 = vmatprep.subr.mxu0 0.0
  %9119 = vmatpush1.msra.mxu0 0.0
  %9120 = vmatprep.subr.mxu0 0.0
  %9121 = vmatpush1.msra.mxu0 0.0
  %9122 = vmatprep.subr.mxu0 0.0
  %9123 = vmatpush1.msra.mxu0 0.0
  %9124 = vmatprep.subr.mxu0 0.0
  %9125 = vmatpush1.msra.mxu0 0.0
  %9126 = vmatprep.subr.mxu0 0.0
  %9127 = vmatpush1.msra.mxu0 0.0
  %9128 = vmatprep.subr.mxu0 0.0
  %9129 = vmatpush1.msra.mxu0 0.0
  %9130 = vmatprep.subr.mxu0 0.0
  %9131 = vmatpush1.msra.mxu0 0.0
  %9132 = vmatprep.subr.mxu0 0.0
  %9133 = vmatpush1.msra.mxu0 0.0
  %9134 = vmatprep.subr.mxu0 0.0
  %9135 = vmatpush1.msra.mxu0 0.0
  %9136 = vmatprep.subr.mxu0 0.0
  %9137 = vmatpush1.msra.mxu0 0.0
  %9138 = vmatprep.subr.mxu0 0.0
  %9139 = vmatpush1.msra.mxu0 %v818
  %9140 = vmatprep.subr.mxu0 0.0
  %9141 = vmatpush1.msra.mxu0 %v817
  %9142 = vmatprep.subr.mxu0 0.0
  %9143 = vmatpush2.msra.mxu0 0.0
  %9144 = vmatprep.subr.mxu0 0.0
  %9145 = vmatpush2.msra.mxu0 0.0
  %9146 = vmatprep.subr.mxu0 0.0
  %9147 = vmatpush2.msra.mxu0 0.0
  %9148 = vmatprep.subr.mxu0 0.0
  %9149 = vmatpush2.msra.mxu0 0.0
  %9150 = vmatprep.subr.mxu0 0.0
  %9151 = vmatpush2.msra.mxu0 0.0
  %9152 = vmatprep.subr.mxu0 0.0
  %9153 = vmatpush2.msra.mxu0 0.0
  %9154 = vmatprep.subr.mxu0 0.0
  %9155 = vmatpush2.msra.mxu0 0.0
  %9156 = vmatprep.subr.mxu0 0.0
  %9157 = vmatpush2.msra.mxu0 0.0
  %9158 = vmatprep.subr.mxu0 0.0
  %9159 = vmatpush2.msra.mxu0 0.0
  %9160 = vmatprep.subr.mxu0 0.0
  %9161 = vmatpush2.msra.mxu0 0.0
  %9162 = vmatprep.subr.mxu0 0.0
  %9163 = vmatpush2.msra.mxu0 0.0
  %9164 = vmatprep.subr.mxu0 0.0
  %9165 = vmatpush2.msra.mxu0 0.0
  %9166 = vmatprep.subr.mxu0 0.0
  %9167 = vmatpush2.msra.mxu0 0.0
  %9168 = vmatprep.subr.mxu0 0.0
  %9169 = vmatpush2.msra.mxu0 0.0
  %9170 = vmatprep.subr.mxu0 0.0
  %9171 = vmatpush2.msra.mxu0 0.0
  %9172 = vmatprep.subr.mxu0 0.0
  %9173 = vmatpush2.msra.mxu0 0.0
  %9174 = vmatprep.mubr.f32.mxu0 0.0
  %9175 = vmatmul.mubr.f32.gmra.mxu0 %v9108
  %v9176 = vpop.f32.mrf.mxu0
  %v9177 = vadd.f32 0.0, %v9176
  %v9178 = vpop.f32.mrf.mxu0
  %9179 = vdwg.mxu0
  %v9181 = vsel %vm316, %v8297, 0
  %9183 = vmatprep.subr.mxu0 0.0
  %9184 = vmatpush1.msra.mxu0 0.0
  %9185 = vmatprep.subr.mxu0 0.0
  %9186 = vmatpush1.msra.mxu0 0.0
  %9187 = vmatprep.subr.mxu0 0.0
  %9188 = vmatpush1.msra.mxu0 0.0
  %9189 = vmatprep.subr.mxu0 0.0
  %9190 = vmatpush1.msra.mxu0 0.0
  %9191 = vmatprep.subr.mxu0 0.0
  %9192 = vmatpush1.msra.mxu0 0.0
  %9193 = vmatprep.subr.mxu0 0.0
  %9194 = vmatpush1.msra.mxu0 0.0
  %9195 = vmatprep.subr.mxu0 0.0
  %9196 = vmatpush1.msra.mxu0 0.0
  %9197 = vmatprep.subr.mxu0 0.0
  %9198 = vmatpush1.msra.mxu0 0.0
  %9199 = vmatprep.subr.mxu0 0.0
  %9200 = vmatpush1.msra.mxu0 0.0
  %9201 = vmatprep.subr.mxu0 0.0
  %9202 = vmatpush1.msra.mxu0 0.0
  %9203 = vmatprep.subr.mxu0 0.0
  %9204 = vmatpush1.msra.mxu0 0.0
  %9205 = vmatprep.subr.mxu0 0.0
  %9206 = vmatpush1.msra.mxu0 0.0
  %9207 = vmatprep.subr.mxu0 0.0
  %9208 = vmatpush1.msra.mxu0 0.0
  %9209 = vmatprep.subr.mxu0 0.0
  %9210 = vmatpush1.msra.mxu0 0.0
  %9211 = vmatprep.subr.mxu0 0.0
  %9212 = vmatpush1.msra.mxu0 %v820
  %9213 = vmatprep.subr.mxu0 0.0
  %9214 = vmatpush1.msra.mxu0 %v819
  %9215 = vmatprep.subr.mxu0 0.0
  %9216 = vmatpush2.msra.mxu0 0.0
  %9217 = vmatprep.subr.mxu0 0.0
  %9218 = vmatpush2.msra.mxu0 0.0
  %9219 = vmatprep.subr.mxu0 0.0
  %9220 = vmatpush2.msra.mxu0 0.0
  %9221 = vmatprep.subr.mxu0 0.0
  %9222 = vmatpush2.msra.mxu0 0.0
  %9223 = vmatprep.subr.mxu0 0.0
  %9224 = vmatpush2.msra.mxu0 0.0
  %9225 = vmatprep.subr.mxu0 0.0
  %9226 = vmatpush2.msra.mxu0 0.0
  %9227 = vmatprep.subr.mxu0 0.0
  %9228 = vmatpush2.msra.mxu0 0.0
  %9229 = vmatprep.subr.mxu0 0.0
  %9230 = vmatpush2.msra.mxu0 0.0
  %9231 = vmatprep.subr.mxu0 0.0
  %9232 = vmatpush2.msra.mxu0 0.0
  %9233 = vmatprep.subr.mxu0 0.0
  %9234 = vmatpush2.msra.mxu0 0.0
  %9235 = vmatprep.subr.mxu0 0.0
  %9236 = vmatpush2.msra.mxu0 0.0
  %9237 = vmatprep.subr.mxu0 0.0
  %9238 = vmatpush2.msra.mxu0 0.0
  %9239 = vmatprep.subr.mxu0 0.0
  %9240 = vmatpush2.msra.mxu0 0.0
  %9241 = vmatprep.subr.mxu0 0.0
  %9242 = vmatpush2.msra.mxu0 0.0
  %9243 = vmatprep.subr.mxu0 0.0
  %9244 = vmatpush2.msra.mxu0 0.0
  %9245 = vmatprep.subr.mxu0 0.0
  %9246 = vmatpush2.msra.mxu0 0.0
  %9247 = vmatprep.mubr.f32.mxu0 0.0
  %9248 = vmatmul.mubr.f32.gmra.mxu0 %v9181
  %v9249 = vpop.f32.mrf.mxu0
  %v9250 = vadd.f32 0.0, %v9249
  %v9251 = vpop.f32.mrf.mxu0
  %9252 = vdwg.mxu0
  %v9254 = vsel %vm316, %v8299, 0
  %9256 = vmatprep.subr.mxu0 0.0
  %9257 = vmatpush1.msra.mxu0 0.0
  %9258 = vmatprep.subr.mxu0 0.0
  %9259 = vmatpush1.msra.mxu0 0.0
  %9260 = vmatprep.subr.mxu0 0.0
  %9261 = vmatpush1.msra.mxu0 0.0
  %9262 = vmatprep.subr.mxu0 0.0
  %9263 = vmatpush1.msra.mxu0 0.0
  %9264 = vmatprep.subr.mxu0 0.0
  %9265 = vmatpush1.msra.mxu0 0.0
  %9266 = vmatprep.subr.mxu0 0.0
  %9267 = vmatpush1.msra.mxu0 0.0
  %9268 = vmatprep.subr.mxu0 0.0
  %9269 = vmatpush1.msra.mxu0 0.0
  %9270 = vmatprep.subr.mxu0 0.0
  %9271 = vmatpush1.msra.mxu0 0.0
  %9272 = vmatprep.subr.mxu0 0.0
  %9273 = vmatpush1.msra.mxu0 0.0
  %9274 = vmatprep.subr.mxu0 0.0
  %9275 = vmatpush1.msra.mxu0 0.0
  %9276 = vmatprep.subr.mxu0 0.0
  %9277 = vmatpush1.msra.mxu0 0.0
  %9278 = vmatprep.subr.mxu0 0.0
  %9279 = vmatpush1.msra.mxu0 0.0
  %9280 = vmatprep.subr.mxu0 0.0
  %9281 = vmatpush1.msra.mxu0 0.0
  %9282 = vmatprep.subr.mxu0 0.0
  %9283 = vmatpush1.msra.mxu0 0.0
  %9284 = vmatprep.subr.mxu0 0.0
  %9285 = vmatpush1.msra.mxu0 %v822
  %9286 = vmatprep.subr.mxu0 0.0
  %9287 = vmatpush1.msra.mxu0 %v821
  %9288 = vmatprep.subr.mxu0 0.0
  %9289 = vmatpush2.msra.mxu0 0.0
  %9290 = vmatprep.subr.mxu0 0.0
  %9291 = vmatpush2.msra.mxu0 0.0
  %9292 = vmatprep.subr.mxu0 0.0
  %9293 = vmatpush2.msra.mxu0 0.0
  %9294 = vmatprep.subr.mxu0 0.0
  %9295 = vmatpush2.msra.mxu0 0.0
  %9296 = vmatprep.subr.mxu0 0.0
  %9297 = vmatpush2.msra.mxu0 0.0
  %9298 = vmatprep.subr.mxu0 0.0
  %9299 = vmatpush2.msra.mxu0 0.0
  %9300 = vmatprep.subr.mxu0 0.0
  %9301 = vmatpush2.msra.mxu0 0.0
  %9302 = vmatprep.subr.mxu0 0.0
  %9303 = vmatpush2.msra.mxu0 0.0
  %9304 = vmatprep.subr.mxu0 0.0
  %9305 = vmatpush2.msra.mxu0 0.0
  %9306 = vmatprep.subr.mxu0 0.0
  %9307 = vmatpush2.msra.mxu0 0.0
  %9308 = vmatprep.subr.mxu0 0.0
  %9309 = vmatpush2.msra.mxu0 0.0
  %9310 = vmatprep.subr.mxu0 0.0
  %9311 = vmatpush2.msra.mxu0 0.0
  %9312 = vmatprep.subr.mxu0 0.0
  %9313 = vmatpush2.msra.mxu0 0.0
  %9314 = vmatprep.subr.mxu0 0.0
  %9315 = vmatpush2.msra.mxu0 0.0
  %9316 = vmatprep.subr.mxu0 0.0
  %9317 = vmatpush2.msra.mxu0 0.0
  %9318 = vmatprep.subr.mxu0 0.0
  %9319 = vmatpush2.msra.mxu0 0.0
  %9320 = vmatprep.mubr.f32.mxu0 0.0
  %9321 = vmatmul.mubr.f32.gmra.mxu0 %v9254
  %v9322 = vpop.f32.mrf.mxu0
  %v9323 = vadd.f32 0.0, %v9322
  %v9324 = vpop.f32.mrf.mxu0
  %9325 = vdwg.mxu0
  %v9327 = vsel %vm316, %v8301, 0
  %9329 = vmatprep.subr.mxu0 0.0
  %9330 = vmatpush1.msra.mxu0 0.0
  %9331 = vmatprep.subr.mxu0 0.0
  %9332 = vmatpush1.msra.mxu0 0.0
  %9333 = vmatprep.subr.mxu0 0.0
  %9334 = vmatpush1.msra.mxu0 0.0
  %9335 = vmatprep.subr.mxu0 0.0
  %9336 = vmatpush1.msra.mxu0 0.0
  %9337 = vmatprep.subr.mxu0 0.0
  %9338 = vmatpush1.msra.mxu0 0.0
  %9339 = vmatprep.subr.mxu0 0.0
  %9340 = vmatpush1.msra.mxu0 0.0
  %9341 = vmatprep.subr.mxu0 0.0
  %9342 = vmatpush1.msra.mxu0 0.0
  %9343 = vmatprep.subr.mxu0 0.0
  %9344 = vmatpush1.msra.mxu0 0.0
  %9345 = vmatprep.subr.mxu0 0.0
  %9346 = vmatpush1.msra.mxu0 0.0
  %9347 = vmatprep.subr.mxu0 0.0
  %9348 = vmatpush1.msra.mxu0 0.0
  %9349 = vmatprep.subr.mxu0 0.0
  %9350 = vmatpush1.msra.mxu0 0.0
  %9351 = vmatprep.subr.mxu0 0.0
  %9352 = vmatpush1.msra.mxu0 0.0
  %9353 = vmatprep.subr.mxu0 0.0
  %9354 = vmatpush1.msra.mxu0 0.0
  %9355 = vmatprep.subr.mxu0 0.0
  %9356 = vmatpush1.msra.mxu0 0.0
  %9357 = vmatprep.subr.mxu0 0.0
  %9358 = vmatpush1.msra.mxu0 %v824
  %9359 = vmatprep.subr.mxu0 0.0
  %9360 = vmatpush1.msra.mxu0 %v823
  %9361 = vmatprep.subr.mxu0 0.0
  %9362 = vmatpush2.msra.mxu0 0.0
  %9363 = vmatprep.subr.mxu0 0.0
  %9364 = vmatpush2.msra.mxu0 0.0
  %9365 = vmatprep.subr.mxu0 0.0
  %9366 = vmatpush2.msra.mxu0 0.0
  %9367 = vmatprep.subr.mxu0 0.0
  %9368 = vmatpush2.msra.mxu0 0.0
  %9369 = vmatprep.subr.mxu0 0.0
  %9370 = vmatpush2.msra.mxu0 0.0
  %9371 = vmatprep.subr.mxu0 0.0
  %9372 = vmatpush2.msra.mxu0 0.0
  %9373 = vmatprep.subr.mxu0 0.0
  %9374 = vmatpush2.msra.mxu0 0.0
  %9375 = vmatprep.subr.mxu0 0.0
  %9376 = vmatpush2.msra.mxu0 0.0
  %9377 = vmatprep.subr.mxu0 0.0
  %9378 = vmatpush2.msra.mxu0 0.0
  %9379 = vmatprep.subr.mxu0 0.0
  %9380 = vmatpush2.msra.mxu0 0.0
  %9381 = vmatprep.subr.mxu0 0.0
  %9382 = vmatpush2.msra.mxu0 0.0
  %9383 = vmatprep.subr.mxu0 0.0
  %9384 = vmatpush2.msra.mxu0 0.0
  %9385 = vmatprep.subr.mxu0 0.0
  %9386 = vmatpush2.msra.mxu0 0.0
  %9387 = vmatprep.subr.mxu0 0.0
  %9388 = vmatpush2.msra.mxu0 0.0
  %9389 = vmatprep.subr.mxu0 0.0
  %9390 = vmatpush2.msra.mxu0 0.0
  %9391 = vmatprep.subr.mxu0 0.0
  %9392 = vmatpush2.msra.mxu0 0.0
  %9393 = vmatprep.mubr.f32.mxu0 0.0
  %9394 = vmatmul.mubr.f32.gmra.mxu0 %v9327
  %v9395 = vpop.f32.mrf.mxu0
  %v9396 = vadd.f32 0.0, %v9395
  %v9397 = vpop.f32.mrf.mxu0
  %9398 = vdwg.mxu0
  %v9400 = vsel %vm316, %v8303, 0
  %9402 = vmatprep.subr.mxu0 0.0
  %9403 = vmatpush1.msra.mxu0 0.0
  %9404 = vmatprep.subr.mxu0 0.0
  %9405 = vmatpush1.msra.mxu0 0.0
  %9406 = vmatprep.subr.mxu0 0.0
  %9407 = vmatpush1.msra.mxu0 0.0
  %9408 = vmatprep.subr.mxu0 0.0
  %9409 = vmatpush1.msra.mxu0 0.0
  %9410 = vmatprep.subr.mxu0 0.0
  %9411 = vmatpush1.msra.mxu0 0.0
  %9412 = vmatprep.subr.mxu0 0.0
  %9413 = vmatpush1.msra.mxu0 0.0
  %9414 = vmatprep.subr.mxu0 0.0
  %9415 = vmatpush1.msra.mxu0 0.0
  %9416 = vmatprep.subr.mxu0 0.0
  %9417 = vmatpush1.msra.mxu0 0.0
  %9418 = vmatprep.subr.mxu0 0.0
  %9419 = vmatpush1.msra.mxu0 0.0
  %9420 = vmatprep.subr.mxu0 0.0
  %9421 = vmatpush1.msra.mxu0 0.0
  %9422 = vmatprep.subr.mxu0 0.0
  %9423 = vmatpush1.msra.mxu0 0.0
  %9424 = vmatprep.subr.mxu0 0.0
  %9425 = vmatpush1.msra.mxu0 0.0
  %9426 = vmatprep.subr.mxu0 0.0
  %9427 = vmatpush1.msra.mxu0 0.0
  %9428 = vmatprep.subr.mxu0 0.0
  %9429 = vmatpush1.msra.mxu0 0.0
  %9430 = vmatprep.subr.mxu0 0.0
  %9431 = vmatpush1.msra.mxu0 %v826
  %9432 = vmatprep.subr.mxu0 0.0
  %9433 = vmatpush1.msra.mxu0 %v825
  %9434 = vmatprep.subr.mxu0 0.0
  %9435 = vmatpush2.msra.mxu0 0.0
  %9436 = vmatprep.subr.mxu0 0.0
  %9437 = vmatpush2.msra.mxu0 0.0
  %9438 = vmatprep.subr.mxu0 0.0
  %9439 = vmatpush2.msra.mxu0 0.0
  %9440 = vmatprep.subr.mxu0 0.0
  %9441 = vmatpush2.msra.mxu0 0.0
  %9442 = vmatprep.subr.mxu0 0.0
  %9443 = vmatpush2.msra.mxu0 0.0
  %9444 = vmatprep.subr.mxu0 0.0
  %9445 = vmatpush2.msra.mxu0 0.0
  %9446 = vmatprep.subr.mxu0 0.0
  %9447 = vmatpush2.msra.mxu0 0.0
  %9448 = vmatprep.subr.mxu0 0.0
  %9449 = vmatpush2.msra.mxu0 0.0
  %9450 = vmatprep.subr.mxu0 0.0
  %9451 = vmatpush2.msra.mxu0 0.0
  %9452 = vmatprep.subr.mxu0 0.0
  %9453 = vmatpush2.msra.mxu0 0.0
  %9454 = vmatprep.subr.mxu0 0.0
  %9455 = vmatpush2.msra.mxu0 0.0
  %9456 = vmatprep.subr.mxu0 0.0
  %9457 = vmatpush2.msra.mxu0 0.0
  %9458 = vmatprep.subr.mxu0 0.0
  %9459 = vmatpush2.msra.mxu0 0.0
  %9460 = vmatprep.subr.mxu0 0.0
  %9461 = vmatpush2.msra.mxu0 0.0
  %9462 = vmatprep.subr.mxu0 0.0
  %9463 = vmatpush2.msra.mxu0 0.0
  %9464 = vmatprep.subr.mxu0 0.0
  %9465 = vmatpush2.msra.mxu0 0.0
  %9466 = vmatprep.mubr.f32.mxu0 0.0
  %9467 = vmatmul.mubr.f32.gmra.mxu0 %v9400
  %v9468 = vpop.f32.mrf.mxu0
  %v9469 = vadd.f32 0.0, %v9468
  %v9470 = vpop.f32.mrf.mxu0
  %9471 = vdwg.mxu0
  %v9472 = vmul.f32 %v8374, %v8374
  %v9473 = vmul.f32 %v8447, %v8447
  %v9474 = vmul.f32 %v8520, %v8520
  %v9475 = vmul.f32 %v8593, %v8593
  %v9476 = vmul.f32 %v8666, %v8666
  %v9477 = vmul.f32 %v8739, %v8739
  %v9478 = vmul.f32 %v8812, %v8812
  %v9479 = vmul.f32 %v8885, %v8885
  %v9480 = vmul.f32 %v8958, %v8958
  %v9481 = vmul.f32 %v9031, %v9031
  %v9482 = vmul.f32 %v9104, %v9104
  %v9483 = vmul.f32 %v9177, %v9177
  %v9484 = vmul.f32 %v9250, %v9250
  %v9485 = vmul.f32 %v9323, %v9323
  %v9486 = vmul.f32 %v9396, %v9396
  %v9487 = vmul.f32 %v9469, %v9469
  %v9488 = vsel %vm2207, %v9472, 0.0
  %9489 = vadd.xlane.f32.xlu0 %v9488
  %v9490 = vpop.xlane.xlu0 %9489
  %v9491 = vsel %vm2207, %v9473, 0.0
  %9492 = vadd.xlane.f32.xlu0 %v9491
  %v9493 = vpop.xlane.xlu0 %9492
  %v9494 = vsel %vm2207, %v9474, 0.0
  %9495 = vadd.xlane.f32.xlu0 %v9494
  %v9496 = vpop.xlane.xlu0 %9495
  %v9497 = vsel %vm2207, %v9475, 0.0
  %9498 = vadd.xlane.f32.xlu0 %v9497
  %v9499 = vpop.xlane.xlu0 %9498
  %v9500 = vsel %vm2207, %v9476, 0.0
  %9501 = vadd.xlane.f32.xlu0 %v9500
  %v9502 = vpop.xlane.xlu0 %9501
  %v9503 = vsel %vm2207, %v9477, 0.0
  %9504 = vadd.xlane.f32.xlu0 %v9503
  %v9505 = vpop.xlane.xlu0 %9504
  %v9506 = vsel %vm2207, %v9478, 0.0
  %9507 = vadd.xlane.f32.xlu0 %v9506
  %v9508 = vpop.xlane.xlu0 %9507
  %v9509 = vsel %vm2207, %v9479, 0.0
  %9510 = vadd.xlane.f32.xlu0 %v9509
  %v9511 = vpop.xlane.xlu0 %9510
  %v9512 = vsel %vm2207, %v9480, 0.0
  %9513 = vadd.xlane.f32.xlu0 %v9512
  %v9514 = vpop.xlane.xlu0 %9513
  %v9515 = vsel %vm2207, %v9481, 0.0
  %9516 = vadd.xlane.f32.xlu0 %v9515
  %v9517 = vpop.xlane.xlu0 %9516
  %v9518 = vsel %vm2207, %v9482, 0.0
  %9519 = vadd.xlane.f32.xlu0 %v9518
  %v9520 = vpop.xlane.xlu0 %9519
  %v9521 = vsel %vm2207, %v9483, 0.0
  %9522 = vadd.xlane.f32.xlu0 %v9521
  %v9523 = vpop.xlane.xlu0 %9522
  %v9524 = vsel %vm2207, %v9484, 0.0
  %9525 = vadd.xlane.f32.xlu0 %v9524
  %v9526 = vpop.xlane.xlu0 %9525
  %v9527 = vsel %vm2207, %v9485, 0.0
  %9528 = vadd.xlane.f32.xlu0 %v9527
  %v9529 = vpop.xlane.xlu0 %9528
  %v9530 = vsel %vm2207, %v9486, 0.0
  %9531 = vadd.xlane.f32.xlu0 %v9530
  %v9532 = vpop.xlane.xlu0 %9531
  %v9533 = vsel %vm2207, %v9487, 0.0
  %9534 = vadd.xlane.f32.xlu0 %v9533
  %v9535 = vpop.xlane.xlu0 %9534
  %v9536 = vrsqrt.pop %v9490
  %v9537 = vmul.f32 %v9490, %v9536
  %vm9538 = vcmp.eq.f32.partialorder %v9490, inf
  %v9539 = vsel %vm9538, %v9490, %v9537
  %vm9540 = vcmp.eq.f32.partialorder %v9490, 0.0
  %v9541 = vand.u32 %v9490, 2147483648
  %v9542 = vsel %vm9540, %v9541, %v9539
  %v9543 = vrsqrt.pop %v9493
  %v9544 = vmul.f32 %v9493, %v9543
  %vm9545 = vcmp.eq.f32.partialorder %v9493, inf
  %v9546 = vsel %vm9545, %v9493, %v9544
  %vm9547 = vcmp.eq.f32.partialorder %v9493, 0.0
  %v9548 = vand.u32 %v9493, 2147483648
  %v9549 = vsel %vm9547, %v9548, %v9546
  %v9550 = vrsqrt.pop %v9496
  %v9551 = vmul.f32 %v9496, %v9550
  %vm9552 = vcmp.eq.f32.partialorder %v9496, inf
  %v9553 = vsel %vm9552, %v9496, %v9551
  %vm9554 = vcmp.eq.f32.partialorder %v9496, 0.0
  %v9555 = vand.u32 %v9496, 2147483648
  %v9556 = vsel %vm9554, %v9555, %v9553
  %v9557 = vrsqrt.pop %v9499
  %v9558 = vmul.f32 %v9499, %v9557
  %vm9559 = vcmp.eq.f32.partialorder %v9499, inf
  %v9560 = vsel %vm9559, %v9499, %v9558
  %vm9561 = vcmp.eq.f32.partialorder %v9499, 0.0
  %v9562 = vand.u32 %v9499, 2147483648
  %v9563 = vsel %vm9561, %v9562, %v9560
  %v9564 = vrsqrt.pop %v9502
  %v9565 = vmul.f32 %v9502, %v9564
  %vm9566 = vcmp.eq.f32.partialorder %v9502, inf
  %v9567 = vsel %vm9566, %v9502, %v9565
  %vm9568 = vcmp.eq.f32.partialorder %v9502, 0.0
  %v9569 = vand.u32 %v9502, 2147483648
  %v9570 = vsel %vm9568, %v9569, %v9567
  %v9571 = vrsqrt.pop %v9505
  %v9572 = vmul.f32 %v9505, %v9571
  %vm9573 = vcmp.eq.f32.partialorder %v9505, inf
  %v9574 = vsel %vm9573, %v9505, %v9572
  %vm9575 = vcmp.eq.f32.partialorder %v9505, 0.0
  %v9576 = vand.u32 %v9505, 2147483648
  %v9577 = vsel %vm9575, %v9576, %v9574
  %v9578 = vrsqrt.pop %v9508
  %v9579 = vmul.f32 %v9508, %v9578
  %vm9580 = vcmp.eq.f32.partialorder %v9508, inf
  %v9581 = vsel %vm9580, %v9508, %v9579
  %vm9582 = vcmp.eq.f32.partialorder %v9508, 0.0
  %v9583 = vand.u32 %v9508, 2147483648
  %v9584 = vsel %vm9582, %v9583, %v9581
  %v9585 = vrsqrt.pop %v9511
  %v9586 = vmul.f32 %v9511, %v9585
  %vm9587 = vcmp.eq.f32.partialorder %v9511, inf
  %v9588 = vsel %vm9587, %v9511, %v9586
  %vm9589 = vcmp.eq.f32.partialorder %v9511, 0.0
  %v9590 = vand.u32 %v9511, 2147483648
  %v9591 = vsel %vm9589, %v9590, %v9588
  %v9592 = vrsqrt.pop %v9514
  %v9593 = vmul.f32 %v9514, %v9592
  %vm9594 = vcmp.eq.f32.partialorder %v9514, inf
  %v9595 = vsel %vm9594, %v9514, %v9593
  %vm9596 = vcmp.eq.f32.partialorder %v9514, 0.0
  %v9597 = vand.u32 %v9514, 2147483648
  %v9598 = vsel %vm9596, %v9597, %v9595
  %v9599 = vrsqrt.pop %v9517
  %v9600 = vmul.f32 %v9517, %v9599
  %vm9601 = vcmp.eq.f32.partialorder %v9517, inf
  %v9602 = vsel %vm9601, %v9517, %v9600
  %vm9603 = vcmp.eq.f32.partialorder %v9517, 0.0
  %v9604 = vand.u32 %v9517, 2147483648
  %v9605 = vsel %vm9603, %v9604, %v9602
  %v9606 = vrsqrt.pop %v9520
  %v9607 = vmul.f32 %v9520, %v9606
  %vm9608 = vcmp.eq.f32.partialorder %v9520, inf
  %v9609 = vsel %vm9608, %v9520, %v9607
  %vm9610 = vcmp.eq.f32.partialorder %v9520, 0.0
  %v9611 = vand.u32 %v9520, 2147483648
  %v9612 = vsel %vm9610, %v9611, %v9609
  %v9613 = vrsqrt.pop %v9523
  %v9614 = vmul.f32 %v9523, %v9613
  %vm9615 = vcmp.eq.f32.partialorder %v9523, inf
  %v9616 = vsel %vm9615, %v9523, %v9614
  %vm9617 = vcmp.eq.f32.partialorder %v9523, 0.0
  %v9618 = vand.u32 %v9523, 2147483648
  %v9619 = vsel %vm9617, %v9618, %v9616
  %v9620 = vrsqrt.pop %v9526
  %v9621 = vmul.f32 %v9526, %v9620
  %vm9622 = vcmp.eq.f32.partialorder %v9526, inf
  %v9623 = vsel %vm9622, %v9526, %v9621
  %vm9624 = vcmp.eq.f32.partialorder %v9526, 0.0
  %v9625 = vand.u32 %v9526, 2147483648
  %v9626 = vsel %vm9624, %v9625, %v9623
  %v9627 = vrsqrt.pop %v9529
  %v9628 = vmul.f32 %v9529, %v9627
  %vm9629 = vcmp.eq.f32.partialorder %v9529, inf
  %v9630 = vsel %vm9629, %v9529, %v9628
  %vm9631 = vcmp.eq.f32.partialorder %v9529, 0.0
  %v9632 = vand.u32 %v9529, 2147483648
  %v9633 = vsel %vm9631, %v9632, %v9630
  %v9634 = vrsqrt.pop %v9532
  %v9635 = vmul.f32 %v9532, %v9634
  %vm9636 = vcmp.eq.f32.partialorder %v9532, inf
  %v9637 = vsel %vm9636, %v9532, %v9635
  %vm9638 = vcmp.eq.f32.partialorder %v9532, 0.0
  %v9639 = vand.u32 %v9532, 2147483648
  %v9640 = vsel %vm9638, %v9639, %v9637
  %v9641 = vrsqrt.pop %v9535
  %v9642 = vmul.f32 %v9535, %v9641
  %vm9643 = vcmp.eq.f32.partialorder %v9535, inf
  %v9644 = vsel %vm9643, %v9535, %v9642
  %vm9645 = vcmp.eq.f32.partialorder %v9535, 0.0
  %v9646 = vand.u32 %v9535, 2147483648
  %v9647 = vsel %vm9645, %v9646, %v9644
  %v9648 = vadd.f32 %v9490, 1.0
  %v9649 = vadd.f32 %v9493, 1.0
  %v9650 = vadd.f32 %v9496, 1.0
  %v9651 = vadd.f32 %v9499, 1.0
  %v9652 = vadd.f32 %v9502, 1.0
  %v9653 = vadd.f32 %v9505, 1.0
  %v9654 = vadd.f32 %v9508, 1.0
  %v9655 = vadd.f32 %v9511, 1.0
  %v9656 = vadd.f32 %v9514, 1.0
  %v9657 = vadd.f32 %v9517, 1.0
  %v9658 = vadd.f32 %v9520, 1.0
  %v9659 = vadd.f32 %v9523, 1.0
  %v9660 = vadd.f32 %v9526, 1.0
  %v9661 = vadd.f32 %v9529, 1.0
  %v9662 = vadd.f32 %v9532, 1.0
  %v9663 = vadd.f32 %v9535, 1.0
  %v9664 = vrcp.pop %v9648
  %v9665 = vmul.f32 %v9542, %v9664
  %v9666 = vrcp.pop %v9649
  %v9667 = vmul.f32 %v9549, %v9666
  %v9668 = vrcp.pop %v9650
  %v9669 = vmul.f32 %v9556, %v9668
  %v9670 = vrcp.pop %v9651
  %v9671 = vmul.f32 %v9563, %v9670
  %v9672 = vrcp.pop %v9652
  %v9673 = vmul.f32 %v9570, %v9672
  %v9674 = vrcp.pop %v9653
  %v9675 = vmul.f32 %v9577, %v9674
  %v9676 = vrcp.pop %v9654
  %v9677 = vmul.f32 %v9584, %v9676
  %v9678 = vrcp.pop %v9655
  %v9679 = vmul.f32 %v9591, %v9678
  %v9680 = vrcp.pop %v9656
  %v9681 = vmul.f32 %v9598, %v9680
  %v9682 = vrcp.pop %v9657
  %v9683 = vmul.f32 %v9605, %v9682
  %v9684 = vrcp.pop %v9658
  %v9685 = vmul.f32 %v9612, %v9684
  %v9686 = vrcp.pop %v9659
  %v9687 = vmul.f32 %v9619, %v9686
  %v9688 = vrcp.pop %v9660
  %v9689 = vmul.f32 %v9626, %v9688
  %v9690 = vrcp.pop %v9661
  %v9691 = vmul.f32 %v9633, %v9690
  %v9692 = vrcp.pop %v9662
  %v9693 = vmul.f32 %v9640, %v9692
  %v9694 = vrcp.pop %v9663
  %v9695 = vmul.f32 %v9647, %v9694
  %v9696 = vmul.f32 %v9665, %v8374
  %v9697 = vmul.f32 %v9667, %v8447
  %v9698 = vmul.f32 %v9669, %v8520
  %v9699 = vmul.f32 %v9671, %v8593
  %v9700 = vmul.f32 %v9673, %v8666
  %v9701 = vmul.f32 %v9675, %v8739
  %v9702 = vmul.f32 %v9677, %v8812
  %v9703 = vmul.f32 %v9679, %v8885
  %v9704 = vmul.f32 %v9681, %v8958
  %v9705 = vmul.f32 %v9683, %v9031
  %v9706 = vmul.f32 %v9685, %v9104
  %v9707 = vmul.f32 %v9687, %v9177
  %v9708 = vmul.f32 %v9689, %v9250
  %v9709 = vmul.f32 %v9691, %v9323
  %v9710 = vmul.f32 %v9693, %v9396
  %v9711 = vmul.f32 %v9695, %v9469
  %v9712 = vlaneseq
  %v9713 = vshrl.u32 %v9712, 7
  %v9714 = vsub.s32 0, %v9713
  %v9715 = vrot.slane %v221, %v9714
  %9717 = vbcast.lane.b32.xlu0 %v9715, 256
  %v9718 = vpop.permute.xlu0 %9717
  %v9719 = vlaneseq
  %v9720 = vshrl.u32 %v9719, 7
  %v9721 = vsub.s32 1, %v9720
  %v9722 = vrot.slane %v221, %v9721
  %9724 = vbcast.lane.b32.xlu0 %v9722, 256
  %v9725 = vpop.permute.xlu0 %9724
  %v9726 = vlaneseq
  %v9727 = vshrl.u32 %v9726, 7
  %v9728 = vsub.s32 2, %v9727
  %v9729 = vrot.slane %v221, %v9728
  %9731 = vbcast.lane.b32.xlu0 %v9729, 256
  %v9732 = vpop.permute.xlu0 %9731
  %v9733 = vlaneseq
  %v9734 = vshrl.u32 %v9733, 7
  %v9735 = vsub.s32 3, %v9734
  %v9736 = vrot.slane %v221, %v9735
  %9738 = vbcast.lane.b32.xlu0 %v9736, 256
  %v9739 = vpop.permute.xlu0 %9738
  %v9740 = vlaneseq
  %v9741 = vshrl.u32 %v9740, 7
  %v9742 = vsub.s32 4, %v9741
  %v9743 = vrot.slane %v221, %v9742
  %9745 = vbcast.lane.b32.xlu0 %v9743, 256
  %v9746 = vpop.permute.xlu0 %9745
  %v9747 = vlaneseq
  %v9748 = vshrl.u32 %v9747, 7
  %v9749 = vsub.s32 5, %v9748
  %v9750 = vrot.slane %v221, %v9749
  %9752 = vbcast.lane.b32.xlu0 %v9750, 256
  %v9753 = vpop.permute.xlu0 %9752
  %v9754 = vlaneseq
  %v9755 = vshrl.u32 %v9754, 7
  %v9756 = vsub.s32 6, %v9755
  %v9757 = vrot.slane %v221, %v9756
  %9759 = vbcast.lane.b32.xlu0 %v9757, 256
  %v9760 = vpop.permute.xlu0 %9759
  %v9761 = vlaneseq
  %v9762 = vshrl.u32 %v9761, 7
  %v9763 = vsub.s32 7, %v9762
  %v9764 = vrot.slane %v221, %v9763
  %9766 = vbcast.lane.b32.xlu0 %v9764, 256
  %v9767 = vpop.permute.xlu0 %9766
  %v9768 = vlaneseq
  %v9769 = vshrl.u32 %v9768, 7
  %v9770 = vsub.s32 0, %v9769
  %v9771 = vrot.slane %v222, %v9770
  %9773 = vbcast.lane.b32.xlu0 %v9771, 256
  %v9774 = vpop.permute.xlu0 %9773
  %v9775 = vlaneseq
  %v9776 = vshrl.u32 %v9775, 7
  %v9777 = vsub.s32 1, %v9776
  %v9778 = vrot.slane %v222, %v9777
  %9780 = vbcast.lane.b32.xlu0 %v9778, 256
  %v9781 = vpop.permute.xlu0 %9780
  %v9782 = vlaneseq
  %v9783 = vshrl.u32 %v9782, 7
  %v9784 = vsub.s32 2, %v9783
  %v9785 = vrot.slane %v222, %v9784
  %9787 = vbcast.lane.b32.xlu0 %v9785, 256
  %v9788 = vpop.permute.xlu0 %9787
  %v9789 = vlaneseq
  %v9790 = vshrl.u32 %v9789, 7
  %v9791 = vsub.s32 3, %v9790
  %v9792 = vrot.slane %v222, %v9791
  %9794 = vbcast.lane.b32.xlu0 %v9792, 256
  %v9795 = vpop.permute.xlu0 %9794
  %v9796 = vlaneseq
  %v9797 = vshrl.u32 %v9796, 7
  %v9798 = vsub.s32 4, %v9797
  %v9799 = vrot.slane %v222, %v9798
  %9801 = vbcast.lane.b32.xlu0 %v9799, 256
  %v9802 = vpop.permute.xlu0 %9801
  %v9803 = vlaneseq
  %v9804 = vshrl.u32 %v9803, 7
  %v9805 = vsub.s32 5, %v9804
  %v9806 = vrot.slane %v222, %v9805
  %9808 = vbcast.lane.b32.xlu0 %v9806, 256
  %v9809 = vpop.permute.xlu0 %9808
  %v9810 = vlaneseq
  %v9811 = vshrl.u32 %v9810, 7
  %v9812 = vsub.s32 6, %v9811
  %v9813 = vrot.slane %v222, %v9812
  %9815 = vbcast.lane.b32.xlu0 %v9813, 256
  %v9816 = vpop.permute.xlu0 %9815
  %v9817 = vlaneseq
  %v9818 = vshrl.u32 %v9817, 7
  %v9819 = vsub.s32 7, %v9818
  %v9820 = vrot.slane %v222, %v9819
  %9822 = vbcast.lane.b32.xlu0 %v9820, 256
  %v9823 = vpop.permute.xlu0 %9822
  %v9824 = vmul.f32 %v9696, %v9718
  %v9825 = vmul.f32 %v9697, %v9725
  %v9826 = vmul.f32 %v9698, %v9732
  %v9827 = vmul.f32 %v9699, %v9739
  %v9828 = vmul.f32 %v9700, %v9746
  %v9829 = vmul.f32 %v9701, %v9753
  %v9830 = vmul.f32 %v9702, %v9760
  %v9831 = vmul.f32 %v9703, %v9767
  %v9832 = vmul.f32 %v9704, %v9774
  %v9833 = vmul.f32 %v9705, %v9781
  %v9834 = vmul.f32 %v9706, %v9788
  %v9835 = vmul.f32 %v9707, %v9795
  %v9836 = vmul.f32 %v9708, %v9802
  %v9837 = vmul.f32 %v9709, %v9809
  %v9838 = vmul.f32 %v9710, %v9816
  %v9839 = vmul.f32 %v9711, %v9823
  %v9840 = vcombine.low %v9824, %v9826
  %v9842 = vunpack.c.l.s4 1983009808
  %v9843 = vunpack.c.0.s8 %v9842
  %v9844 = vlaneseq
  %v9845 = vshrl.u32 %v9844, 7
  %v9846 = vsub.s32 %v9843, %v9845
  %v9847 = vrot.slane %v9840, %v9846
  %v9848 = vcombine.low %v9825, %v9827
  %v9850 = vunpack.c.l.s4 1983009808
  %v9851 = vunpack.c.0.s8 %v9850
  %v9852 = vlaneseq
  %v9853 = vshrl.u32 %v9852, 7
  %v9854 = vsub.s32 %v9851, %v9853
  %v9855 = vrot.slane %v9848, %v9854
  %v9856 = vcombine.low %v9828, %v9830
  %v9858 = vunpack.c.l.s4 1983009808
  %v9859 = vunpack.c.0.s8 %v9858
  %v9860 = vlaneseq
  %v9861 = vshrl.u32 %v9860, 7
  %v9862 = vsub.s32 %v9859, %v9861
  %v9863 = vrot.slane %v9856, %v9862
  %v9864 = vcombine.low %v9829, %v9831
  %v9866 = vunpack.c.l.s4 1983009808
  %v9867 = vunpack.c.0.s8 %v9866
  %v9868 = vlaneseq
  %v9869 = vshrl.u32 %v9868, 7
  %v9870 = vsub.s32 %v9867, %v9869
  %v9871 = vrot.slane %v9864, %v9870
  %v9872 = vcombine.low %v9847, %v9855
  %v9873 = vcombine.high %v9847, %v9855
  %v9875 = vunpack.c.l.s4 1934713408
  %v9876 = vunpack.c.0.s8 %v9875
  %v9877 = vlaneseq
  %v9878 = vshrl.u32 %v9877, 7
  %v9879 = vsub.s32 %v9876, %v9878
  %v9880 = vrot.slane %v9872, %v9879
  %v9882 = vunpack.c.l.s4 1934713408
  %v9883 = vunpack.c.0.s8 %v9882
  %v9884 = vlaneseq
  %v9885 = vshrl.u32 %v9884, 7
  %v9886 = vsub.s32 %v9883, %v9885
  %v9887 = vrot.slane %v9873, %v9886
  %v9888 = vcombine.low %v9863, %v9871
  %v9889 = vcombine.high %v9863, %v9871
  %v9891 = vunpack.c.l.s4 1934713408
  %v9892 = vunpack.c.0.s8 %v9891
  %v9893 = vlaneseq
  %v9894 = vshrl.u32 %v9893, 7
  %v9895 = vsub.s32 %v9892, %v9894
  %v9896 = vrot.slane %v9888, %v9895
  %v9898 = vunpack.c.l.s4 1934713408
  %v9899 = vunpack.c.0.s8 %v9898
  %v9900 = vlaneseq
  %v9901 = vshrl.u32 %v9900, 7
  %v9902 = vsub.s32 %v9899, %v9901
  %v9903 = vrot.slane %v9889, %v9902
  %v9904 = vcombine.low %v9880, %v9896
  %v9905 = vcombine.high %v9880, %v9896
  %v9906 = vcombine.low %v9887, %v9903
  %v9907 = vcombine.high %v9887, %v9903
  %v9908 = vcombine.low %v9832, %v9834
  %v9910 = vunpack.c.l.s4 1983009808
  %v9911 = vunpack.c.0.s8 %v9910
  %v9912 = vlaneseq
  %v9913 = vshrl.u32 %v9912, 7
  %v9914 = vsub.s32 %v9911, %v9913
  %v9915 = vrot.slane %v9908, %v9914
  %v9916 = vcombine.low %v9833, %v9835
  %v9918 = vunpack.c.l.s4 1983009808
  %v9919 = vunpack.c.0.s8 %v9918
  %v9920 = vlaneseq
  %v9921 = vshrl.u32 %v9920, 7
  %v9922 = vsub.s32 %v9919, %v9921
  %v9923 = vrot.slane %v9916, %v9922
  %v9924 = vcombine.low %v9836, %v9838
  %v9926 = vunpack.c.l.s4 1983009808
  %v9927 = vunpack.c.0.s8 %v9926
  %v9928 = vlaneseq
  %v9929 = vshrl.u32 %v9928, 7
  %v9930 = vsub.s32 %v9927, %v9929
  %v9931 = vrot.slane %v9924, %v9930
  %v9932 = vcombine.low %v9837, %v9839
  %v9934 = vunpack.c.l.s4 1983009808
  %v9935 = vunpack.c.0.s8 %v9934
  %v9936 = vlaneseq
  %v9937 = vshrl.u32 %v9936, 7
  %v9938 = vsub.s32 %v9935, %v9937
  %v9939 = vrot.slane %v9932, %v9938
  %v9940 = vcombine.low %v9915, %v9923
  %v9941 = vcombine.high %v9915, %v9923
  %v9943 = vunpack.c.l.s4 1934713408
  %v9944 = vunpack.c.0.s8 %v9943
  %v9945 = vlaneseq
  %v9946 = vshrl.u32 %v9945, 7
  %v9947 = vsub.s32 %v9944, %v9946
  %v9948 = vrot.slane %v9940, %v9947
  %v9950 = vunpack.c.l.s4 1934713408
  %v9951 = vunpack.c.0.s8 %v9950
  %v9952 = vlaneseq
  %v9953 = vshrl.u32 %v9952, 7
  %v9954 = vsub.s32 %v9951, %v9953
  %v9955 = vrot.slane %v9941, %v9954
  %v9956 = vcombine.low %v9931, %v9939
  %v9957 = vcombine.high %v9931, %v9939
  %v9959 = vunpack.c.l.s4 1934713408
  %v9960 = vunpack.c.0.s8 %v9959
  %v9961 = vlaneseq
  %v9962 = vshrl.u32 %v9961, 7
  %v9963 = vsub.s32 %v9960, %v9962
  %v9964 = vrot.slane %v9956, %v9963
  %v9966 = vunpack.c.l.s4 1934713408
  %v9967 = vunpack.c.0.s8 %v9966
  %v9968 = vlaneseq
  %v9969 = vshrl.u32 %v9968, 7
  %v9970 = vsub.s32 %v9967, %v9969
  %v9971 = vrot.slane %v9957, %v9970
  %v9972 = vcombine.low %v9948, %v9964
  %v9973 = vcombine.high %v9948, %v9964
  %v9974 = vcombine.low %v9955, %v9971
  %v9975 = vcombine.high %v9955, %v9971
  %9978 = vrot.lane.b32.xlu0 %v9905, 16
  %v9979 = vpop.permute.xlu0 %9978
  %9980 = vrot.lane.b32.xlu0 %v9973, 16
  %v9981 = vpop.permute.xlu0 %9980
  %9986 = vrot.lane.b32.xlu0 %v9906, 32
  %v9987 = vpop.permute.xlu0 %9986
  %9988 = vrot.lane.b32.xlu0 %v9974, 32
  %v9989 = vpop.permute.xlu0 %9988
  %9994 = vrot.lane.b32.xlu0 %v9907, 48
  %v9995 = vpop.permute.xlu0 %9994
  %9996 = vrot.lane.b32.xlu0 %v9975, 48
  %v9997 = vpop.permute.xlu0 %9996
  %v10000 = vsel %vm316, %v9904, %v9979
  %v10001 = vsel %vm316, %v9972, %v9981
  %vm10002 = vcmask 261120
  %v10003 = vsel %vm10002, %v10000, %v9987
  %v10004 = vsel %vm10002, %v10001, %v9989
  %vm10005 = vcmask 392192
  %v10006 = vsel %vm10005, %v10003, %v9995
  %v10007 = vsel %vm10005, %v10004, %v9997
  %vm10008 = vcmask 523264
  %10009 = vst.msk [vmem:[%s7] sm:$0xff] %vm10008, %v10006
  %10010 = vst.msk [vmem:[%s7 + $0x8] sm:$0xff] %vm10008, %v10007
  %v10011 = vsel %vm2207, %v7984, 0.0
  %v10012 = vrot.slane %v10011, 4
  %v10013 = vadd.f32 %v10011, %v10012
  %v10014 = vrot.slane %v10013, 2
  %v10015 = vadd.f32 %v10013, %v10014
  %v10016 = vrot.slane %v10015, 1
  %v10017 = vadd.f32 %v10015, %v10016
  %v10018 = vsel %vm2207, %v7985, 0.0
  %v10019 = vrot.slane %v10018, 4
  %v10020 = vadd.f32 %v10018, %v10019
  %v10021 = vrot.slane %v10020, 2
  %v10022 = vadd.f32 %v10020, %v10021
  %v10023 = vrot.slane %v10022, 1
  %v10024 = vadd.f32 %v10022, %v10023
  %v10025 = vsel %vm2207, %v7986, 0.0
  %v10026 = vrot.slane %v10025, 4
  %v10027 = vadd.f32 %v10025, %v10026
  %v10028 = vrot.slane %v10027, 2
  %v10029 = vadd.f32 %v10027, %v10028
  %v10030 = vrot.slane %v10029, 1
  %v10031 = vadd.f32 %v10029, %v10030
  %v10032 = vsel %vm2207, %v7987, 0.0
  %v10033 = vrot.slane %v10032, 4
  %v10034 = vadd.f32 %v10032, %v10033
  %v10035 = vrot.slane %v10034, 2
  %v10036 = vadd.f32 %v10034, %v10035
  %v10037 = vrot.slane %v10036, 1
  %v10038 = vadd.f32 %v10036, %v10037
  %v10039 = vsel %vm2207, %v7988, 0.0
  %v10040 = vrot.slane %v10039, 4
  %v10041 = vadd.f32 %v10039, %v10040
  %v10042 = vrot.slane %v10041, 2
  %v10043 = vadd.f32 %v10041, %v10042
  %v10044 = vrot.slane %v10043, 1
  %v10045 = vadd.f32 %v10043, %v10044
  %v10046 = vsel %vm2207, %v7989, 0.0
  %v10047 = vrot.slane %v10046, 4
  %v10048 = vadd.f32 %v10046, %v10047
  %v10049 = vrot.slane %v10048, 2
  %v10050 = vadd.f32 %v10048, %v10049
  %v10051 = vrot.slane %v10050, 1
  %v10052 = vadd.f32 %v10050, %v10051
  %v10053 = vsel %vm2207, %v7990, 0.0
  %v10054 = vrot.slane %v10053, 4
  %v10055 = vadd.f32 %v10053, %v10054
  %v10056 = vrot.slane %v10055, 2
  %v10057 = vadd.f32 %v10055, %v10056
  %v10058 = vrot.slane %v10057, 1
  %v10059 = vadd.f32 %v10057, %v10058
  %v10060 = vsel %vm2207, %v7991, 0.0
  %v10061 = vrot.slane %v10060, 4
  %v10062 = vadd.f32 %v10060, %v10061
  %v10063 = vrot.slane %v10062, 2
  %v10064 = vadd.f32 %v10062, %v10063
  %v10065 = vrot.slane %v10064, 1
  %v10066 = vadd.f32 %v10064, %v10065
  %v10067 = vsel %vm2207, %v7992, 0.0
  %v10068 = vrot.slane %v10067, 4
  %v10069 = vadd.f32 %v10067, %v10068
  %v10070 = vrot.slane %v10069, 2
  %v10071 = vadd.f32 %v10069, %v10070
  %v10072 = vrot.slane %v10071, 1
  %v10073 = vadd.f32 %v10071, %v10072
  %v10074 = vsel %vm2207, %v7993, 0.0
  %v10075 = vrot.slane %v10074, 4
  %v10076 = vadd.f32 %v10074, %v10075
  %v10077 = vrot.slane %v10076, 2
  %v10078 = vadd.f32 %v10076, %v10077
  %v10079 = vrot.slane %v10078, 1
  %v10080 = vadd.f32 %v10078, %v10079
  %v10081 = vsel %vm2207, %v7994, 0.0
  %v10082 = vrot.slane %v10081, 4
  %v10083 = vadd.f32 %v10081, %v10082
  %v10084 = vrot.slane %v10083, 2
  %v10085 = vadd.f32 %v10083, %v10084
  %v10086 = vrot.slane %v10085, 1
  %v10087 = vadd.f32 %v10085, %v10086
  %v10088 = vsel %vm2207, %v7995, 0.0
  %v10089 = vrot.slane %v10088, 4
  %v10090 = vadd.f32 %v10088, %v10089
  %v10091 = vrot.slane %v10090, 2
  %v10092 = vadd.f32 %v10090, %v10091
  %v10093 = vrot.slane %v10092, 1
  %v10094 = vadd.f32 %v10092, %v10093
  %v10095 = vsel %vm2207, %v7996, 0.0
  %v10096 = vrot.slane %v10095, 4
  %v10097 = vadd.f32 %v10095, %v10096
  %v10098 = vrot.slane %v10097, 2
  %v10099 = vadd.f32 %v10097, %v10098
  %v10100 = vrot.slane %v10099, 1
  %v10101 = vadd.f32 %v10099, %v10100
  %v10102 = vsel %vm2207, %v7997, 0.0
  %v10103 = vrot.slane %v10102, 4
  %v10104 = vadd.f32 %v10102, %v10103
  %v10105 = vrot.slane %v10104, 2
  %v10106 = vadd.f32 %v10104, %v10105
  %v10107 = vrot.slane %v10106, 1
  %v10108 = vadd.f32 %v10106, %v10107
  %v10109 = vsel %vm2207, %v7998, 0.0
  %v10110 = vrot.slane %v10109, 4
  %v10111 = vadd.f32 %v10109, %v10110
  %v10112 = vrot.slane %v10111, 2
  %v10113 = vadd.f32 %v10111, %v10112
  %v10114 = vrot.slane %v10113, 1
  %v10115 = vadd.f32 %v10113, %v10114
  %v10116 = vsel %vm2207, %v7999, 0.0
  %v10117 = vrot.slane %v10116, 4
  %v10118 = vadd.f32 %v10116, %v10117
  %v10119 = vrot.slane %v10118, 2
  %v10120 = vadd.f32 %v10118, %v10119
  %v10121 = vrot.slane %v10120, 1
  %v10122 = vadd.f32 %v10120, %v10121
  %v10123 = vrcp.pop 4.0
  %v10124 = vmul.f32 %v10017, %v10123
  %v10125 = vmul.f32 %v10024, %v10123
  %v10126 = vmul.f32 %v10031, %v10123
  %v10127 = vmul.f32 %v10038, %v10123
  %v10128 = vmul.f32 %v10045, %v10123
  %v10129 = vmul.f32 %v10052, %v10123
  %v10130 = vmul.f32 %v10059, %v10123
  %v10131 = vmul.f32 %v10066, %v10123
  %v10132 = vmul.f32 %v10073, %v10123
  %v10133 = vmul.f32 %v10080, %v10123
  %v10134 = vmul.f32 %v10087, %v10123
  %v10135 = vmul.f32 %v10094, %v10123
  %v10136 = vmul.f32 %v10101, %v10123
  %v10137 = vmul.f32 %v10108, %v10123
  %v10138 = vmul.f32 %v10115, %v10123
  %v10139 = vmul.f32 %v10122, %v10123
  %v10140 = vlog2.pop %v8166
  %v10141 = vmul.f32 %v10140, 0.6931472
  %v10142 = vlog2.pop %v8173
  %v10143 = vmul.f32 %v10142, 0.6931472
  %v10144 = vlog2.pop %v8180
  %v10145 = vmul.f32 %v10144, 0.6931472
  %v10146 = vlog2.pop %v8187
  %v10147 = vmul.f32 %v10146, 0.6931472
  %v10148 = vlog2.pop %v8194
  %v10149 = vmul.f32 %v10148, 0.6931472
  %v10150 = vlog2.pop %v8201
  %v10151 = vmul.f32 %v10150, 0.6931472
  %v10152 = vlog2.pop %v8208
  %v10153 = vmul.f32 %v10152, 0.6931472
  %v10154 = vlog2.pop %v8215
  %v10155 = vmul.f32 %v10154, 0.6931472
  %v10156 = vlog2.pop %v8222
  %v10157 = vmul.f32 %v10156, 0.6931472
  %v10158 = vlog2.pop %v8229
  %v10159 = vmul.f32 %v10158, 0.6931472
  %v10160 = vlog2.pop %v8236
  %v10161 = vmul.f32 %v10160, 0.6931472
  %v10162 = vlog2.pop %v8243
  %v10163 = vmul.f32 %v10162, 0.6931472
  %v10164 = vlog2.pop %v8250
  %v10165 = vmul.f32 %v10164, 0.6931472
  %v10166 = vlog2.pop %v8257
  %v10167 = vmul.f32 %v10166, 0.6931472
  %v10168 = vlog2.pop %v8264
  %v10169 = vmul.f32 %v10168, 0.6931472
  %v10170 = vlog2.pop %v8271
  %v10171 = vmul.f32 %v10170, 0.6931472
  %v10172 = vadd.f32 %v8006, %v10141
  %v10173 = vadd.f32 %v8013, %v10143
  %v10174 = vadd.f32 %v8020, %v10145
  %v10175 = vadd.f32 %v8027, %v10147
  %v10176 = vadd.f32 %v8034, %v10149
  %v10177 = vadd.f32 %v8041, %v10151
  %v10178 = vadd.f32 %v8048, %v10153
  %v10179 = vadd.f32 %v8055, %v10155
  %v10180 = vadd.f32 %v8062, %v10157
  %v10181 = vadd.f32 %v8069, %v10159
  %v10182 = vadd.f32 %v8076, %v10161
  %v10183 = vadd.f32 %v8083, %v10163
  %v10184 = vadd.f32 %v8090, %v10165
  %v10185 = vadd.f32 %v8097, %v10167
  %v10186 = vadd.f32 %v8104, %v10169
  %v10187 = vadd.f32 %v8111, %v10171
  %v10188 = vsub.f32 %v10172, %v10124
  %v10189 = vsub.f32 %v10173, %v10125
  %v10190 = vsub.f32 %v10174, %v10126
  %v10191 = vsub.f32 %v10175, %v10127
  %v10192 = vsub.f32 %v10176, %v10128
  %v10193 = vsub.f32 %v10177, %v10129
  %v10194 = vsub.f32 %v10178, %v10130
  %v10195 = vsub.f32 %v10179, %v10131
  %v10196 = vsub.f32 %v10180, %v10132
  %v10197 = vsub.f32 %v10181, %v10133
  %v10198 = vsub.f32 %v10182, %v10134
  %v10199 = vsub.f32 %v10183, %v10135
  %v10200 = vsub.f32 %v10184, %v10136
  %v10201 = vsub.f32 %v10185, %v10137
  %v10202 = vsub.f32 %v10186, %v10138
  %v10203 = vsub.f32 %v10187, %v10139
  %vm10204 = vcmp.gt.f32.partialorder %v223, 0.5
  %vm10205 = vcmp.gt.f32.partialorder %v224, 0.5
  %vm10222 = vcmask 1041409
  %v10223 = vsel %vm10222, %v10189, %v10188
  %vm10224 = vcmask 1042434
  %v10225 = vsel %vm10224, %v10190, %v10223
  %vm10226 = vcmask 1043459
  %v10227 = vsel %vm10226, %v10191, %v10225
  %vm10228 = vcmask 1044484
  %v10229 = vsel %vm10228, %v10192, %v10227
  %vm10230 = vcmask 1045509
  %v10231 = vsel %vm10230, %v10193, %v10229
  %vm10232 = vcmask 1046534
  %v10233 = vsel %vm10232, %v10194, %v10231
  %vm10234 = vcmask 1047559
  %v10235 = vsel %vm10234, %v10195, %v10233
  %v10236 = vsel %vm10222, %v10197, %v10196
  %v10237 = vsel %vm10224, %v10198, %v10236
  %v10238 = vsel %vm10226, %v10199, %v10237
  %v10239 = vsel %vm10228, %v10200, %v10238
  %v10240 = vsel %vm10230, %v10201, %v10239
  %v10241 = vsel %vm10232, %v10202, %v10240
  %v10242 = vsel %vm10234, %v10203, %v10241
  %v10245 = vsel %vm10204, %v10235, inf
  %v10246 = vsel %vm10205, %v10242, inf
  %10247 = vst.msk [vmem:[%s8] sm:$0xff] %vm316, %v10245
  %10248 = vst.msk [vmem:[%s8 + $0x8] sm:$0xff] %vm316, %v10246
  // Predicated region
  $region30: #{base_capnet_forward.1} parent=0 // pred_check
    _
  $region31: #{base_capnet_forward.1} parent=0 // pred_check_branch
    %10250 = sbr.rel (0) target = $region33
  $region32: #{base_capnet_forward.1} parent=0 // pred_region
    _
  $region33: #{base_capnet_forward.1} parent=0 // pred_fallthru
    _
  // Predicated region
  $region34: #{base_capnet_forward.1} parent=0 // pred_check
    _
  $region35: #{base_capnet_forward.1} parent=0 // pred_check_branch
    %10252 = sbr.rel (0) target = $region37
  $region36: #{base_capnet_forward.1} parent=0 // pred_region
    _
  $region37: #{base_capnet_forward.1} parent=0 // pred_fallthru
    _
  // Predicated region
  $region38: #{base_capnet_forward.1} parent=0 // pred_check
    _
  $region39: #{base_capnet_forward.1} parent=0 // pred_check_branch
    %10254 = sbr.rel (0) target = $region41
  $region40: #{base_capnet_forward.1} parent=0 // pred_region
    _
  $region41: #{base_capnet_forward.1} parent=0 // pred_fallthru
    _
  // Predicated region
  $region42: #{base_capnet_forward.1} parent=0 // pred_check
    _
  $region43: #{base_capnet_forward.1} parent=0 // pred_check_branch
    %10256 = sbr.rel (0) target = $region45
  $region44: #{base_capnet_forward.1} parent=0 // pred_region
    _
  $region45: #{base_capnet_forward.1} parent=0 // pred_fallthru
    _

</llo_original>
